<compile_context>
chip_gen: v6e
topology: v6e:2x2x1
jax: 0.10.0
libtpu: 0.0.40
codegen_flags: <defaults>
</compile_context>

<pallas_src>
import jax
import jax.numpy as jnp
from jax.experimental import pallas as pl
from jax.experimental.pallas import tpu as pltpu

# ---- small, module-consistent sizes ----------------------------------------
EMBEDDING_SIZE = 15          # (scaled down from 50)
CONDITION_SIZE = 1
INPUT_SIZE = EMBEDDING_SIZE + CONDITION_SIZE   # 16
HIDDEN_SIZE = 32             # (scaled down from 512)
NUM_LAYERS = 3
N_VOCAB = 64                 # (scaled down; real value comes from token_to_index)
TEMPERATURE = 0.8
BATCH = 2
SEQ = 8

HP = 128                     # padded hidden width (lane-aligned gate blocks)
VP = 128                     # padded vocab width (lane-dense logits store)


# ---------------------------------------------------------------------------
# Pallas kernel: 3-layer LSTM (wavefront) + linear head, single invocation.
# ---------------------------------------------------------------------------
def _lstm_head_kernel(
    x_ref,        # (T*B, I)          f32  time-major-flattened input
    h0_ref,       # (L, B, HP)        f32  padded initial hidden state
    c0_ref,       # (L, B, HP)        f32
    wih0_ref,     # (I, 4*HP)         f32  layer-0 input weights (gate-padded, g x2)
    whh0_ref,     # (HP, 4*HP)        f32  layer-0 recurrent weights
    wfused_ref,   # (2, 2*HP, 4*HP)   f32  layers 1/2: [Wih ; Whh] stacked on rows
    bias_ref,     # (L, 1, 4*HP)      f32  bih + bhh (gate-padded, g x2)
    wlin_ref,     # (HP, VP)          f32  head weights, 1/temperature folded in
    blin_ref,     # (1, VP)           f32
    logits_ref,   # out: (T*B, VP)    f32  lane-dense, time-major flat
    hout_ref,     # out: (L, B, HP)   f32
    cout_ref,     # out: (L, B, HP)   f32
):
    TB = x_ref.shape[0]
    L, B, H = h0_ref.shape       # H == HP inside the kernel
    T = TB // B

    def cell(gates, c_prev):
        # One sigmoid over the full (B, 4*HP) gate slab.  tanh(g) is recovered
        # from the same sigmoid pass (g-gate weights/bias pre-scaled by 2), so
        # only tanh(c) remains as a second serial EUP push.
        sig = jax.nn.sigmoid(gates)
        i_g = sig[:, 0 * H:1 * H]
        f_g = sig[:, 1 * H:2 * H]
        g_g = 2.0 * sig[:, 2 * H:3 * H] - 1.0
        o_g = sig[:, 3 * H:4 * H]
        c_new = f_g * c_prev + i_g * g_g
        h_new = o_g * jnp.tanh(c_new)
        return h_new, c_new

    # Hoisted layer-0 input projection: one big MXU op, fully off the
    # recurrence chain (no dependence on h/c).
    g0_all = jnp.dot(x_ref[...], wih0_ref[...],
                     preferred_element_type=jnp.float32) + bias_ref[0]  # (T*B, 4*HP)

    h_st = [h0_ref[l] for l in range(L)]
    c_st = [c0_ref[l] for l in range(L)]
    outs2 = []                   # layer-2 per-step outputs, kept in values

    # Wavefront: at wave w the three layers process time steps w, w-1, w-2.
    # Layer l's input at wave w is layer (l-1)'s h from the *previous* wave,
    # read from h_st before this wave's updates are committed.
    # TODO(synk): at real sizes (H=512) switch to lax.fori_loop(unroll=k) and
    # stage gates in VMEM scratch instead of holding them live across a full
    # unroll (vreg-spill guard).
    for w in range(T + L - 1):
        nh = list(h_st)
        nc = list(c_st)
        if w < T:                                   # layer 0, t = w
            t = w
            gates0 = g0_all[t * B:(t + 1) * B, :] + jnp.dot(
                h_st[0], whh0_ref[...], preferred_element_type=jnp.float32)
            nh[0], nc[0] = cell(gates0, c_st[0])
        if 1 <= w <= T:                             # layer 1, t = w - 1
            gates1 = jnp.dot(
                jnp.concatenate([h_st[0], h_st[1]], axis=-1), wfused_ref[0],
                preferred_element_type=jnp.float32) + bias_ref[1]
            nh[1], nc[1] = cell(gates1, c_st[1])
        if 2 <= w:                                  # layer 2, t = w - 2
            gates2 = jnp.dot(
                jnp.concatenate([h_st[1], h_st[2]], axis=-1), wfused_ref[1],
                preferred_element_type=jnp.float32) + bias_ref[2]
            h2, c2 = cell(gates2, c_st[2])
            nh[2], nc[2] = h2, c2
            outs2.append(h2)
        h_st, c_st = nh, nc

    # TODO(synk): Dropout(0.2) is identity here (inference/eval semantics).
    # Head: layer-2 outputs never touch VMEM scratch; one lane-dense matmul.
    # Temperature scaling is folded into wlin/blin at parameter-prep time.
    seq2 = jnp.concatenate(outs2, axis=0)                        # (T*B, HP)
    logits_ref[...] = (jnp.dot(seq2, wlin_ref[...],
                               preferred_element_type=jnp.float32)
                       + blin_ref[...]).astype(logits_ref.dtype)

    for l in range(L):
        hout_ref[l] = h_st[l]
        cout_ref[l] = c_st[l]


# ---------------------------------------------------------------------------
# Parameter preparation (padding / gate alignment / folding) — done once.
# ---------------------------------------------------------------------------
def _pad_gate_weight(w_raw, in_dim_pad, H):
    """w_raw: (in_dim, 4*H), PyTorch gate order i,f,g,o -> (in_dim_pad, 4*HP).

    Each gate block is placed at a 128-lane-aligned column offset; padded
    rows/columns are zero; the g-gate block is scaled by 2 (tanh-via-sigmoid).
    """
    in_dim = w_raw.shape[0]
    w = jnp.zeros((in_dim_pad, 4 * HP), jnp.float32)
    for g in range(4):
        blk = w_raw[:, g * H:(g + 1) * H]
        if g == 2:
            blk = blk * 2.0
        w = w.at[:in_dim, g * HP:g * HP + H].set(blk)
    return w


def _pad_gate_bias(b_raw, H):
    """b_raw: (1, 4*H) -> (1, 4*HP), g-gate block scaled by 2, padding zero."""
    b = jnp.zeros((1, 4 * HP), jnp.float32)
    for g in range(4):
        blk = b_raw[:, g * H:(g + 1) * H]
        if g == 2:
            blk = blk * 2.0
        b = b.at[:, g * HP:g * HP + H].set(blk)
    return b


def prepare_kernel_params(p):
    H, I, V, L = HIDDEN_SIZE, INPUT_SIZE, N_VOCAB, NUM_LAYERS
    wih0 = _pad_gate_weight(p["wih0"], I, H)                          # (I, 4*HP)
    whh = [_pad_gate_weight(p["whh"][l], HP, H) for l in range(L)]    # (HP, 4*HP)
    wih12 = [_pad_gate_weight(p["wih1"], HP, H),
             _pad_gate_weight(p["wih2"], HP, H)]
    wfused = jnp.stack(
        [jnp.concatenate([wih12[i], whh[i + 1]], axis=0) for i in range(2)],
        axis=0)                                                       # (2, 2*HP, 4*HP)
    bias = jnp.stack(
        [_pad_gate_bias(p["bih"][l] + p["bhh"][l], H) for l in range(L)],
        axis=0)                                                       # (L, 1, 4*HP)
    wlin = jnp.zeros((HP, VP), jnp.float32).at[:H, :V].set(
        p["wlin"] * (1.0 / TEMPERATURE))
    blin = jnp.zeros((1, VP), jnp.float32).at[:, :V].set(
        p["blin"] * (1.0 / TEMPERATURE))
    return {"wih0": wih0, "whh0": whh[0], "wfused": wfused,
            "bias": bias, "wlin": wlin, "blin": blin}


# ---------------------------------------------------------------------------
# Wrapper (plain-JAX glue: transposes/padding + pallas_call plumbing)
# ---------------------------------------------------------------------------
@jax.jit
def sentiment_lstm_forward(x, h, c, kp):
    """x: (B, T, I) batch_first, h/c: (L, B, H). Returns (logits (B,T,V), (h, c))."""
    B, T, I = x.shape
    L, _, H = h.shape

    # time-major then flatten: (B,T,I) -> (T,B,I) -> (T*B, I)
    x_flat = jnp.transpose(x, (1, 0, 2)).reshape(T * B, I)
    h_pad = jnp.pad(h, ((0, 0), (0, 0), (0, HP - H)))
    c_pad = jnp.pad(c, ((0, 0), (0, 0), (0, HP - H)))

    vmem = pl.BlockSpec(memory_space=pltpu.MemorySpace.VMEM)
    out_shapes = (
        jax.ShapeDtypeStruct((T * B, VP), jnp.float32),   # logits (time-major, flat, lane-dense)
        jax.ShapeDtypeStruct((L, B, HP), jnp.float32),    # h_out (padded)
        jax.ShapeDtypeStruct((L, B, HP), jnp.float32),    # c_out (padded)
    )

    logits_flat, h_out, c_out = pl.pallas_call(
        _lstm_head_kernel,
        out_shape=out_shapes,
        in_specs=[vmem] * 9,
        out_specs=(vmem, vmem, vmem),
    )(x_flat, h_pad, c_pad,
      kp["wih0"], kp["whh0"], kp["wfused"],
      kp["bias"], kp["wlin"], kp["blin"])

    logits = jnp.transpose(logits_flat.reshape(T, B, VP), (1, 0, 2))[:, :, :N_VOCAB]
    return logits, (h_out[..., :H], c_out[..., :H])


# ---------------------------------------------------------------------------
# Pure-JAX reference (for correctness check) — uses the raw parameters.
# ---------------------------------------------------------------------------
def reference_forward(x, h, c, params):
    B, T, I = x.shape
    L, _, H = h.shape
    wihs = [params["wih0"], params["wih1"], params["wih2"]]
    seq = x
    h_out, c_out = [], []
    for l in range(L):
        wih, whh = wihs[l], params["whh"][l]
        bias = params["bih"][l] + params["bhh"][l]
        hs, cs = h[l], c[l]
        outs = []
        for t in range(T):
            gates = seq[:, t, :] @ wih + hs @ whh + bias
            i_g = jax.nn.sigmoid(gates[:, 0 * H:1 * H])
            f_g = jax.nn.sigmoid(gates[:, 1 * H:2 * H])
            g_g = jnp.tanh(gates[:, 2 * H:3 * H])
            o_g = jax.nn.sigmoid(gates[:, 3 * H:4 * H])
            cs = f_g * cs + i_g * g_g
            hs = o_g * jnp.tanh(cs)
            outs.append(hs)
        seq = jnp.stack(outs, axis=1)
        h_out.append(hs)
        c_out.append(cs)
    logits = (seq @ params["wlin"] + params["blin"]) / TEMPERATURE
    return logits, (jnp.stack(h_out), jnp.stack(c_out))


# ---------------------------------------------------------------------------
def make_params(key):
    """Deterministic synthetic parameters (shapes match nn.LSTM / nn.Linear,
    stored pre-transposed to (in_dim, 4H) / (H, V) math convention)."""
    H, I, V, L = HIDDEN_SIZE, INPUT_SIZE, N_VOCAB, NUM_LAYERS
    k = 1.0 / jnp.sqrt(jnp.float32(H))
    keys = jax.random.split(key, 10)
    u = lambda kk, shape: jax.random.uniform(kk, shape, jnp.float32, -k, k)
    return {
        "wih0": u(keys[0], (I, 4 * H)),
        "wih1": u(keys[1], (H, 4 * H)),
        "wih2": u(keys[2], (H, 4 * H)),
        "whh":  u(keys[3], (L, H, 4 * H)),
        "bih":  u(keys[4], (L, 1, 4 * H)),
        "bhh":  u(keys[5], (L, 1, 4 * H)),
        "wlin": u(keys[6], (H, V)),
        "blin": u(keys[7], (1, V)),
    }


if __name__ == "__main__":
    key = jax.random.PRNGKey(0)
    k_x, k_h, k_c, k_p = jax.random.split(key, 4)

    x = jax.random.normal(k_x, (BATCH, SEQ, INPUT_SIZE), jnp.float32)
    h0 = jax.random.normal(k_h, (NUM_LAYERS, BATCH, HIDDEN_SIZE), jnp.float32)
    c0 = jax.random.normal(k_c, (NUM_LAYERS, BATCH, HIDDEN_SIZE), jnp.float32)
    params = make_params(k_p)
    kparams = prepare_kernel_params(params)

    logits, (h_out, c_out) = sentiment_lstm_forward(x, h0, c0, kparams)
    jax.block_until_ready((logits, h_out, c_out))

    ref_logits, (ref_h, ref_c) = reference_forward(x, h0, c0, params)
    assert logits.shape == (BATCH, SEQ, N_VOCAB)
    assert h_out.shape == (NUM_LAYERS, BATCH, HIDDEN_SIZE)
    assert c_out.shape == (NUM_LAYERS, BATCH, HIDDEN_SIZE)
    assert jnp.allclose(logits, ref_logits, atol=1e-3, rtol=1e-3)
    assert jnp.allclose(h_out, ref_h, atol=1e-3, rtol=1e-3)
    assert jnp.allclose(c_out, ref_c, atol=1e-3, rtol=1e-3)

    print("KERNEL_OK")
</pallas_src>

<mosaic_0001>
module attributes {stable_mosaic.version = 11 : i64} {
  func.func @_lstm_head_kernel(%arg0: memref<16x16xf32, #tpu.memory_space<vmem>>, %arg1: memref<3x2x128xf32, #tpu.memory_space<vmem>>, %arg2: memref<3x2x128xf32, #tpu.memory_space<vmem>>, %arg3: memref<16x512xf32, #tpu.memory_space<vmem>>, %arg4: memref<128x512xf32, #tpu.memory_space<vmem>>, %arg5: memref<2x256x512xf32, #tpu.memory_space<vmem>>, %arg6: memref<3x1x512xf32, #tpu.memory_space<vmem>>, %arg7: memref<128x128xf32, #tpu.memory_space<vmem>>, %arg8: memref<1x128xf32, #tpu.memory_space<vmem>>, %arg9: memref<16x128xf32, #tpu.memory_space<vmem>>, %arg10: memref<3x2x128xf32, #tpu.memory_space<vmem>>, %arg11: memref<3x2x128xf32, #tpu.memory_space<vmem>>) attributes {dimension_semantics = [], scalar_prefetch = 0 : i64, scratch_operands = 0 : i64, tpu.core_type = #tpu.core_type<tc>} {
    %c0 = arith.constant 0 : index
    %c0_0 = arith.constant 0 : index
    %0 = vector.load %arg0[%c0, %c0_0] : memref<16x16xf32, #tpu.memory_space<vmem>>, vector<16x16xf32>
    %c0_1 = arith.constant 0 : index
    %c0_2 = arith.constant 0 : index
    %1 = vector.load %arg3[%c0_1, %c0_2] : memref<16x512xf32, #tpu.memory_space<vmem>>, vector<16x512xf32>
    %cst = arith.constant dense<0.000000e+00> : vector<16x512xf32>
    %2 = tpu.matmul %0, %1, %cst {dimension_numbers = #tpu.dot_dimension_numbers<[1], [0], [0], [1], [0, 0, 1, 1], [], []>} : vector<16x16xf32>, vector<16x512xf32>, vector<16x512xf32> -> vector<16x512xf32>
    %c0_3 = arith.constant 0 : index
    %c0_4 = arith.constant 0 : index
    %c0_5 = arith.constant 0 : index
    %3 = vector.load %arg6[%c0_3, %c0_4, %c0_5] : memref<3x1x512xf32, #tpu.memory_space<vmem>>, vector<1x1x512xf32>
    %4 = vector.shape_cast %3 : vector<1x1x512xf32> to vector<1x512xf32>
    %5 = vector.broadcast %4 : vector<1x512xf32> to vector<16x512xf32>
    %6 = arith.addf %2, %5 : vector<16x512xf32>
    %c0_6 = arith.constant 0 : index
    %c0_7 = arith.constant 0 : index
    %c0_8 = arith.constant 0 : index
    %7 = vector.load %arg1[%c0_6, %c0_7, %c0_8] : memref<3x2x128xf32, #tpu.memory_space<vmem>>, vector<1x2x128xf32>
    %8 = vector.shape_cast %7 : vector<1x2x128xf32> to vector<2x128xf32>
    %c1 = arith.constant 1 : index
    %c0_9 = arith.constant 0 : index
    %c0_10 = arith.constant 0 : index
    %9 = vector.load %arg1[%c1, %c0_9, %c0_10] : memref<3x2x128xf32, #tpu.memory_space<vmem>>, vector<1x2x128xf32>
    %10 = vector.shape_cast %9 : vector<1x2x128xf32> to vector<2x128xf32>
    %c2 = arith.constant 2 : index
    %c0_11 = arith.constant 0 : index
    %c0_12 = arith.constant 0 : index
    %11 = vector.load %arg1[%c2, %c0_11, %c0_12] : memref<3x2x128xf32, #tpu.memory_space<vmem>>, vector<1x2x128xf32>
    %12 = vector.shape_cast %11 : vector<1x2x128xf32> to vector<2x128xf32>
    %c0_13 = arith.constant 0 : index
    %c0_14 = arith.constant 0 : index
    %c0_15 = arith.constant 0 : index
    %13 = vector.load %arg2[%c0_13, %c0_14, %c0_15] : memref<3x2x128xf32, #tpu.memory_space<vmem>>, vector<1x2x128xf32>
    %14 = vector.shape_cast %13 : vector<1x2x128xf32> to vector<2x128xf32>
    %c1_16 = arith.constant 1 : index
    %c0_17 = arith.constant 0 : index
    %c0_18 = arith.constant 0 : index
    %15 = vector.load %arg2[%c1_16, %c0_17, %c0_18] : memref<3x2x128xf32, #tpu.memory_space<vmem>>, vector<1x2x128xf32>
    %16 = vector.shape_cast %15 : vector<1x2x128xf32> to vector<2x128xf32>
    %c2_19 = arith.constant 2 : index
    %c0_20 = arith.constant 0 : index
    %c0_21 = arith.constant 0 : index
    %17 = vector.load %arg2[%c2_19, %c0_20, %c0_21] : memref<3x2x128xf32, #tpu.memory_space<vmem>>, vector<1x2x128xf32>
    %18 = vector.shape_cast %17 : vector<1x2x128xf32> to vector<2x128xf32>
    %19 = vector.extract_strided_slice %6 {offsets = [0, 0], sizes = [2, 512], strides = [1, 1]} : vector<16x512xf32> to vector<2x512xf32>
    %c0_22 = arith.constant 0 : index
    %c0_23 = arith.constant 0 : index
    %20 = vector.load %arg4[%c0_22, %c0_23] : memref<128x512xf32, #tpu.memory_space<vmem>>, vector<128x512xf32>
    %cst_24 = arith.constant dense<0.000000e+00> : vector<2x512xf32>
    %21 = tpu.matmul %8, %20, %cst_24 {dimension_numbers = #tpu.dot_dimension_numbers<[1], [0], [0], [1], [0, 0, 1, 1], [], []>} : vector<2x128xf32>, vector<128x512xf32>, vector<2x512xf32> -> vector<2x512xf32>
    %22 = arith.addf %19, %21 : vector<2x512xf32>
    %23 = arith.negf %22 : vector<2x512xf32>
    %24 = math.exp %23 : vector<2x512xf32>
    %cst_25 = arith.constant 1.000000e+00 : f32
    %25 = vector.broadcast %cst_25 : f32 to vector<2x512xf32>
    %26 = arith.addf %25, %24 : vector<2x512xf32>
    %27 = arith.divf %25, %26 : vector<2x512xf32>
    %28 = vector.extract_strided_slice %27 {offsets = [0, 0], sizes = [2, 128], strides = [1, 1]} : vector<2x512xf32> to vector<2x128xf32>
    %29 = vector.extract_strided_slice %27 {offsets = [0, 128], sizes = [2, 128], strides = [1, 1]} : vector<2x512xf32> to vector<2x128xf32>
    %30 = vector.extract_strided_slice %27 {offsets = [0, 256], sizes = [2, 128], strides = [1, 1]} : vector<2x512xf32> to vector<2x128xf32>
    %cst_26 = arith.constant 2.000000e+00 : f32
    %31 = vector.broadcast %cst_26 : f32 to vector<2x128xf32>
    %32 = arith.mulf %31, %30 : vector<2x128xf32>
    %cst_27 = arith.constant 1.000000e+00 : f32
    %33 = vector.broadcast %cst_27 : f32 to vector<2x128xf32>
    %34 = arith.subf %32, %33 : vector<2x128xf32>
    %35 = vector.extract_strided_slice %27 {offsets = [0, 384], sizes = [2, 128], strides = [1, 1]} : vector<2x512xf32> to vector<2x128xf32>
    %36 = arith.mulf %29, %14 : vector<2x128xf32>
    %37 = arith.mulf %28, %34 : vector<2x128xf32>
    %38 = arith.addf %36, %37 : vector<2x128xf32>
    %39 = math.tanh %38 : vector<2x128xf32>
    %40 = arith.mulf %35, %39 : vector<2x128xf32>
    %41 = vector.extract_strided_slice %6 {offsets = [2, 0], sizes = [2, 512], strides = [1, 1]} : vector<16x512xf32> to vector<2x512xf32>
    %c0_28 = arith.constant 0 : index
    %c0_29 = arith.constant 0 : index
    %42 = vector.load %arg4[%c0_28, %c0_29] : memref<128x512xf32, #tpu.memory_space<vmem>>, vector<128x512xf32>
    %cst_30 = arith.constant dense<0.000000e+00> : vector<2x512xf32>
    %43 = tpu.matmul %40, %42, %cst_30 {dimension_numbers = #tpu.dot_dimension_numbers<[1], [0], [0], [1], [0, 0, 1, 1], [], []>} : vector<2x128xf32>, vector<128x512xf32>, vector<2x512xf32> -> vector<2x512xf32>
    %44 = arith.addf %41, %43 : vector<2x512xf32>
    %45 = arith.negf %44 : vector<2x512xf32>
    %46 = math.exp %45 : vector<2x512xf32>
    %cst_31 = arith.constant 1.000000e+00 : f32
    %47 = vector.broadcast %cst_31 : f32 to vector<2x512xf32>
    %48 = arith.addf %47, %46 : vector<2x512xf32>
    %49 = arith.divf %47, %48 : vector<2x512xf32>
    %50 = vector.extract_strided_slice %49 {offsets = [0, 0], sizes = [2, 128], strides = [1, 1]} : vector<2x512xf32> to vector<2x128xf32>
    %51 = vector.extract_strided_slice %49 {offsets = [0, 128], sizes = [2, 128], strides = [1, 1]} : vector<2x512xf32> to vector<2x128xf32>
    %52 = vector.extract_strided_slice %49 {offsets = [0, 256], sizes = [2, 128], strides = [1, 1]} : vector<2x512xf32> to vector<2x128xf32>
    %cst_32 = arith.constant 2.000000e+00 : f32
    %53 = vector.broadcast %cst_32 : f32 to vector<2x128xf32>
    %54 = arith.mulf %53, %52 : vector<2x128xf32>
    %cst_33 = arith.constant 1.000000e+00 : f32
    %55 = vector.broadcast %cst_33 : f32 to vector<2x128xf32>
    %56 = arith.subf %54, %55 : vector<2x128xf32>
    %57 = vector.extract_strided_slice %49 {offsets = [0, 384], sizes = [2, 128], strides = [1, 1]} : vector<2x512xf32> to vector<2x128xf32>
    %58 = arith.mulf %51, %38 : vector<2x128xf32>
    %59 = arith.mulf %50, %56 : vector<2x128xf32>
    %60 = arith.addf %58, %59 : vector<2x128xf32>
    %61 = math.tanh %60 : vector<2x128xf32>
    %62 = arith.mulf %57, %61 : vector<2x128xf32>
    %63 = tpu.concatenate %40, %10 in 1 : vector<2x128xf32>, vector<2x128xf32> -> vector<2x256xf32>
    %c0_34 = arith.constant 0 : index
    %c0_35 = arith.constant 0 : index
    %c0_36 = arith.constant 0 : index
    %64 = vector.load %arg5[%c0_34, %c0_35, %c0_36] : memref<2x256x512xf32, #tpu.memory_space<vmem>>, vector<1x256x512xf32>
    %65 = vector.shape_cast %64 : vector<1x256x512xf32> to vector<256x512xf32>
    %cst_37 = arith.constant dense<0.000000e+00> : vector<2x512xf32>
    %66 = tpu.matmul %63, %65, %cst_37 {dimension_numbers = #tpu.dot_dimension_numbers<[1], [0], [0], [1], [0, 0, 1, 1], [], []>} : vector<2x256xf32>, vector<256x512xf32>, vector<2x512xf32> -> vector<2x512xf32>
    %c1_38 = arith.constant 1 : index
    %c0_39 = arith.constant 0 : index
    %c0_40 = arith.constant 0 : index
    %67 = vector.load %arg6[%c1_38, %c0_39, %c0_40] : memref<3x1x512xf32, #tpu.memory_space<vmem>>, vector<1x1x512xf32>
    %68 = vector.shape_cast %67 : vector<1x1x512xf32> to vector<1x512xf32>
    %69 = vector.broadcast %68 : vector<1x512xf32> to vector<2x512xf32>
    %70 = arith.addf %66, %69 : vector<2x512xf32>
    %71 = arith.negf %70 : vector<2x512xf32>
    %72 = math.exp %71 : vector<2x512xf32>
    %cst_41 = arith.constant 1.000000e+00 : f32
    %73 = vector.broadcast %cst_41 : f32 to vector<2x512xf32>
    %74 = arith.addf %73, %72 : vector<2x512xf32>
    %75 = arith.divf %73, %74 : vector<2x512xf32>
    %76 = vector.extract_strided_slice %75 {offsets = [0, 0], sizes = [2, 128], strides = [1, 1]} : vector<2x512xf32> to vector<2x128xf32>
    %77 = vector.extract_strided_slice %75 {offsets = [0, 128], sizes = [2, 128], strides = [1, 1]} : vector<2x512xf32> to vector<2x128xf32>
    %78 = vector.extract_strided_slice %75 {offsets = [0, 256], sizes = [2, 128], strides = [1, 1]} : vector<2x512xf32> to vector<2x128xf32>
    %cst_42 = arith.constant 2.000000e+00 : f32
    %79 = vector.broadcast %cst_42 : f32 to vector<2x128xf32>
    %80 = arith.mulf %79, %78 : vector<2x128xf32>
    %cst_43 = arith.constant 1.000000e+00 : f32
    %81 = vector.broadcast %cst_43 : f32 to vector<2x128xf32>
    %82 = arith.subf %80, %81 : vector<2x128xf32>
    %83 = vector.extract_strided_slice %75 {offsets = [0, 384], sizes = [2, 128], strides = [1, 1]} : vector<2x512xf32> to vector<2x128xf32>
    %84 = arith.mulf %77, %16 : vector<2x128xf32>
    %85 = arith.mulf %76, %82 : vector<2x128xf32>
    %86 = arith.addf %84, %85 : vector<2x128xf32>
    %87 = math.tanh %86 : vector<2x128xf32>
    %88 = arith.mulf %83, %87 : vector<2x128xf32>
    %89 = vector.extract_strided_slice %6 {offsets = [4, 0], sizes = [2, 512], strides = [1, 1]} : vector<16x512xf32> to vector<2x512xf32>
    %c0_44 = arith.constant 0 : index
    %c0_45 = arith.constant 0 : index
    %90 = vector.load %arg4[%c0_44, %c0_45] : memref<128x512xf32, #tpu.memory_space<vmem>>, vector<128x512xf32>
    %cst_46 = arith.constant dense<0.000000e+00> : vector<2x512xf32>
    %91 = tpu.matmul %62, %90, %cst_46 {dimension_numbers = #tpu.dot_dimension_numbers<[1], [0], [0], [1], [0, 0, 1, 1], [], []>} : vector<2x128xf32>, vector<128x512xf32>, vector<2x512xf32> -> vector<2x512xf32>
    %92 = arith.addf %89, %91 : vector<2x512xf32>
    %93 = arith.negf %92 : vector<2x512xf32>
    %94 = math.exp %93 : vector<2x512xf32>
    %cst_47 = arith.constant 1.000000e+00 : f32
    %95 = vector.broadcast %cst_47 : f32 to vector<2x512xf32>
    %96 = arith.addf %95, %94 : vector<2x512xf32>
    %97 = arith.divf %95, %96 : vector<2x512xf32>
    %98 = vector.extract_strided_slice %97 {offsets = [0, 0], sizes = [2, 128], strides = [1, 1]} : vector<2x512xf32> to vector<2x128xf32>
    %99 = vector.extract_strided_slice %97 {offsets = [0, 128], sizes = [2, 128], strides = [1, 1]} : vector<2x512xf32> to vector<2x128xf32>
    %100 = vector.extract_strided_slice %97 {offsets = [0, 256], sizes = [2, 128], strides = [1, 1]} : vector<2x512xf32> to vector<2x128xf32>
    %cst_48 = arith.constant 2.000000e+00 : f32
    %101 = vector.broadcast %cst_48 : f32 to vector<2x128xf32>
    %102 = arith.mulf %101, %100 : vector<2x128xf32>
    %cst_49 = arith.constant 1.000000e+00 : f32
    %103 = vector.broadcast %cst_49 : f32 to vector<2x128xf32>
    %104 = arith.subf %102, %103 : vector<2x128xf32>
    %105 = vector.extract_strided_slice %97 {offsets = [0, 384], sizes = [2, 128], strides = [1, 1]} : vector<2x512xf32> to vector<2x128xf32>
    %106 = arith.mulf %99, %60 : vector<2x128xf32>
    %107 = arith.mulf %98, %104 : vector<2x128xf32>
    %108 = arith.addf %106, %107 : vector<2x128xf32>
    %109 = math.tanh %108 : vector<2x128xf32>
    %110 = arith.mulf %105, %109 : vector<2x128xf32>
    %111 = tpu.concatenate %62, %88 in 1 : vector<2x128xf32>, vector<2x128xf32> -> vector<2x256xf32>
    %c0_50 = arith.constant 0 : index
    %c0_51 = arith.constant 0 : index
    %c0_52 = arith.constant 0 : index
    %112 = vector.load %arg5[%c0_50, %c0_51, %c0_52] : memref<2x256x512xf32, #tpu.memory_space<vmem>>, vector<1x256x512xf32>
    %113 = vector.shape_cast %112 : vector<1x256x512xf32> to vector<256x512xf32>
    %cst_53 = arith.constant dense<0.000000e+00> : vector<2x512xf32>
    %114 = tpu.matmul %111, %113, %cst_53 {dimension_numbers = #tpu.dot_dimension_numbers<[1], [0], [0], [1], [0, 0, 1, 1], [], []>} : vector<2x256xf32>, vector<256x512xf32>, vector<2x512xf32> -> vector<2x512xf32>
    %c1_54 = arith.constant 1 : index
    %c0_55 = arith.constant 0 : index
    %c0_56 = arith.constant 0 : index
    %115 = vector.load %arg6[%c1_54, %c0_55, %c0_56] : memref<3x1x512xf32, #tpu.memory_space<vmem>>, vector<1x1x512xf32>
    %116 = vector.shape_cast %115 : vector<1x1x512xf32> to vector<1x512xf32>
    %117 = vector.broadcast %116 : vector<1x512xf32> to vector<2x512xf32>
    %118 = arith.addf %114, %117 : vector<2x512xf32>
    %119 = arith.negf %118 : vector<2x512xf32>
    %120 = math.exp %119 : vector<2x512xf32>
    %cst_57 = arith.constant 1.000000e+00 : f32
    %121 = vector.broadcast %cst_57 : f32 to vector<2x512xf32>
    %122 = arith.addf %121, %120 : vector<2x512xf32>
    %123 = arith.divf %121, %122 : vector<2x512xf32>
    %124 = vector.extract_strided_slice %123 {offsets = [0, 0], sizes = [2, 128], strides = [1, 1]} : vector<2x512xf32> to vector<2x128xf32>
    %125 = vector.extract_strided_slice %123 {offsets = [0, 128], sizes = [2, 128], strides = [1, 1]} : vector<2x512xf32> to vector<2x128xf32>
    %126 = vector.extract_strided_slice %123 {offsets = [0, 256], sizes = [2, 128], strides = [1, 1]} : vector<2x512xf32> to vector<2x128xf32>
    %cst_58 = arith.constant 2.000000e+00 : f32
    %127 = vector.broadcast %cst_58 : f32 to vector<2x128xf32>
    %128 = arith.mulf %127, %126 : vector<2x128xf32>
    %cst_59 = arith.constant 1.000000e+00 : f32
    %129 = vector.broadcast %cst_59 : f32 to vector<2x128xf32>
    %130 = arith.subf %128, %129 : vector<2x128xf32>
    %131 = vector.extract_strided_slice %123 {offsets = [0, 384], sizes = [2, 128], strides = [1, 1]} : vector<2x512xf32> to vector<2x128xf32>
    %132 = arith.mulf %125, %86 : vector<2x128xf32>
    %133 = arith.mulf %124, %130 : vector<2x128xf32>
    %134 = arith.addf %132, %133 : vector<2x128xf32>
    %135 = math.tanh %134 : vector<2x128xf32>
    %136 = arith.mulf %131, %135 : vector<2x128xf32>
    %137 = tpu.concatenate %88, %12 in 1 : vector<2x128xf32>, vector<2x128xf32> -> vector<2x256xf32>
    %c1_60 = arith.constant 1 : index
    %c0_61 = arith.constant 0 : index
    %c0_62 = arith.constant 0 : index
    %138 = vector.load %arg5[%c1_60, %c0_61, %c0_62] : memref<2x256x512xf32, #tpu.memory_space<vmem>>, vector<1x256x512xf32>
    %139 = vector.shape_cast %138 : vector<1x256x512xf32> to vector<256x512xf32>
    %cst_63 = arith.constant dense<0.000000e+00> : vector<2x512xf32>
    %140 = tpu.matmul %137, %139, %cst_63 {dimension_numbers = #tpu.dot_dimension_numbers<[1], [0], [0], [1], [0, 0, 1, 1], [], []>} : vector<2x256xf32>, vector<256x512xf32>, vector<2x512xf32> -> vector<2x512xf32>
    %c2_64 = arith.constant 2 : index
    %c0_65 = arith.constant 0 : index
    %c0_66 = arith.constant 0 : index
    %141 = vector.load %arg6[%c2_64, %c0_65, %c0_66] : memref<3x1x512xf32, #tpu.memory_space<vmem>>, vector<1x1x512xf32>
    %142 = vector.shape_cast %141 : vector<1x1x512xf32> to vector<1x512xf32>
    %143 = vector.broadcast %142 : vector<1x512xf32> to vector<2x512xf32>
    %144 = arith.addf %140, %143 : vector<2x512xf32>
    %145 = arith.negf %144 : vector<2x512xf32>
    %146 = math.exp %145 : vector<2x512xf32>
    %cst_67 = arith.constant 1.000000e+00 : f32
    %147 = vector.broadcast %cst_67 : f32 to vector<2x512xf32>
    %148 = arith.addf %147, %146 : vector<2x512xf32>
    %149 = arith.divf %147, %148 : vector<2x512xf32>
    %150 = vector.extract_strided_slice %149 {offsets = [0, 0], sizes = [2, 128], strides = [1, 1]} : vector<2x512xf32> to vector<2x128xf32>
    %151 = vector.extract_strided_slice %149 {offsets = [0, 128], sizes = [2, 128], strides = [1, 1]} : vector<2x512xf32> to vector<2x128xf32>
    %152 = vector.extract_strided_slice %149 {offsets = [0, 256], sizes = [2, 128], strides = [1, 1]} : vector<2x512xf32> to vector<2x128xf32>
    %cst_68 = arith.constant 2.000000e+00 : f32
    %153 = vector.broadcast %cst_68 : f32 to vector<2x128xf32>
    %154 = arith.mulf %153, %152 : vector<2x128xf32>
    %cst_69 = arith.constant 1.000000e+00 : f32
    %155 = vector.broadcast %cst_69 : f32 to vector<2x128xf32>
    %156 = arith.subf %154, %155 : vector<2x128xf32>
    %157 = vector.extract_strided_slice %149 {offsets = [0, 384], sizes = [2, 128], strides = [1, 1]} : vector<2x512xf32> to vector<2x128xf32>
    %158 = arith.mulf %151, %18 : vector<2x128xf32>
    %159 = arith.mulf %150, %156 : vector<2x128xf32>
    %160 = arith.addf %158, %159 : vector<2x128xf32>
    %161 = math.tanh %160 : vector<2x128xf32>
    %162 = arith.mulf %157, %161 : vector<2x128xf32>
    %163 = vector.extract_strided_slice %6 {offsets = [6, 0], sizes = [2, 512], strides = [1, 1]} : vector<16x512xf32> to vector<2x512xf32>
    %c0_70 = arith.constant 0 : index
    %c0_71 = arith.constant 0 : index
    %164 = vector.load %arg4[%c0_70, %c0_71] : memref<128x512xf32, #tpu.memory_space<vmem>>, vector<128x512xf32>
    %cst_72 = arith.constant dense<0.000000e+00> : vector<2x512xf32>
    %165 = tpu.matmul %110, %164, %cst_72 {dimension_numbers = #tpu.dot_dimension_numbers<[1], [0], [0], [1], [0, 0, 1, 1], [], []>} : vector<2x128xf32>, vector<128x512xf32>, vector<2x512xf32> -> vector<2x512xf32>
    %166 = arith.addf %163, %165 : vector<2x512xf32>
    %167 = arith.negf %166 : vector<2x512xf32>
    %168 = math.exp %167 : vector<2x512xf32>
    %cst_73 = arith.constant 1.000000e+00 : f32
    %169 = vector.broadcast %cst_73 : f32 to vector<2x512xf32>
    %170 = arith.addf %169, %168 : vector<2x512xf32>
    %171 = arith.divf %169, %170 : vector<2x512xf32>
    %172 = vector.extract_strided_slice %171 {offsets = [0, 0], sizes = [2, 128], strides = [1, 1]} : vector<2x512xf32> to vector<2x128xf32>
    %173 = vector.extract_strided_slice %171 {offsets = [0, 128], sizes = [2, 128], strides = [1, 1]} : vector<2x512xf32> to vector<2x128xf32>
    %174 = vector.extract_strided_slice %171 {offsets = [0, 256], sizes = [2, 128], strides = [1, 1]} : vector<2x512xf32> to vector<2x128xf32>
    %cst_74 = arith.constant 2.000000e+00 : f32
    %175 = vector.broadcast %cst_74 : f32 to vector<2x128xf32>
    %176 = arith.mulf %175, %174 : vector<2x128xf32>
    %cst_75 = arith.constant 1.000000e+00 : f32
    %177 = vector.broadcast %cst_75 : f32 to vector<2x128xf32>
    %178 = arith.subf %176, %177 : vector<2x128xf32>
    %179 = vector.extract_strided_slice %171 {offsets = [0, 384], sizes = [2, 128], strides = [1, 1]} : vector<2x512xf32> to vector<2x128xf32>
    %180 = arith.mulf %173, %108 : vector<2x128xf32>
    %181 = arith.mulf %172, %178 : vector<2x128xf32>
    %182 = arith.addf %180, %181 : vector<2x128xf32>
    %183 = math.tanh %182 : vector<2x128xf32>
    %184 = arith.mulf %179, %183 : vector<2x128xf32>
    %185 = tpu.concatenate %110, %136 in 1 : vector<2x128xf32>, vector<2x128xf32> -> vector<2x256xf32>
    %c0_76 = arith.constant 0 : index
    %c0_77 = arith.constant 0 : index
    %c0_78 = arith.constant 0 : index
    %186 = vector.load %arg5[%c0_76, %c0_77, %c0_78] : memref<2x256x512xf32, #tpu.memory_space<vmem>>, vector<1x256x512xf32>
    %187 = vector.shape_cast %186 : vector<1x256x512xf32> to vector<256x512xf32>
    %cst_79 = arith.constant dense<0.000000e+00> : vector<2x512xf32>
    %188 = tpu.matmul %185, %187, %cst_79 {dimension_numbers = #tpu.dot_dimension_numbers<[1], [0], [0], [1], [0, 0, 1, 1], [], []>} : vector<2x256xf32>, vector<256x512xf32>, vector<2x512xf32> -> vector<2x512xf32>
    %c1_80 = arith.constant 1 : index
    %c0_81 = arith.constant 0 : index
    %c0_82 = arith.constant 0 : index
    %189 = vector.load %arg6[%c1_80, %c0_81, %c0_82] : memref<3x1x512xf32, #tpu.memory_space<vmem>>, vector<1x1x512xf32>
    %190 = vector.shape_cast %189 : vector<1x1x512xf32> to vector<1x512xf32>
    %191 = vector.broadcast %190 : vector<1x512xf32> to vector<2x512xf32>
    %192 = arith.addf %188, %191 : vector<2x512xf32>
    %193 = arith.negf %192 : vector<2x512xf32>
    %194 = math.exp %193 : vector<2x512xf32>
    %cst_83 = arith.constant 1.000000e+00 : f32
    %195 = vector.broadcast %cst_83 : f32 to vector<2x512xf32>
    %196 = arith.addf %195, %194 : vector<2x512xf32>
    %197 = arith.divf %195, %196 : vector<2x512xf32>
    %198 = vector.extract_strided_slice %197 {offsets = [0, 0], sizes = [2, 128], strides = [1, 1]} : vector<2x512xf32> to vector<2x128xf32>
    %199 = vector.extract_strided_slice %197 {offsets = [0, 128], sizes = [2, 128], strides = [1, 1]} : vector<2x512xf32> to vector<2x128xf32>
    %200 = vector.extract_strided_slice %197 {offsets = [0, 256], sizes = [2, 128], strides = [1, 1]} : vector<2x512xf32> to vector<2x128xf32>
    %cst_84 = arith.constant 2.000000e+00 : f32
    %201 = vector.broadcast %cst_84 : f32 to vector<2x128xf32>
    %202 = arith.mulf %201, %200 : vector<2x128xf32>
    %cst_85 = arith.constant 1.000000e+00 : f32
    %203 = vector.broadcast %cst_85 : f32 to vector<2x128xf32>
    %204 = arith.subf %202, %203 : vector<2x128xf32>
    %205 = vector.extract_strided_slice %197 {offsets = [0, 384], sizes = [2, 128], strides = [1, 1]} : vector<2x512xf32> to vector<2x128xf32>
    %206 = arith.mulf %199, %134 : vector<2x128xf32>
    %207 = arith.mulf %198, %204 : vector<2x128xf32>
    %208 = arith.addf %206, %207 : vector<2x128xf32>
    %209 = math.tanh %208 : vector<2x128xf32>
    %210 = arith.mulf %205, %209 : vector<2x128xf32>
    %211 = tpu.concatenate %136, %162 in 1 : vector<2x128xf32>, vector<2x128xf32> -> vector<2x256xf32>
    %c1_86 = arith.constant 1 : index
    %c0_87 = arith.constant 0 : index
    %c0_88 = arith.constant 0 : index
    %212 = vector.load %arg5[%c1_86, %c0_87, %c0_88] : memref<2x256x512xf32, #tpu.memory_space<vmem>>, vector<1x256x512xf32>
    %213 = vector.shape_cast %212 : vector<1x256x512xf32> to vector<256x512xf32>
    %cst_89 = arith.constant dense<0.000000e+00> : vector<2x512xf32>
    %214 = tpu.matmul %211, %213, %cst_89 {dimension_numbers = #tpu.dot_dimension_numbers<[1], [0], [0], [1], [0, 0, 1, 1], [], []>} : vector<2x256xf32>, vector<256x512xf32>, vector<2x512xf32> -> vector<2x512xf32>
    %c2_90 = arith.constant 2 : index
    %c0_91 = arith.constant 0 : index
    %c0_92 = arith.constant 0 : index
    %215 = vector.load %arg6[%c2_90, %c0_91, %c0_92] : memref<3x1x512xf32, #tpu.memory_space<vmem>>, vector<1x1x512xf32>
    %216 = vector.shape_cast %215 : vector<1x1x512xf32> to vector<1x512xf32>
    %217 = vector.broadcast %216 : vector<1x512xf32> to vector<2x512xf32>
    %218 = arith.addf %214, %217 : vector<2x512xf32>
    %219 = arith.negf %218 : vector<2x512xf32>
    %220 = math.exp %219 : vector<2x512xf32>
    %cst_93 = arith.constant 1.000000e+00 : f32
    %221 = vector.broadcast %cst_93 : f32 to vector<2x512xf32>
    %222 = arith.addf %221, %220 : vector<2x512xf32>
    %223 = arith.divf %221, %222 : vector<2x512xf32>
    %224 = vector.extract_strided_slice %223 {offsets = [0, 0], sizes = [2, 128], strides = [1, 1]} : vector<2x512xf32> to vector<2x128xf32>
    %225 = vector.extract_strided_slice %223 {offsets = [0, 128], sizes = [2, 128], strides = [1, 1]} : vector<2x512xf32> to vector<2x128xf32>
    %226 = vector.extract_strided_slice %223 {offsets = [0, 256], sizes = [2, 128], strides = [1, 1]} : vector<2x512xf32> to vector<2x128xf32>
    %cst_94 = arith.constant 2.000000e+00 : f32
    %227 = vector.broadcast %cst_94 : f32 to vector<2x128xf32>
    %228 = arith.mulf %227, %226 : vector<2x128xf32>
    %cst_95 = arith.constant 1.000000e+00 : f32
    %229 = vector.broadcast %cst_95 : f32 to vector<2x128xf32>
    %230 = arith.subf %228, %229 : vector<2x128xf32>
    %231 = vector.extract_strided_slice %223 {offsets = [0, 384], sizes = [2, 128], strides = [1, 1]} : vector<2x512xf32> to vector<2x128xf32>
    %232 = arith.mulf %225, %160 : vector<2x128xf32>
    %233 = arith.mulf %224, %230 : vector<2x128xf32>
    %234 = arith.addf %232, %233 : vector<2x128xf32>
    %235 = math.tanh %234 : vector<2x128xf32>
    %236 = arith.mulf %231, %235 : vector<2x128xf32>
    %237 = vector.extract_strided_slice %6 {offsets = [8, 0], sizes = [2, 512], strides = [1, 1]} : vector<16x512xf32> to vector<2x512xf32>
    %c0_96 = arith.constant 0 : index
    %c0_97 = arith.constant 0 : index
    %238 = vector.load %arg4[%c0_96, %c0_97] : memref<128x512xf32, #tpu.memory_space<vmem>>, vector<128x512xf32>
    %cst_98 = arith.constant dense<0.000000e+00> : vector<2x512xf32>
    %239 = tpu.matmul %184, %238, %cst_98 {dimension_numbers = #tpu.dot_dimension_numbers<[1], [0], [0], [1], [0, 0, 1, 1], [], []>} : vector<2x128xf32>, vector<128x512xf32>, vector<2x512xf32> -> vector<2x512xf32>
    %240 = arith.addf %237, %239 : vector<2x512xf32>
    %241 = arith.negf %240 : vector<2x512xf32>
    %242 = math.exp %241 : vector<2x512xf32>
    %cst_99 = arith.constant 1.000000e+00 : f32
    %243 = vector.broadcast %cst_99 : f32 to vector<2x512xf32>
    %244 = arith.addf %243, %242 : vector<2x512xf32>
    %245 = arith.divf %243, %244 : vector<2x512xf32>
    %246 = vector.extract_strided_slice %245 {offsets = [0, 0], sizes = [2, 128], strides = [1, 1]} : vector<2x512xf32> to vector<2x128xf32>
    %247 = vector.extract_strided_slice %245 {offsets = [0, 128], sizes = [2, 128], strides = [1, 1]} : vector<2x512xf32> to vector<2x128xf32>
    %248 = vector.extract_strided_slice %245 {offsets = [0, 256], sizes = [2, 128], strides = [1, 1]} : vector<2x512xf32> to vector<2x128xf32>
    %cst_100 = arith.constant 2.000000e+00 : f32
    %249 = vector.broadcast %cst_100 : f32 to vector<2x128xf32>
    %250 = arith.mulf %249, %248 : vector<2x128xf32>
    %cst_101 = arith.constant 1.000000e+00 : f32
    %251 = vector.broadcast %cst_101 : f32 to vector<2x128xf32>
    %252 = arith.subf %250, %251 : vector<2x128xf32>
    %253 = vector.extract_strided_slice %245 {offsets = [0, 384], sizes = [2, 128], strides = [1, 1]} : vector<2x512xf32> to vector<2x128xf32>
    %254 = arith.mulf %247, %182 : vector<2x128xf32>
    %255 = arith.mulf %246, %252 : vector<2x128xf32>
    %256 = arith.addf %254, %255 : vector<2x128xf32>
    %257 = math.tanh %256 : vector<2x128xf32>
    %258 = arith.mulf %253, %257 : vector<2x128xf32>
    %259 = tpu.concatenate %184, %210 in 1 : vector<2x128xf32>, vector<2x128xf32> -> vector<2x256xf32>
    %c0_102 = arith.constant 0 : index
    %c0_103 = arith.constant 0 : index
    %c0_104 = arith.constant 0 : index
    %260 = vector.load %arg5[%c0_102, %c0_103, %c0_104] : memref<2x256x512xf32, #tpu.memory_space<vmem>>, vector<1x256x512xf32>
    %261 = vector.shape_cast %260 : vector<1x256x512xf32> to vector<256x512xf32>
    %cst_105 = arith.constant dense<0.000000e+00> : vector<2x512xf32>
    %262 = tpu.matmul %259, %261, %cst_105 {dimension_numbers = #tpu.dot_dimension_numbers<[1], [0], [0], [1], [0, 0, 1, 1], [], []>} : vector<2x256xf32>, vector<256x512xf32>, vector<2x512xf32> -> vector<2x512xf32>
    %c1_106 = arith.constant 1 : index
    %c0_107 = arith.constant 0 : index
    %c0_108 = arith.constant 0 : index
    %263 = vector.load %arg6[%c1_106, %c0_107, %c0_108] : memref<3x1x512xf32, #tpu.memory_space<vmem>>, vector<1x1x512xf32>
    %264 = vector.shape_cast %263 : vector<1x1x512xf32> to vector<1x512xf32>
    %265 = vector.broadcast %264 : vector<1x512xf32> to vector<2x512xf32>
    %266 = arith.addf %262, %265 : vector<2x512xf32>
    %267 = arith.negf %266 : vector<2x512xf32>
    %268 = math.exp %267 : vector<2x512xf32>
    %cst_109 = arith.constant 1.000000e+00 : f32
    %269 = vector.broadcast %cst_109 : f32 to vector<2x512xf32>
    %270 = arith.addf %269, %268 : vector<2x512xf32>
    %271 = arith.divf %269, %270 : vector<2x512xf32>
    %272 = vector.extract_strided_slice %271 {offsets = [0, 0], sizes = [2, 128], strides = [1, 1]} : vector<2x512xf32> to vector<2x128xf32>
    %273 = vector.extract_strided_slice %271 {offsets = [0, 128], sizes = [2, 128], strides = [1, 1]} : vector<2x512xf32> to vector<2x128xf32>
    %274 = vector.extract_strided_slice %271 {offsets = [0, 256], sizes = [2, 128], strides = [1, 1]} : vector<2x512xf32> to vector<2x128xf32>
    %cst_110 = arith.constant 2.000000e+00 : f32
    %275 = vector.broadcast %cst_110 : f32 to vector<2x128xf32>
    %276 = arith.mulf %275, %274 : vector<2x128xf32>
    %cst_111 = arith.constant 1.000000e+00 : f32
    %277 = vector.broadcast %cst_111 : f32 to vector<2x128xf32>
    %278 = arith.subf %276, %277 : vector<2x128xf32>
    %279 = vector.extract_strided_slice %271 {offsets = [0, 384], sizes = [2, 128], strides = [1, 1]} : vector<2x512xf32> to vector<2x128xf32>
    %280 = arith.mulf %273, %208 : vector<2x128xf32>
    %281 = arith.mulf %272, %278 : vector<2x128xf32>
    %282 = arith.addf %280, %281 : vector<2x128xf32>
    %283 = math.tanh %282 : vector<2x128xf32>
    %284 = arith.mulf %279, %283 : vector<2x128xf32>
    %285 = tpu.concatenate %210, %236 in 1 : vector<2x128xf32>, vector<2x128xf32> -> vector<2x256xf32>
    %c1_112 = arith.constant 1 : index
    %c0_113 = arith.constant 0 : index
    %c0_114 = arith.constant 0 : index
    %286 = vector.load %arg5[%c1_112, %c0_113, %c0_114] : memref<2x256x512xf32, #tpu.memory_space<vmem>>, vector<1x256x512xf32>
    %287 = vector.shape_cast %286 : vector<1x256x512xf32> to vector<256x512xf32>
    %cst_115 = arith.constant dense<0.000000e+00> : vector<2x512xf32>
    %288 = tpu.matmul %285, %287, %cst_115 {dimension_numbers = #tpu.dot_dimension_numbers<[1], [0], [0], [1], [0, 0, 1, 1], [], []>} : vector<2x256xf32>, vector<256x512xf32>, vector<2x512xf32> -> vector<2x512xf32>
    %c2_116 = arith.constant 2 : index
    %c0_117 = arith.constant 0 : index
    %c0_118 = arith.constant 0 : index
    %289 = vector.load %arg6[%c2_116, %c0_117, %c0_118] : memref<3x1x512xf32, #tpu.memory_space<vmem>>, vector<1x1x512xf32>
    %290 = vector.shape_cast %289 : vector<1x1x512xf32> to vector<1x512xf32>
    %291 = vector.broadcast %290 : vector<1x512xf32> to vector<2x512xf32>
    %292 = arith.addf %288, %291 : vector<2x512xf32>
    %293 = arith.negf %292 : vector<2x512xf32>
    %294 = math.exp %293 : vector<2x512xf32>
    %cst_119 = arith.constant 1.000000e+00 : f32
    %295 = vector.broadcast %cst_119 : f32 to vector<2x512xf32>
    %296 = arith.addf %295, %294 : vector<2x512xf32>
    %297 = arith.divf %295, %296 : vector<2x512xf32>
    %298 = vector.extract_strided_slice %297 {offsets = [0, 0], sizes = [2, 128], strides = [1, 1]} : vector<2x512xf32> to vector<2x128xf32>
    %299 = vector.extract_strided_slice %297 {offsets = [0, 128], sizes = [2, 128], strides = [1, 1]} : vector<2x512xf32> to vector<2x128xf32>
    %300 = vector.extract_strided_slice %297 {offsets = [0, 256], sizes = [2, 128], strides = [1, 1]} : vector<2x512xf32> to vector<2x128xf32>
    %cst_120 = arith.constant 2.000000e+00 : f32
    %301 = vector.broadcast %cst_120 : f32 to vector<2x128xf32>
    %302 = arith.mulf %301, %300 : vector<2x128xf32>
    %cst_121 = arith.constant 1.000000e+00 : f32
    %303 = vector.broadcast %cst_121 : f32 to vector<2x128xf32>
    %304 = arith.subf %302, %303 : vector<2x128xf32>
    %305 = vector.extract_strided_slice %297 {offsets = [0, 384], sizes = [2, 128], strides = [1, 1]} : vector<2x512xf32> to vector<2x128xf32>
    %306 = arith.mulf %299, %234 : vector<2x128xf32>
    %307 = arith.mulf %298, %304 : vector<2x128xf32>
    %308 = arith.addf %306, %307 : vector<2x128xf32>
    %309 = math.tanh %308 : vector<2x128xf32>
    %310 = arith.mulf %305, %309 : vector<2x128xf32>
    %311 = vector.extract_strided_slice %6 {offsets = [10, 0], sizes = [2, 512], strides = [1, 1]} : vector<16x512xf32> to vector<2x512xf32>
    %c0_122 = arith.constant 0 : index
    %c0_123 = arith.constant 0 : index
    %312 = vector.load %arg4[%c0_122, %c0_123] : memref<128x512xf32, #tpu.memory_space<vmem>>, vector<128x512xf32>
    %cst_124 = arith.constant dense<0.000000e+00> : vector<2x512xf32>
    %313 = tpu.matmul %258, %312, %cst_124 {dimension_numbers = #tpu.dot_dimension_numbers<[1], [0], [0], [1], [0, 0, 1, 1], [], []>} : vector<2x128xf32>, vector<128x512xf32>, vector<2x512xf32> -> vector<2x512xf32>
    %314 = arith.addf %311, %313 : vector<2x512xf32>
    %315 = arith.negf %314 : vector<2x512xf32>
    %316 = math.exp %315 : vector<2x512xf32>
    %cst_125 = arith.constant 1.000000e+00 : f32
    %317 = vector.broadcast %cst_125 : f32 to vector<2x512xf32>
    %318 = arith.addf %317, %316 : vector<2x512xf32>
    %319 = arith.divf %317, %318 : vector<2x512xf32>
    %320 = vector.extract_strided_slice %319 {offsets = [0, 0], sizes = [2, 128], strides = [1, 1]} : vector<2x512xf32> to vector<2x128xf32>
    %321 = vector.extract_strided_slice %319 {offsets = [0, 128], sizes = [2, 128], strides = [1, 1]} : vector<2x512xf32> to vector<2x128xf32>
    %322 = vector.extract_strided_slice %319 {offsets = [0, 256], sizes = [2, 128], strides = [1, 1]} : vector<2x512xf32> to vector<2x128xf32>
    %cst_126 = arith.constant 2.000000e+00 : f32
    %323 = vector.broadcast %cst_126 : f32 to vector<2x128xf32>
    %324 = arith.mulf %323, %322 : vector<2x128xf32>
    %cst_127 = arith.constant 1.000000e+00 : f32
    %325 = vector.broadcast %cst_127 : f32 to vector<2x128xf32>
    %326 = arith.subf %324, %325 : vector<2x128xf32>
    %327 = vector.extract_strided_slice %319 {offsets = [0, 384], sizes = [2, 128], strides = [1, 1]} : vector<2x512xf32> to vector<2x128xf32>
    %328 = arith.mulf %321, %256 : vector<2x128xf32>
    %329 = arith.mulf %320, %326 : vector<2x128xf32>
    %330 = arith.addf %328, %329 : vector<2x128xf32>
    %331 = math.tanh %330 : vector<2x128xf32>
    %332 = arith.mulf %327, %331 : vector<2x128xf32>
    %333 = tpu.concatenate %258, %284 in 1 : vector<2x128xf32>, vector<2x128xf32> -> vector<2x256xf32>
    %c0_128 = arith.constant 0 : index
    %c0_129 = arith.constant 0 : index
    %c0_130 = arith.constant 0 : index
    %334 = vector.load %arg5[%c0_128, %c0_129, %c0_130] : memref<2x256x512xf32, #tpu.memory_space<vmem>>, vector<1x256x512xf32>
    %335 = vector.shape_cast %334 : vector<1x256x512xf32> to vector<256x512xf32>
    %cst_131 = arith.constant dense<0.000000e+00> : vector<2x512xf32>
    %336 = tpu.matmul %333, %335, %cst_131 {dimension_numbers = #tpu.dot_dimension_numbers<[1], [0], [0], [1], [0, 0, 1, 1], [], []>} : vector<2x256xf32>, vector<256x512xf32>, vector<2x512xf32> -> vector<2x512xf32>
    %c1_132 = arith.constant 1 : index
    %c0_133 = arith.constant 0 : index
    %c0_134 = arith.constant 0 : index
    %337 = vector.load %arg6[%c1_132, %c0_133, %c0_134] : memref<3x1x512xf32, #tpu.memory_space<vmem>>, vector<1x1x512xf32>
    %338 = vector.shape_cast %337 : vector<1x1x512xf32> to vector<1x512xf32>
    %339 = vector.broadcast %338 : vector<1x512xf32> to vector<2x512xf32>
    %340 = arith.addf %336, %339 : vector<2x512xf32>
    %341 = arith.negf %340 : vector<2x512xf32>
    %342 = math.exp %341 : vector<2x512xf32>
    %cst_135 = arith.constant 1.000000e+00 : f32
    %343 = vector.broadcast %cst_135 : f32 to vector<2x512xf32>
    %344 = arith.addf %343, %342 : vector<2x512xf32>
    %345 = arith.divf %343, %344 : vector<2x512xf32>
    %346 = vector.extract_strided_slice %345 {offsets = [0, 0], sizes = [2, 128], strides = [1, 1]} : vector<2x512xf32> to vector<2x128xf32>
    %347 = vector.extract_strided_slice %345 {offsets = [0, 128], sizes = [2, 128], strides = [1, 1]} : vector<2x512xf32> to vector<2x128xf32>
    %348 = vector.extract_strided_slice %345 {offsets = [0, 256], sizes = [2, 128], strides = [1, 1]} : vector<2x512xf32> to vector<2x128xf32>
    %cst_136 = arith.constant 2.000000e+00 : f32
    %349 = vector.broadcast %cst_136 : f32 to vector<2x128xf32>
    %350 = arith.mulf %349, %348 : vector<2x128xf32>
    %cst_137 = arith.constant 1.000000e+00 : f32
    %351 = vector.broadcast %cst_137 : f32 to vector<2x128xf32>
    %352 = arith.subf %350, %351 : vector<2x128xf32>
    %353 = vector.extract_strided_slice %345 {offsets = [0, 384], sizes = [2, 128], strides = [1, 1]} : vector<2x512xf32> to vector<2x128xf32>
    %354 = arith.mulf %347, %282 : vector<2x128xf32>
    %355 = arith.mulf %346, %352 : vector<2x128xf32>
    %356 = arith.addf %354, %355 : vector<2x128xf32>
    %357 = math.tanh %356 : vector<2x128xf32>
    %358 = arith.mulf %353, %357 : vector<2x128xf32>
    %359 = tpu.concatenate %284, %310 in 1 : vector<2x128xf32>, vector<2x128xf32> -> vector<2x256xf32>
    %c1_138 = arith.constant 1 : index
    %c0_139 = arith.constant 0 : index
    %c0_140 = arith.constant 0 : index
    %360 = vector.load %arg5[%c1_138, %c0_139, %c0_140] : memref<2x256x512xf32, #tpu.memory_space<vmem>>, vector<1x256x512xf32>
    %361 = vector.shape_cast %360 : vector<1x256x512xf32> to vector<256x512xf32>
    %cst_141 = arith.constant dense<0.000000e+00> : vector<2x512xf32>
    %362 = tpu.matmul %359, %361, %cst_141 {dimension_numbers = #tpu.dot_dimension_numbers<[1], [0], [0], [1], [0, 0, 1, 1], [], []>} : vector<2x256xf32>, vector<256x512xf32>, vector<2x512xf32> -> vector<2x512xf32>
    %c2_142 = arith.constant 2 : index
    %c0_143 = arith.constant 0 : index
    %c0_144 = arith.constant 0 : index
    %363 = vector.load %arg6[%c2_142, %c0_143, %c0_144] : memref<3x1x512xf32, #tpu.memory_space<vmem>>, vector<1x1x512xf32>
    %364 = vector.shape_cast %363 : vector<1x1x512xf32> to vector<1x512xf32>
    %365 = vector.broadcast %364 : vector<1x512xf32> to vector<2x512xf32>
    %366 = arith.addf %362, %365 : vector<2x512xf32>
    %367 = arith.negf %366 : vector<2x512xf32>
    %368 = math.exp %367 : vector<2x512xf32>
    %cst_145 = arith.constant 1.000000e+00 : f32
    %369 = vector.broadcast %cst_145 : f32 to vector<2x512xf32>
    %370 = arith.addf %369, %368 : vector<2x512xf32>
    %371 = arith.divf %369, %370 : vector<2x512xf32>
    %372 = vector.extract_strided_slice %371 {offsets = [0, 0], sizes = [2, 128], strides = [1, 1]} : vector<2x512xf32> to vector<2x128xf32>
    %373 = vector.extract_strided_slice %371 {offsets = [0, 128], sizes = [2, 128], strides = [1, 1]} : vector<2x512xf32> to vector<2x128xf32>
    %374 = vector.extract_strided_slice %371 {offsets = [0, 256], sizes = [2, 128], strides = [1, 1]} : vector<2x512xf32> to vector<2x128xf32>
    %cst_146 = arith.constant 2.000000e+00 : f32
    %375 = vector.broadcast %cst_146 : f32 to vector<2x128xf32>
    %376 = arith.mulf %375, %374 : vector<2x128xf32>
    %cst_147 = arith.constant 1.000000e+00 : f32
    %377 = vector.broadcast %cst_147 : f32 to vector<2x128xf32>
    %378 = arith.subf %376, %377 : vector<2x128xf32>
    %379 = vector.extract_strided_slice %371 {offsets = [0, 384], sizes = [2, 128], strides = [1, 1]} : vector<2x512xf32> to vector<2x128xf32>
    %380 = arith.mulf %373, %308 : vector<2x128xf32>
    %381 = arith.mulf %372, %378 : vector<2x128xf32>
    %382 = arith.addf %380, %381 : vector<2x128xf32>
    %383 = math.tanh %382 : vector<2x128xf32>
    %384 = arith.mulf %379, %383 : vector<2x128xf32>
    %385 = vector.extract_strided_slice %6 {offsets = [12, 0], sizes = [2, 512], strides = [1, 1]} : vector<16x512xf32> to vector<2x512xf32>
    %c0_148 = arith.constant 0 : index
    %c0_149 = arith.constant 0 : index
    %386 = vector.load %arg4[%c0_148, %c0_149] : memref<128x512xf32, #tpu.memory_space<vmem>>, vector<128x512xf32>
    %cst_150 = arith.constant dense<0.000000e+00> : vector<2x512xf32>
    %387 = tpu.matmul %332, %386, %cst_150 {dimension_numbers = #tpu.dot_dimension_numbers<[1], [0], [0], [1], [0, 0, 1, 1], [], []>} : vector<2x128xf32>, vector<128x512xf32>, vector<2x512xf32> -> vector<2x512xf32>
    %388 = arith.addf %385, %387 : vector<2x512xf32>
    %389 = arith.negf %388 : vector<2x512xf32>
    %390 = math.exp %389 : vector<2x512xf32>
    %cst_151 = arith.constant 1.000000e+00 : f32
    %391 = vector.broadcast %cst_151 : f32 to vector<2x512xf32>
    %392 = arith.addf %391, %390 : vector<2x512xf32>
    %393 = arith.divf %391, %392 : vector<2x512xf32>
    %394 = vector.extract_strided_slice %393 {offsets = [0, 0], sizes = [2, 128], strides = [1, 1]} : vector<2x512xf32> to vector<2x128xf32>
    %395 = vector.extract_strided_slice %393 {offsets = [0, 128], sizes = [2, 128], strides = [1, 1]} : vector<2x512xf32> to vector<2x128xf32>
    %396 = vector.extract_strided_slice %393 {offsets = [0, 256], sizes = [2, 128], strides = [1, 1]} : vector<2x512xf32> to vector<2x128xf32>
    %cst_152 = arith.constant 2.000000e+00 : f32
    %397 = vector.broadcast %cst_152 : f32 to vector<2x128xf32>
    %398 = arith.mulf %397, %396 : vector<2x128xf32>
    %cst_153 = arith.constant 1.000000e+00 : f32
    %399 = vector.broadcast %cst_153 : f32 to vector<2x128xf32>
    %400 = arith.subf %398, %399 : vector<2x128xf32>
    %401 = vector.extract_strided_slice %393 {offsets = [0, 384], sizes = [2, 128], strides = [1, 1]} : vector<2x512xf32> to vector<2x128xf32>
    %402 = arith.mulf %395, %330 : vector<2x128xf32>
    %403 = arith.mulf %394, %400 : vector<2x128xf32>
    %404 = arith.addf %402, %403 : vector<2x128xf32>
    %405 = math.tanh %404 : vector<2x128xf32>
    %406 = arith.mulf %401, %405 : vector<2x128xf32>
    %407 = tpu.concatenate %332, %358 in 1 : vector<2x128xf32>, vector<2x128xf32> -> vector<2x256xf32>
    %c0_154 = arith.constant 0 : index
    %c0_155 = arith.constant 0 : index
    %c0_156 = arith.constant 0 : index
    %408 = vector.load %arg5[%c0_154, %c0_155, %c0_156] : memref<2x256x512xf32, #tpu.memory_space<vmem>>, vector<1x256x512xf32>
    %409 = vector.shape_cast %408 : vector<1x256x512xf32> to vector<256x512xf32>
    %cst_157 = arith.constant dense<0.000000e+00> : vector<2x512xf32>
    %410 = tpu.matmul %407, %409, %cst_157 {dimension_numbers = #tpu.dot_dimension_numbers<[1], [0], [0], [1], [0, 0, 1, 1], [], []>} : vector<2x256xf32>, vector<256x512xf32>, vector<2x512xf32> -> vector<2x512xf32>
    %c1_158 = arith.constant 1 : index
    %c0_159 = arith.constant 0 : index
    %c0_160 = arith.constant 0 : index
    %411 = vector.load %arg6[%c1_158, %c0_159, %c0_160] : memref<3x1x512xf32, #tpu.memory_space<vmem>>, vector<1x1x512xf32>
    %412 = vector.shape_cast %411 : vector<1x1x512xf32> to vector<1x512xf32>
    %413 = vector.broadcast %412 : vector<1x512xf32> to vector<2x512xf32>
    %414 = arith.addf %410, %413 : vector<2x512xf32>
    %415 = arith.negf %414 : vector<2x512xf32>
    %416 = math.exp %415 : vector<2x512xf32>
    %cst_161 = arith.constant 1.000000e+00 : f32
    %417 = vector.broadcast %cst_161 : f32 to vector<2x512xf32>
    %418 = arith.addf %417, %416 : vector<2x512xf32>
    %419 = arith.divf %417, %418 : vector<2x512xf32>
    %420 = vector.extract_strided_slice %419 {offsets = [0, 0], sizes = [2, 128], strides = [1, 1]} : vector<2x512xf32> to vector<2x128xf32>
    %421 = vector.extract_strided_slice %419 {offsets = [0, 128], sizes = [2, 128], strides = [1, 1]} : vector<2x512xf32> to vector<2x128xf32>
    %422 = vector.extract_strided_slice %419 {offsets = [0, 256], sizes = [2, 128], strides = [1, 1]} : vector<2x512xf32> to vector<2x128xf32>
    %cst_162 = arith.constant 2.000000e+00 : f32
    %423 = vector.broadcast %cst_162 : f32 to vector<2x128xf32>
    %424 = arith.mulf %423, %422 : vector<2x128xf32>
    %cst_163 = arith.constant 1.000000e+00 : f32
    %425 = vector.broadcast %cst_163 : f32 to vector<2x128xf32>
    %426 = arith.subf %424, %425 : vector<2x128xf32>
    %427 = vector.extract_strided_slice %419 {offsets = [0, 384], sizes = [2, 128], strides = [1, 1]} : vector<2x512xf32> to vector<2x128xf32>
    %428 = arith.mulf %421, %356 : vector<2x128xf32>
    %429 = arith.mulf %420, %426 : vector<2x128xf32>
    %430 = arith.addf %428, %429 : vector<2x128xf32>
    %431 = math.tanh %430 : vector<2x128xf32>
    %432 = arith.mulf %427, %431 : vector<2x128xf32>
    %433 = tpu.concatenate %358, %384 in 1 : vector<2x128xf32>, vector<2x128xf32> -> vector<2x256xf32>
    %c1_164 = arith.constant 1 : index
    %c0_165 = arith.constant 0 : index
    %c0_166 = arith.constant 0 : index
    %434 = vector.load %arg5[%c1_164, %c0_165, %c0_166] : memref<2x256x512xf32, #tpu.memory_space<vmem>>, vector<1x256x512xf32>
    %435 = vector.shape_cast %434 : vector<1x256x512xf32> to vector<256x512xf32>
    %cst_167 = arith.constant dense<0.000000e+00> : vector<2x512xf32>
    %436 = tpu.matmul %433, %435, %cst_167 {dimension_numbers = #tpu.dot_dimension_numbers<[1], [0], [0], [1], [0, 0, 1, 1], [], []>} : vector<2x256xf32>, vector<256x512xf32>, vector<2x512xf32> -> vector<2x512xf32>
    %c2_168 = arith.constant 2 : index
    %c0_169 = arith.constant 0 : index
    %c0_170 = arith.constant 0 : index
    %437 = vector.load %arg6[%c2_168, %c0_169, %c0_170] : memref<3x1x512xf32, #tpu.memory_space<vmem>>, vector<1x1x512xf32>
    %438 = vector.shape_cast %437 : vector<1x1x512xf32> to vector<1x512xf32>
    %439 = vector.broadcast %438 : vector<1x512xf32> to vector<2x512xf32>
    %440 = arith.addf %436, %439 : vector<2x512xf32>
    %441 = arith.negf %440 : vector<2x512xf32>
    %442 = math.exp %441 : vector<2x512xf32>
    %cst_171 = arith.constant 1.000000e+00 : f32
    %443 = vector.broadcast %cst_171 : f32 to vector<2x512xf32>
    %444 = arith.addf %443, %442 : vector<2x512xf32>
    %445 = arith.divf %443, %444 : vector<2x512xf32>
    %446 = vector.extract_strided_slice %445 {offsets = [0, 0], sizes = [2, 128], strides = [1, 1]} : vector<2x512xf32> to vector<2x128xf32>
    %447 = vector.extract_strided_slice %445 {offsets = [0, 128], sizes = [2, 128], strides = [1, 1]} : vector<2x512xf32> to vector<2x128xf32>
    %448 = vector.extract_strided_slice %445 {offsets = [0, 256], sizes = [2, 128], strides = [1, 1]} : vector<2x512xf32> to vector<2x128xf32>
    %cst_172 = arith.constant 2.000000e+00 : f32
    %449 = vector.broadcast %cst_172 : f32 to vector<2x128xf32>
    %450 = arith.mulf %449, %448 : vector<2x128xf32>
    %cst_173 = arith.constant 1.000000e+00 : f32
    %451 = vector.broadcast %cst_173 : f32 to vector<2x128xf32>
    %452 = arith.subf %450, %451 : vector<2x128xf32>
    %453 = vector.extract_strided_slice %445 {offsets = [0, 384], sizes = [2, 128], strides = [1, 1]} : vector<2x512xf32> to vector<2x128xf32>
    %454 = arith.mulf %447, %382 : vector<2x128xf32>
    %455 = arith.mulf %446, %452 : vector<2x128xf32>
    %456 = arith.addf %454, %455 : vector<2x128xf32>
    %457 = math.tanh %456 : vector<2x128xf32>
    %458 = arith.mulf %453, %457 : vector<2x128xf32>
    %459 = vector.extract_strided_slice %6 {offsets = [14, 0], sizes = [2, 512], strides = [1, 1]} : vector<16x512xf32> to vector<2x512xf32>
    %c0_174 = arith.constant 0 : index
    %c0_175 = arith.constant 0 : index
    %460 = vector.load %arg4[%c0_174, %c0_175] : memref<128x512xf32, #tpu.memory_space<vmem>>, vector<128x512xf32>
    %cst_176 = arith.constant dense<0.000000e+00> : vector<2x512xf32>
    %461 = tpu.matmul %406, %460, %cst_176 {dimension_numbers = #tpu.dot_dimension_numbers<[1], [0], [0], [1], [0, 0, 1, 1], [], []>} : vector<2x128xf32>, vector<128x512xf32>, vector<2x512xf32> -> vector<2x512xf32>
    %462 = arith.addf %459, %461 : vector<2x512xf32>
    %463 = arith.negf %462 : vector<2x512xf32>
    %464 = math.exp %463 : vector<2x512xf32>
    %cst_177 = arith.constant 1.000000e+00 : f32
    %465 = vector.broadcast %cst_177 : f32 to vector<2x512xf32>
    %466 = arith.addf %465, %464 : vector<2x512xf32>
    %467 = arith.divf %465, %466 : vector<2x512xf32>
    %468 = vector.extract_strided_slice %467 {offsets = [0, 0], sizes = [2, 128], strides = [1, 1]} : vector<2x512xf32> to vector<2x128xf32>
    %469 = vector.extract_strided_slice %467 {offsets = [0, 128], sizes = [2, 128], strides = [1, 1]} : vector<2x512xf32> to vector<2x128xf32>
    %470 = vector.extract_strided_slice %467 {offsets = [0, 256], sizes = [2, 128], strides = [1, 1]} : vector<2x512xf32> to vector<2x128xf32>
    %cst_178 = arith.constant 2.000000e+00 : f32
    %471 = vector.broadcast %cst_178 : f32 to vector<2x128xf32>
    %472 = arith.mulf %471, %470 : vector<2x128xf32>
    %cst_179 = arith.constant 1.000000e+00 : f32
    %473 = vector.broadcast %cst_179 : f32 to vector<2x128xf32>
    %474 = arith.subf %472, %473 : vector<2x128xf32>
    %475 = vector.extract_strided_slice %467 {offsets = [0, 384], sizes = [2, 128], strides = [1, 1]} : vector<2x512xf32> to vector<2x128xf32>
    %476 = arith.mulf %469, %404 : vector<2x128xf32>
    %477 = arith.mulf %468, %474 : vector<2x128xf32>
    %478 = arith.addf %476, %477 : vector<2x128xf32>
    %479 = math.tanh %478 : vector<2x128xf32>
    %480 = arith.mulf %475, %479 : vector<2x128xf32>
    %481 = tpu.concatenate %406, %432 in 1 : vector<2x128xf32>, vector<2x128xf32> -> vector<2x256xf32>
    %c0_180 = arith.constant 0 : index
    %c0_181 = arith.constant 0 : index
    %c0_182 = arith.constant 0 : index
    %482 = vector.load %arg5[%c0_180, %c0_181, %c0_182] : memref<2x256x512xf32, #tpu.memory_space<vmem>>, vector<1x256x512xf32>
    %483 = vector.shape_cast %482 : vector<1x256x512xf32> to vector<256x512xf32>
    %cst_183 = arith.constant dense<0.000000e+00> : vector<2x512xf32>
    %484 = tpu.matmul %481, %483, %cst_183 {dimension_numbers = #tpu.dot_dimension_numbers<[1], [0], [0], [1], [0, 0, 1, 1], [], []>} : vector<2x256xf32>, vector<256x512xf32>, vector<2x512xf32> -> vector<2x512xf32>
    %c1_184 = arith.constant 1 : index
    %c0_185 = arith.constant 0 : index
    %c0_186 = arith.constant 0 : index
    %485 = vector.load %arg6[%c1_184, %c0_185, %c0_186] : memref<3x1x512xf32, #tpu.memory_space<vmem>>, vector<1x1x512xf32>
    %486 = vector.shape_cast %485 : vector<1x1x512xf32> to vector<1x512xf32>
    %487 = vector.broadcast %486 : vector<1x512xf32> to vector<2x512xf32>
    %488 = arith.addf %484, %487 : vector<2x512xf32>
    %489 = arith.negf %488 : vector<2x512xf32>
    %490 = math.exp %489 : vector<2x512xf32>
    %cst_187 = arith.constant 1.000000e+00 : f32
    %491 = vector.broadcast %cst_187 : f32 to vector<2x512xf32>
    %492 = arith.addf %491, %490 : vector<2x512xf32>
    %493 = arith.divf %491, %492 : vector<2x512xf32>
    %494 = vector.extract_strided_slice %493 {offsets = [0, 0], sizes = [2, 128], strides = [1, 1]} : vector<2x512xf32> to vector<2x128xf32>
    %495 = vector.extract_strided_slice %493 {offsets = [0, 128], sizes = [2, 128], strides = [1, 1]} : vector<2x512xf32> to vector<2x128xf32>
    %496 = vector.extract_strided_slice %493 {offsets = [0, 256], sizes = [2, 128], strides = [1, 1]} : vector<2x512xf32> to vector<2x128xf32>
    %cst_188 = arith.constant 2.000000e+00 : f32
    %497 = vector.broadcast %cst_188 : f32 to vector<2x128xf32>
    %498 = arith.mulf %497, %496 : vector<2x128xf32>
    %cst_189 = arith.constant 1.000000e+00 : f32
    %499 = vector.broadcast %cst_189 : f32 to vector<2x128xf32>
    %500 = arith.subf %498, %499 : vector<2x128xf32>
    %501 = vector.extract_strided_slice %493 {offsets = [0, 384], sizes = [2, 128], strides = [1, 1]} : vector<2x512xf32> to vector<2x128xf32>
    %502 = arith.mulf %495, %430 : vector<2x128xf32>
    %503 = arith.mulf %494, %500 : vector<2x128xf32>
    %504 = arith.addf %502, %503 : vector<2x128xf32>
    %505 = math.tanh %504 : vector<2x128xf32>
    %506 = arith.mulf %501, %505 : vector<2x128xf32>
    %507 = tpu.concatenate %432, %458 in 1 : vector<2x128xf32>, vector<2x128xf32> -> vector<2x256xf32>
    %c1_190 = arith.constant 1 : index
    %c0_191 = arith.constant 0 : index
    %c0_192 = arith.constant 0 : index
    %508 = vector.load %arg5[%c1_190, %c0_191, %c0_192] : memref<2x256x512xf32, #tpu.memory_space<vmem>>, vector<1x256x512xf32>
    %509 = vector.shape_cast %508 : vector<1x256x512xf32> to vector<256x512xf32>
    %cst_193 = arith.constant dense<0.000000e+00> : vector<2x512xf32>
    %510 = tpu.matmul %507, %509, %cst_193 {dimension_numbers = #tpu.dot_dimension_numbers<[1], [0], [0], [1], [0, 0, 1, 1], [], []>} : vector<2x256xf32>, vector<256x512xf32>, vector<2x512xf32> -> vector<2x512xf32>
    %c2_194 = arith.constant 2 : index
    %c0_195 = arith.constant 0 : index
    %c0_196 = arith.constant 0 : index
    %511 = vector.load %arg6[%c2_194, %c0_195, %c0_196] : memref<3x1x512xf32, #tpu.memory_space<vmem>>, vector<1x1x512xf32>
    %512 = vector.shape_cast %511 : vector<1x1x512xf32> to vector<1x512xf32>
    %513 = vector.broadcast %512 : vector<1x512xf32> to vector<2x512xf32>
    %514 = arith.addf %510, %513 : vector<2x512xf32>
    %515 = arith.negf %514 : vector<2x512xf32>
    %516 = math.exp %515 : vector<2x512xf32>
    %cst_197 = arith.constant 1.000000e+00 : f32
    %517 = vector.broadcast %cst_197 : f32 to vector<2x512xf32>
    %518 = arith.addf %517, %516 : vector<2x512xf32>
    %519 = arith.divf %517, %518 : vector<2x512xf32>
    %520 = vector.extract_strided_slice %519 {offsets = [0, 0], sizes = [2, 128], strides = [1, 1]} : vector<2x512xf32> to vector<2x128xf32>
    %521 = vector.extract_strided_slice %519 {offsets = [0, 128], sizes = [2, 128], strides = [1, 1]} : vector<2x512xf32> to vector<2x128xf32>
    %522 = vector.extract_strided_slice %519 {offsets = [0, 256], sizes = [2, 128], strides = [1, 1]} : vector<2x512xf32> to vector<2x128xf32>
    %cst_198 = arith.constant 2.000000e+00 : f32
    %523 = vector.broadcast %cst_198 : f32 to vector<2x128xf32>
    %524 = arith.mulf %523, %522 : vector<2x128xf32>
    %cst_199 = arith.constant 1.000000e+00 : f32
    %525 = vector.broadcast %cst_199 : f32 to vector<2x128xf32>
    %526 = arith.subf %524, %525 : vector<2x128xf32>
    %527 = vector.extract_strided_slice %519 {offsets = [0, 384], sizes = [2, 128], strides = [1, 1]} : vector<2x512xf32> to vector<2x128xf32>
    %528 = arith.mulf %521, %456 : vector<2x128xf32>
    %529 = arith.mulf %520, %526 : vector<2x128xf32>
    %530 = arith.addf %528, %529 : vector<2x128xf32>
    %531 = math.tanh %530 : vector<2x128xf32>
    %532 = arith.mulf %527, %531 : vector<2x128xf32>
    %533 = tpu.concatenate %480, %506 in 1 : vector<2x128xf32>, vector<2x128xf32> -> vector<2x256xf32>
    %c0_200 = arith.constant 0 : index
    %c0_201 = arith.constant 0 : index
    %c0_202 = arith.constant 0 : index
    %534 = vector.load %arg5[%c0_200, %c0_201, %c0_202] : memref<2x256x512xf32, #tpu.memory_space<vmem>>, vector<1x256x512xf32>
    %535 = vector.shape_cast %534 : vector<1x256x512xf32> to vector<256x512xf32>
    %cst_203 = arith.constant dense<0.000000e+00> : vector<2x512xf32>
    %536 = tpu.matmul %533, %535, %cst_203 {dimension_numbers = #tpu.dot_dimension_numbers<[1], [0], [0], [1], [0, 0, 1, 1], [], []>} : vector<2x256xf32>, vector<256x512xf32>, vector<2x512xf32> -> vector<2x512xf32>
    %c1_204 = arith.constant 1 : index
    %c0_205 = arith.constant 0 : index
    %c0_206 = arith.constant 0 : index
    %537 = vector.load %arg6[%c1_204, %c0_205, %c0_206] : memref<3x1x512xf32, #tpu.memory_space<vmem>>, vector<1x1x512xf32>
    %538 = vector.shape_cast %537 : vector<1x1x512xf32> to vector<1x512xf32>
    %539 = vector.broadcast %538 : vector<1x512xf32> to vector<2x512xf32>
    %540 = arith.addf %536, %539 : vector<2x512xf32>
    %541 = arith.negf %540 : vector<2x512xf32>
    %542 = math.exp %541 : vector<2x512xf32>
    %cst_207 = arith.constant 1.000000e+00 : f32
    %543 = vector.broadcast %cst_207 : f32 to vector<2x512xf32>
    %544 = arith.addf %543, %542 : vector<2x512xf32>
    %545 = arith.divf %543, %544 : vector<2x512xf32>
    %546 = vector.extract_strided_slice %545 {offsets = [0, 0], sizes = [2, 128], strides = [1, 1]} : vector<2x512xf32> to vector<2x128xf32>
    %547 = vector.extract_strided_slice %545 {offsets = [0, 128], sizes = [2, 128], strides = [1, 1]} : vector<2x512xf32> to vector<2x128xf32>
    %548 = vector.extract_strided_slice %545 {offsets = [0, 256], sizes = [2, 128], strides = [1, 1]} : vector<2x512xf32> to vector<2x128xf32>
    %cst_208 = arith.constant 2.000000e+00 : f32
    %549 = vector.broadcast %cst_208 : f32 to vector<2x128xf32>
    %550 = arith.mulf %549, %548 : vector<2x128xf32>
    %cst_209 = arith.constant 1.000000e+00 : f32
    %551 = vector.broadcast %cst_209 : f32 to vector<2x128xf32>
    %552 = arith.subf %550, %551 : vector<2x128xf32>
    %553 = vector.extract_strided_slice %545 {offsets = [0, 384], sizes = [2, 128], strides = [1, 1]} : vector<2x512xf32> to vector<2x128xf32>
    %554 = arith.mulf %547, %504 : vector<2x128xf32>
    %555 = arith.mulf %546, %552 : vector<2x128xf32>
    %556 = arith.addf %554, %555 : vector<2x128xf32>
    %557 = math.tanh %556 : vector<2x128xf32>
    %558 = arith.mulf %553, %557 : vector<2x128xf32>
    %559 = tpu.concatenate %506, %532 in 1 : vector<2x128xf32>, vector<2x128xf32> -> vector<2x256xf32>
    %c1_210 = arith.constant 1 : index
    %c0_211 = arith.constant 0 : index
    %c0_212 = arith.constant 0 : index
    %560 = vector.load %arg5[%c1_210, %c0_211, %c0_212] : memref<2x256x512xf32, #tpu.memory_space<vmem>>, vector<1x256x512xf32>
    %561 = vector.shape_cast %560 : vector<1x256x512xf32> to vector<256x512xf32>
    %cst_213 = arith.constant dense<0.000000e+00> : vector<2x512xf32>
    %562 = tpu.matmul %559, %561, %cst_213 {dimension_numbers = #tpu.dot_dimension_numbers<[1], [0], [0], [1], [0, 0, 1, 1], [], []>} : vector<2x256xf32>, vector<256x512xf32>, vector<2x512xf32> -> vector<2x512xf32>
    %c2_214 = arith.constant 2 : index
    %c0_215 = arith.constant 0 : index
    %c0_216 = arith.constant 0 : index
    %563 = vector.load %arg6[%c2_214, %c0_215, %c0_216] : memref<3x1x512xf32, #tpu.memory_space<vmem>>, vector<1x1x512xf32>
    %564 = vector.shape_cast %563 : vector<1x1x512xf32> to vector<1x512xf32>
    %565 = vector.broadcast %564 : vector<1x512xf32> to vector<2x512xf32>
    %566 = arith.addf %562, %565 : vector<2x512xf32>
    %567 = arith.negf %566 : vector<2x512xf32>
    %568 = math.exp %567 : vector<2x512xf32>
    %cst_217 = arith.constant 1.000000e+00 : f32
    %569 = vector.broadcast %cst_217 : f32 to vector<2x512xf32>
    %570 = arith.addf %569, %568 : vector<2x512xf32>
    %571 = arith.divf %569, %570 : vector<2x512xf32>
    %572 = vector.extract_strided_slice %571 {offsets = [0, 0], sizes = [2, 128], strides = [1, 1]} : vector<2x512xf32> to vector<2x128xf32>
    %573 = vector.extract_strided_slice %571 {offsets = [0, 128], sizes = [2, 128], strides = [1, 1]} : vector<2x512xf32> to vector<2x128xf32>
    %574 = vector.extract_strided_slice %571 {offsets = [0, 256], sizes = [2, 128], strides = [1, 1]} : vector<2x512xf32> to vector<2x128xf32>
    %cst_218 = arith.constant 2.000000e+00 : f32
    %575 = vector.broadcast %cst_218 : f32 to vector<2x128xf32>
    %576 = arith.mulf %575, %574 : vector<2x128xf32>
    %cst_219 = arith.constant 1.000000e+00 : f32
    %577 = vector.broadcast %cst_219 : f32 to vector<2x128xf32>
    %578 = arith.subf %576, %577 : vector<2x128xf32>
    %579 = vector.extract_strided_slice %571 {offsets = [0, 384], sizes = [2, 128], strides = [1, 1]} : vector<2x512xf32> to vector<2x128xf32>
    %580 = arith.mulf %573, %530 : vector<2x128xf32>
    %581 = arith.mulf %572, %578 : vector<2x128xf32>
    %582 = arith.addf %580, %581 : vector<2x128xf32>
    %583 = math.tanh %582 : vector<2x128xf32>
    %584 = arith.mulf %579, %583 : vector<2x128xf32>
    %585 = tpu.concatenate %558, %584 in 1 : vector<2x128xf32>, vector<2x128xf32> -> vector<2x256xf32>
    %c1_220 = arith.constant 1 : index
    %c0_221 = arith.constant 0 : index
    %c0_222 = arith.constant 0 : index
    %586 = vector.load %arg5[%c1_220, %c0_221, %c0_222] : memref<2x256x512xf32, #tpu.memory_space<vmem>>, vector<1x256x512xf32>
    %587 = vector.shape_cast %586 : vector<1x256x512xf32> to vector<256x512xf32>
    %cst_223 = arith.constant dense<0.000000e+00> : vector<2x512xf32>
    %588 = tpu.matmul %585, %587, %cst_223 {dimension_numbers = #tpu.dot_dimension_numbers<[1], [0], [0], [1], [0, 0, 1, 1], [], []>} : vector<2x256xf32>, vector<256x512xf32>, vector<2x512xf32> -> vector<2x512xf32>
    %c2_224 = arith.constant 2 : index
    %c0_225 = arith.constant 0 : index
    %c0_226 = arith.constant 0 : index
    %589 = vector.load %arg6[%c2_224, %c0_225, %c0_226] : memref<3x1x512xf32, #tpu.memory_space<vmem>>, vector<1x1x512xf32>
    %590 = vector.shape_cast %589 : vector<1x1x512xf32> to vector<1x512xf32>
    %591 = vector.broadcast %590 : vector<1x512xf32> to vector<2x512xf32>
    %592 = arith.addf %588, %591 : vector<2x512xf32>
    %593 = arith.negf %592 : vector<2x512xf32>
    %594 = math.exp %593 : vector<2x512xf32>
    %cst_227 = arith.constant 1.000000e+00 : f32
    %595 = vector.broadcast %cst_227 : f32 to vector<2x512xf32>
    %596 = arith.addf %595, %594 : vector<2x512xf32>
    %597 = arith.divf %595, %596 : vector<2x512xf32>
    %598 = vector.extract_strided_slice %597 {offsets = [0, 0], sizes = [2, 128], strides = [1, 1]} : vector<2x512xf32> to vector<2x128xf32>
    %599 = vector.extract_strided_slice %597 {offsets = [0, 128], sizes = [2, 128], strides = [1, 1]} : vector<2x512xf32> to vector<2x128xf32>
    %600 = vector.extract_strided_slice %597 {offsets = [0, 256], sizes = [2, 128], strides = [1, 1]} : vector<2x512xf32> to vector<2x128xf32>
    %cst_228 = arith.constant 2.000000e+00 : f32
    %601 = vector.broadcast %cst_228 : f32 to vector<2x128xf32>
    %602 = arith.mulf %601, %600 : vector<2x128xf32>
    %cst_229 = arith.constant 1.000000e+00 : f32
    %603 = vector.broadcast %cst_229 : f32 to vector<2x128xf32>
    %604 = arith.subf %602, %603 : vector<2x128xf32>
    %605 = vector.extract_strided_slice %597 {offsets = [0, 384], sizes = [2, 128], strides = [1, 1]} : vector<2x512xf32> to vector<2x128xf32>
    %606 = arith.mulf %599, %582 : vector<2x128xf32>
    %607 = arith.mulf %598, %604 : vector<2x128xf32>
    %608 = arith.addf %606, %607 : vector<2x128xf32>
    %609 = math.tanh %608 : vector<2x128xf32>
    %610 = arith.mulf %605, %609 : vector<2x128xf32>
    %611 = tpu.concatenate %162, %236, %310, %384, %458, %532, %584, %610 in 0 : vector<2x128xf32>, vector<2x128xf32>, vector<2x128xf32>, vector<2x128xf32>, vector<2x128xf32>, vector<2x128xf32>, vector<2x128xf32>, vector<2x128xf32> -> vector<16x128xf32>
    %c0_230 = arith.constant 0 : index
    %c0_231 = arith.constant 0 : index
    %612 = vector.load %arg7[%c0_230, %c0_231] : memref<128x128xf32, #tpu.memory_space<vmem>>, vector<128x128xf32>
    %cst_232 = arith.constant dense<0.000000e+00> : vector<16x128xf32>
    %613 = tpu.matmul %611, %612, %cst_232 {dimension_numbers = #tpu.dot_dimension_numbers<[1], [0], [0], [1], [0, 0, 1, 1], [], []>} : vector<16x128xf32>, vector<128x128xf32>, vector<16x128xf32> -> vector<16x128xf32>
    %c0_233 = arith.constant 0 : index
    %c0_234 = arith.constant 0 : index
    %614 = vector.load %arg8[%c0_233, %c0_234] : memref<1x128xf32, #tpu.memory_space<vmem>>, vector<1x128xf32>
    %615 = vector.broadcast %614 : vector<1x128xf32> to vector<16x128xf32>
    %616 = arith.addf %613, %615 : vector<16x128xf32>
    %c0_235 = arith.constant 0 : index
    %c0_236 = arith.constant 0 : index
    %617 = vector.load %arg9[%c0_235, %c0_236] : memref<16x128xf32, #tpu.memory_space<vmem>>, vector<16x128xf32>
    tpu.vector_store %arg9[%c0_235, %c0_236], %616 {strides = array<i32>} : memref<16x128xf32, #tpu.memory_space<vmem>>, vector<16x128xf32>,
    %c0_237 = arith.constant 0 : index
    %c0_238 = arith.constant 0 : index
    %c0_239 = arith.constant 0 : index
    %618 = vector.load %arg10[%c0_237, %c0_238, %c0_239] : memref<3x2x128xf32, #tpu.memory_space<vmem>>, vector<1x2x128xf32>
    %619 = vector.shape_cast %618 : vector<1x2x128xf32> to vector<2x128xf32>
    %620 = vector.shape_cast %480 : vector<2x128xf32> to vector<1x2x128xf32>
    tpu.vector_store %arg10[%c0_237, %c0_238, %c0_239], %620 {strides = array<i32>} : memref<3x2x128xf32, #tpu.memory_space<vmem>>, vector<1x2x128xf32>,
    %c0_240 = arith.constant 0 : index
    %c0_241 = arith.constant 0 : index
    %c0_242 = arith.constant 0 : index
    %621 = vector.load %arg11[%c0_240, %c0_241, %c0_242] : memref<3x2x128xf32, #tpu.memory_space<vmem>>, vector<1x2x128xf32>
    %622 = vector.shape_cast %621 : vector<1x2x128xf32> to vector<2x128xf32>
    %623 = vector.shape_cast %478 : vector<2x128xf32> to vector<1x2x128xf32>
    tpu.vector_store %arg11[%c0_240, %c0_241, %c0_242], %623 {strides = array<i32>} : memref<3x2x128xf32, #tpu.memory_space<vmem>>, vector<1x2x128xf32>,
    %c1_243 = arith.constant 1 : index
    %c0_244 = arith.constant 0 : index
    %c0_245 = arith.constant 0 : index
    %624 = vector.load %arg10[%c1_243, %c0_244, %c0_245] : memref<3x2x128xf32, #tpu.memory_space<vmem>>, vector<1x2x128xf32>
    %625 = vector.shape_cast %624 : vector<1x2x128xf32> to vector<2x128xf32>
    %626 = vector.shape_cast %558 : vector<2x128xf32> to vector<1x2x128xf32>
    tpu.vector_store %arg10[%c1_243, %c0_244, %c0_245], %626 {strides = array<i32>} : memref<3x2x128xf32, #tpu.memory_space<vmem>>, vector<1x2x128xf32>,
    %c1_246 = arith.constant 1 : index
    %c0_247 = arith.constant 0 : index
    %c0_248 = arith.constant 0 : index
    %627 = vector.load %arg11[%c1_246, %c0_247, %c0_248] : memref<3x2x128xf32, #tpu.memory_space<vmem>>, vector<1x2x128xf32>
    %628 = vector.shape_cast %627 : vector<1x2x128xf32> to vector<2x128xf32>
    %629 = vector.shape_cast %556 : vector<2x128xf32> to vector<1x2x128xf32>
    tpu.vector_store %arg11[%c1_246, %c0_247, %c0_248], %629 {strides = array<i32>} : memref<3x2x128xf32, #tpu.memory_space<vmem>>, vector<1x2x128xf32>,
    %c2_249 = arith.constant 2 : index
    %c0_250 = arith.constant 0 : index
    %c0_251 = arith.constant 0 : index
    %630 = vector.load %arg10[%c2_249, %c0_250, %c0_251] : memref<3x2x128xf32, #tpu.memory_space<vmem>>, vector<1x2x128xf32>
    %631 = vector.shape_cast %630 : vector<1x2x128xf32> to vector<2x128xf32>
    %632 = vector.shape_cast %610 : vector<2x128xf32> to vector<1x2x128xf32>
    tpu.vector_store %arg10[%c2_249, %c0_250, %c0_251], %632 {strides = array<i32>} : memref<3x2x128xf32, #tpu.memory_space<vmem>>, vector<1x2x128xf32>,
    %c2_252 = arith.constant 2 : index
    %c0_253 = arith.constant 0 : index
    %c0_254 = arith.constant 0 : index
    %633 = vector.load %arg11[%c2_252, %c0_253, %c0_254] : memref<3x2x128xf32, #tpu.memory_space<vmem>>, vector<1x2x128xf32>
    %634 = vector.shape_cast %633 : vector<1x2x128xf32> to vector<2x128xf32>
    %635 = vector.shape_cast %608 : vector<2x128xf32> to vector<1x2x128xf32>
    tpu.vector_store %arg11[%c2_252, %c0_253, %c0_254], %635 {strides = array<i32>} : memref<3x2x128xf32, #tpu.memory_space<vmem>>, vector<1x2x128xf32>,
    return
  }
}

</mosaic_0001>

<llo_original>
// kernel: sentiment_lstm_forward.1
$region0: #{sentiment_lstm_forward.1}
  #allocation0 [shape = 'u32[]', space=smem, size = 0x4, offset = 0x4, fixed_abs, tag = 'smem constant byte address 0x4 - core index']
  #allocation1 [shape = 'u32[144,128]{1,0:T(1,128)}', space=vmem, size = 0x12000, scoped, tag = 'internal scratch']
  %s0 = inlined_call_operand.vmem [shape: f32[16,16], index: 0, kind: input, shape index: {}]
  %s1 = inlined_call_operand.vmem [shape: f32[3,2,128], index: 1, kind: input, shape index: {}]
  %s2 = inlined_call_operand.vmem [shape: f32[3,2,128], index: 2, kind: input, shape index: {}]
  %s3 = inlined_call_operand.vmem [shape: f32[16,512], index: 3, kind: input, shape index: {}]
  %s4 = inlined_call_operand.hbm [shape: f32[128,512], index: 4, kind: input, shape index: {}]
  %s5 = inlined_call_operand.hbm [shape: f32[2,256,512], index: 5, kind: input, shape index: {}]
  %s6 = inlined_call_operand.hbm [shape: f32[3,1,512], index: 6, kind: input, shape index: {}]
  %s7 = inlined_call_operand.hbm [shape: f32[128,128], index: 7, kind: input, shape index: {}]
  %s8 = inlined_call_operand.vmem [shape: f32[1,128], index: 8, kind: input, shape index: {}]
  %s9 = inlined_call_operand.vmem [shape: f32[16,128], index: 9, kind: output, shape index: {0}]
  %s10 = inlined_call_operand.hbm [shape: f32[3,2,128], index: 10, kind: output, shape index: {1}]
  %s11 = inlined_call_operand.hbm [shape: f32[3,2,128], index: 11, kind: output, shape index: {2}]
  %12 = xla_tuple %s9, %s10, %s11
  %s13 = sld [smem:[#allocation0]]
  $region78: #{sentiment_lstm_forward.1} parent=0
    _
  %s15 = ssub.s32 1, %s13
  %s16 = scalar_select 0, %s15, %s13
  $region1: #{sentiment_lstm_forward.1} parent=0
    #allocation2 [shape = 'u8[262144]{0}', space=vmem, size = 0x40000, scoped, tag = 'input window, operand 4, single buffered']
    #allocation3 [shape = 's32[1]{0}', space=sflag, size = 0x4, scoped, tag = 'scoped memory for sentiment_lstm_forward.1']
    #allocation4 [shape = 's32[1]{0}', space=sflag, size = 0x4, scoped, tag = 'scoped memory for sentiment_lstm_forward.1']
    #allocation5 [shape = 'u8[1048576]{0}', space=vmem, size = 0x100000, scoped, tag = 'input window, operand 5, single buffered']
    #allocation6 [shape = 's32[1]{0}', space=sflag, size = 0x4, scoped, tag = 'scoped memory for sentiment_lstm_forward.1']
    #allocation7 [shape = 'u8[6144]{0}', space=vmem, size = 0x1800, scoped, tag = 'input window, operand 6, single buffered']
    #allocation8 [shape = 'u8[65536]{0}', space=vmem, size = 0x10000, scoped, tag = 'input window, operand 7, single buffered']
    #allocation9 [shape = 's32[1]{0}', space=sflag, size = 0x4, scoped, tag = 'scoped memory for sentiment_lstm_forward.1']
    #allocation10 [shape = 'u8[3072]{0}', space=vmem, size = 0xc00, scoped, tag = 'output window, operand 1, single buffered']
    #allocation11 [shape = 'u8[3072]{0}', space=vmem, size = 0xc00, scoped, tag = 'output window, operand 2, single buffered']
    #allocation12 [shape = 's32[1]{0}', space=sflag, size = 0x4, scoped, tag = 'scoped memory for sentiment_lstm_forward.1']
    %17 = vsyncpa [#allocation3], 0
    %18 = vsyncpa [#allocation6], 0
    %19 = vsyncpa [#allocation9], 0
    %20 = vsyncpa [#allocation4], 0
    %21 = vsyncpa [#allocation12], 0
    // Predicated region
    $region2: #{sentiment_lstm_forward.1} parent=1 // pred_check
      _
    $region3: #{sentiment_lstm_forward.1} parent=1 // pred_check_branch
      %23 = sbr.rel (0) target = $region5
    $region4: #{sentiment_lstm_forward.1} parent=1 // pred_region
      _
    $region5: #{sentiment_lstm_forward.1} parent=1 // pred_fallthru
      _
    // Predicated region
    $region6: #{sentiment_lstm_forward.1} parent=1 // pred_check
      _
    $region7: #{sentiment_lstm_forward.1} parent=1 // pred_check_branch
      %25 = sbr.rel (0) target = $region9
    $region8: #{sentiment_lstm_forward.1} parent=1 // pred_region
      _
    $region9: #{sentiment_lstm_forward.1} parent=1 // pred_fallthru
      _
    // Predicated region
    $region10: #{sentiment_lstm_forward.1} parent=1 // pred_check
      _
    $region11: #{sentiment_lstm_forward.1} parent=1 // pred_check_branch
      %27 = sbr.rel (0) target = $region13
    $region12: #{sentiment_lstm_forward.1} parent=1 // pred_region
      _
    $region13: #{sentiment_lstm_forward.1} parent=1 // pred_fallthru
      _
    // Predicated region
    $region14: #{sentiment_lstm_forward.1} parent=1 // pred_check
      _
    $region15: #{sentiment_lstm_forward.1} parent=1 // pred_check_branch
      %29 = sbr.rel (0) target = $region17
    $region16: #{sentiment_lstm_forward.1} parent=1 // pred_region
      _
    $region17: #{sentiment_lstm_forward.1} parent=1 // pred_fallthru
      _
    // Predicated region
    $region18: #{sentiment_lstm_forward.1} parent=1 // pred_check
      _
    $region19: #{sentiment_lstm_forward.1} parent=1 // pred_check_branch
      %31 = sbr.rel (0) target = $region21
    $region20: #{sentiment_lstm_forward.1} parent=1 // pred_region
      %s33 = ssub.s32 8192, 8192
      %34 = vsyncadd [#allocation3], %s33
      %s35 = sshll.u32 [#allocation2], 4
      %s36 = int_to_ptr.vmem [resolvable:$true] %s35
      %41 = dma.hbm_to_vmem [thread:$0]  %s4, 8192, %s36, [#allocation3], 512, 512, 32
    $region21: #{sentiment_lstm_forward.1} parent=1 // pred_fallthru
      _
    // Predicated region
    $region22: #{sentiment_lstm_forward.1} parent=1 // pred_check
      _
    $region23: #{sentiment_lstm_forward.1} parent=1 // pred_check_branch
      %43 = sbr.rel (0) target = $region25
    $region24: #{sentiment_lstm_forward.1} parent=1 // pred_region
      %s45 = ssub.s32 32768, 32768
      %46 = vsyncadd [#allocation6], %s45
      %s47 = sshll.u32 [#allocation5], 4
      %s48 = int_to_ptr.vmem [resolvable:$true] %s47
      %53 = dma.hbm_to_vmem [thread:$0]  %s5, 32768, %s48, [#allocation6], 512, 512, 32
    $region25: #{sentiment_lstm_forward.1} parent=1 // pred_fallthru
      _
    // Predicated region
    $region26: #{sentiment_lstm_forward.1} parent=1 // pred_check
      _
    $region27: #{sentiment_lstm_forward.1} parent=1 // pred_check_branch
      %55 = sbr.rel (0) target = $region29
    $region28: #{sentiment_lstm_forward.1} parent=1 // pred_region
      %s57 = ssub.s32 192, 192
      %58 = vsyncadd [#allocation6], %s57
      %s59 = sshll.u32 [#allocation7], 4
      %s60 = int_to_ptr.vmem [resolvable:$true] %s59
      %65 = dma.hbm_to_vmem [thread:$0]  %s6, 192, %s60, [#allocation6], 64, 64, 4
    $region29: #{sentiment_lstm_forward.1} parent=1 // pred_fallthru
      _
    // Predicated region
    $region30: #{sentiment_lstm_forward.1} parent=1 // pred_check
      _
    $region31: #{sentiment_lstm_forward.1} parent=1 // pred_check_branch
      %67 = sbr.rel (0) target = $region33
    $region32: #{sentiment_lstm_forward.1} parent=1 // pred_region
      %s69 = ssub.s32 2048, 2048
      %70 = vsyncadd [#allocation9], %s69
      %s71 = sshll.u32 [#allocation8], 4
      %s72 = int_to_ptr.vmem [resolvable:$true] %s71
      %77 = dma.hbm_to_vmem [thread:$0]  %s7, 2048, %s72, [#allocation9], 128, 128, 8
    $region33: #{sentiment_lstm_forward.1} parent=1 // pred_fallthru
      _
    // Predicated region
    $region34: #{sentiment_lstm_forward.1} parent=1 // pred_check
      _
    $region35: #{sentiment_lstm_forward.1} parent=1 // pred_check_branch
      %79 = sbr.rel (0) target = $region37
    $region36: #{sentiment_lstm_forward.1} parent=1 // pred_region
      _
    $region37: #{sentiment_lstm_forward.1} parent=1 // pred_fallthru
      _
    // Predicated region
    $region38: #{sentiment_lstm_forward.1} parent=1 // pred_check
      _
    $region39: #{sentiment_lstm_forward.1} parent=1 // pred_check_branch
      %81 = sbr.rel (0) target = $region41
    $region40: #{sentiment_lstm_forward.1} parent=1 // pred_region
      %82 = dma.done [#allocation3], 8192
    $region41: #{sentiment_lstm_forward.1} parent=1 // pred_fallthru
      _
    // Predicated region
    $region42: #{sentiment_lstm_forward.1} parent=1 // pred_check
      _
    $region43: #{sentiment_lstm_forward.1} parent=1 // pred_check_branch
      %84 = sbr.rel (0) target = $region45
    $region44: #{sentiment_lstm_forward.1} parent=1 // pred_region
      %85 = dma.done [#allocation6], 32768
    $region45: #{sentiment_lstm_forward.1} parent=1 // pred_fallthru
      _
    // Predicated region
    $region46: #{sentiment_lstm_forward.1} parent=1 // pred_check
      _
    $region47: #{sentiment_lstm_forward.1} parent=1 // pred_check_branch
      %87 = sbr.rel (0) target = $region49
    $region48: #{sentiment_lstm_forward.1} parent=1 // pred_region
      %88 = dma.done [#allocation6], 192
    $region49: #{sentiment_lstm_forward.1} parent=1 // pred_fallthru
      _
    // Predicated region
    $region50: #{sentiment_lstm_forward.1} parent=1 // pred_check
      _
    $region51: #{sentiment_lstm_forward.1} parent=1 // pred_check_branch
      %90 = sbr.rel (0) target = $region53
    $region52: #{sentiment_lstm_forward.1} parent=1 // pred_region
      %91 = dma.done [#allocation9], 2048
    $region53: #{sentiment_lstm_forward.1} parent=1 // pred_fallthru
      _
    %v92 = vld [vmem:[%s0] sm:$0xff]
    %v93 = vld [vmem:[%s0 + $0x8] sm:$0xff]
    %v94 = vld [vmem:[%s3] sm:$0xff]
    %v95 = vld [vmem:[%s3 + $0x8] sm:$0xff]
    %v96 = vld [vmem:[%s3 + $0x10] sm:$0xff]
    %v97 = vld [vmem:[%s3 + $0x18] sm:$0xff]
    %v98 = vld [vmem:[%s3 + $0x20] sm:$0xff]
    %v99 = vld [vmem:[%s3 + $0x28] sm:$0xff]
    %v100 = vld [vmem:[%s3 + $0x30] sm:$0xff]
    %v101 = vld [vmem:[%s3 + $0x38] sm:$0xff]
    %v102 = vld [vmem:[#allocation7] sm:$0xf]
    %v104 = vlaneseq
    %v105 = vshrl.u32 %v104, 7
    %v106 = vsub.s32 0, %v105
    %v107 = vrot.slane %v102, %v106
    %v108 = vlaneseq
    %v109 = vshrl.u32 %v108, 7
    %v110 = vsub.s32 1, %v109
    %v111 = vrot.slane %v102, %v110
    %v112 = vlaneseq
    %v113 = vshrl.u32 %v112, 7
    %v114 = vsub.s32 2, %v113
    %v115 = vrot.slane %v102, %v114
    %v116 = vlaneseq
    %v117 = vshrl.u32 %v116, 7
    %v118 = vsub.s32 3, %v117
    %v119 = vrot.slane %v102, %v118
    %vm124 = vcmask 130048
    %v126 = vsel %vm124, %v92, 0
    %v129 = vsel %vm124, %v93, 0
    %131 = vmatprep.subr.mxu0 0.0
    %132 = vmatpush1.msra.mxu0 0.0
    %133 = vmatprep.subr.mxu0 0.0
    %134 = vmatpush1.msra.mxu0 0.0
    %135 = vmatprep.subr.mxu0 0.0
    %136 = vmatpush1.msra.mxu0 0.0
    %137 = vmatprep.subr.mxu0 0.0
    %138 = vmatpush1.msra.mxu0 0.0
    %139 = vmatprep.subr.mxu0 0.0
    %140 = vmatpush1.msra.mxu0 0.0
    %141 = vmatprep.subr.mxu0 0.0
    %142 = vmatpush1.msra.mxu0 0.0
    %143 = vmatprep.subr.mxu0 0.0
    %144 = vmatpush1.msra.mxu0 0.0
    %145 = vmatprep.subr.mxu0 0.0
    %146 = vmatpush1.msra.mxu0 0.0
    %147 = vmatprep.subr.mxu0 0.0
    %148 = vmatpush1.msra.mxu0 0.0
    %149 = vmatprep.subr.mxu0 0.0
    %150 = vmatpush1.msra.mxu0 0.0
    %151 = vmatprep.subr.mxu0 0.0
    %152 = vmatpush1.msra.mxu0 0.0
    %153 = vmatprep.subr.mxu0 0.0
    %154 = vmatpush1.msra.mxu0 0.0
    %155 = vmatprep.subr.mxu0 0.0
    %156 = vmatpush1.msra.mxu0 0.0
    %157 = vmatprep.subr.mxu0 0.0
    %158 = vmatpush1.msra.mxu0 0.0
    %159 = vmatprep.subr.mxu0 %v99
    %160 = vmatpush1.msra.mxu0 %v98
    %161 = vmatprep.subr.mxu0 %v95
    %162 = vmatpush1.msra.mxu0 %v94
    %163 = vmatprep.subr.mxu0 0.0
    %164 = vmatpush2.msra.mxu0 0.0
    %165 = vmatprep.subr.mxu0 0.0
    %166 = vmatpush2.msra.mxu0 0.0
    %167 = vmatprep.subr.mxu0 0.0
    %168 = vmatpush2.msra.mxu0 0.0
    %169 = vmatprep.subr.mxu0 0.0
    %170 = vmatpush2.msra.mxu0 0.0
    %171 = vmatprep.subr.mxu0 0.0
    %172 = vmatpush2.msra.mxu0 0.0
    %173 = vmatprep.subr.mxu0 0.0
    %174 = vmatpush2.msra.mxu0 0.0
    %175 = vmatprep.subr.mxu0 0.0
    %176 = vmatpush2.msra.mxu0 0.0
    %177 = vmatprep.subr.mxu0 0.0
    %178 = vmatpush2.msra.mxu0 0.0
    %179 = vmatprep.subr.mxu0 0.0
    %180 = vmatpush2.msra.mxu0 0.0
    %181 = vmatprep.subr.mxu0 0.0
    %182 = vmatpush2.msra.mxu0 0.0
    %183 = vmatprep.subr.mxu0 0.0
    %184 = vmatpush2.msra.mxu0 0.0
    %185 = vmatprep.subr.mxu0 0.0
    %186 = vmatpush2.msra.mxu0 0.0
    %187 = vmatprep.subr.mxu0 0.0
    %188 = vmatpush2.msra.mxu0 0.0
    %189 = vmatprep.subr.mxu0 0.0
    %190 = vmatpush2.msra.mxu0 0.0
    %191 = vmatprep.subr.mxu0 0.0
    %192 = vmatpush2.msra.mxu0 0.0
    %193 = vmatprep.subr.mxu0 0.0
    %194 = vmatpush2.msra.mxu0 0.0
    %195 = vmatprep.mubr.f32.mxu0 0.0
    %196 = vmatmul.mubr.f32.gmra.mxu0 %v126
    %v197 = vpop.f32.mrf.mxu0
    %v198 = vadd.f32 %v107, %v197
    %v199 = vpop.f32.mrf.mxu0
    %v200 = vadd.f32 %v111, %v199
    %201 = vmatprep.mubr.f32.mxu0 0.0
    %202 = vmatmul.mubr.f32.gmra.mxu0 %v129
    %v203 = vpop.f32.mrf.mxu0
    %v204 = vadd.f32 %v107, %v203
    %v205 = vpop.f32.mrf.mxu0
    %v206 = vadd.f32 %v111, %v205
    %207 = vdwg.mxu0
    %208 = vmatprep.subr.mxu0 0.0
    %209 = vmatpush1.msra.mxu0 0.0
    %210 = vmatprep.subr.mxu0 0.0
    %211 = vmatpush1.msra.mxu0 0.0
    %212 = vmatprep.subr.mxu0 0.0
    %213 = vmatpush1.msra.mxu0 0.0
    %214 = vmatprep.subr.mxu0 0.0
    %215 = vmatpush1.msra.mxu0 0.0
    %216 = vmatprep.subr.mxu0 0.0
    %217 = vmatpush1.msra.mxu0 0.0
    %218 = vmatprep.subr.mxu0 0.0
    %219 = vmatpush1.msra.mxu0 0.0
    %220 = vmatprep.subr.mxu0 0.0
    %221 = vmatpush1.msra.mxu0 0.0
    %222 = vmatprep.subr.mxu0 0.0
    %223 = vmatpush1.msra.mxu0 0.0
    %224 = vmatprep.subr.mxu0 0.0
    %225 = vmatpush1.msra.mxu0 0.0
    %226 = vmatprep.subr.mxu0 0.0
    %227 = vmatpush1.msra.mxu0 0.0
    %228 = vmatprep.subr.mxu0 0.0
    %229 = vmatpush1.msra.mxu0 0.0
    %230 = vmatprep.subr.mxu0 0.0
    %231 = vmatpush1.msra.mxu0 0.0
    %232 = vmatprep.subr.mxu0 0.0
    %233 = vmatpush1.msra.mxu0 0.0
    %234 = vmatprep.subr.mxu0 0.0
    %235 = vmatpush1.msra.mxu0 0.0
    %236 = vmatprep.subr.mxu0 %v101
    %237 = vmatpush1.msra.mxu0 %v100
    %238 = vmatprep.subr.mxu0 %v97
    %239 = vmatpush1.msra.mxu0 %v96
    %240 = vmatprep.subr.mxu0 0.0
    %241 = vmatpush2.msra.mxu0 0.0
    %242 = vmatprep.subr.mxu0 0.0
    %243 = vmatpush2.msra.mxu0 0.0
    %244 = vmatprep.subr.mxu0 0.0
    %245 = vmatpush2.msra.mxu0 0.0
    %246 = vmatprep.subr.mxu0 0.0
    %247 = vmatpush2.msra.mxu0 0.0
    %248 = vmatprep.subr.mxu0 0.0
    %249 = vmatpush2.msra.mxu0 0.0
    %250 = vmatprep.subr.mxu0 0.0
    %251 = vmatpush2.msra.mxu0 0.0
    %252 = vmatprep.subr.mxu0 0.0
    %253 = vmatpush2.msra.mxu0 0.0
    %254 = vmatprep.subr.mxu0 0.0
    %255 = vmatpush2.msra.mxu0 0.0
    %256 = vmatprep.subr.mxu0 0.0
    %257 = vmatpush2.msra.mxu0 0.0
    %258 = vmatprep.subr.mxu0 0.0
    %259 = vmatpush2.msra.mxu0 0.0
    %260 = vmatprep.subr.mxu0 0.0
    %261 = vmatpush2.msra.mxu0 0.0
    %262 = vmatprep.subr.mxu0 0.0
    %263 = vmatpush2.msra.mxu0 0.0
    %264 = vmatprep.subr.mxu0 0.0
    %265 = vmatpush2.msra.mxu0 0.0
    %266 = vmatprep.subr.mxu0 0.0
    %267 = vmatpush2.msra.mxu0 0.0
    %268 = vmatprep.subr.mxu0 0.0
    %269 = vmatpush2.msra.mxu0 0.0
    %270 = vmatprep.subr.mxu0 0.0
    %271 = vmatpush2.msra.mxu0 0.0
    %272 = vmatprep.mubr.f32.mxu0 0.0
    %273 = vmatmul.mubr.f32.gmra.mxu0 %v126
    %v274 = vpop.f32.mrf.mxu0
    %v275 = vadd.f32 %v115, %v274
    %v276 = vpop.f32.mrf.mxu0
    %v277 = vadd.f32 %v119, %v276
    %278 = vmatprep.mubr.f32.mxu0 0.0
    %279 = vmatmul.mubr.f32.gmra.mxu0 %v129
    %v280 = vpop.f32.mrf.mxu0
    %v281 = vadd.f32 %v115, %v280
    %v282 = vpop.f32.mrf.mxu0
    %v283 = vadd.f32 %v119, %v282
    %284 = vdwg.mxu0
    %v285 = vld [vmem:[%s1] sm:$0x3]
    %s286 = scalar_lea.vmem %s1, 2
    %v287 = vld [vmem:[%s286] sm:$0x3]
    %s288 = scalar_lea.vmem %s1, 4
    %v289 = vld [vmem:[%s288] sm:$0x3]
    %v290 = vld [vmem:[%s2] sm:$0x3]
    %s291 = scalar_lea.vmem %s2, 2
    %v292 = vld [vmem:[%s291] sm:$0x3]
    %s293 = scalar_lea.vmem %s2, 4
    %v294 = vld [vmem:[%s293] sm:$0x3]
    %v295 = vld [vmem:[#allocation2] sm:$0xff]
    %v296 = vld [vmem:[#allocation2 + $0x8] sm:$0xff]
    %v297 = vld [vmem:[#allocation2 + $0x10] sm:$0xff]
    %v298 = vld [vmem:[#allocation2 + $0x18] sm:$0xff]
    %v299 = vld [vmem:[#allocation2 + $0x20] sm:$0xff]
    %v300 = vld [vmem:[#allocation2 + $0x28] sm:$0xff]
    %v301 = vld [vmem:[#allocation2 + $0x30] sm:$0xff]
    %v302 = vld [vmem:[#allocation2 + $0x38] sm:$0xff]
    %v303 = vld [vmem:[#allocation2 + $0x40] sm:$0xff]
    %v304 = vld [vmem:[#allocation2 + $0x48] sm:$0xff]
    %v305 = vld [vmem:[#allocation2 + $0x50] sm:$0xff]
    %v306 = vld [vmem:[#allocation2 + $0x58] sm:$0xff]
    %v307 = vld [vmem:[#allocation2 + $0x60] sm:$0xff]
    %v308 = vld [vmem:[#allocation2 + $0x68] sm:$0xff]
    %v309 = vld [vmem:[#allocation2 + $0x70] sm:$0xff]
    %v310 = vld [vmem:[#allocation2 + $0x78] sm:$0xff]
    %v311 = vld [vmem:[#allocation2 + $0x80] sm:$0xff]
    %v312 = vld [vmem:[#allocation2 + $0x88] sm:$0xff]
    %v313 = vld [vmem:[#allocation2 + $0x90] sm:$0xff]
    %v314 = vld [vmem:[#allocation2 + $0x98] sm:$0xff]
    %v315 = vld [vmem:[#allocation2 + $0xa0] sm:$0xff]
    %v316 = vld [vmem:[#allocation2 + $0xa8] sm:$0xff]
    %v317 = vld [vmem:[#allocation2 + $0xb0] sm:$0xff]
    %v318 = vld [vmem:[#allocation2 + $0xb8] sm:$0xff]
    %v319 = vld [vmem:[#allocation2 + $0xc0] sm:$0xff]
    %v320 = vld [vmem:[#allocation2 + $0xc8] sm:$0xff]
    %v321 = vld [vmem:[#allocation2 + $0xd0] sm:$0xff]
    %v322 = vld [vmem:[#allocation2 + $0xd8] sm:$0xff]
    %v323 = vld [vmem:[#allocation2 + $0xe0] sm:$0xff]
    %v324 = vld [vmem:[#allocation2 + $0xe8] sm:$0xff]
    %v325 = vld [vmem:[#allocation2 + $0xf0] sm:$0xff]
    %v326 = vld [vmem:[#allocation2 + $0xf8] sm:$0xff]
    %v327 = vld [vmem:[#allocation2 + $0x100] sm:$0xff]
    %v328 = vld [vmem:[#allocation2 + $0x108] sm:$0xff]
    %v329 = vld [vmem:[#allocation2 + $0x110] sm:$0xff]
    %v330 = vld [vmem:[#allocation2 + $0x118] sm:$0xff]
    %v331 = vld [vmem:[#allocation2 + $0x120] sm:$0xff]
    %v332 = vld [vmem:[#allocation2 + $0x128] sm:$0xff]
    %v333 = vld [vmem:[#allocation2 + $0x130] sm:$0xff]
    %v334 = vld [vmem:[#allocation2 + $0x138] sm:$0xff]
    %v335 = vld [vmem:[#allocation2 + $0x140] sm:$0xff]
    %v336 = vld [vmem:[#allocation2 + $0x148] sm:$0xff]
    %v337 = vld [vmem:[#allocation2 + $0x150] sm:$0xff]
    %v338 = vld [vmem:[#allocation2 + $0x158] sm:$0xff]
    %v339 = vld [vmem:[#allocation2 + $0x160] sm:$0xff]
    %v340 = vld [vmem:[#allocation2 + $0x168] sm:$0xff]
    %v341 = vld [vmem:[#allocation2 + $0x170] sm:$0xff]
    %v342 = vld [vmem:[#allocation2 + $0x178] sm:$0xff]
    %v343 = vld [vmem:[#allocation2 + $0x180] sm:$0xff]
    %v344 = vld [vmem:[#allocation2 + $0x188] sm:$0xff]
    %v345 = vld [vmem:[#allocation2 + $0x190] sm:$0xff]
    %v346 = vld [vmem:[#allocation2 + $0x198] sm:$0xff]
    %v347 = vld [vmem:[#allocation2 + $0x1a0] sm:$0xff]
    %v348 = vld [vmem:[#allocation2 + $0x1a8] sm:$0xff]
    %v349 = vld [vmem:[#allocation2 + $0x1b0] sm:$0xff]
    %v350 = vld [vmem:[#allocation2 + $0x1b8] sm:$0xff]
    %v351 = vld [vmem:[#allocation2 + $0x1c0] sm:$0xff]
    %v352 = vld [vmem:[#allocation2 + $0x1c8] sm:$0xff]
    %v353 = vld [vmem:[#allocation2 + $0x1d0] sm:$0xff]
    %v354 = vld [vmem:[#allocation2 + $0x1d8] sm:$0xff]
    %v355 = vld [vmem:[#allocation2 + $0x1e0] sm:$0xff]
    %v356 = vld [vmem:[#allocation2 + $0x1e8] sm:$0xff]
    %v357 = vld [vmem:[#allocation2 + $0x1f0] sm:$0xff]
    %v358 = vld [vmem:[#allocation2 + $0x1f8] sm:$0xff]
    %359 = vmatprep.subr.mxu0 %v356
    %360 = vmatpush1.msra.mxu0 %v355
    %361 = vmatprep.subr.mxu0 %v352
    %362 = vmatpush1.msra.mxu0 %v351
    %363 = vmatprep.subr.mxu0 %v348
    %364 = vmatpush1.msra.mxu0 %v347
    %365 = vmatprep.subr.mxu0 %v344
    %366 = vmatpush1.msra.mxu0 %v343
    %367 = vmatprep.subr.mxu0 %v340
    %368 = vmatpush1.msra.mxu0 %v339
    %369 = vmatprep.subr.mxu0 %v336
    %370 = vmatpush1.msra.mxu0 %v335
    %371 = vmatprep.subr.mxu0 %v332
    %372 = vmatpush1.msra.mxu0 %v331
    %373 = vmatprep.subr.mxu0 %v328
    %374 = vmatpush1.msra.mxu0 %v327
    %375 = vmatprep.subr.mxu0 %v324
    %376 = vmatpush1.msra.mxu0 %v323
    %377 = vmatprep.subr.mxu0 %v320
    %378 = vmatpush1.msra.mxu0 %v319
    %379 = vmatprep.subr.mxu0 %v316
    %380 = vmatpush1.msra.mxu0 %v315
    %381 = vmatprep.subr.mxu0 %v312
    %382 = vmatpush1.msra.mxu0 %v311
    %383 = vmatprep.subr.mxu0 %v308
    %384 = vmatpush1.msra.mxu0 %v307
    %385 = vmatprep.subr.mxu0 %v304
    %386 = vmatpush1.msra.mxu0 %v303
    %387 = vmatprep.subr.mxu0 %v300
    %388 = vmatpush1.msra.mxu0 %v299
    %389 = vmatprep.subr.mxu0 %v296
    %390 = vmatpush1.msra.mxu0 %v295
    %391 = vmatprep.subr.mxu0 0.0
    %392 = vmatpush2.msra.mxu0 0.0
    %393 = vmatprep.subr.mxu0 0.0
    %394 = vmatpush2.msra.mxu0 0.0
    %395 = vmatprep.subr.mxu0 0.0
    %396 = vmatpush2.msra.mxu0 0.0
    %397 = vmatprep.subr.mxu0 0.0
    %398 = vmatpush2.msra.mxu0 0.0
    %399 = vmatprep.subr.mxu0 0.0
    %400 = vmatpush2.msra.mxu0 0.0
    %401 = vmatprep.subr.mxu0 0.0
    %402 = vmatpush2.msra.mxu0 0.0
    %403 = vmatprep.subr.mxu0 0.0
    %404 = vmatpush2.msra.mxu0 0.0
    %405 = vmatprep.subr.mxu0 0.0
    %406 = vmatpush2.msra.mxu0 0.0
    %407 = vmatprep.subr.mxu0 0.0
    %408 = vmatpush2.msra.mxu0 0.0
    %409 = vmatprep.subr.mxu0 0.0
    %410 = vmatpush2.msra.mxu0 0.0
    %411 = vmatprep.subr.mxu0 0.0
    %412 = vmatpush2.msra.mxu0 0.0
    %413 = vmatprep.subr.mxu0 0.0
    %414 = vmatpush2.msra.mxu0 0.0
    %415 = vmatprep.subr.mxu0 0.0
    %416 = vmatpush2.msra.mxu0 0.0
    %417 = vmatprep.subr.mxu0 0.0
    %418 = vmatpush2.msra.mxu0 0.0
    %419 = vmatprep.subr.mxu0 0.0
    %420 = vmatpush2.msra.mxu0 0.0
    %421 = vmatprep.subr.mxu0 0.0
    %422 = vmatpush2.msra.mxu0 0.0
    %423 = vmatprep.mubr.f32.mxu0 0.0
    %424 = vmatmul.mubr.f32.gmra.mxu0 %v285
    %v425 = vpop.f32.mrf.mxu0
    %v426 = vadd.f32 0.0, %v425
    %v427 = vpop.f32.mrf.mxu0
    %v428 = vadd.f32 0.0, %v427
    %429 = vdwg.mxu0
    %430 = vmatprep.subr.mxu0 %v358
    %431 = vmatpush1.msra.mxu0 %v357
    %432 = vmatprep.subr.mxu0 %v354
    %433 = vmatpush1.msra.mxu0 %v353
    %434 = vmatprep.subr.mxu0 %v350
    %435 = vmatpush1.msra.mxu0 %v349
    %436 = vmatprep.subr.mxu0 %v346
    %437 = vmatpush1.msra.mxu0 %v345
    %438 = vmatprep.subr.mxu0 %v342
    %439 = vmatpush1.msra.mxu0 %v341
    %440 = vmatprep.subr.mxu0 %v338
    %441 = vmatpush1.msra.mxu0 %v337
    %442 = vmatprep.subr.mxu0 %v334
    %443 = vmatpush1.msra.mxu0 %v333
    %444 = vmatprep.subr.mxu0 %v330
    %445 = vmatpush1.msra.mxu0 %v329
    %446 = vmatprep.subr.mxu0 %v326
    %447 = vmatpush1.msra.mxu0 %v325
    %448 = vmatprep.subr.mxu0 %v322
    %449 = vmatpush1.msra.mxu0 %v321
    %450 = vmatprep.subr.mxu0 %v318
    %451 = vmatpush1.msra.mxu0 %v317
    %452 = vmatprep.subr.mxu0 %v314
    %453 = vmatpush1.msra.mxu0 %v313
    %454 = vmatprep.subr.mxu0 %v310
    %455 = vmatpush1.msra.mxu0 %v309
    %456 = vmatprep.subr.mxu0 %v306
    %457 = vmatpush1.msra.mxu0 %v305
    %458 = vmatprep.subr.mxu0 %v302
    %459 = vmatpush1.msra.mxu0 %v301
    %460 = vmatprep.subr.mxu0 %v298
    %461 = vmatpush1.msra.mxu0 %v297
    %462 = vmatprep.subr.mxu0 0.0
    %463 = vmatpush2.msra.mxu0 0.0
    %464 = vmatprep.subr.mxu0 0.0
    %465 = vmatpush2.msra.mxu0 0.0
    %466 = vmatprep.subr.mxu0 0.0
    %467 = vmatpush2.msra.mxu0 0.0
    %468 = vmatprep.subr.mxu0 0.0
    %469 = vmatpush2.msra.mxu0 0.0
    %470 = vmatprep.subr.mxu0 0.0
    %471 = vmatpush2.msra.mxu0 0.0
    %472 = vmatprep.subr.mxu0 0.0
    %473 = vmatpush2.msra.mxu0 0.0
    %474 = vmatprep.subr.mxu0 0.0
    %475 = vmatpush2.msra.mxu0 0.0
    %476 = vmatprep.subr.mxu0 0.0
    %477 = vmatpush2.msra.mxu0 0.0
    %478 = vmatprep.subr.mxu0 0.0
    %479 = vmatpush2.msra.mxu0 0.0
    %480 = vmatprep.subr.mxu0 0.0
    %481 = vmatpush2.msra.mxu0 0.0
    %482 = vmatprep.subr.mxu0 0.0
    %483 = vmatpush2.msra.mxu0 0.0
    %484 = vmatprep.subr.mxu0 0.0
    %485 = vmatpush2.msra.mxu0 0.0
    %486 = vmatprep.subr.mxu0 0.0
    %487 = vmatpush2.msra.mxu0 0.0
    %488 = vmatprep.subr.mxu0 0.0
    %489 = vmatpush2.msra.mxu0 0.0
    %490 = vmatprep.subr.mxu0 0.0
    %491 = vmatpush2.msra.mxu0 0.0
    %492 = vmatprep.subr.mxu0 0.0
    %493 = vmatpush2.msra.mxu0 0.0
    %494 = vmatprep.mubr.f32.mxu0 0.0
    %495 = vmatmul.mubr.f32.gmra.mxu0 %v285
    %v496 = vpop.f32.mrf.mxu0
    %v497 = vadd.f32 0.0, %v496
    %v498 = vpop.f32.mrf.mxu0
    %v499 = vadd.f32 0.0, %v498
    %500 = vdwg.mxu0
    %v501 = vadd.f32 %v198, %v426
    %v502 = vadd.f32 %v200, %v428
    %v503 = vadd.f32 %v275, %v497
    %v504 = vadd.f32 %v277, %v499
    %v505 = vxor.u32 %v501, 2147483648
    %v506 = vxor.u32 %v502, 2147483648
    %v507 = vxor.u32 %v503, 2147483648
    %v508 = vxor.u32 %v504, 2147483648
    %v509 = vmul.f32 %v505, 1.442695
    %v510 = vpow.pop %v509
    %v511 = vmul.f32 %v506, 1.442695
    %v512 = vpow.pop %v511
    %v513 = vmul.f32 %v507, 1.442695
    %v514 = vpow.pop %v513
    %v515 = vmul.f32 %v508, 1.442695
    %v516 = vpow.pop %v515
    %v517 = vadd.f32 %v510, 1.0
    %v518 = vadd.f32 %v512, 1.0
    %v519 = vadd.f32 %v514, 1.0
    %v520 = vadd.f32 %v516, 1.0
    %v521 = vrcp.pop %v517
    %v522 = vmul.f32 1.0, %v521
    %v523 = vrcp.pop %v518
    %v524 = vmul.f32 1.0, %v523
    %v525 = vrcp.pop %v519
    %v526 = vmul.f32 1.0, %v525
    %v527 = vrcp.pop %v520
    %v528 = vmul.f32 1.0, %v527
    %v529 = vmul.f32 %v526, 2.0
    %v530 = vsub.f32 %v529, 1.0
    %v531 = vmul.f32 %v524, %v290
    %v532 = vmul.f32 %v522, %v530
    %v533 = vadd.f32 %v531, %v532
    %v534 = vtanh.pop %v533
    %v535 = vmul.f32 %v528, %v534
    %536 = vmatprep.subr.mxu0 %v356
    %537 = vmatpush1.msra.mxu0 %v355
    %538 = vmatprep.subr.mxu0 %v352
    %539 = vmatpush1.msra.mxu0 %v351
    %540 = vmatprep.subr.mxu0 %v348
    %541 = vmatpush1.msra.mxu0 %v347
    %542 = vmatprep.subr.mxu0 %v344
    %543 = vmatpush1.msra.mxu0 %v343
    %544 = vmatprep.subr.mxu0 %v340
    %545 = vmatpush1.msra.mxu0 %v339
    %546 = vmatprep.subr.mxu0 %v336
    %547 = vmatpush1.msra.mxu0 %v335
    %548 = vmatprep.subr.mxu0 %v332
    %549 = vmatpush1.msra.mxu0 %v331
    %550 = vmatprep.subr.mxu0 %v328
    %551 = vmatpush1.msra.mxu0 %v327
    %552 = vmatprep.subr.mxu0 %v324
    %553 = vmatpush1.msra.mxu0 %v323
    %554 = vmatprep.subr.mxu0 %v320
    %555 = vmatpush1.msra.mxu0 %v319
    %556 = vmatprep.subr.mxu0 %v316
    %557 = vmatpush1.msra.mxu0 %v315
    %558 = vmatprep.subr.mxu0 %v312
    %559 = vmatpush1.msra.mxu0 %v311
    %560 = vmatprep.subr.mxu0 %v308
    %561 = vmatpush1.msra.mxu0 %v307
    %562 = vmatprep.subr.mxu0 %v304
    %563 = vmatpush1.msra.mxu0 %v303
    %564 = vmatprep.subr.mxu0 %v300
    %565 = vmatpush1.msra.mxu0 %v299
    %566 = vmatprep.subr.mxu0 %v296
    %567 = vmatpush1.msra.mxu0 %v295
    %568 = vmatprep.subr.mxu0 0.0
    %569 = vmatpush2.msra.mxu0 0.0
    %570 = vmatprep.subr.mxu0 0.0
    %571 = vmatpush2.msra.mxu0 0.0
    %572 = vmatprep.subr.mxu0 0.0
    %573 = vmatpush2.msra.mxu0 0.0
    %574 = vmatprep.subr.mxu0 0.0
    %575 = vmatpush2.msra.mxu0 0.0
    %576 = vmatprep.subr.mxu0 0.0
    %577 = vmatpush2.msra.mxu0 0.0
    %578 = vmatprep.subr.mxu0 0.0
    %579 = vmatpush2.msra.mxu0 0.0
    %580 = vmatprep.subr.mxu0 0.0
    %581 = vmatpush2.msra.mxu0 0.0
    %582 = vmatprep.subr.mxu0 0.0
    %583 = vmatpush2.msra.mxu0 0.0
    %584 = vmatprep.subr.mxu0 0.0
    %585 = vmatpush2.msra.mxu0 0.0
    %586 = vmatprep.subr.mxu0 0.0
    %587 = vmatpush2.msra.mxu0 0.0
    %588 = vmatprep.subr.mxu0 0.0
    %589 = vmatpush2.msra.mxu0 0.0
    %590 = vmatprep.subr.mxu0 0.0
    %591 = vmatpush2.msra.mxu0 0.0
    %592 = vmatprep.subr.mxu0 0.0
    %593 = vmatpush2.msra.mxu0 0.0
    %594 = vmatprep.subr.mxu0 0.0
    %595 = vmatpush2.msra.mxu0 0.0
    %596 = vmatprep.subr.mxu0 0.0
    %597 = vmatpush2.msra.mxu0 0.0
    %598 = vmatprep.subr.mxu0 0.0
    %599 = vmatpush2.msra.mxu0 0.0
    %600 = vmatprep.mubr.f32.mxu0 0.0
    %601 = vmatmul.mubr.f32.gmra.mxu0 %v535
    %v602 = vpop.f32.mrf.mxu0
    %v603 = vadd.f32 0.0, %v602
    %v604 = vpop.f32.mrf.mxu0
    %v605 = vadd.f32 0.0, %v604
    %606 = vdwg.mxu0
    %607 = vmatprep.subr.mxu0 %v358
    %608 = vmatpush1.msra.mxu0 %v357
    %609 = vmatprep.subr.mxu0 %v354
    %610 = vmatpush1.msra.mxu0 %v353
    %611 = vmatprep.subr.mxu0 %v350
    %612 = vmatpush1.msra.mxu0 %v349
    %613 = vmatprep.subr.mxu0 %v346
    %614 = vmatpush1.msra.mxu0 %v345
    %615 = vmatprep.subr.mxu0 %v342
    %616 = vmatpush1.msra.mxu0 %v341
    %617 = vmatprep.subr.mxu0 %v338
    %618 = vmatpush1.msra.mxu0 %v337
    %619 = vmatprep.subr.mxu0 %v334
    %620 = vmatpush1.msra.mxu0 %v333
    %621 = vmatprep.subr.mxu0 %v330
    %622 = vmatpush1.msra.mxu0 %v329
    %623 = vmatprep.subr.mxu0 %v326
    %624 = vmatpush1.msra.mxu0 %v325
    %625 = vmatprep.subr.mxu0 %v322
    %626 = vmatpush1.msra.mxu0 %v321
    %627 = vmatprep.subr.mxu0 %v318
    %628 = vmatpush1.msra.mxu0 %v317
    %629 = vmatprep.subr.mxu0 %v314
    %630 = vmatpush1.msra.mxu0 %v313
    %631 = vmatprep.subr.mxu0 %v310
    %632 = vmatpush1.msra.mxu0 %v309
    %633 = vmatprep.subr.mxu0 %v306
    %634 = vmatpush1.msra.mxu0 %v305
    %635 = vmatprep.subr.mxu0 %v302
    %636 = vmatpush1.msra.mxu0 %v301
    %637 = vmatprep.subr.mxu0 %v298
    %638 = vmatpush1.msra.mxu0 %v297
    %639 = vmatprep.subr.mxu0 0.0
    %640 = vmatpush2.msra.mxu0 0.0
    %641 = vmatprep.subr.mxu0 0.0
    %642 = vmatpush2.msra.mxu0 0.0
    %643 = vmatprep.subr.mxu0 0.0
    %644 = vmatpush2.msra.mxu0 0.0
    %645 = vmatprep.subr.mxu0 0.0
    %646 = vmatpush2.msra.mxu0 0.0
    %647 = vmatprep.subr.mxu0 0.0
    %648 = vmatpush2.msra.mxu0 0.0
    %649 = vmatprep.subr.mxu0 0.0
    %650 = vmatpush2.msra.mxu0 0.0
    %651 = vmatprep.subr.mxu0 0.0
    %652 = vmatpush2.msra.mxu0 0.0
    %653 = vmatprep.subr.mxu0 0.0
    %654 = vmatpush2.msra.mxu0 0.0
    %655 = vmatprep.subr.mxu0 0.0
    %656 = vmatpush2.msra.mxu0 0.0
    %657 = vmatprep.subr.mxu0 0.0
    %658 = vmatpush2.msra.mxu0 0.0
    %659 = vmatprep.subr.mxu0 0.0
    %660 = vmatpush2.msra.mxu0 0.0
    %661 = vmatprep.subr.mxu0 0.0
    %662 = vmatpush2.msra.mxu0 0.0
    %663 = vmatprep.subr.mxu0 0.0
    %664 = vmatpush2.msra.mxu0 0.0
    %665 = vmatprep.subr.mxu0 0.0
    %666 = vmatpush2.msra.mxu0 0.0
    %667 = vmatprep.subr.mxu0 0.0
    %668 = vmatpush2.msra.mxu0 0.0
    %669 = vmatprep.subr.mxu0 0.0
    %670 = vmatpush2.msra.mxu0 0.0
    %671 = vmatprep.mubr.f32.mxu0 0.0
    %672 = vmatmul.mubr.f32.gmra.mxu0 %v535
    %v673 = vpop.f32.mrf.mxu0
    %v674 = vadd.f32 0.0, %v673
    %v675 = vpop.f32.mrf.mxu0
    %v676 = vadd.f32 0.0, %v675
    %677 = vdwg.mxu0
    %v682 = vrot.slane %v603, 6
    %v683 = vrot.slane %v605, 6
    %v684 = vrot.slane %v674, 6
    %v685 = vrot.slane %v676, 6
    %v690 = vadd.f32 %v198, %v682
    %v691 = vadd.f32 %v200, %v683
    %v692 = vadd.f32 %v275, %v684
    %v693 = vadd.f32 %v277, %v685
    %v694 = vxor.u32 %v690, 2147483648
    %v695 = vxor.u32 %v691, 2147483648
    %v696 = vxor.u32 %v692, 2147483648
    %v697 = vxor.u32 %v693, 2147483648
    %v698 = vmul.f32 %v694, 1.442695
    %v699 = vpow.pop %v698
    %v700 = vmul.f32 %v695, 1.442695
    %v701 = vpow.pop %v700
    %v702 = vmul.f32 %v696, 1.442695
    %v703 = vpow.pop %v702
    %v704 = vmul.f32 %v697, 1.442695
    %v705 = vpow.pop %v704
    %v706 = vadd.f32 %v699, 1.0
    %v707 = vadd.f32 %v701, 1.0
    %v708 = vadd.f32 %v703, 1.0
    %v709 = vadd.f32 %v705, 1.0
    %v710 = vrcp.pop %v706
    %v711 = vmul.f32 1.0, %v710
    %v712 = vrcp.pop %v707
    %v713 = vmul.f32 1.0, %v712
    %v714 = vrcp.pop %v708
    %v715 = vmul.f32 1.0, %v714
    %v716 = vrcp.pop %v709
    %v717 = vmul.f32 1.0, %v716
    %v718 = vmul.f32 %v715, 2.0
    %v719 = vsub.f32 %v718, 1.0
    %v721 = vrot.slane %v533, 6
    %v723 = vmul.f32 %v713, %v721
    %v724 = vmul.f32 %v711, %v719
    %v725 = vadd.f32 %v723, %v724
    %v726 = vtanh.pop %v725
    %v727 = vmul.f32 %v717, %v726
    %v728 = vld [vmem:[#allocation5] sm:$0xff]
    %v729 = vld [vmem:[#allocation5 + $0x8] sm:$0xff]
    %v730 = vld [vmem:[#allocation5 + $0x10] sm:$0xff]
    %v731 = vld [vmem:[#allocation5 + $0x18] sm:$0xff]
    %v732 = vld [vmem:[#allocation5 + $0x20] sm:$0xff]
    %v733 = vld [vmem:[#allocation5 + $0x28] sm:$0xff]
    %v734 = vld [vmem:[#allocation5 + $0x30] sm:$0xff]
    %v735 = vld [vmem:[#allocation5 + $0x38] sm:$0xff]
    %v736 = vld [vmem:[#allocation5 + $0x40] sm:$0xff]
    %v737 = vld [vmem:[#allocation5 + $0x48] sm:$0xff]
    %v738 = vld [vmem:[#allocation5 + $0x50] sm:$0xff]
    %v739 = vld [vmem:[#allocation5 + $0x58] sm:$0xff]
    %v740 = vld [vmem:[#allocation5 + $0x60] sm:$0xff]
    %v741 = vld [vmem:[#allocation5 + $0x68] sm:$0xff]
    %v742 = vld [vmem:[#allocation5 + $0x70] sm:$0xff]
    %v743 = vld [vmem:[#allocation5 + $0x78] sm:$0xff]
    %v744 = vld [vmem:[#allocation5 + $0x80] sm:$0xff]
    %v745 = vld [vmem:[#allocation5 + $0x88] sm:$0xff]
    %v746 = vld [vmem:[#allocation5 + $0x90] sm:$0xff]
    %v747 = vld [vmem:[#allocation5 + $0x98] sm:$0xff]
    %v748 = vld [vmem:[#allocation5 + $0xa0] sm:$0xff]
    %v749 = vld [vmem:[#allocation5 + $0xa8] sm:$0xff]
    %v750 = vld [vmem:[#allocation5 + $0xb0] sm:$0xff]
    %v751 = vld [vmem:[#allocation5 + $0xb8] sm:$0xff]
    %v752 = vld [vmem:[#allocation5 + $0xc0] sm:$0xff]
    %v753 = vld [vmem:[#allocation5 + $0xc8] sm:$0xff]
    %v754 = vld [vmem:[#allocation5 + $0xd0] sm:$0xff]
    %v755 = vld [vmem:[#allocation5 + $0xd8] sm:$0xff]
    %v756 = vld [vmem:[#allocation5 + $0xe0] sm:$0xff]
    %v757 = vld [vmem:[#allocation5 + $0xe8] sm:$0xff]
    %v758 = vld [vmem:[#allocation5 + $0xf0] sm:$0xff]
    %v759 = vld [vmem:[#allocation5 + $0xf8] sm:$0xff]
    %v760 = vld [vmem:[#allocation5 + $0x100] sm:$0xff]
    %v761 = vld [vmem:[#allocation5 + $0x108] sm:$0xff]
    %v762 = vld [vmem:[#allocation5 + $0x110] sm:$0xff]
    %v763 = vld [vmem:[#allocation5 + $0x118] sm:$0xff]
    %v764 = vld [vmem:[#allocation5 + $0x120] sm:$0xff]
    %v765 = vld [vmem:[#allocation5 + $0x128] sm:$0xff]
    %v766 = vld [vmem:[#allocation5 + $0x130] sm:$0xff]
    %v767 = vld [vmem:[#allocation5 + $0x138] sm:$0xff]
    %v768 = vld [vmem:[#allocation5 + $0x140] sm:$0xff]
    %v769 = vld [vmem:[#allocation5 + $0x148] sm:$0xff]
    %v770 = vld [vmem:[#allocation5 + $0x150] sm:$0xff]
    %v771 = vld [vmem:[#allocation5 + $0x158] sm:$0xff]
    %v772 = vld [vmem:[#allocation5 + $0x160] sm:$0xff]
    %v773 = vld [vmem:[#allocation5 + $0x168] sm:$0xff]
    %v774 = vld [vmem:[#allocation5 + $0x170] sm:$0xff]
    %v775 = vld [vmem:[#allocation5 + $0x178] sm:$0xff]
    %v776 = vld [vmem:[#allocation5 + $0x180] sm:$0xff]
    %v777 = vld [vmem:[#allocation5 + $0x188] sm:$0xff]
    %v778 = vld [vmem:[#allocation5 + $0x190] sm:$0xff]
    %v779 = vld [vmem:[#allocation5 + $0x198] sm:$0xff]
    %v780 = vld [vmem:[#allocation5 + $0x1a0] sm:$0xff]
    %v781 = vld [vmem:[#allocation5 + $0x1a8] sm:$0xff]
    %v782 = vld [vmem:[#allocation5 + $0x1b0] sm:$0xff]
    %v783 = vld [vmem:[#allocation5 + $0x1b8] sm:$0xff]
    %v784 = vld [vmem:[#allocation5 + $0x1c0] sm:$0xff]
    %v785 = vld [vmem:[#allocation5 + $0x1c8] sm:$0xff]
    %v786 = vld [vmem:[#allocation5 + $0x1d0] sm:$0xff]
    %v787 = vld [vmem:[#allocation5 + $0x1d8] sm:$0xff]
    %v788 = vld [vmem:[#allocation5 + $0x1e0] sm:$0xff]
    %v789 = vld [vmem:[#allocation5 + $0x1e8] sm:$0xff]
    %v790 = vld [vmem:[#allocation5 + $0x1f0] sm:$0xff]
    %v791 = vld [vmem:[#allocation5 + $0x1f8] sm:$0xff]
    %v792 = vld [vmem:[#allocation5 + $0x200] sm:$0xff]
    %v793 = vld [vmem:[#allocation5 + $0x208] sm:$0xff]
    %v794 = vld [vmem:[#allocation5 + $0x210] sm:$0xff]
    %v795 = vld [vmem:[#allocation5 + $0x218] sm:$0xff]
    %v796 = vld [vmem:[#allocation5 + $0x220] sm:$0xff]
    %v797 = vld [vmem:[#allocation5 + $0x228] sm:$0xff]
    %v798 = vld [vmem:[#allocation5 + $0x230] sm:$0xff]
    %v799 = vld [vmem:[#allocation5 + $0x238] sm:$0xff]
    %v800 = vld [vmem:[#allocation5 + $0x240] sm:$0xff]
    %v801 = vld [vmem:[#allocation5 + $0x248] sm:$0xff]
    %v802 = vld [vmem:[#allocation5 + $0x250] sm:$0xff]
    %v803 = vld [vmem:[#allocation5 + $0x258] sm:$0xff]
    %v804 = vld [vmem:[#allocation5 + $0x260] sm:$0xff]
    %v805 = vld [vmem:[#allocation5 + $0x268] sm:$0xff]
    %v806 = vld [vmem:[#allocation5 + $0x270] sm:$0xff]
    %v807 = vld [vmem:[#allocation5 + $0x278] sm:$0xff]
    %v808 = vld [vmem:[#allocation5 + $0x280] sm:$0xff]
    %v809 = vld [vmem:[#allocation5 + $0x288] sm:$0xff]
    %v810 = vld [vmem:[#allocation5 + $0x290] sm:$0xff]
    %v811 = vld [vmem:[#allocation5 + $0x298] sm:$0xff]
    %v812 = vld [vmem:[#allocation5 + $0x2a0] sm:$0xff]
    %v813 = vld [vmem:[#allocation5 + $0x2a8] sm:$0xff]
    %v814 = vld [vmem:[#allocation5 + $0x2b0] sm:$0xff]
    %v815 = vld [vmem:[#allocation5 + $0x2b8] sm:$0xff]
    %v816 = vld [vmem:[#allocation5 + $0x2c0] sm:$0xff]
    %v817 = vld [vmem:[#allocation5 + $0x2c8] sm:$0xff]
    %v818 = vld [vmem:[#allocation5 + $0x2d0] sm:$0xff]
    %v819 = vld [vmem:[#allocation5 + $0x2d8] sm:$0xff]
    %v820 = vld [vmem:[#allocation5 + $0x2e0] sm:$0xff]
    %v821 = vld [vmem:[#allocation5 + $0x2e8] sm:$0xff]
    %v822 = vld [vmem:[#allocation5 + $0x2f0] sm:$0xff]
    %v823 = vld [vmem:[#allocation5 + $0x2f8] sm:$0xff]
    %v824 = vld [vmem:[#allocation5 + $0x300] sm:$0xff]
    %v825 = vld [vmem:[#allocation5 + $0x308] sm:$0xff]
    %v826 = vld [vmem:[#allocation5 + $0x310] sm:$0xff]
    %v827 = vld [vmem:[#allocation5 + $0x318] sm:$0xff]
    %v828 = vld [vmem:[#allocation5 + $0x320] sm:$0xff]
    %v829 = vld [vmem:[#allocation5 + $0x328] sm:$0xff]
    %v830 = vld [vmem:[#allocation5 + $0x330] sm:$0xff]
    %v831 = vld [vmem:[#allocation5 + $0x338] sm:$0xff]
    %v832 = vld [vmem:[#allocation5 + $0x340] sm:$0xff]
    %v833 = vld [vmem:[#allocation5 + $0x348] sm:$0xff]
    %v834 = vld [vmem:[#allocation5 + $0x350] sm:$0xff]
    %v835 = vld [vmem:[#allocation5 + $0x358] sm:$0xff]
    %v836 = vld [vmem:[#allocation5 + $0x360] sm:$0xff]
    %v837 = vld [vmem:[#allocation5 + $0x368] sm:$0xff]
    %v838 = vld [vmem:[#allocation5 + $0x370] sm:$0xff]
    %v839 = vld [vmem:[#allocation5 + $0x378] sm:$0xff]
    %v840 = vld [vmem:[#allocation5 + $0x380] sm:$0xff]
    %v841 = vld [vmem:[#allocation5 + $0x388] sm:$0xff]
    %v842 = vld [vmem:[#allocation5 + $0x390] sm:$0xff]
    %v843 = vld [vmem:[#allocation5 + $0x398] sm:$0xff]
    %v844 = vld [vmem:[#allocation5 + $0x3a0] sm:$0xff]
    %v845 = vld [vmem:[#allocation5 + $0x3a8] sm:$0xff]
    %v846 = vld [vmem:[#allocation5 + $0x3b0] sm:$0xff]
    %v847 = vld [vmem:[#allocation5 + $0x3b8] sm:$0xff]
    %v848 = vld [vmem:[#allocation5 + $0x3c0] sm:$0xff]
    %v849 = vld [vmem:[#allocation5 + $0x3c8] sm:$0xff]
    %v850 = vld [vmem:[#allocation5 + $0x3d0] sm:$0xff]
    %v851 = vld [vmem:[#allocation5 + $0x3d8] sm:$0xff]
    %v852 = vld [vmem:[#allocation5 + $0x3e0] sm:$0xff]
    %v853 = vld [vmem:[#allocation5 + $0x3e8] sm:$0xff]
    %v854 = vld [vmem:[#allocation5 + $0x3f0] sm:$0xff]
    %v855 = vld [vmem:[#allocation5 + $0x3f8] sm:$0xff]
    %s856 = scalar_lea.vmem [#allocation7], 4
    %v857 = vld [vmem:[%s856] sm:$0xf]
    %v859 = vlaneseq
    %v860 = vshrl.u32 %v859, 7
    %v861 = vsub.s32 0, %v860
    %v862 = vrot.slane %v857, %v861
    %v863 = vlaneseq
    %v864 = vshrl.u32 %v863, 7
    %v865 = vsub.s32 1, %v864
    %v866 = vrot.slane %v857, %v865
    %v867 = vlaneseq
    %v868 = vshrl.u32 %v867, 7
    %v869 = vsub.s32 2, %v868
    %v870 = vrot.slane %v857, %v869
    %v871 = vlaneseq
    %v872 = vshrl.u32 %v871, 7
    %v873 = vsub.s32 3, %v872
    %v874 = vrot.slane %v857, %v873
    %879 = vmatprep.subr.mxu0 %v789
    %880 = vmatpush1.msra.mxu0 %v788
    %881 = vmatprep.subr.mxu0 %v785
    %882 = vmatpush1.msra.mxu0 %v784
    %883 = vmatprep.subr.mxu0 %v781
    %884 = vmatpush1.msra.mxu0 %v780
    %885 = vmatprep.subr.mxu0 %v777
    %886 = vmatpush1.msra.mxu0 %v776
    %887 = vmatprep.subr.mxu0 %v773
    %888 = vmatpush1.msra.mxu0 %v772
    %889 = vmatprep.subr.mxu0 %v769
    %890 = vmatpush1.msra.mxu0 %v768
    %891 = vmatprep.subr.mxu0 %v765
    %892 = vmatpush1.msra.mxu0 %v764
    %893 = vmatprep.subr.mxu0 %v761
    %894 = vmatpush1.msra.mxu0 %v760
    %895 = vmatprep.subr.mxu0 %v757
    %896 = vmatpush1.msra.mxu0 %v756
    %897 = vmatprep.subr.mxu0 %v753
    %898 = vmatpush1.msra.mxu0 %v752
    %899 = vmatprep.subr.mxu0 %v749
    %900 = vmatpush1.msra.mxu0 %v748
    %901 = vmatprep.subr.mxu0 %v745
    %902 = vmatpush1.msra.mxu0 %v744
    %903 = vmatprep.subr.mxu0 %v741
    %904 = vmatpush1.msra.mxu0 %v740
    %905 = vmatprep.subr.mxu0 %v737
    %906 = vmatpush1.msra.mxu0 %v736
    %907 = vmatprep.subr.mxu0 %v733
    %908 = vmatpush1.msra.mxu0 %v732
    %909 = vmatprep.subr.mxu0 %v729
    %910 = vmatpush1.msra.mxu0 %v728
    %911 = vmatprep.subr.mxu0 %v853
    %912 = vmatpush2.msra.mxu0 %v852
    %913 = vmatprep.subr.mxu0 %v849
    %914 = vmatpush2.msra.mxu0 %v848
    %915 = vmatprep.subr.mxu0 %v845
    %916 = vmatpush2.msra.mxu0 %v844
    %917 = vmatprep.subr.mxu0 %v841
    %918 = vmatpush2.msra.mxu0 %v840
    %919 = vmatprep.subr.mxu0 %v837
    %920 = vmatpush2.msra.mxu0 %v836
    %921 = vmatprep.subr.mxu0 %v833
    %922 = vmatpush2.msra.mxu0 %v832
    %923 = vmatprep.subr.mxu0 %v829
    %924 = vmatpush2.msra.mxu0 %v828
    %925 = vmatprep.subr.mxu0 %v825
    %926 = vmatpush2.msra.mxu0 %v824
    %927 = vmatprep.subr.mxu0 %v821
    %928 = vmatpush2.msra.mxu0 %v820
    %929 = vmatprep.subr.mxu0 %v817
    %930 = vmatpush2.msra.mxu0 %v816
    %931 = vmatprep.subr.mxu0 %v813
    %932 = vmatpush2.msra.mxu0 %v812
    %933 = vmatprep.subr.mxu0 %v809
    %934 = vmatpush2.msra.mxu0 %v808
    %935 = vmatprep.subr.mxu0 %v805
    %936 = vmatpush2.msra.mxu0 %v804
    %937 = vmatprep.subr.mxu0 %v801
    %938 = vmatpush2.msra.mxu0 %v800
    %939 = vmatprep.subr.mxu0 %v797
    %940 = vmatpush2.msra.mxu0 %v796
    %941 = vmatprep.subr.mxu0 %v793
    %942 = vmatpush2.msra.mxu0 %v792
    %943 = vmatprep.mubr.f32.mxu0 %v287
    %944 = vmatmul.mubr.f32.gmra.mxu0 %v535
    %v945 = vpop.f32.mrf.mxu0
    %v946 = vadd.f32 %v862, %v945
    %v947 = vpop.f32.mrf.mxu0
    %v948 = vadd.f32 %v866, %v947
    %949 = vdwg.mxu0
    %950 = vmatprep.subr.mxu0 %v791
    %951 = vmatpush1.msra.mxu0 %v790
    %952 = vmatprep.subr.mxu0 %v787
    %953 = vmatpush1.msra.mxu0 %v786
    %954 = vmatprep.subr.mxu0 %v783
    %955 = vmatpush1.msra.mxu0 %v782
    %956 = vmatprep.subr.mxu0 %v779
    %957 = vmatpush1.msra.mxu0 %v778
    %958 = vmatprep.subr.mxu0 %v775
    %959 = vmatpush1.msra.mxu0 %v774
    %960 = vmatprep.subr.mxu0 %v771
    %961 = vmatpush1.msra.mxu0 %v770
    %962 = vmatprep.subr.mxu0 %v767
    %963 = vmatpush1.msra.mxu0 %v766
    %964 = vmatprep.subr.mxu0 %v763
    %965 = vmatpush1.msra.mxu0 %v762
    %966 = vmatprep.subr.mxu0 %v759
    %967 = vmatpush1.msra.mxu0 %v758
    %968 = vmatprep.subr.mxu0 %v755
    %969 = vmatpush1.msra.mxu0 %v754
    %970 = vmatprep.subr.mxu0 %v751
    %971 = vmatpush1.msra.mxu0 %v750
    %972 = vmatprep.subr.mxu0 %v747
    %973 = vmatpush1.msra.mxu0 %v746
    %974 = vmatprep.subr.mxu0 %v743
    %975 = vmatpush1.msra.mxu0 %v742
    %976 = vmatprep.subr.mxu0 %v739
    %977 = vmatpush1.msra.mxu0 %v738
    %978 = vmatprep.subr.mxu0 %v735
    %979 = vmatpush1.msra.mxu0 %v734
    %980 = vmatprep.subr.mxu0 %v731
    %981 = vmatpush1.msra.mxu0 %v730
    %982 = vmatprep.subr.mxu0 %v855
    %983 = vmatpush2.msra.mxu0 %v854
    %984 = vmatprep.subr.mxu0 %v851
    %985 = vmatpush2.msra.mxu0 %v850
    %986 = vmatprep.subr.mxu0 %v847
    %987 = vmatpush2.msra.mxu0 %v846
    %988 = vmatprep.subr.mxu0 %v843
    %989 = vmatpush2.msra.mxu0 %v842
    %990 = vmatprep.subr.mxu0 %v839
    %991 = vmatpush2.msra.mxu0 %v838
    %992 = vmatprep.subr.mxu0 %v835
    %993 = vmatpush2.msra.mxu0 %v834
    %994 = vmatprep.subr.mxu0 %v831
    %995 = vmatpush2.msra.mxu0 %v830
    %996 = vmatprep.subr.mxu0 %v827
    %997 = vmatpush2.msra.mxu0 %v826
    %998 = vmatprep.subr.mxu0 %v823
    %999 = vmatpush2.msra.mxu0 %v822
    %1000 = vmatprep.subr.mxu0 %v819
    %1001 = vmatpush2.msra.mxu0 %v818
    %1002 = vmatprep.subr.mxu0 %v815
    %1003 = vmatpush2.msra.mxu0 %v814
    %1004 = vmatprep.subr.mxu0 %v811
    %1005 = vmatpush2.msra.mxu0 %v810
    %1006 = vmatprep.subr.mxu0 %v807
    %1007 = vmatpush2.msra.mxu0 %v806
    %1008 = vmatprep.subr.mxu0 %v803
    %1009 = vmatpush2.msra.mxu0 %v802
    %1010 = vmatprep.subr.mxu0 %v799
    %1011 = vmatpush2.msra.mxu0 %v798
    %1012 = vmatprep.subr.mxu0 %v795
    %1013 = vmatpush2.msra.mxu0 %v794
    %1014 = vmatprep.mubr.f32.mxu0 %v287
    %1015 = vmatmul.mubr.f32.gmra.mxu0 %v535
    %v1016 = vpop.f32.mrf.mxu0
    %v1017 = vadd.f32 %v870, %v1016
    %v1018 = vpop.f32.mrf.mxu0
    %v1019 = vadd.f32 %v874, %v1018
    %1020 = vdwg.mxu0
    %v1021 = vxor.u32 %v946, 2147483648
    %v1022 = vxor.u32 %v948, 2147483648
    %v1023 = vxor.u32 %v1017, 2147483648
    %v1024 = vxor.u32 %v1019, 2147483648
    %v1025 = vmul.f32 %v1021, 1.442695
    %v1026 = vpow.pop %v1025
    %v1027 = vmul.f32 %v1022, 1.442695
    %v1028 = vpow.pop %v1027
    %v1029 = vmul.f32 %v1023, 1.442695
    %v1030 = vpow.pop %v1029
    %v1031 = vmul.f32 %v1024, 1.442695
    %v1032 = vpow.pop %v1031
    %v1033 = vadd.f32 %v1026, 1.0
    %v1034 = vadd.f32 %v1028, 1.0
    %v1035 = vadd.f32 %v1030, 1.0
    %v1036 = vadd.f32 %v1032, 1.0
    %v1037 = vrcp.pop %v1033
    %v1038 = vmul.f32 1.0, %v1037
    %v1039 = vrcp.pop %v1034
    %v1040 = vmul.f32 1.0, %v1039
    %v1041 = vrcp.pop %v1035
    %v1042 = vmul.f32 1.0, %v1041
    %v1043 = vrcp.pop %v1036
    %v1044 = vmul.f32 1.0, %v1043
    %v1045 = vmul.f32 %v1042, 2.0
    %v1046 = vsub.f32 %v1045, 1.0
    %v1047 = vmul.f32 %v1040, %v292
    %v1048 = vmul.f32 %v1038, %v1046
    %v1049 = vadd.f32 %v1047, %v1048
    %v1050 = vtanh.pop %v1049
    %v1051 = vmul.f32 %v1044, %v1050
    %v1053 = vrot.slane %v727, 2
    %1055 = vmatprep.subr.mxu0 %v356
    %1056 = vmatpush1.msra.mxu0 %v355
    %1057 = vmatprep.subr.mxu0 %v352
    %1058 = vmatpush1.msra.mxu0 %v351
    %1059 = vmatprep.subr.mxu0 %v348
    %1060 = vmatpush1.msra.mxu0 %v347
    %1061 = vmatprep.subr.mxu0 %v344
    %1062 = vmatpush1.msra.mxu0 %v343
    %1063 = vmatprep.subr.mxu0 %v340
    %1064 = vmatpush1.msra.mxu0 %v339
    %1065 = vmatprep.subr.mxu0 %v336
    %1066 = vmatpush1.msra.mxu0 %v335
    %1067 = vmatprep.subr.mxu0 %v332
    %1068 = vmatpush1.msra.mxu0 %v331
    %1069 = vmatprep.subr.mxu0 %v328
    %1070 = vmatpush1.msra.mxu0 %v327
    %1071 = vmatprep.subr.mxu0 %v324
    %1072 = vmatpush1.msra.mxu0 %v323
    %1073 = vmatprep.subr.mxu0 %v320
    %1074 = vmatpush1.msra.mxu0 %v319
    %1075 = vmatprep.subr.mxu0 %v316
    %1076 = vmatpush1.msra.mxu0 %v315
    %1077 = vmatprep.subr.mxu0 %v312
    %1078 = vmatpush1.msra.mxu0 %v311
    %1079 = vmatprep.subr.mxu0 %v308
    %1080 = vmatpush1.msra.mxu0 %v307
    %1081 = vmatprep.subr.mxu0 %v304
    %1082 = vmatpush1.msra.mxu0 %v303
    %1083 = vmatprep.subr.mxu0 %v300
    %1084 = vmatpush1.msra.mxu0 %v299
    %1085 = vmatprep.subr.mxu0 %v296
    %1086 = vmatpush1.msra.mxu0 %v295
    %1087 = vmatprep.subr.mxu0 0.0
    %1088 = vmatpush2.msra.mxu0 0.0
    %1089 = vmatprep.subr.mxu0 0.0
    %1090 = vmatpush2.msra.mxu0 0.0
    %1091 = vmatprep.subr.mxu0 0.0
    %1092 = vmatpush2.msra.mxu0 0.0
    %1093 = vmatprep.subr.mxu0 0.0
    %1094 = vmatpush2.msra.mxu0 0.0
    %1095 = vmatprep.subr.mxu0 0.0
    %1096 = vmatpush2.msra.mxu0 0.0
    %1097 = vmatprep.subr.mxu0 0.0
    %1098 = vmatpush2.msra.mxu0 0.0
    %1099 = vmatprep.subr.mxu0 0.0
    %1100 = vmatpush2.msra.mxu0 0.0
    %1101 = vmatprep.subr.mxu0 0.0
    %1102 = vmatpush2.msra.mxu0 0.0
    %1103 = vmatprep.subr.mxu0 0.0
    %1104 = vmatpush2.msra.mxu0 0.0
    %1105 = vmatprep.subr.mxu0 0.0
    %1106 = vmatpush2.msra.mxu0 0.0
    %1107 = vmatprep.subr.mxu0 0.0
    %1108 = vmatpush2.msra.mxu0 0.0
    %1109 = vmatprep.subr.mxu0 0.0
    %1110 = vmatpush2.msra.mxu0 0.0
    %1111 = vmatprep.subr.mxu0 0.0
    %1112 = vmatpush2.msra.mxu0 0.0
    %1113 = vmatprep.subr.mxu0 0.0
    %1114 = vmatpush2.msra.mxu0 0.0
    %1115 = vmatprep.subr.mxu0 0.0
    %1116 = vmatpush2.msra.mxu0 0.0
    %1117 = vmatprep.subr.mxu0 0.0
    %1118 = vmatpush2.msra.mxu0 0.0
    %1119 = vmatprep.mubr.f32.mxu0 0.0
    %1120 = vmatmul.mubr.f32.gmra.mxu0 %v1053
    %v1121 = vpop.f32.mrf.mxu0
    %v1122 = vadd.f32 0.0, %v1121
    %v1123 = vpop.f32.mrf.mxu0
    %v1124 = vadd.f32 0.0, %v1123
    %1125 = vdwg.mxu0
    %1126 = vmatprep.subr.mxu0 %v358
    %1127 = vmatpush1.msra.mxu0 %v357
    %1128 = vmatprep.subr.mxu0 %v354
    %1129 = vmatpush1.msra.mxu0 %v353
    %1130 = vmatprep.subr.mxu0 %v350
    %1131 = vmatpush1.msra.mxu0 %v349
    %1132 = vmatprep.subr.mxu0 %v346
    %1133 = vmatpush1.msra.mxu0 %v345
    %1134 = vmatprep.subr.mxu0 %v342
    %1135 = vmatpush1.msra.mxu0 %v341
    %1136 = vmatprep.subr.mxu0 %v338
    %1137 = vmatpush1.msra.mxu0 %v337
    %1138 = vmatprep.subr.mxu0 %v334
    %1139 = vmatpush1.msra.mxu0 %v333
    %1140 = vmatprep.subr.mxu0 %v330
    %1141 = vmatpush1.msra.mxu0 %v329
    %1142 = vmatprep.subr.mxu0 %v326
    %1143 = vmatpush1.msra.mxu0 %v325
    %1144 = vmatprep.subr.mxu0 %v322
    %1145 = vmatpush1.msra.mxu0 %v321
    %1146 = vmatprep.subr.mxu0 %v318
    %1147 = vmatpush1.msra.mxu0 %v317
    %1148 = vmatprep.subr.mxu0 %v314
    %1149 = vmatpush1.msra.mxu0 %v313
    %1150 = vmatprep.subr.mxu0 %v310
    %1151 = vmatpush1.msra.mxu0 %v309
    %1152 = vmatprep.subr.mxu0 %v306
    %1153 = vmatpush1.msra.mxu0 %v305
    %1154 = vmatprep.subr.mxu0 %v302
    %1155 = vmatpush1.msra.mxu0 %v301
    %1156 = vmatprep.subr.mxu0 %v298
    %1157 = vmatpush1.msra.mxu0 %v297
    %1158 = vmatprep.subr.mxu0 0.0
    %1159 = vmatpush2.msra.mxu0 0.0
    %1160 = vmatprep.subr.mxu0 0.0
    %1161 = vmatpush2.msra.mxu0 0.0
    %1162 = vmatprep.subr.mxu0 0.0
    %1163 = vmatpush2.msra.mxu0 0.0
    %1164 = vmatprep.subr.mxu0 0.0
    %1165 = vmatpush2.msra.mxu0 0.0
    %1166 = vmatprep.subr.mxu0 0.0
    %1167 = vmatpush2.msra.mxu0 0.0
    %1168 = vmatprep.subr.mxu0 0.0
    %1169 = vmatpush2.msra.mxu0 0.0
    %1170 = vmatprep.subr.mxu0 0.0
    %1171 = vmatpush2.msra.mxu0 0.0
    %1172 = vmatprep.subr.mxu0 0.0
    %1173 = vmatpush2.msra.mxu0 0.0
    %1174 = vmatprep.subr.mxu0 0.0
    %1175 = vmatpush2.msra.mxu0 0.0
    %1176 = vmatprep.subr.mxu0 0.0
    %1177 = vmatpush2.msra.mxu0 0.0
    %1178 = vmatprep.subr.mxu0 0.0
    %1179 = vmatpush2.msra.mxu0 0.0
    %1180 = vmatprep.subr.mxu0 0.0
    %1181 = vmatpush2.msra.mxu0 0.0
    %1182 = vmatprep.subr.mxu0 0.0
    %1183 = vmatpush2.msra.mxu0 0.0
    %1184 = vmatprep.subr.mxu0 0.0
    %1185 = vmatpush2.msra.mxu0 0.0
    %1186 = vmatprep.subr.mxu0 0.0
    %1187 = vmatpush2.msra.mxu0 0.0
    %1188 = vmatprep.subr.mxu0 0.0
    %1189 = vmatpush2.msra.mxu0 0.0
    %1190 = vmatprep.mubr.f32.mxu0 0.0
    %1191 = vmatmul.mubr.f32.gmra.mxu0 %v1053
    %v1192 = vpop.f32.mrf.mxu0
    %v1193 = vadd.f32 0.0, %v1192
    %v1194 = vpop.f32.mrf.mxu0
    %v1195 = vadd.f32 0.0, %v1194
    %1196 = vdwg.mxu0
    %v1201 = vrot.slane %v1122, 4
    %v1202 = vrot.slane %v1124, 4
    %v1203 = vrot.slane %v1193, 4
    %v1204 = vrot.slane %v1195, 4
    %v1209 = vadd.f32 %v198, %v1201
    %v1210 = vadd.f32 %v200, %v1202
    %v1211 = vadd.f32 %v275, %v1203
    %v1212 = vadd.f32 %v277, %v1204
    %v1213 = vxor.u32 %v1209, 2147483648
    %v1214 = vxor.u32 %v1210, 2147483648
    %v1215 = vxor.u32 %v1211, 2147483648
    %v1216 = vxor.u32 %v1212, 2147483648
    %v1217 = vmul.f32 %v1213, 1.442695
    %v1218 = vpow.pop %v1217
    %v1219 = vmul.f32 %v1214, 1.442695
    %v1220 = vpow.pop %v1219
    %v1221 = vmul.f32 %v1215, 1.442695
    %v1222 = vpow.pop %v1221
    %v1223 = vmul.f32 %v1216, 1.442695
    %v1224 = vpow.pop %v1223
    %v1225 = vadd.f32 %v1218, 1.0
    %v1226 = vadd.f32 %v1220, 1.0
    %v1227 = vadd.f32 %v1222, 1.0
    %v1228 = vadd.f32 %v1224, 1.0
    %v1229 = vrcp.pop %v1225
    %v1230 = vmul.f32 1.0, %v1229
    %v1231 = vrcp.pop %v1226
    %v1232 = vmul.f32 1.0, %v1231
    %v1233 = vrcp.pop %v1227
    %v1234 = vmul.f32 1.0, %v1233
    %v1235 = vrcp.pop %v1228
    %v1236 = vmul.f32 1.0, %v1235
    %v1237 = vmul.f32 %v1234, 2.0
    %v1238 = vsub.f32 %v1237, 1.0
    %v1240 = vrot.slane %v725, 6
    %v1242 = vmul.f32 %v1232, %v1240
    %v1243 = vmul.f32 %v1230, %v1238
    %v1244 = vadd.f32 %v1242, %v1243
    %v1245 = vtanh.pop %v1244
    %v1246 = vmul.f32 %v1236, %v1245
    %v1248 = vrot.slane %v1051, 6
    %v1249 = vrot.slane %v1248, 2
    %1251 = vmatprep.subr.mxu0 %v789
    %1252 = vmatpush1.msra.mxu0 %v788
    %1253 = vmatprep.subr.mxu0 %v785
    %1254 = vmatpush1.msra.mxu0 %v784
    %1255 = vmatprep.subr.mxu0 %v781
    %1256 = vmatpush1.msra.mxu0 %v780
    %1257 = vmatprep.subr.mxu0 %v777
    %1258 = vmatpush1.msra.mxu0 %v776
    %1259 = vmatprep.subr.mxu0 %v773
    %1260 = vmatpush1.msra.mxu0 %v772
    %1261 = vmatprep.subr.mxu0 %v769
    %1262 = vmatpush1.msra.mxu0 %v768
    %1263 = vmatprep.subr.mxu0 %v765
    %1264 = vmatpush1.msra.mxu0 %v764
    %1265 = vmatprep.subr.mxu0 %v761
    %1266 = vmatpush1.msra.mxu0 %v760
    %1267 = vmatprep.subr.mxu0 %v757
    %1268 = vmatpush1.msra.mxu0 %v756
    %1269 = vmatprep.subr.mxu0 %v753
    %1270 = vmatpush1.msra.mxu0 %v752
    %1271 = vmatprep.subr.mxu0 %v749
    %1272 = vmatpush1.msra.mxu0 %v748
    %1273 = vmatprep.subr.mxu0 %v745
    %1274 = vmatpush1.msra.mxu0 %v744
    %1275 = vmatprep.subr.mxu0 %v741
    %1276 = vmatpush1.msra.mxu0 %v740
    %1277 = vmatprep.subr.mxu0 %v737
    %1278 = vmatpush1.msra.mxu0 %v736
    %1279 = vmatprep.subr.mxu0 %v733
    %1280 = vmatpush1.msra.mxu0 %v732
    %1281 = vmatprep.subr.mxu0 %v729
    %1282 = vmatpush1.msra.mxu0 %v728
    %1283 = vmatprep.subr.mxu0 %v853
    %1284 = vmatpush2.msra.mxu0 %v852
    %1285 = vmatprep.subr.mxu0 %v849
    %1286 = vmatpush2.msra.mxu0 %v848
    %1287 = vmatprep.subr.mxu0 %v845
    %1288 = vmatpush2.msra.mxu0 %v844
    %1289 = vmatprep.subr.mxu0 %v841
    %1290 = vmatpush2.msra.mxu0 %v840
    %1291 = vmatprep.subr.mxu0 %v837
    %1292 = vmatpush2.msra.mxu0 %v836
    %1293 = vmatprep.subr.mxu0 %v833
    %1294 = vmatpush2.msra.mxu0 %v832
    %1295 = vmatprep.subr.mxu0 %v829
    %1296 = vmatpush2.msra.mxu0 %v828
    %1297 = vmatprep.subr.mxu0 %v825
    %1298 = vmatpush2.msra.mxu0 %v824
    %1299 = vmatprep.subr.mxu0 %v821
    %1300 = vmatpush2.msra.mxu0 %v820
    %1301 = vmatprep.subr.mxu0 %v817
    %1302 = vmatpush2.msra.mxu0 %v816
    %1303 = vmatprep.subr.mxu0 %v813
    %1304 = vmatpush2.msra.mxu0 %v812
    %1305 = vmatprep.subr.mxu0 %v809
    %1306 = vmatpush2.msra.mxu0 %v808
    %1307 = vmatprep.subr.mxu0 %v805
    %1308 = vmatpush2.msra.mxu0 %v804
    %1309 = vmatprep.subr.mxu0 %v801
    %1310 = vmatpush2.msra.mxu0 %v800
    %1311 = vmatprep.subr.mxu0 %v797
    %1312 = vmatpush2.msra.mxu0 %v796
    %1313 = vmatprep.subr.mxu0 %v793
    %1314 = vmatpush2.msra.mxu0 %v792
    %1315 = vmatprep.mubr.f32.mxu0 %v1249
    %1316 = vmatmul.mubr.f32.gmra.mxu0 %v1053
    %v1317 = vpop.f32.mrf.mxu0
    %v1318 = vadd.f32 %v862, %v1317
    %v1319 = vpop.f32.mrf.mxu0
    %v1320 = vadd.f32 %v866, %v1319
    %1321 = vdwg.mxu0
    %1322 = vmatprep.subr.mxu0 %v791
    %1323 = vmatpush1.msra.mxu0 %v790
    %1324 = vmatprep.subr.mxu0 %v787
    %1325 = vmatpush1.msra.mxu0 %v786
    %1326 = vmatprep.subr.mxu0 %v783
    %1327 = vmatpush1.msra.mxu0 %v782
    %1328 = vmatprep.subr.mxu0 %v779
    %1329 = vmatpush1.msra.mxu0 %v778
    %1330 = vmatprep.subr.mxu0 %v775
    %1331 = vmatpush1.msra.mxu0 %v774
    %1332 = vmatprep.subr.mxu0 %v771
    %1333 = vmatpush1.msra.mxu0 %v770
    %1334 = vmatprep.subr.mxu0 %v767
    %1335 = vmatpush1.msra.mxu0 %v766
    %1336 = vmatprep.subr.mxu0 %v763
    %1337 = vmatpush1.msra.mxu0 %v762
    %1338 = vmatprep.subr.mxu0 %v759
    %1339 = vmatpush1.msra.mxu0 %v758
    %1340 = vmatprep.subr.mxu0 %v755
    %1341 = vmatpush1.msra.mxu0 %v754
    %1342 = vmatprep.subr.mxu0 %v751
    %1343 = vmatpush1.msra.mxu0 %v750
    %1344 = vmatprep.subr.mxu0 %v747
    %1345 = vmatpush1.msra.mxu0 %v746
    %1346 = vmatprep.subr.mxu0 %v743
    %1347 = vmatpush1.msra.mxu0 %v742
    %1348 = vmatprep.subr.mxu0 %v739
    %1349 = vmatpush1.msra.mxu0 %v738
    %1350 = vmatprep.subr.mxu0 %v735
    %1351 = vmatpush1.msra.mxu0 %v734
    %1352 = vmatprep.subr.mxu0 %v731
    %1353 = vmatpush1.msra.mxu0 %v730
    %1354 = vmatprep.subr.mxu0 %v855
    %1355 = vmatpush2.msra.mxu0 %v854
    %1356 = vmatprep.subr.mxu0 %v851
    %1357 = vmatpush2.msra.mxu0 %v850
    %1358 = vmatprep.subr.mxu0 %v847
    %1359 = vmatpush2.msra.mxu0 %v846
    %1360 = vmatprep.subr.mxu0 %v843
    %1361 = vmatpush2.msra.mxu0 %v842
    %1362 = vmatprep.subr.mxu0 %v839
    %1363 = vmatpush2.msra.mxu0 %v838
    %1364 = vmatprep.subr.mxu0 %v835
    %1365 = vmatpush2.msra.mxu0 %v834
    %1366 = vmatprep.subr.mxu0 %v831
    %1367 = vmatpush2.msra.mxu0 %v830
    %1368 = vmatprep.subr.mxu0 %v827
    %1369 = vmatpush2.msra.mxu0 %v826
    %1370 = vmatprep.subr.mxu0 %v823
    %1371 = vmatpush2.msra.mxu0 %v822
    %1372 = vmatprep.subr.mxu0 %v819
    %1373 = vmatpush2.msra.mxu0 %v818
    %1374 = vmatprep.subr.mxu0 %v815
    %1375 = vmatpush2.msra.mxu0 %v814
    %1376 = vmatprep.subr.mxu0 %v811
    %1377 = vmatpush2.msra.mxu0 %v810
    %1378 = vmatprep.subr.mxu0 %v807
    %1379 = vmatpush2.msra.mxu0 %v806
    %1380 = vmatprep.subr.mxu0 %v803
    %1381 = vmatpush2.msra.mxu0 %v802
    %1382 = vmatprep.subr.mxu0 %v799
    %1383 = vmatpush2.msra.mxu0 %v798
    %1384 = vmatprep.subr.mxu0 %v795
    %1385 = vmatpush2.msra.mxu0 %v794
    %1386 = vmatprep.mubr.f32.mxu0 %v1249
    %1387 = vmatmul.mubr.f32.gmra.mxu0 %v1053
    %v1388 = vpop.f32.mrf.mxu0
    %v1389 = vadd.f32 %v870, %v1388
    %v1390 = vpop.f32.mrf.mxu0
    %v1391 = vadd.f32 %v874, %v1390
    %1392 = vdwg.mxu0
    %v1393 = vxor.u32 %v1318, 2147483648
    %v1394 = vxor.u32 %v1320, 2147483648
    %v1395 = vxor.u32 %v1389, 2147483648
    %v1396 = vxor.u32 %v1391, 2147483648
    %v1397 = vmul.f32 %v1393, 1.442695
    %v1398 = vpow.pop %v1397
    %v1399 = vmul.f32 %v1394, 1.442695
    %v1400 = vpow.pop %v1399
    %v1401 = vmul.f32 %v1395, 1.442695
    %v1402 = vpow.pop %v1401
    %v1403 = vmul.f32 %v1396, 1.442695
    %v1404 = vpow.pop %v1403
    %v1405 = vadd.f32 %v1398, 1.0
    %v1406 = vadd.f32 %v1400, 1.0
    %v1407 = vadd.f32 %v1402, 1.0
    %v1408 = vadd.f32 %v1404, 1.0
    %v1409 = vrcp.pop %v1405
    %v1410 = vmul.f32 1.0, %v1409
    %v1411 = vrcp.pop %v1406
    %v1412 = vmul.f32 1.0, %v1411
    %v1413 = vrcp.pop %v1407
    %v1414 = vmul.f32 1.0, %v1413
    %v1415 = vrcp.pop %v1408
    %v1416 = vmul.f32 1.0, %v1415
    %v1417 = vmul.f32 %v1414, 2.0
    %v1418 = vsub.f32 %v1417, 1.0
    %v1419 = vmul.f32 %v1412, %v1049
    %v1420 = vmul.f32 %v1410, %v1418
    %v1421 = vadd.f32 %v1419, %v1420
    %v1422 = vtanh.pop %v1421
    %v1423 = vmul.f32 %v1416, %v1422
    %s1424 = scalar_lea.vmem [#allocation5], 1024
    %v1425 = vld [vmem:[%s1424] sm:$0xff]
    %v1426 = vld [vmem:[%s1424 + $0x8] sm:$0xff]
    %v1427 = vld [vmem:[%s1424 + $0x10] sm:$0xff]
    %v1428 = vld [vmem:[%s1424 + $0x18] sm:$0xff]
    %v1429 = vld [vmem:[%s1424 + $0x20] sm:$0xff]
    %v1430 = vld [vmem:[%s1424 + $0x28] sm:$0xff]
    %v1431 = vld [vmem:[%s1424 + $0x30] sm:$0xff]
    %v1432 = vld [vmem:[%s1424 + $0x38] sm:$0xff]
    %v1433 = vld [vmem:[%s1424 + $0x40] sm:$0xff]
    %v1434 = vld [vmem:[%s1424 + $0x48] sm:$0xff]
    %v1435 = vld [vmem:[%s1424 + $0x50] sm:$0xff]
    %v1436 = vld [vmem:[%s1424 + $0x58] sm:$0xff]
    %v1437 = vld [vmem:[%s1424 + $0x60] sm:$0xff]
    %v1438 = vld [vmem:[%s1424 + $0x68] sm:$0xff]
    %v1439 = vld [vmem:[%s1424 + $0x70] sm:$0xff]
    %v1440 = vld [vmem:[%s1424 + $0x78] sm:$0xff]
    %v1441 = vld [vmem:[%s1424 + $0x80] sm:$0xff]
    %v1442 = vld [vmem:[%s1424 + $0x88] sm:$0xff]
    %v1443 = vld [vmem:[%s1424 + $0x90] sm:$0xff]
    %v1444 = vld [vmem:[%s1424 + $0x98] sm:$0xff]
    %v1445 = vld [vmem:[%s1424 + $0xa0] sm:$0xff]
    %v1446 = vld [vmem:[%s1424 + $0xa8] sm:$0xff]
    %v1447 = vld [vmem:[%s1424 + $0xb0] sm:$0xff]
    %v1448 = vld [vmem:[%s1424 + $0xb8] sm:$0xff]
    %v1449 = vld [vmem:[%s1424 + $0xc0] sm:$0xff]
    %v1450 = vld [vmem:[%s1424 + $0xc8] sm:$0xff]
    %v1451 = vld [vmem:[%s1424 + $0xd0] sm:$0xff]
    %v1452 = vld [vmem:[%s1424 + $0xd8] sm:$0xff]
    %v1453 = vld [vmem:[%s1424 + $0xe0] sm:$0xff]
    %v1454 = vld [vmem:[%s1424 + $0xe8] sm:$0xff]
    %v1455 = vld [vmem:[%s1424 + $0xf0] sm:$0xff]
    %v1456 = vld [vmem:[%s1424 + $0xf8] sm:$0xff]
    %v1457 = vld [vmem:[%s1424 + $0x100] sm:$0xff]
    %v1458 = vld [vmem:[%s1424 + $0x108] sm:$0xff]
    %v1459 = vld [vmem:[%s1424 + $0x110] sm:$0xff]
    %v1460 = vld [vmem:[%s1424 + $0x118] sm:$0xff]
    %v1461 = vld [vmem:[%s1424 + $0x120] sm:$0xff]
    %v1462 = vld [vmem:[%s1424 + $0x128] sm:$0xff]
    %v1463 = vld [vmem:[%s1424 + $0x130] sm:$0xff]
    %v1464 = vld [vmem:[%s1424 + $0x138] sm:$0xff]
    %v1465 = vld [vmem:[%s1424 + $0x140] sm:$0xff]
    %v1466 = vld [vmem:[%s1424 + $0x148] sm:$0xff]
    %v1467 = vld [vmem:[%s1424 + $0x150] sm:$0xff]
    %v1468 = vld [vmem:[%s1424 + $0x158] sm:$0xff]
    %v1469 = vld [vmem:[%s1424 + $0x160] sm:$0xff]
    %v1470 = vld [vmem:[%s1424 + $0x168] sm:$0xff]
    %v1471 = vld [vmem:[%s1424 + $0x170] sm:$0xff]
    %v1472 = vld [vmem:[%s1424 + $0x178] sm:$0xff]
    %v1473 = vld [vmem:[%s1424 + $0x180] sm:$0xff]
    %v1474 = vld [vmem:[%s1424 + $0x188] sm:$0xff]
    %v1475 = vld [vmem:[%s1424 + $0x190] sm:$0xff]
    %v1476 = vld [vmem:[%s1424 + $0x198] sm:$0xff]
    %v1477 = vld [vmem:[%s1424 + $0x1a0] sm:$0xff]
    %v1478 = vld [vmem:[%s1424 + $0x1a8] sm:$0xff]
    %v1479 = vld [vmem:[%s1424 + $0x1b0] sm:$0xff]
    %v1480 = vld [vmem:[%s1424 + $0x1b8] sm:$0xff]
    %v1481 = vld [vmem:[%s1424 + $0x1c0] sm:$0xff]
    %v1482 = vld [vmem:[%s1424 + $0x1c8] sm:$0xff]
    %v1483 = vld [vmem:[%s1424 + $0x1d0] sm:$0xff]
    %v1484 = vld [vmem:[%s1424 + $0x1d8] sm:$0xff]
    %v1485 = vld [vmem:[%s1424 + $0x1e0] sm:$0xff]
    %v1486 = vld [vmem:[%s1424 + $0x1e8] sm:$0xff]
    %v1487 = vld [vmem:[%s1424 + $0x1f0] sm:$0xff]
    %v1488 = vld [vmem:[%s1424 + $0x1f8] sm:$0xff]
    %v1489 = vld [vmem:[%s1424 + $0x200] sm:$0xff]
    %v1490 = vld [vmem:[%s1424 + $0x208] sm:$0xff]
    %v1491 = vld [vmem:[%s1424 + $0x210] sm:$0xff]
    %v1492 = vld [vmem:[%s1424 + $0x218] sm:$0xff]
    %v1493 = vld [vmem:[%s1424 + $0x220] sm:$0xff]
    %v1494 = vld [vmem:[%s1424 + $0x228] sm:$0xff]
    %v1495 = vld [vmem:[%s1424 + $0x230] sm:$0xff]
    %v1496 = vld [vmem:[%s1424 + $0x238] sm:$0xff]
    %v1497 = vld [vmem:[%s1424 + $0x240] sm:$0xff]
    %v1498 = vld [vmem:[%s1424 + $0x248] sm:$0xff]
    %v1499 = vld [vmem:[%s1424 + $0x250] sm:$0xff]
    %v1500 = vld [vmem:[%s1424 + $0x258] sm:$0xff]
    %v1501 = vld [vmem:[%s1424 + $0x260] sm:$0xff]
    %v1502 = vld [vmem:[%s1424 + $0x268] sm:$0xff]
    %v1503 = vld [vmem:[%s1424 + $0x270] sm:$0xff]
    %v1504 = vld [vmem:[%s1424 + $0x278] sm:$0xff]
    %v1505 = vld [vmem:[%s1424 + $0x280] sm:$0xff]
    %v1506 = vld [vmem:[%s1424 + $0x288] sm:$0xff]
    %v1507 = vld [vmem:[%s1424 + $0x290] sm:$0xff]
    %v1508 = vld [vmem:[%s1424 + $0x298] sm:$0xff]
    %v1509 = vld [vmem:[%s1424 + $0x2a0] sm:$0xff]
    %v1510 = vld [vmem:[%s1424 + $0x2a8] sm:$0xff]
    %v1511 = vld [vmem:[%s1424 + $0x2b0] sm:$0xff]
    %v1512 = vld [vmem:[%s1424 + $0x2b8] sm:$0xff]
    %v1513 = vld [vmem:[%s1424 + $0x2c0] sm:$0xff]
    %v1514 = vld [vmem:[%s1424 + $0x2c8] sm:$0xff]
    %v1515 = vld [vmem:[%s1424 + $0x2d0] sm:$0xff]
    %v1516 = vld [vmem:[%s1424 + $0x2d8] sm:$0xff]
    %v1517 = vld [vmem:[%s1424 + $0x2e0] sm:$0xff]
    %v1518 = vld [vmem:[%s1424 + $0x2e8] sm:$0xff]
    %v1519 = vld [vmem:[%s1424 + $0x2f0] sm:$0xff]
    %v1520 = vld [vmem:[%s1424 + $0x2f8] sm:$0xff]
    %v1521 = vld [vmem:[%s1424 + $0x300] sm:$0xff]
    %v1522 = vld [vmem:[%s1424 + $0x308] sm:$0xff]
    %v1523 = vld [vmem:[%s1424 + $0x310] sm:$0xff]
    %v1524 = vld [vmem:[%s1424 + $0x318] sm:$0xff]
    %v1525 = vld [vmem:[%s1424 + $0x320] sm:$0xff]
    %v1526 = vld [vmem:[%s1424 + $0x328] sm:$0xff]
    %v1527 = vld [vmem:[%s1424 + $0x330] sm:$0xff]
    %v1528 = vld [vmem:[%s1424 + $0x338] sm:$0xff]
    %v1529 = vld [vmem:[%s1424 + $0x340] sm:$0xff]
    %v1530 = vld [vmem:[%s1424 + $0x348] sm:$0xff]
    %v1531 = vld [vmem:[%s1424 + $0x350] sm:$0xff]
    %v1532 = vld [vmem:[%s1424 + $0x358] sm:$0xff]
    %v1533 = vld [vmem:[%s1424 + $0x360] sm:$0xff]
    %v1534 = vld [vmem:[%s1424 + $0x368] sm:$0xff]
    %v1535 = vld [vmem:[%s1424 + $0x370] sm:$0xff]
    %v1536 = vld [vmem:[%s1424 + $0x378] sm:$0xff]
    %v1537 = vld [vmem:[%s1424 + $0x380] sm:$0xff]
    %v1538 = vld [vmem:[%s1424 + $0x388] sm:$0xff]
    %v1539 = vld [vmem:[%s1424 + $0x390] sm:$0xff]
    %v1540 = vld [vmem:[%s1424 + $0x398] sm:$0xff]
    %v1541 = vld [vmem:[%s1424 + $0x3a0] sm:$0xff]
    %v1542 = vld [vmem:[%s1424 + $0x3a8] sm:$0xff]
    %v1543 = vld [vmem:[%s1424 + $0x3b0] sm:$0xff]
    %v1544 = vld [vmem:[%s1424 + $0x3b8] sm:$0xff]
    %v1545 = vld [vmem:[%s1424 + $0x3c0] sm:$0xff]
    %v1546 = vld [vmem:[%s1424 + $0x3c8] sm:$0xff]
    %v1547 = vld [vmem:[%s1424 + $0x3d0] sm:$0xff]
    %v1548 = vld [vmem:[%s1424 + $0x3d8] sm:$0xff]
    %v1549 = vld [vmem:[%s1424 + $0x3e0] sm:$0xff]
    %v1550 = vld [vmem:[%s1424 + $0x3e8] sm:$0xff]
    %v1551 = vld [vmem:[%s1424 + $0x3f0] sm:$0xff]
    %v1552 = vld [vmem:[%s1424 + $0x3f8] sm:$0xff]
    %s1553 = scalar_lea.vmem [#allocation7], 8
    %v1554 = vld [vmem:[%s1553] sm:$0xf]
    %v1556 = vlaneseq
    %v1557 = vshrl.u32 %v1556, 7
    %v1558 = vsub.s32 0, %v1557
    %v1559 = vrot.slane %v1554, %v1558
    %v1560 = vlaneseq
    %v1561 = vshrl.u32 %v1560, 7
    %v1562 = vsub.s32 1, %v1561
    %v1563 = vrot.slane %v1554, %v1562
    %v1564 = vlaneseq
    %v1565 = vshrl.u32 %v1564, 7
    %v1566 = vsub.s32 2, %v1565
    %v1567 = vrot.slane %v1554, %v1566
    %v1568 = vlaneseq
    %v1569 = vshrl.u32 %v1568, 7
    %v1570 = vsub.s32 3, %v1569
    %v1571 = vrot.slane %v1554, %v1570
    %1576 = vmatprep.subr.mxu0 %v1486
    %1577 = vmatpush1.msra.mxu0 %v1485
    %1578 = vmatprep.subr.mxu0 %v1482
    %1579 = vmatpush1.msra.mxu0 %v1481
    %1580 = vmatprep.subr.mxu0 %v1478
    %1581 = vmatpush1.msra.mxu0 %v1477
    %1582 = vmatprep.subr.mxu0 %v1474
    %1583 = vmatpush1.msra.mxu0 %v1473
    %1584 = vmatprep.subr.mxu0 %v1470
    %1585 = vmatpush1.msra.mxu0 %v1469
    %1586 = vmatprep.subr.mxu0 %v1466
    %1587 = vmatpush1.msra.mxu0 %v1465
    %1588 = vmatprep.subr.mxu0 %v1462
    %1589 = vmatpush1.msra.mxu0 %v1461
    %1590 = vmatprep.subr.mxu0 %v1458
    %1591 = vmatpush1.msra.mxu0 %v1457
    %1592 = vmatprep.subr.mxu0 %v1454
    %1593 = vmatpush1.msra.mxu0 %v1453
    %1594 = vmatprep.subr.mxu0 %v1450
    %1595 = vmatpush1.msra.mxu0 %v1449
    %1596 = vmatprep.subr.mxu0 %v1446
    %1597 = vmatpush1.msra.mxu0 %v1445
    %1598 = vmatprep.subr.mxu0 %v1442
    %1599 = vmatpush1.msra.mxu0 %v1441
    %1600 = vmatprep.subr.mxu0 %v1438
    %1601 = vmatpush1.msra.mxu0 %v1437
    %1602 = vmatprep.subr.mxu0 %v1434
    %1603 = vmatpush1.msra.mxu0 %v1433
    %1604 = vmatprep.subr.mxu0 %v1430
    %1605 = vmatpush1.msra.mxu0 %v1429
    %1606 = vmatprep.subr.mxu0 %v1426
    %1607 = vmatpush1.msra.mxu0 %v1425
    %1608 = vmatprep.subr.mxu0 %v1550
    %1609 = vmatpush2.msra.mxu0 %v1549
    %1610 = vmatprep.subr.mxu0 %v1546
    %1611 = vmatpush2.msra.mxu0 %v1545
    %1612 = vmatprep.subr.mxu0 %v1542
    %1613 = vmatpush2.msra.mxu0 %v1541
    %1614 = vmatprep.subr.mxu0 %v1538
    %1615 = vmatpush2.msra.mxu0 %v1537
    %1616 = vmatprep.subr.mxu0 %v1534
    %1617 = vmatpush2.msra.mxu0 %v1533
    %1618 = vmatprep.subr.mxu0 %v1530
    %1619 = vmatpush2.msra.mxu0 %v1529
    %1620 = vmatprep.subr.mxu0 %v1526
    %1621 = vmatpush2.msra.mxu0 %v1525
    %1622 = vmatprep.subr.mxu0 %v1522
    %1623 = vmatpush2.msra.mxu0 %v1521
    %1624 = vmatprep.subr.mxu0 %v1518
    %1625 = vmatpush2.msra.mxu0 %v1517
    %1626 = vmatprep.subr.mxu0 %v1514
    %1627 = vmatpush2.msra.mxu0 %v1513
    %1628 = vmatprep.subr.mxu0 %v1510
    %1629 = vmatpush2.msra.mxu0 %v1509
    %1630 = vmatprep.subr.mxu0 %v1506
    %1631 = vmatpush2.msra.mxu0 %v1505
    %1632 = vmatprep.subr.mxu0 %v1502
    %1633 = vmatpush2.msra.mxu0 %v1501
    %1634 = vmatprep.subr.mxu0 %v1498
    %1635 = vmatpush2.msra.mxu0 %v1497
    %1636 = vmatprep.subr.mxu0 %v1494
    %1637 = vmatpush2.msra.mxu0 %v1493
    %1638 = vmatprep.subr.mxu0 %v1490
    %1639 = vmatpush2.msra.mxu0 %v1489
    %1640 = vmatprep.mubr.f32.mxu0 %v289
    %1641 = vmatmul.mubr.f32.gmra.mxu0 %v1051
    %v1642 = vpop.f32.mrf.mxu0
    %v1643 = vadd.f32 %v1559, %v1642
    %v1644 = vpop.f32.mrf.mxu0
    %v1645 = vadd.f32 %v1563, %v1644
    %1646 = vdwg.mxu0
    %1647 = vmatprep.subr.mxu0 %v1488
    %1648 = vmatpush1.msra.mxu0 %v1487
    %1649 = vmatprep.subr.mxu0 %v1484
    %1650 = vmatpush1.msra.mxu0 %v1483
    %1651 = vmatprep.subr.mxu0 %v1480
    %1652 = vmatpush1.msra.mxu0 %v1479
    %1653 = vmatprep.subr.mxu0 %v1476
    %1654 = vmatpush1.msra.mxu0 %v1475
    %1655 = vmatprep.subr.mxu0 %v1472
    %1656 = vmatpush1.msra.mxu0 %v1471
    %1657 = vmatprep.subr.mxu0 %v1468
    %1658 = vmatpush1.msra.mxu0 %v1467
    %1659 = vmatprep.subr.mxu0 %v1464
    %1660 = vmatpush1.msra.mxu0 %v1463
    %1661 = vmatprep.subr.mxu0 %v1460
    %1662 = vmatpush1.msra.mxu0 %v1459
    %1663 = vmatprep.subr.mxu0 %v1456
    %1664 = vmatpush1.msra.mxu0 %v1455
    %1665 = vmatprep.subr.mxu0 %v1452
    %1666 = vmatpush1.msra.mxu0 %v1451
    %1667 = vmatprep.subr.mxu0 %v1448
    %1668 = vmatpush1.msra.mxu0 %v1447
    %1669 = vmatprep.subr.mxu0 %v1444
    %1670 = vmatpush1.msra.mxu0 %v1443
    %1671 = vmatprep.subr.mxu0 %v1440
    %1672 = vmatpush1.msra.mxu0 %v1439
    %1673 = vmatprep.subr.mxu0 %v1436
    %1674 = vmatpush1.msra.mxu0 %v1435
    %1675 = vmatprep.subr.mxu0 %v1432
    %1676 = vmatpush1.msra.mxu0 %v1431
    %1677 = vmatprep.subr.mxu0 %v1428
    %1678 = vmatpush1.msra.mxu0 %v1427
    %1679 = vmatprep.subr.mxu0 %v1552
    %1680 = vmatpush2.msra.mxu0 %v1551
    %1681 = vmatprep.subr.mxu0 %v1548
    %1682 = vmatpush2.msra.mxu0 %v1547
    %1683 = vmatprep.subr.mxu0 %v1544
    %1684 = vmatpush2.msra.mxu0 %v1543
    %1685 = vmatprep.subr.mxu0 %v1540
    %1686 = vmatpush2.msra.mxu0 %v1539
    %1687 = vmatprep.subr.mxu0 %v1536
    %1688 = vmatpush2.msra.mxu0 %v1535
    %1689 = vmatprep.subr.mxu0 %v1532
    %1690 = vmatpush2.msra.mxu0 %v1531
    %1691 = vmatprep.subr.mxu0 %v1528
    %1692 = vmatpush2.msra.mxu0 %v1527
    %1693 = vmatprep.subr.mxu0 %v1524
    %1694 = vmatpush2.msra.mxu0 %v1523
    %1695 = vmatprep.subr.mxu0 %v1520
    %1696 = vmatpush2.msra.mxu0 %v1519
    %1697 = vmatprep.subr.mxu0 %v1516
    %1698 = vmatpush2.msra.mxu0 %v1515
    %1699 = vmatprep.subr.mxu0 %v1512
    %1700 = vmatpush2.msra.mxu0 %v1511
    %1701 = vmatprep.subr.mxu0 %v1508
    %1702 = vmatpush2.msra.mxu0 %v1507
    %1703 = vmatprep.subr.mxu0 %v1504
    %1704 = vmatpush2.msra.mxu0 %v1503
    %1705 = vmatprep.subr.mxu0 %v1500
    %1706 = vmatpush2.msra.mxu0 %v1499
    %1707 = vmatprep.subr.mxu0 %v1496
    %1708 = vmatpush2.msra.mxu0 %v1495
    %1709 = vmatprep.subr.mxu0 %v1492
    %1710 = vmatpush2.msra.mxu0 %v1491
    %1711 = vmatprep.mubr.f32.mxu0 %v289
    %1712 = vmatmul.mubr.f32.gmra.mxu0 %v1051
    %v1713 = vpop.f32.mrf.mxu0
    %v1714 = vadd.f32 %v1567, %v1713
    %v1715 = vpop.f32.mrf.mxu0
    %v1716 = vadd.f32 %v1571, %v1715
    %1717 = vdwg.mxu0
    %v1718 = vxor.u32 %v1643, 2147483648
    %v1719 = vxor.u32 %v1645, 2147483648
    %v1720 = vxor.u32 %v1714, 2147483648
    %v1721 = vxor.u32 %v1716, 2147483648
    %v1722 = vmul.f32 %v1718, 1.442695
    %v1723 = vpow.pop %v1722
    %v1724 = vmul.f32 %v1719, 1.442695
    %v1725 = vpow.pop %v1724
    %v1726 = vmul.f32 %v1720, 1.442695
    %v1727 = vpow.pop %v1726
    %v1728 = vmul.f32 %v1721, 1.442695
    %v1729 = vpow.pop %v1728
    %v1730 = vadd.f32 %v1723, 1.0
    %v1731 = vadd.f32 %v1725, 1.0
    %v1732 = vadd.f32 %v1727, 1.0
    %v1733 = vadd.f32 %v1729, 1.0
    %v1734 = vrcp.pop %v1730
    %v1735 = vmul.f32 1.0, %v1734
    %v1736 = vrcp.pop %v1731
    %v1737 = vmul.f32 1.0, %v1736
    %v1738 = vrcp.pop %v1732
    %v1739 = vmul.f32 1.0, %v1738
    %v1740 = vrcp.pop %v1733
    %v1741 = vmul.f32 1.0, %v1740
    %v1742 = vmul.f32 %v1739, 2.0
    %v1743 = vsub.f32 %v1742, 1.0
    %v1744 = vmul.f32 %v1737, %v294
    %v1745 = vmul.f32 %v1735, %v1743
    %v1746 = vadd.f32 %v1744, %v1745
    %v1747 = vtanh.pop %v1746
    %v1748 = vmul.f32 %v1741, %v1747
    %v1750 = vrot.slane %v1246, 4
    %1752 = vmatprep.subr.mxu0 %v356
    %1753 = vmatpush1.msra.mxu0 %v355
    %1754 = vmatprep.subr.mxu0 %v352
    %1755 = vmatpush1.msra.mxu0 %v351
    %1756 = vmatprep.subr.mxu0 %v348
    %1757 = vmatpush1.msra.mxu0 %v347
    %1758 = vmatprep.subr.mxu0 %v344
    %1759 = vmatpush1.msra.mxu0 %v343
    %1760 = vmatprep.subr.mxu0 %v340
    %1761 = vmatpush1.msra.mxu0 %v339
    %1762 = vmatprep.subr.mxu0 %v336
    %1763 = vmatpush1.msra.mxu0 %v335
    %1764 = vmatprep.subr.mxu0 %v332
    %1765 = vmatpush1.msra.mxu0 %v331
    %1766 = vmatprep.subr.mxu0 %v328
    %1767 = vmatpush1.msra.mxu0 %v327
    %1768 = vmatprep.subr.mxu0 %v324
    %1769 = vmatpush1.msra.mxu0 %v323
    %1770 = vmatprep.subr.mxu0 %v320
    %1771 = vmatpush1.msra.mxu0 %v319
    %1772 = vmatprep.subr.mxu0 %v316
    %1773 = vmatpush1.msra.mxu0 %v315
    %1774 = vmatprep.subr.mxu0 %v312
    %1775 = vmatpush1.msra.mxu0 %v311
    %1776 = vmatprep.subr.mxu0 %v308
    %1777 = vmatpush1.msra.mxu0 %v307
    %1778 = vmatprep.subr.mxu0 %v304
    %1779 = vmatpush1.msra.mxu0 %v303
    %1780 = vmatprep.subr.mxu0 %v300
    %1781 = vmatpush1.msra.mxu0 %v299
    %1782 = vmatprep.subr.mxu0 %v296
    %1783 = vmatpush1.msra.mxu0 %v295
    %1784 = vmatprep.subr.mxu0 0.0
    %1785 = vmatpush2.msra.mxu0 0.0
    %1786 = vmatprep.subr.mxu0 0.0
    %1787 = vmatpush2.msra.mxu0 0.0
    %1788 = vmatprep.subr.mxu0 0.0
    %1789 = vmatpush2.msra.mxu0 0.0
    %1790 = vmatprep.subr.mxu0 0.0
    %1791 = vmatpush2.msra.mxu0 0.0
    %1792 = vmatprep.subr.mxu0 0.0
    %1793 = vmatpush2.msra.mxu0 0.0
    %1794 = vmatprep.subr.mxu0 0.0
    %1795 = vmatpush2.msra.mxu0 0.0
    %1796 = vmatprep.subr.mxu0 0.0
    %1797 = vmatpush2.msra.mxu0 0.0
    %1798 = vmatprep.subr.mxu0 0.0
    %1799 = vmatpush2.msra.mxu0 0.0
    %1800 = vmatprep.subr.mxu0 0.0
    %1801 = vmatpush2.msra.mxu0 0.0
    %1802 = vmatprep.subr.mxu0 0.0
    %1803 = vmatpush2.msra.mxu0 0.0
    %1804 = vmatprep.subr.mxu0 0.0
    %1805 = vmatpush2.msra.mxu0 0.0
    %1806 = vmatprep.subr.mxu0 0.0
    %1807 = vmatpush2.msra.mxu0 0.0
    %1808 = vmatprep.subr.mxu0 0.0
    %1809 = vmatpush2.msra.mxu0 0.0
    %1810 = vmatprep.subr.mxu0 0.0
    %1811 = vmatpush2.msra.mxu0 0.0
    %1812 = vmatprep.subr.mxu0 0.0
    %1813 = vmatpush2.msra.mxu0 0.0
    %1814 = vmatprep.subr.mxu0 0.0
    %1815 = vmatpush2.msra.mxu0 0.0
    %1816 = vmatprep.mubr.f32.mxu0 0.0
    %1817 = vmatmul.mubr.f32.gmra.mxu0 %v1750
    %v1818 = vpop.f32.mrf.mxu0
    %v1819 = vadd.f32 0.0, %v1818
    %v1820 = vpop.f32.mrf.mxu0
    %v1821 = vadd.f32 0.0, %v1820
    %1822 = vdwg.mxu0
    %1823 = vmatprep.subr.mxu0 %v358
    %1824 = vmatpush1.msra.mxu0 %v357
    %1825 = vmatprep.subr.mxu0 %v354
    %1826 = vmatpush1.msra.mxu0 %v353
    %1827 = vmatprep.subr.mxu0 %v350
    %1828 = vmatpush1.msra.mxu0 %v349
    %1829 = vmatprep.subr.mxu0 %v346
    %1830 = vmatpush1.msra.mxu0 %v345
    %1831 = vmatprep.subr.mxu0 %v342
    %1832 = vmatpush1.msra.mxu0 %v341
    %1833 = vmatprep.subr.mxu0 %v338
    %1834 = vmatpush1.msra.mxu0 %v337
    %1835 = vmatprep.subr.mxu0 %v334
    %1836 = vmatpush1.msra.mxu0 %v333
    %1837 = vmatprep.subr.mxu0 %v330
    %1838 = vmatpush1.msra.mxu0 %v329
    %1839 = vmatprep.subr.mxu0 %v326
    %1840 = vmatpush1.msra.mxu0 %v325
    %1841 = vmatprep.subr.mxu0 %v322
    %1842 = vmatpush1.msra.mxu0 %v321
    %1843 = vmatprep.subr.mxu0 %v318
    %1844 = vmatpush1.msra.mxu0 %v317
    %1845 = vmatprep.subr.mxu0 %v314
    %1846 = vmatpush1.msra.mxu0 %v313
    %1847 = vmatprep.subr.mxu0 %v310
    %1848 = vmatpush1.msra.mxu0 %v309
    %1849 = vmatprep.subr.mxu0 %v306
    %1850 = vmatpush1.msra.mxu0 %v305
    %1851 = vmatprep.subr.mxu0 %v302
    %1852 = vmatpush1.msra.mxu0 %v301
    %1853 = vmatprep.subr.mxu0 %v298
    %1854 = vmatpush1.msra.mxu0 %v297
    %1855 = vmatprep.subr.mxu0 0.0
    %1856 = vmatpush2.msra.mxu0 0.0
    %1857 = vmatprep.subr.mxu0 0.0
    %1858 = vmatpush2.msra.mxu0 0.0
    %1859 = vmatprep.subr.mxu0 0.0
    %1860 = vmatpush2.msra.mxu0 0.0
    %1861 = vmatprep.subr.mxu0 0.0
    %1862 = vmatpush2.msra.mxu0 0.0
    %1863 = vmatprep.subr.mxu0 0.0
    %1864 = vmatpush2.msra.mxu0 0.0
    %1865 = vmatprep.subr.mxu0 0.0
    %1866 = vmatpush2.msra.mxu0 0.0
    %1867 = vmatprep.subr.mxu0 0.0
    %1868 = vmatpush2.msra.mxu0 0.0
    %1869 = vmatprep.subr.mxu0 0.0
    %1870 = vmatpush2.msra.mxu0 0.0
    %1871 = vmatprep.subr.mxu0 0.0
    %1872 = vmatpush2.msra.mxu0 0.0
    %1873 = vmatprep.subr.mxu0 0.0
    %1874 = vmatpush2.msra.mxu0 0.0
    %1875 = vmatprep.subr.mxu0 0.0
    %1876 = vmatpush2.msra.mxu0 0.0
    %1877 = vmatprep.subr.mxu0 0.0
    %1878 = vmatpush2.msra.mxu0 0.0
    %1879 = vmatprep.subr.mxu0 0.0
    %1880 = vmatpush2.msra.mxu0 0.0
    %1881 = vmatprep.subr.mxu0 0.0
    %1882 = vmatpush2.msra.mxu0 0.0
    %1883 = vmatprep.subr.mxu0 0.0
    %1884 = vmatpush2.msra.mxu0 0.0
    %1885 = vmatprep.subr.mxu0 0.0
    %1886 = vmatpush2.msra.mxu0 0.0
    %1887 = vmatprep.mubr.f32.mxu0 0.0
    %1888 = vmatmul.mubr.f32.gmra.mxu0 %v1750
    %v1889 = vpop.f32.mrf.mxu0
    %v1890 = vadd.f32 0.0, %v1889
    %v1891 = vpop.f32.mrf.mxu0
    %v1892 = vadd.f32 0.0, %v1891
    %1893 = vdwg.mxu0
    %v1898 = vrot.slane %v1819, 2
    %v1899 = vrot.slane %v1821, 2
    %v1900 = vrot.slane %v1890, 2
    %v1901 = vrot.slane %v1892, 2
    %v1906 = vadd.f32 %v198, %v1898
    %v1907 = vadd.f32 %v200, %v1899
    %v1908 = vadd.f32 %v275, %v1900
    %v1909 = vadd.f32 %v277, %v1901
    %v1910 = vxor.u32 %v1906, 2147483648
    %v1911 = vxor.u32 %v1907, 2147483648
    %v1912 = vxor.u32 %v1908, 2147483648
    %v1913 = vxor.u32 %v1909, 2147483648
    %v1914 = vmul.f32 %v1910, 1.442695
    %v1915 = vpow.pop %v1914
    %v1916 = vmul.f32 %v1911, 1.442695
    %v1917 = vpow.pop %v1916
    %v1918 = vmul.f32 %v1912, 1.442695
    %v1919 = vpow.pop %v1918
    %v1920 = vmul.f32 %v1913, 1.442695
    %v1921 = vpow.pop %v1920
    %v1922 = vadd.f32 %v1915, 1.0
    %v1923 = vadd.f32 %v1917, 1.0
    %v1924 = vadd.f32 %v1919, 1.0
    %v1925 = vadd.f32 %v1921, 1.0
    %v1926 = vrcp.pop %v1922
    %v1927 = vmul.f32 1.0, %v1926
    %v1928 = vrcp.pop %v1923
    %v1929 = vmul.f32 1.0, %v1928
    %v1930 = vrcp.pop %v1924
    %v1931 = vmul.f32 1.0, %v1930
    %v1932 = vrcp.pop %v1925
    %v1933 = vmul.f32 1.0, %v1932
    %v1934 = vmul.f32 %v1931, 2.0
    %v1935 = vsub.f32 %v1934, 1.0
    %v1937 = vrot.slane %v1244, 6
    %v1939 = vmul.f32 %v1929, %v1937
    %v1940 = vmul.f32 %v1927, %v1935
    %v1941 = vadd.f32 %v1939, %v1940
    %v1942 = vtanh.pop %v1941
    %v1943 = vmul.f32 %v1933, %v1942
    %v1945 = vrot.slane %v1423, 4
    %v1946 = vrot.slane %v1945, 4
    %1948 = vmatprep.subr.mxu0 %v789
    %1949 = vmatpush1.msra.mxu0 %v788
    %1950 = vmatprep.subr.mxu0 %v785
    %1951 = vmatpush1.msra.mxu0 %v784
    %1952 = vmatprep.subr.mxu0 %v781
    %1953 = vmatpush1.msra.mxu0 %v780
    %1954 = vmatprep.subr.mxu0 %v777
    %1955 = vmatpush1.msra.mxu0 %v776
    %1956 = vmatprep.subr.mxu0 %v773
    %1957 = vmatpush1.msra.mxu0 %v772
    %1958 = vmatprep.subr.mxu0 %v769
    %1959 = vmatpush1.msra.mxu0 %v768
    %1960 = vmatprep.subr.mxu0 %v765
    %1961 = vmatpush1.msra.mxu0 %v764
    %1962 = vmatprep.subr.mxu0 %v761
    %1963 = vmatpush1.msra.mxu0 %v760
    %1964 = vmatprep.subr.mxu0 %v757
    %1965 = vmatpush1.msra.mxu0 %v756
    %1966 = vmatprep.subr.mxu0 %v753
    %1967 = vmatpush1.msra.mxu0 %v752
    %1968 = vmatprep.subr.mxu0 %v749
    %1969 = vmatpush1.msra.mxu0 %v748
    %1970 = vmatprep.subr.mxu0 %v745
    %1971 = vmatpush1.msra.mxu0 %v744
    %1972 = vmatprep.subr.mxu0 %v741
    %1973 = vmatpush1.msra.mxu0 %v740
    %1974 = vmatprep.subr.mxu0 %v737
    %1975 = vmatpush1.msra.mxu0 %v736
    %1976 = vmatprep.subr.mxu0 %v733
    %1977 = vmatpush1.msra.mxu0 %v732
    %1978 = vmatprep.subr.mxu0 %v729
    %1979 = vmatpush1.msra.mxu0 %v728
    %1980 = vmatprep.subr.mxu0 %v853
    %1981 = vmatpush2.msra.mxu0 %v852
    %1982 = vmatprep.subr.mxu0 %v849
    %1983 = vmatpush2.msra.mxu0 %v848
    %1984 = vmatprep.subr.mxu0 %v845
    %1985 = vmatpush2.msra.mxu0 %v844
    %1986 = vmatprep.subr.mxu0 %v841
    %1987 = vmatpush2.msra.mxu0 %v840
    %1988 = vmatprep.subr.mxu0 %v837
    %1989 = vmatpush2.msra.mxu0 %v836
    %1990 = vmatprep.subr.mxu0 %v833
    %1991 = vmatpush2.msra.mxu0 %v832
    %1992 = vmatprep.subr.mxu0 %v829
    %1993 = vmatpush2.msra.mxu0 %v828
    %1994 = vmatprep.subr.mxu0 %v825
    %1995 = vmatpush2.msra.mxu0 %v824
    %1996 = vmatprep.subr.mxu0 %v821
    %1997 = vmatpush2.msra.mxu0 %v820
    %1998 = vmatprep.subr.mxu0 %v817
    %1999 = vmatpush2.msra.mxu0 %v816
    %2000 = vmatprep.subr.mxu0 %v813
    %2001 = vmatpush2.msra.mxu0 %v812
    %2002 = vmatprep.subr.mxu0 %v809
    %2003 = vmatpush2.msra.mxu0 %v808
    %2004 = vmatprep.subr.mxu0 %v805
    %2005 = vmatpush2.msra.mxu0 %v804
    %2006 = vmatprep.subr.mxu0 %v801
    %2007 = vmatpush2.msra.mxu0 %v800
    %2008 = vmatprep.subr.mxu0 %v797
    %2009 = vmatpush2.msra.mxu0 %v796
    %2010 = vmatprep.subr.mxu0 %v793
    %2011 = vmatpush2.msra.mxu0 %v792
    %2012 = vmatprep.mubr.f32.mxu0 %v1946
    %2013 = vmatmul.mubr.f32.gmra.mxu0 %v1750
    %v2014 = vpop.f32.mrf.mxu0
    %v2015 = vadd.f32 %v862, %v2014
    %v2016 = vpop.f32.mrf.mxu0
    %v2017 = vadd.f32 %v866, %v2016
    %2018 = vdwg.mxu0
    %2019 = vmatprep.subr.mxu0 %v791
    %2020 = vmatpush1.msra.mxu0 %v790
    %2021 = vmatprep.subr.mxu0 %v787
    %2022 = vmatpush1.msra.mxu0 %v786
    %2023 = vmatprep.subr.mxu0 %v783
    %2024 = vmatpush1.msra.mxu0 %v782
    %2025 = vmatprep.subr.mxu0 %v779
    %2026 = vmatpush1.msra.mxu0 %v778
    %2027 = vmatprep.subr.mxu0 %v775
    %2028 = vmatpush1.msra.mxu0 %v774
    %2029 = vmatprep.subr.mxu0 %v771
    %2030 = vmatpush1.msra.mxu0 %v770
    %2031 = vmatprep.subr.mxu0 %v767
    %2032 = vmatpush1.msra.mxu0 %v766
    %2033 = vmatprep.subr.mxu0 %v763
    %2034 = vmatpush1.msra.mxu0 %v762
    %2035 = vmatprep.subr.mxu0 %v759
    %2036 = vmatpush1.msra.mxu0 %v758
    %2037 = vmatprep.subr.mxu0 %v755
    %2038 = vmatpush1.msra.mxu0 %v754
    %2039 = vmatprep.subr.mxu0 %v751
    %2040 = vmatpush1.msra.mxu0 %v750
    %2041 = vmatprep.subr.mxu0 %v747
    %2042 = vmatpush1.msra.mxu0 %v746
    %2043 = vmatprep.subr.mxu0 %v743
    %2044 = vmatpush1.msra.mxu0 %v742
    %2045 = vmatprep.subr.mxu0 %v739
    %2046 = vmatpush1.msra.mxu0 %v738
    %2047 = vmatprep.subr.mxu0 %v735
    %2048 = vmatpush1.msra.mxu0 %v734
    %2049 = vmatprep.subr.mxu0 %v731
    %2050 = vmatpush1.msra.mxu0 %v730
    %2051 = vmatprep.subr.mxu0 %v855
    %2052 = vmatpush2.msra.mxu0 %v854
    %2053 = vmatprep.subr.mxu0 %v851
    %2054 = vmatpush2.msra.mxu0 %v850
    %2055 = vmatprep.subr.mxu0 %v847
    %2056 = vmatpush2.msra.mxu0 %v846
    %2057 = vmatprep.subr.mxu0 %v843
    %2058 = vmatpush2.msra.mxu0 %v842
    %2059 = vmatprep.subr.mxu0 %v839
    %2060 = vmatpush2.msra.mxu0 %v838
    %2061 = vmatprep.subr.mxu0 %v835
    %2062 = vmatpush2.msra.mxu0 %v834
    %2063 = vmatprep.subr.mxu0 %v831
    %2064 = vmatpush2.msra.mxu0 %v830
    %2065 = vmatprep.subr.mxu0 %v827
    %2066 = vmatpush2.msra.mxu0 %v826
    %2067 = vmatprep.subr.mxu0 %v823
    %2068 = vmatpush2.msra.mxu0 %v822
    %2069 = vmatprep.subr.mxu0 %v819
    %2070 = vmatpush2.msra.mxu0 %v818
    %2071 = vmatprep.subr.mxu0 %v815
    %2072 = vmatpush2.msra.mxu0 %v814
    %2073 = vmatprep.subr.mxu0 %v811
    %2074 = vmatpush2.msra.mxu0 %v810
    %2075 = vmatprep.subr.mxu0 %v807
    %2076 = vmatpush2.msra.mxu0 %v806
    %2077 = vmatprep.subr.mxu0 %v803
    %2078 = vmatpush2.msra.mxu0 %v802
    %2079 = vmatprep.subr.mxu0 %v799
    %2080 = vmatpush2.msra.mxu0 %v798
    %2081 = vmatprep.subr.mxu0 %v795
    %2082 = vmatpush2.msra.mxu0 %v794
    %2083 = vmatprep.mubr.f32.mxu0 %v1946
    %2084 = vmatmul.mubr.f32.gmra.mxu0 %v1750
    %v2085 = vpop.f32.mrf.mxu0
    %v2086 = vadd.f32 %v870, %v2085
    %v2087 = vpop.f32.mrf.mxu0
    %v2088 = vadd.f32 %v874, %v2087
    %2089 = vdwg.mxu0
    %v2090 = vxor.u32 %v2015, 2147483648
    %v2091 = vxor.u32 %v2017, 2147483648
    %v2092 = vxor.u32 %v2086, 2147483648
    %v2093 = vxor.u32 %v2088, 2147483648
    %v2094 = vmul.f32 %v2090, 1.442695
    %v2095 = vpow.pop %v2094
    %v2096 = vmul.f32 %v2091, 1.442695
    %v2097 = vpow.pop %v2096
    %v2098 = vmul.f32 %v2092, 1.442695
    %v2099 = vpow.pop %v2098
    %v2100 = vmul.f32 %v2093, 1.442695
    %v2101 = vpow.pop %v2100
    %v2102 = vadd.f32 %v2095, 1.0
    %v2103 = vadd.f32 %v2097, 1.0
    %v2104 = vadd.f32 %v2099, 1.0
    %v2105 = vadd.f32 %v2101, 1.0
    %v2106 = vrcp.pop %v2102
    %v2107 = vmul.f32 1.0, %v2106
    %v2108 = vrcp.pop %v2103
    %v2109 = vmul.f32 1.0, %v2108
    %v2110 = vrcp.pop %v2104
    %v2111 = vmul.f32 1.0, %v2110
    %v2112 = vrcp.pop %v2105
    %v2113 = vmul.f32 1.0, %v2112
    %v2114 = vmul.f32 %v2111, 2.0
    %v2115 = vsub.f32 %v2114, 1.0
    %v2116 = vmul.f32 %v2109, %v1421
    %v2117 = vmul.f32 %v2107, %v2115
    %v2118 = vadd.f32 %v2116, %v2117
    %v2119 = vtanh.pop %v2118
    %v2120 = vmul.f32 %v2113, %v2119
    %2121 = vmatprep.subr.mxu0 %v1486
    %2122 = vmatpush1.msra.mxu0 %v1485
    %2123 = vmatprep.subr.mxu0 %v1482
    %2124 = vmatpush1.msra.mxu0 %v1481
    %2125 = vmatprep.subr.mxu0 %v1478
    %2126 = vmatpush1.msra.mxu0 %v1477
    %2127 = vmatprep.subr.mxu0 %v1474
    %2128 = vmatpush1.msra.mxu0 %v1473
    %2129 = vmatprep.subr.mxu0 %v1470
    %2130 = vmatpush1.msra.mxu0 %v1469
    %2131 = vmatprep.subr.mxu0 %v1466
    %2132 = vmatpush1.msra.mxu0 %v1465
    %2133 = vmatprep.subr.mxu0 %v1462
    %2134 = vmatpush1.msra.mxu0 %v1461
    %2135 = vmatprep.subr.mxu0 %v1458
    %2136 = vmatpush1.msra.mxu0 %v1457
    %2137 = vmatprep.subr.mxu0 %v1454
    %2138 = vmatpush1.msra.mxu0 %v1453
    %2139 = vmatprep.subr.mxu0 %v1450
    %2140 = vmatpush1.msra.mxu0 %v1449
    %2141 = vmatprep.subr.mxu0 %v1446
    %2142 = vmatpush1.msra.mxu0 %v1445
    %2143 = vmatprep.subr.mxu0 %v1442
    %2144 = vmatpush1.msra.mxu0 %v1441
    %2145 = vmatprep.subr.mxu0 %v1438
    %2146 = vmatpush1.msra.mxu0 %v1437
    %2147 = vmatprep.subr.mxu0 %v1434
    %2148 = vmatpush1.msra.mxu0 %v1433
    %2149 = vmatprep.subr.mxu0 %v1430
    %2150 = vmatpush1.msra.mxu0 %v1429
    %2151 = vmatprep.subr.mxu0 %v1426
    %2152 = vmatpush1.msra.mxu0 %v1425
    %2153 = vmatprep.subr.mxu0 %v1550
    %2154 = vmatpush2.msra.mxu0 %v1549
    %2155 = vmatprep.subr.mxu0 %v1546
    %2156 = vmatpush2.msra.mxu0 %v1545
    %2157 = vmatprep.subr.mxu0 %v1542
    %2158 = vmatpush2.msra.mxu0 %v1541
    %2159 = vmatprep.subr.mxu0 %v1538
    %2160 = vmatpush2.msra.mxu0 %v1537
    %2161 = vmatprep.subr.mxu0 %v1534
    %2162 = vmatpush2.msra.mxu0 %v1533
    %2163 = vmatprep.subr.mxu0 %v1530
    %2164 = vmatpush2.msra.mxu0 %v1529
    %2165 = vmatprep.subr.mxu0 %v1526
    %2166 = vmatpush2.msra.mxu0 %v1525
    %2167 = vmatprep.subr.mxu0 %v1522
    %2168 = vmatpush2.msra.mxu0 %v1521
    %2169 = vmatprep.subr.mxu0 %v1518
    %2170 = vmatpush2.msra.mxu0 %v1517
    %2171 = vmatprep.subr.mxu0 %v1514
    %2172 = vmatpush2.msra.mxu0 %v1513
    %2173 = vmatprep.subr.mxu0 %v1510
    %2174 = vmatpush2.msra.mxu0 %v1509
    %2175 = vmatprep.subr.mxu0 %v1506
    %2176 = vmatpush2.msra.mxu0 %v1505
    %2177 = vmatprep.subr.mxu0 %v1502
    %2178 = vmatpush2.msra.mxu0 %v1501
    %2179 = vmatprep.subr.mxu0 %v1498
    %2180 = vmatpush2.msra.mxu0 %v1497
    %2181 = vmatprep.subr.mxu0 %v1494
    %2182 = vmatpush2.msra.mxu0 %v1493
    %2183 = vmatprep.subr.mxu0 %v1490
    %2184 = vmatpush2.msra.mxu0 %v1489
    %2185 = vmatprep.mubr.f32.mxu0 %v1748
    %2186 = vmatmul.mubr.f32.gmra.mxu0 %v1423
    %v2187 = vpop.f32.mrf.mxu0
    %v2188 = vadd.f32 %v1559, %v2187
    %v2189 = vpop.f32.mrf.mxu0
    %v2190 = vadd.f32 %v1563, %v2189
    %2191 = vdwg.mxu0
    %2192 = vmatprep.subr.mxu0 %v1488
    %2193 = vmatpush1.msra.mxu0 %v1487
    %2194 = vmatprep.subr.mxu0 %v1484
    %2195 = vmatpush1.msra.mxu0 %v1483
    %2196 = vmatprep.subr.mxu0 %v1480
    %2197 = vmatpush1.msra.mxu0 %v1479
    %2198 = vmatprep.subr.mxu0 %v1476
    %2199 = vmatpush1.msra.mxu0 %v1475
    %2200 = vmatprep.subr.mxu0 %v1472
    %2201 = vmatpush1.msra.mxu0 %v1471
    %2202 = vmatprep.subr.mxu0 %v1468
    %2203 = vmatpush1.msra.mxu0 %v1467
    %2204 = vmatprep.subr.mxu0 %v1464
    %2205 = vmatpush1.msra.mxu0 %v1463
    %2206 = vmatprep.subr.mxu0 %v1460
    %2207 = vmatpush1.msra.mxu0 %v1459
    %2208 = vmatprep.subr.mxu0 %v1456
    %2209 = vmatpush1.msra.mxu0 %v1455
    %2210 = vmatprep.subr.mxu0 %v1452
    %2211 = vmatpush1.msra.mxu0 %v1451
    %2212 = vmatprep.subr.mxu0 %v1448
    %2213 = vmatpush1.msra.mxu0 %v1447
    %2214 = vmatprep.subr.mxu0 %v1444
    %2215 = vmatpush1.msra.mxu0 %v1443
    %2216 = vmatprep.subr.mxu0 %v1440
    %2217 = vmatpush1.msra.mxu0 %v1439
    %2218 = vmatprep.subr.mxu0 %v1436
    %2219 = vmatpush1.msra.mxu0 %v1435
    %2220 = vmatprep.subr.mxu0 %v1432
    %2221 = vmatpush1.msra.mxu0 %v1431
    %2222 = vmatprep.subr.mxu0 %v1428
    %2223 = vmatpush1.msra.mxu0 %v1427
    %2224 = vmatprep.subr.mxu0 %v1552
    %2225 = vmatpush2.msra.mxu0 %v1551
    %2226 = vmatprep.subr.mxu0 %v1548
    %2227 = vmatpush2.msra.mxu0 %v1547
    %2228 = vmatprep.subr.mxu0 %v1544
    %2229 = vmatpush2.msra.mxu0 %v1543
    %2230 = vmatprep.subr.mxu0 %v1540
    %2231 = vmatpush2.msra.mxu0 %v1539
    %2232 = vmatprep.subr.mxu0 %v1536
    %2233 = vmatpush2.msra.mxu0 %v1535
    %2234 = vmatprep.subr.mxu0 %v1532
    %2235 = vmatpush2.msra.mxu0 %v1531
    %2236 = vmatprep.subr.mxu0 %v1528
    %2237 = vmatpush2.msra.mxu0 %v1527
    %2238 = vmatprep.subr.mxu0 %v1524
    %2239 = vmatpush2.msra.mxu0 %v1523
    %2240 = vmatprep.subr.mxu0 %v1520
    %2241 = vmatpush2.msra.mxu0 %v1519
    %2242 = vmatprep.subr.mxu0 %v1516
    %2243 = vmatpush2.msra.mxu0 %v1515
    %2244 = vmatprep.subr.mxu0 %v1512
    %2245 = vmatpush2.msra.mxu0 %v1511
    %2246 = vmatprep.subr.mxu0 %v1508
    %2247 = vmatpush2.msra.mxu0 %v1507
    %2248 = vmatprep.subr.mxu0 %v1504
    %2249 = vmatpush2.msra.mxu0 %v1503
    %2250 = vmatprep.subr.mxu0 %v1500
    %2251 = vmatpush2.msra.mxu0 %v1499
    %2252 = vmatprep.subr.mxu0 %v1496
    %2253 = vmatpush2.msra.mxu0 %v1495
    %2254 = vmatprep.subr.mxu0 %v1492
    %2255 = vmatpush2.msra.mxu0 %v1491
    %2256 = vmatprep.mubr.f32.mxu0 %v1748
    %2257 = vmatmul.mubr.f32.gmra.mxu0 %v1423
    %v2258 = vpop.f32.mrf.mxu0
    %v2259 = vadd.f32 %v1567, %v2258
    %v2260 = vpop.f32.mrf.mxu0
    %v2261 = vadd.f32 %v1571, %v2260
    %2262 = vdwg.mxu0
    %v2263 = vxor.u32 %v2188, 2147483648
    %v2264 = vxor.u32 %v2190, 2147483648
    %v2265 = vxor.u32 %v2259, 2147483648
    %v2266 = vxor.u32 %v2261, 2147483648
    %v2267 = vmul.f32 %v2263, 1.442695
    %v2268 = vpow.pop %v2267
    %v2269 = vmul.f32 %v2264, 1.442695
    %v2270 = vpow.pop %v2269
    %v2271 = vmul.f32 %v2265, 1.442695
    %v2272 = vpow.pop %v2271
    %v2273 = vmul.f32 %v2266, 1.442695
    %v2274 = vpow.pop %v2273
    %v2275 = vadd.f32 %v2268, 1.0
    %v2276 = vadd.f32 %v2270, 1.0
    %v2277 = vadd.f32 %v2272, 1.0
    %v2278 = vadd.f32 %v2274, 1.0
    %v2279 = vrcp.pop %v2275
    %v2280 = vmul.f32 1.0, %v2279
    %v2281 = vrcp.pop %v2276
    %v2282 = vmul.f32 1.0, %v2281
    %v2283 = vrcp.pop %v2277
    %v2284 = vmul.f32 1.0, %v2283
    %v2285 = vrcp.pop %v2278
    %v2286 = vmul.f32 1.0, %v2285
    %v2287 = vmul.f32 %v2284, 2.0
    %v2288 = vsub.f32 %v2287, 1.0
    %v2289 = vmul.f32 %v2282, %v1746
    %v2290 = vmul.f32 %v2280, %v2288
    %v2291 = vadd.f32 %v2289, %v2290
    %v2292 = vtanh.pop %v2291
    %v2293 = vmul.f32 %v2286, %v2292
    %v2295 = vrot.slane %v1943, 6
    %2297 = vmatprep.subr.mxu0 %v356
    %2298 = vmatpush1.msra.mxu0 %v355
    %2299 = vmatprep.subr.mxu0 %v352
    %2300 = vmatpush1.msra.mxu0 %v351
    %2301 = vmatprep.subr.mxu0 %v348
    %2302 = vmatpush1.msra.mxu0 %v347
    %2303 = vmatprep.subr.mxu0 %v344
    %2304 = vmatpush1.msra.mxu0 %v343
    %2305 = vmatprep.subr.mxu0 %v340
    %2306 = vmatpush1.msra.mxu0 %v339
    %2307 = vmatprep.subr.mxu0 %v336
    %2308 = vmatpush1.msra.mxu0 %v335
    %2309 = vmatprep.subr.mxu0 %v332
    %2310 = vmatpush1.msra.mxu0 %v331
    %2311 = vmatprep.subr.mxu0 %v328
    %2312 = vmatpush1.msra.mxu0 %v327
    %2313 = vmatprep.subr.mxu0 %v324
    %2314 = vmatpush1.msra.mxu0 %v323
    %2315 = vmatprep.subr.mxu0 %v320
    %2316 = vmatpush1.msra.mxu0 %v319
    %2317 = vmatprep.subr.mxu0 %v316
    %2318 = vmatpush1.msra.mxu0 %v315
    %2319 = vmatprep.subr.mxu0 %v312
    %2320 = vmatpush1.msra.mxu0 %v311
    %2321 = vmatprep.subr.mxu0 %v308
    %2322 = vmatpush1.msra.mxu0 %v307
    %2323 = vmatprep.subr.mxu0 %v304
    %2324 = vmatpush1.msra.mxu0 %v303
    %2325 = vmatprep.subr.mxu0 %v300
    %2326 = vmatpush1.msra.mxu0 %v299
    %2327 = vmatprep.subr.mxu0 %v296
    %2328 = vmatpush1.msra.mxu0 %v295
    %2329 = vmatprep.subr.mxu0 0.0
    %2330 = vmatpush2.msra.mxu0 0.0
    %2331 = vmatprep.subr.mxu0 0.0
    %2332 = vmatpush2.msra.mxu0 0.0
    %2333 = vmatprep.subr.mxu0 0.0
    %2334 = vmatpush2.msra.mxu0 0.0
    %2335 = vmatprep.subr.mxu0 0.0
    %2336 = vmatpush2.msra.mxu0 0.0
    %2337 = vmatprep.subr.mxu0 0.0
    %2338 = vmatpush2.msra.mxu0 0.0
    %2339 = vmatprep.subr.mxu0 0.0
    %2340 = vmatpush2.msra.mxu0 0.0
    %2341 = vmatprep.subr.mxu0 0.0
    %2342 = vmatpush2.msra.mxu0 0.0
    %2343 = vmatprep.subr.mxu0 0.0
    %2344 = vmatpush2.msra.mxu0 0.0
    %2345 = vmatprep.subr.mxu0 0.0
    %2346 = vmatpush2.msra.mxu0 0.0
    %2347 = vmatprep.subr.mxu0 0.0
    %2348 = vmatpush2.msra.mxu0 0.0
    %2349 = vmatprep.subr.mxu0 0.0
    %2350 = vmatpush2.msra.mxu0 0.0
    %2351 = vmatprep.subr.mxu0 0.0
    %2352 = vmatpush2.msra.mxu0 0.0
    %2353 = vmatprep.subr.mxu0 0.0
    %2354 = vmatpush2.msra.mxu0 0.0
    %2355 = vmatprep.subr.mxu0 0.0
    %2356 = vmatpush2.msra.mxu0 0.0
    %2357 = vmatprep.subr.mxu0 0.0
    %2358 = vmatpush2.msra.mxu0 0.0
    %2359 = vmatprep.subr.mxu0 0.0
    %2360 = vmatpush2.msra.mxu0 0.0
    %2361 = vmatprep.mubr.f32.mxu0 0.0
    %2362 = vmatmul.mubr.f32.gmra.mxu0 %v2295
    %v2363 = vpop.f32.mrf.mxu0
    %v2364 = vadd.f32 0.0, %v2363
    %v2365 = vpop.f32.mrf.mxu0
    %v2366 = vadd.f32 0.0, %v2365
    %2367 = vdwg.mxu0
    %2368 = vmatprep.subr.mxu0 %v358
    %2369 = vmatpush1.msra.mxu0 %v357
    %2370 = vmatprep.subr.mxu0 %v354
    %2371 = vmatpush1.msra.mxu0 %v353
    %2372 = vmatprep.subr.mxu0 %v350
    %2373 = vmatpush1.msra.mxu0 %v349
    %2374 = vmatprep.subr.mxu0 %v346
    %2375 = vmatpush1.msra.mxu0 %v345
    %2376 = vmatprep.subr.mxu0 %v342
    %2377 = vmatpush1.msra.mxu0 %v341
    %2378 = vmatprep.subr.mxu0 %v338
    %2379 = vmatpush1.msra.mxu0 %v337
    %2380 = vmatprep.subr.mxu0 %v334
    %2381 = vmatpush1.msra.mxu0 %v333
    %2382 = vmatprep.subr.mxu0 %v330
    %2383 = vmatpush1.msra.mxu0 %v329
    %2384 = vmatprep.subr.mxu0 %v326
    %2385 = vmatpush1.msra.mxu0 %v325
    %2386 = vmatprep.subr.mxu0 %v322
    %2387 = vmatpush1.msra.mxu0 %v321
    %2388 = vmatprep.subr.mxu0 %v318
    %2389 = vmatpush1.msra.mxu0 %v317
    %2390 = vmatprep.subr.mxu0 %v314
    %2391 = vmatpush1.msra.mxu0 %v313
    %2392 = vmatprep.subr.mxu0 %v310
    %2393 = vmatpush1.msra.mxu0 %v309
    %2394 = vmatprep.subr.mxu0 %v306
    %2395 = vmatpush1.msra.mxu0 %v305
    %2396 = vmatprep.subr.mxu0 %v302
    %2397 = vmatpush1.msra.mxu0 %v301
    %2398 = vmatprep.subr.mxu0 %v298
    %2399 = vmatpush1.msra.mxu0 %v297
    %2400 = vmatprep.subr.mxu0 0.0
    %2401 = vmatpush2.msra.mxu0 0.0
    %2402 = vmatprep.subr.mxu0 0.0
    %2403 = vmatpush2.msra.mxu0 0.0
    %2404 = vmatprep.subr.mxu0 0.0
    %2405 = vmatpush2.msra.mxu0 0.0
    %2406 = vmatprep.subr.mxu0 0.0
    %2407 = vmatpush2.msra.mxu0 0.0
    %2408 = vmatprep.subr.mxu0 0.0
    %2409 = vmatpush2.msra.mxu0 0.0
    %2410 = vmatprep.subr.mxu0 0.0
    %2411 = vmatpush2.msra.mxu0 0.0
    %2412 = vmatprep.subr.mxu0 0.0
    %2413 = vmatpush2.msra.mxu0 0.0
    %2414 = vmatprep.subr.mxu0 0.0
    %2415 = vmatpush2.msra.mxu0 0.0
    %2416 = vmatprep.subr.mxu0 0.0
    %2417 = vmatpush2.msra.mxu0 0.0
    %2418 = vmatprep.subr.mxu0 0.0
    %2419 = vmatpush2.msra.mxu0 0.0
    %2420 = vmatprep.subr.mxu0 0.0
    %2421 = vmatpush2.msra.mxu0 0.0
    %2422 = vmatprep.subr.mxu0 0.0
    %2423 = vmatpush2.msra.mxu0 0.0
    %2424 = vmatprep.subr.mxu0 0.0
    %2425 = vmatpush2.msra.mxu0 0.0
    %2426 = vmatprep.subr.mxu0 0.0
    %2427 = vmatpush2.msra.mxu0 0.0
    %2428 = vmatprep.subr.mxu0 0.0
    %2429 = vmatpush2.msra.mxu0 0.0
    %2430 = vmatprep.subr.mxu0 0.0
    %2431 = vmatpush2.msra.mxu0 0.0
    %2432 = vmatprep.mubr.f32.mxu0 0.0
    %2433 = vmatmul.mubr.f32.gmra.mxu0 %v2295
    %v2434 = vpop.f32.mrf.mxu0
    %v2435 = vadd.f32 0.0, %v2434
    %v2436 = vpop.f32.mrf.mxu0
    %v2437 = vadd.f32 0.0, %v2436
    %2438 = vdwg.mxu0
    %v2439 = vadd.f32 %v204, %v2364
    %v2440 = vadd.f32 %v206, %v2366
    %v2441 = vadd.f32 %v281, %v2435
    %v2442 = vadd.f32 %v283, %v2437
    %v2443 = vxor.u32 %v2439, 2147483648
    %v2444 = vxor.u32 %v2440, 2147483648
    %v2445 = vxor.u32 %v2441, 2147483648
    %v2446 = vxor.u32 %v2442, 2147483648
    %v2447 = vmul.f32 %v2443, 1.442695
    %v2448 = vpow.pop %v2447
    %v2449 = vmul.f32 %v2444, 1.442695
    %v2450 = vpow.pop %v2449
    %v2451 = vmul.f32 %v2445, 1.442695
    %v2452 = vpow.pop %v2451
    %v2453 = vmul.f32 %v2446, 1.442695
    %v2454 = vpow.pop %v2453
    %v2455 = vadd.f32 %v2448, 1.0
    %v2456 = vadd.f32 %v2450, 1.0
    %v2457 = vadd.f32 %v2452, 1.0
    %v2458 = vadd.f32 %v2454, 1.0
    %v2459 = vrcp.pop %v2455
    %v2460 = vmul.f32 1.0, %v2459
    %v2461 = vrcp.pop %v2456
    %v2462 = vmul.f32 1.0, %v2461
    %v2463 = vrcp.pop %v2457
    %v2464 = vmul.f32 1.0, %v2463
    %v2465 = vrcp.pop %v2458
    %v2466 = vmul.f32 1.0, %v2465
    %v2467 = vmul.f32 %v2464, 2.0
    %v2468 = vsub.f32 %v2467, 1.0
    %v2470 = vrot.slane %v1941, 6
    %v2472 = vmul.f32 %v2462, %v2470
    %v2473 = vmul.f32 %v2460, %v2468
    %v2474 = vadd.f32 %v2472, %v2473
    %v2475 = vtanh.pop %v2474
    %v2476 = vmul.f32 %v2466, %v2475
    %v2478 = vrot.slane %v2120, 2
    %v2479 = vrot.slane %v2478, 6
    %2481 = vmatprep.subr.mxu0 %v789
    %2482 = vmatpush1.msra.mxu0 %v788
    %2483 = vmatprep.subr.mxu0 %v785
    %2484 = vmatpush1.msra.mxu0 %v784
    %2485 = vmatprep.subr.mxu0 %v781
    %2486 = vmatpush1.msra.mxu0 %v780
    %2487 = vmatprep.subr.mxu0 %v777
    %2488 = vmatpush1.msra.mxu0 %v776
    %2489 = vmatprep.subr.mxu0 %v773
    %2490 = vmatpush1.msra.mxu0 %v772
    %2491 = vmatprep.subr.mxu0 %v769
    %2492 = vmatpush1.msra.mxu0 %v768
    %2493 = vmatprep.subr.mxu0 %v765
    %2494 = vmatpush1.msra.mxu0 %v764
    %2495 = vmatprep.subr.mxu0 %v761
    %2496 = vmatpush1.msra.mxu0 %v760
    %2497 = vmatprep.subr.mxu0 %v757
    %2498 = vmatpush1.msra.mxu0 %v756
    %2499 = vmatprep.subr.mxu0 %v753
    %2500 = vmatpush1.msra.mxu0 %v752
    %2501 = vmatprep.subr.mxu0 %v749
    %2502 = vmatpush1.msra.mxu0 %v748
    %2503 = vmatprep.subr.mxu0 %v745
    %2504 = vmatpush1.msra.mxu0 %v744
    %2505 = vmatprep.subr.mxu0 %v741
    %2506 = vmatpush1.msra.mxu0 %v740
    %2507 = vmatprep.subr.mxu0 %v737
    %2508 = vmatpush1.msra.mxu0 %v736
    %2509 = vmatprep.subr.mxu0 %v733
    %2510 = vmatpush1.msra.mxu0 %v732
    %2511 = vmatprep.subr.mxu0 %v729
    %2512 = vmatpush1.msra.mxu0 %v728
    %2513 = vmatprep.subr.mxu0 %v853
    %2514 = vmatpush2.msra.mxu0 %v852
    %2515 = vmatprep.subr.mxu0 %v849
    %2516 = vmatpush2.msra.mxu0 %v848
    %2517 = vmatprep.subr.mxu0 %v845
    %2518 = vmatpush2.msra.mxu0 %v844
    %2519 = vmatprep.subr.mxu0 %v841
    %2520 = vmatpush2.msra.mxu0 %v840
    %2521 = vmatprep.subr.mxu0 %v837
    %2522 = vmatpush2.msra.mxu0 %v836
    %2523 = vmatprep.subr.mxu0 %v833
    %2524 = vmatpush2.msra.mxu0 %v832
    %2525 = vmatprep.subr.mxu0 %v829
    %2526 = vmatpush2.msra.mxu0 %v828
    %2527 = vmatprep.subr.mxu0 %v825
    %2528 = vmatpush2.msra.mxu0 %v824
    %2529 = vmatprep.subr.mxu0 %v821
    %2530 = vmatpush2.msra.mxu0 %v820
    %2531 = vmatprep.subr.mxu0 %v817
    %2532 = vmatpush2.msra.mxu0 %v816
    %2533 = vmatprep.subr.mxu0 %v813
    %2534 = vmatpush2.msra.mxu0 %v812
    %2535 = vmatprep.subr.mxu0 %v809
    %2536 = vmatpush2.msra.mxu0 %v808
    %2537 = vmatprep.subr.mxu0 %v805
    %2538 = vmatpush2.msra.mxu0 %v804
    %2539 = vmatprep.subr.mxu0 %v801
    %2540 = vmatpush2.msra.mxu0 %v800
    %2541 = vmatprep.subr.mxu0 %v797
    %2542 = vmatpush2.msra.mxu0 %v796
    %2543 = vmatprep.subr.mxu0 %v793
    %2544 = vmatpush2.msra.mxu0 %v792
    %2545 = vmatprep.mubr.f32.mxu0 %v2479
    %2546 = vmatmul.mubr.f32.gmra.mxu0 %v2295
    %v2547 = vpop.f32.mrf.mxu0
    %v2548 = vadd.f32 %v862, %v2547
    %v2549 = vpop.f32.mrf.mxu0
    %v2550 = vadd.f32 %v866, %v2549
    %2551 = vdwg.mxu0
    %2552 = vmatprep.subr.mxu0 %v791
    %2553 = vmatpush1.msra.mxu0 %v790
    %2554 = vmatprep.subr.mxu0 %v787
    %2555 = vmatpush1.msra.mxu0 %v786
    %2556 = vmatprep.subr.mxu0 %v783
    %2557 = vmatpush1.msra.mxu0 %v782
    %2558 = vmatprep.subr.mxu0 %v779
    %2559 = vmatpush1.msra.mxu0 %v778
    %2560 = vmatprep.subr.mxu0 %v775
    %2561 = vmatpush1.msra.mxu0 %v774
    %2562 = vmatprep.subr.mxu0 %v771
    %2563 = vmatpush1.msra.mxu0 %v770
    %2564 = vmatprep.subr.mxu0 %v767
    %2565 = vmatpush1.msra.mxu0 %v766
    %2566 = vmatprep.subr.mxu0 %v763
    %2567 = vmatpush1.msra.mxu0 %v762
    %2568 = vmatprep.subr.mxu0 %v759
    %2569 = vmatpush1.msra.mxu0 %v758
    %2570 = vmatprep.subr.mxu0 %v755
    %2571 = vmatpush1.msra.mxu0 %v754
    %2572 = vmatprep.subr.mxu0 %v751
    %2573 = vmatpush1.msra.mxu0 %v750
    %2574 = vmatprep.subr.mxu0 %v747
    %2575 = vmatpush1.msra.mxu0 %v746
    %2576 = vmatprep.subr.mxu0 %v743
    %2577 = vmatpush1.msra.mxu0 %v742
    %2578 = vmatprep.subr.mxu0 %v739
    %2579 = vmatpush1.msra.mxu0 %v738
    %2580 = vmatprep.subr.mxu0 %v735
    %2581 = vmatpush1.msra.mxu0 %v734
    %2582 = vmatprep.subr.mxu0 %v731
    %2583 = vmatpush1.msra.mxu0 %v730
    %2584 = vmatprep.subr.mxu0 %v855
    %2585 = vmatpush2.msra.mxu0 %v854
    %2586 = vmatprep.subr.mxu0 %v851
    %2587 = vmatpush2.msra.mxu0 %v850
    %2588 = vmatprep.subr.mxu0 %v847
    %2589 = vmatpush2.msra.mxu0 %v846
    %2590 = vmatprep.subr.mxu0 %v843
    %2591 = vmatpush2.msra.mxu0 %v842
    %2592 = vmatprep.subr.mxu0 %v839
    %2593 = vmatpush2.msra.mxu0 %v838
    %2594 = vmatprep.subr.mxu0 %v835
    %2595 = vmatpush2.msra.mxu0 %v834
    %2596 = vmatprep.subr.mxu0 %v831
    %2597 = vmatpush2.msra.mxu0 %v830
    %2598 = vmatprep.subr.mxu0 %v827
    %2599 = vmatpush2.msra.mxu0 %v826
    %2600 = vmatprep.subr.mxu0 %v823
    %2601 = vmatpush2.msra.mxu0 %v822
    %2602 = vmatprep.subr.mxu0 %v819
    %2603 = vmatpush2.msra.mxu0 %v818
    %2604 = vmatprep.subr.mxu0 %v815
    %2605 = vmatpush2.msra.mxu0 %v814
    %2606 = vmatprep.subr.mxu0 %v811
    %2607 = vmatpush2.msra.mxu0 %v810
    %2608 = vmatprep.subr.mxu0 %v807
    %2609 = vmatpush2.msra.mxu0 %v806
    %2610 = vmatprep.subr.mxu0 %v803
    %2611 = vmatpush2.msra.mxu0 %v802
    %2612 = vmatprep.subr.mxu0 %v799
    %2613 = vmatpush2.msra.mxu0 %v798
    %2614 = vmatprep.subr.mxu0 %v795
    %2615 = vmatpush2.msra.mxu0 %v794
    %2616 = vmatprep.mubr.f32.mxu0 %v2479
    %2617 = vmatmul.mubr.f32.gmra.mxu0 %v2295
    %v2618 = vpop.f32.mrf.mxu0
    %v2619 = vadd.f32 %v870, %v2618
    %v2620 = vpop.f32.mrf.mxu0
    %v2621 = vadd.f32 %v874, %v2620
    %2622 = vdwg.mxu0
    %v2623 = vxor.u32 %v2548, 2147483648
    %v2624 = vxor.u32 %v2550, 2147483648
    %v2625 = vxor.u32 %v2619, 2147483648
    %v2626 = vxor.u32 %v2621, 2147483648
    %v2627 = vmul.f32 %v2623, 1.442695
    %v2628 = vpow.pop %v2627
    %v2629 = vmul.f32 %v2624, 1.442695
    %v2630 = vpow.pop %v2629
    %v2631 = vmul.f32 %v2625, 1.442695
    %v2632 = vpow.pop %v2631
    %v2633 = vmul.f32 %v2626, 1.442695
    %v2634 = vpow.pop %v2633
    %v2635 = vadd.f32 %v2628, 1.0
    %v2636 = vadd.f32 %v2630, 1.0
    %v2637 = vadd.f32 %v2632, 1.0
    %v2638 = vadd.f32 %v2634, 1.0
    %v2639 = vrcp.pop %v2635
    %v2640 = vmul.f32 1.0, %v2639
    %v2641 = vrcp.pop %v2636
    %v2642 = vmul.f32 1.0, %v2641
    %v2643 = vrcp.pop %v2637
    %v2644 = vmul.f32 1.0, %v2643
    %v2645 = vrcp.pop %v2638
    %v2646 = vmul.f32 1.0, %v2645
    %v2647 = vmul.f32 %v2644, 2.0
    %v2648 = vsub.f32 %v2647, 1.0
    %v2649 = vmul.f32 %v2642, %v2118
    %v2650 = vmul.f32 %v2640, %v2648
    %v2651 = vadd.f32 %v2649, %v2650
    %v2652 = vtanh.pop %v2651
    %v2653 = vmul.f32 %v2646, %v2652
    %2654 = vmatprep.subr.mxu0 %v1486
    %2655 = vmatpush1.msra.mxu0 %v1485
    %2656 = vmatprep.subr.mxu0 %v1482
    %2657 = vmatpush1.msra.mxu0 %v1481
    %2658 = vmatprep.subr.mxu0 %v1478
    %2659 = vmatpush1.msra.mxu0 %v1477
    %2660 = vmatprep.subr.mxu0 %v1474
    %2661 = vmatpush1.msra.mxu0 %v1473
    %2662 = vmatprep.subr.mxu0 %v1470
    %2663 = vmatpush1.msra.mxu0 %v1469
    %2664 = vmatprep.subr.mxu0 %v1466
    %2665 = vmatpush1.msra.mxu0 %v1465
    %2666 = vmatprep.subr.mxu0 %v1462
    %2667 = vmatpush1.msra.mxu0 %v1461
    %2668 = vmatprep.subr.mxu0 %v1458
    %2669 = vmatpush1.msra.mxu0 %v1457
    %2670 = vmatprep.subr.mxu0 %v1454
    %2671 = vmatpush1.msra.mxu0 %v1453
    %2672 = vmatprep.subr.mxu0 %v1450
    %2673 = vmatpush1.msra.mxu0 %v1449
    %2674 = vmatprep.subr.mxu0 %v1446
    %2675 = vmatpush1.msra.mxu0 %v1445
    %2676 = vmatprep.subr.mxu0 %v1442
    %2677 = vmatpush1.msra.mxu0 %v1441
    %2678 = vmatprep.subr.mxu0 %v1438
    %2679 = vmatpush1.msra.mxu0 %v1437
    %2680 = vmatprep.subr.mxu0 %v1434
    %2681 = vmatpush1.msra.mxu0 %v1433
    %2682 = vmatprep.subr.mxu0 %v1430
    %2683 = vmatpush1.msra.mxu0 %v1429
    %2684 = vmatprep.subr.mxu0 %v1426
    %2685 = vmatpush1.msra.mxu0 %v1425
    %2686 = vmatprep.subr.mxu0 %v1550
    %2687 = vmatpush2.msra.mxu0 %v1549
    %2688 = vmatprep.subr.mxu0 %v1546
    %2689 = vmatpush2.msra.mxu0 %v1545
    %2690 = vmatprep.subr.mxu0 %v1542
    %2691 = vmatpush2.msra.mxu0 %v1541
    %2692 = vmatprep.subr.mxu0 %v1538
    %2693 = vmatpush2.msra.mxu0 %v1537
    %2694 = vmatprep.subr.mxu0 %v1534
    %2695 = vmatpush2.msra.mxu0 %v1533
    %2696 = vmatprep.subr.mxu0 %v1530
    %2697 = vmatpush2.msra.mxu0 %v1529
    %2698 = vmatprep.subr.mxu0 %v1526
    %2699 = vmatpush2.msra.mxu0 %v1525
    %2700 = vmatprep.subr.mxu0 %v1522
    %2701 = vmatpush2.msra.mxu0 %v1521
    %2702 = vmatprep.subr.mxu0 %v1518
    %2703 = vmatpush2.msra.mxu0 %v1517
    %2704 = vmatprep.subr.mxu0 %v1514
    %2705 = vmatpush2.msra.mxu0 %v1513
    %2706 = vmatprep.subr.mxu0 %v1510
    %2707 = vmatpush2.msra.mxu0 %v1509
    %2708 = vmatprep.subr.mxu0 %v1506
    %2709 = vmatpush2.msra.mxu0 %v1505
    %2710 = vmatprep.subr.mxu0 %v1502
    %2711 = vmatpush2.msra.mxu0 %v1501
    %2712 = vmatprep.subr.mxu0 %v1498
    %2713 = vmatpush2.msra.mxu0 %v1497
    %2714 = vmatprep.subr.mxu0 %v1494
    %2715 = vmatpush2.msra.mxu0 %v1493
    %2716 = vmatprep.subr.mxu0 %v1490
    %2717 = vmatpush2.msra.mxu0 %v1489
    %2718 = vmatprep.mubr.f32.mxu0 %v2293
    %2719 = vmatmul.mubr.f32.gmra.mxu0 %v2120
    %v2720 = vpop.f32.mrf.mxu0
    %v2721 = vadd.f32 %v1559, %v2720
    %v2722 = vpop.f32.mrf.mxu0
    %v2723 = vadd.f32 %v1563, %v2722
    %2724 = vdwg.mxu0
    %2725 = vmatprep.subr.mxu0 %v1488
    %2726 = vmatpush1.msra.mxu0 %v1487
    %2727 = vmatprep.subr.mxu0 %v1484
    %2728 = vmatpush1.msra.mxu0 %v1483
    %2729 = vmatprep.subr.mxu0 %v1480
    %2730 = vmatpush1.msra.mxu0 %v1479
    %2731 = vmatprep.subr.mxu0 %v1476
    %2732 = vmatpush1.msra.mxu0 %v1475
    %2733 = vmatprep.subr.mxu0 %v1472
    %2734 = vmatpush1.msra.mxu0 %v1471
    %2735 = vmatprep.subr.mxu0 %v1468
    %2736 = vmatpush1.msra.mxu0 %v1467
    %2737 = vmatprep.subr.mxu0 %v1464
    %2738 = vmatpush1.msra.mxu0 %v1463
    %2739 = vmatprep.subr.mxu0 %v1460
    %2740 = vmatpush1.msra.mxu0 %v1459
    %2741 = vmatprep.subr.mxu0 %v1456
    %2742 = vmatpush1.msra.mxu0 %v1455
    %2743 = vmatprep.subr.mxu0 %v1452
    %2744 = vmatpush1.msra.mxu0 %v1451
    %2745 = vmatprep.subr.mxu0 %v1448
    %2746 = vmatpush1.msra.mxu0 %v1447
    %2747 = vmatprep.subr.mxu0 %v1444
    %2748 = vmatpush1.msra.mxu0 %v1443
    %2749 = vmatprep.subr.mxu0 %v1440
    %2750 = vmatpush1.msra.mxu0 %v1439
    %2751 = vmatprep.subr.mxu0 %v1436
    %2752 = vmatpush1.msra.mxu0 %v1435
    %2753 = vmatprep.subr.mxu0 %v1432
    %2754 = vmatpush1.msra.mxu0 %v1431
    %2755 = vmatprep.subr.mxu0 %v1428
    %2756 = vmatpush1.msra.mxu0 %v1427
    %2757 = vmatprep.subr.mxu0 %v1552
    %2758 = vmatpush2.msra.mxu0 %v1551
    %2759 = vmatprep.subr.mxu0 %v1548
    %2760 = vmatpush2.msra.mxu0 %v1547
    %2761 = vmatprep.subr.mxu0 %v1544
    %2762 = vmatpush2.msra.mxu0 %v1543
    %2763 = vmatprep.subr.mxu0 %v1540
    %2764 = vmatpush2.msra.mxu0 %v1539
    %2765 = vmatprep.subr.mxu0 %v1536
    %2766 = vmatpush2.msra.mxu0 %v1535
    %2767 = vmatprep.subr.mxu0 %v1532
    %2768 = vmatpush2.msra.mxu0 %v1531
    %2769 = vmatprep.subr.mxu0 %v1528
    %2770 = vmatpush2.msra.mxu0 %v1527
    %2771 = vmatprep.subr.mxu0 %v1524
    %2772 = vmatpush2.msra.mxu0 %v1523
    %2773 = vmatprep.subr.mxu0 %v1520
    %2774 = vmatpush2.msra.mxu0 %v1519
    %2775 = vmatprep.subr.mxu0 %v1516
    %2776 = vmatpush2.msra.mxu0 %v1515
    %2777 = vmatprep.subr.mxu0 %v1512
    %2778 = vmatpush2.msra.mxu0 %v1511
    %2779 = vmatprep.subr.mxu0 %v1508
    %2780 = vmatpush2.msra.mxu0 %v1507
    %2781 = vmatprep.subr.mxu0 %v1504
    %2782 = vmatpush2.msra.mxu0 %v1503
    %2783 = vmatprep.subr.mxu0 %v1500
    %2784 = vmatpush2.msra.mxu0 %v1499
    %2785 = vmatprep.subr.mxu0 %v1496
    %2786 = vmatpush2.msra.mxu0 %v1495
    %2787 = vmatprep.subr.mxu0 %v1492
    %2788 = vmatpush2.msra.mxu0 %v1491
    %2789 = vmatprep.mubr.f32.mxu0 %v2293
    %2790 = vmatmul.mubr.f32.gmra.mxu0 %v2120
    %v2791 = vpop.f32.mrf.mxu0
    %v2792 = vadd.f32 %v1567, %v2791
    %v2793 = vpop.f32.mrf.mxu0
    %v2794 = vadd.f32 %v1571, %v2793
    %2795 = vdwg.mxu0
    %v2796 = vxor.u32 %v2721, 2147483648
    %v2797 = vxor.u32 %v2723, 2147483648
    %v2798 = vxor.u32 %v2792, 2147483648
    %v2799 = vxor.u32 %v2794, 2147483648
    %v2800 = vmul.f32 %v2796, 1.442695
    %v2801 = vpow.pop %v2800
    %v2802 = vmul.f32 %v2797, 1.442695
    %v2803 = vpow.pop %v2802
    %v2804 = vmul.f32 %v2798, 1.442695
    %v2805 = vpow.pop %v2804
    %v2806 = vmul.f32 %v2799, 1.442695
    %v2807 = vpow.pop %v2806
    %v2808 = vadd.f32 %v2801, 1.0
    %v2809 = vadd.f32 %v2803, 1.0
    %v2810 = vadd.f32 %v2805, 1.0
    %v2811 = vadd.f32 %v2807, 1.0
    %v2812 = vrcp.pop %v2808
    %v2813 = vmul.f32 1.0, %v2812
    %v2814 = vrcp.pop %v2809
    %v2815 = vmul.f32 1.0, %v2814
    %v2816 = vrcp.pop %v2810
    %v2817 = vmul.f32 1.0, %v2816
    %v2818 = vrcp.pop %v2811
    %v2819 = vmul.f32 1.0, %v2818
    %v2820 = vmul.f32 %v2817, 2.0
    %v2821 = vsub.f32 %v2820, 1.0
    %v2822 = vmul.f32 %v2815, %v2291
    %v2823 = vmul.f32 %v2813, %v2821
    %v2824 = vadd.f32 %v2822, %v2823
    %v2825 = vtanh.pop %v2824
    %v2826 = vmul.f32 %v2819, %v2825
    %2827 = vmatprep.subr.mxu0 %v356
    %2828 = vmatpush1.msra.mxu0 %v355
    %2829 = vmatprep.subr.mxu0 %v352
    %2830 = vmatpush1.msra.mxu0 %v351
    %2831 = vmatprep.subr.mxu0 %v348
    %2832 = vmatpush1.msra.mxu0 %v347
    %2833 = vmatprep.subr.mxu0 %v344
    %2834 = vmatpush1.msra.mxu0 %v343
    %2835 = vmatprep.subr.mxu0 %v340
    %2836 = vmatpush1.msra.mxu0 %v339
    %2837 = vmatprep.subr.mxu0 %v336
    %2838 = vmatpush1.msra.mxu0 %v335
    %2839 = vmatprep.subr.mxu0 %v332
    %2840 = vmatpush1.msra.mxu0 %v331
    %2841 = vmatprep.subr.mxu0 %v328
    %2842 = vmatpush1.msra.mxu0 %v327
    %2843 = vmatprep.subr.mxu0 %v324
    %2844 = vmatpush1.msra.mxu0 %v323
    %2845 = vmatprep.subr.mxu0 %v320
    %2846 = vmatpush1.msra.mxu0 %v319
    %2847 = vmatprep.subr.mxu0 %v316
    %2848 = vmatpush1.msra.mxu0 %v315
    %2849 = vmatprep.subr.mxu0 %v312
    %2850 = vmatpush1.msra.mxu0 %v311
    %2851 = vmatprep.subr.mxu0 %v308
    %2852 = vmatpush1.msra.mxu0 %v307
    %2853 = vmatprep.subr.mxu0 %v304
    %2854 = vmatpush1.msra.mxu0 %v303
    %2855 = vmatprep.subr.mxu0 %v300
    %2856 = vmatpush1.msra.mxu0 %v299
    %2857 = vmatprep.subr.mxu0 %v296
    %2858 = vmatpush1.msra.mxu0 %v295
    %2859 = vmatprep.subr.mxu0 0.0
    %2860 = vmatpush2.msra.mxu0 0.0
    %2861 = vmatprep.subr.mxu0 0.0
    %2862 = vmatpush2.msra.mxu0 0.0
    %2863 = vmatprep.subr.mxu0 0.0
    %2864 = vmatpush2.msra.mxu0 0.0
    %2865 = vmatprep.subr.mxu0 0.0
    %2866 = vmatpush2.msra.mxu0 0.0
    %2867 = vmatprep.subr.mxu0 0.0
    %2868 = vmatpush2.msra.mxu0 0.0
    %2869 = vmatprep.subr.mxu0 0.0
    %2870 = vmatpush2.msra.mxu0 0.0
    %2871 = vmatprep.subr.mxu0 0.0
    %2872 = vmatpush2.msra.mxu0 0.0
    %2873 = vmatprep.subr.mxu0 0.0
    %2874 = vmatpush2.msra.mxu0 0.0
    %2875 = vmatprep.subr.mxu0 0.0
    %2876 = vmatpush2.msra.mxu0 0.0
    %2877 = vmatprep.subr.mxu0 0.0
    %2878 = vmatpush2.msra.mxu0 0.0
    %2879 = vmatprep.subr.mxu0 0.0
    %2880 = vmatpush2.msra.mxu0 0.0
    %2881 = vmatprep.subr.mxu0 0.0
    %2882 = vmatpush2.msra.mxu0 0.0
    %2883 = vmatprep.subr.mxu0 0.0
    %2884 = vmatpush2.msra.mxu0 0.0
    %2885 = vmatprep.subr.mxu0 0.0
    %2886 = vmatpush2.msra.mxu0 0.0
    %2887 = vmatprep.subr.mxu0 0.0
    %2888 = vmatpush2.msra.mxu0 0.0
    %2889 = vmatprep.subr.mxu0 0.0
    %2890 = vmatpush2.msra.mxu0 0.0
    %2891 = vmatprep.mubr.f32.mxu0 0.0
    %2892 = vmatmul.mubr.f32.gmra.mxu0 %v2476
    %v2893 = vpop.f32.mrf.mxu0
    %v2894 = vadd.f32 0.0, %v2893
    %v2895 = vpop.f32.mrf.mxu0
    %v2896 = vadd.f32 0.0, %v2895
    %2897 = vdwg.mxu0
    %2898 = vmatprep.subr.mxu0 %v358
    %2899 = vmatpush1.msra.mxu0 %v357
    %2900 = vmatprep.subr.mxu0 %v354
    %2901 = vmatpush1.msra.mxu0 %v353
    %2902 = vmatprep.subr.mxu0 %v350
    %2903 = vmatpush1.msra.mxu0 %v349
    %2904 = vmatprep.subr.mxu0 %v346
    %2905 = vmatpush1.msra.mxu0 %v345
    %2906 = vmatprep.subr.mxu0 %v342
    %2907 = vmatpush1.msra.mxu0 %v341
    %2908 = vmatprep.subr.mxu0 %v338
    %2909 = vmatpush1.msra.mxu0 %v337
    %2910 = vmatprep.subr.mxu0 %v334
    %2911 = vmatpush1.msra.mxu0 %v333
    %2912 = vmatprep.subr.mxu0 %v330
    %2913 = vmatpush1.msra.mxu0 %v329
    %2914 = vmatprep.subr.mxu0 %v326
    %2915 = vmatpush1.msra.mxu0 %v325
    %2916 = vmatprep.subr.mxu0 %v322
    %2917 = vmatpush1.msra.mxu0 %v321
    %2918 = vmatprep.subr.mxu0 %v318
    %2919 = vmatpush1.msra.mxu0 %v317
    %2920 = vmatprep.subr.mxu0 %v314
    %2921 = vmatpush1.msra.mxu0 %v313
    %2922 = vmatprep.subr.mxu0 %v310
    %2923 = vmatpush1.msra.mxu0 %v309
    %2924 = vmatprep.subr.mxu0 %v306
    %2925 = vmatpush1.msra.mxu0 %v305
    %2926 = vmatprep.subr.mxu0 %v302
    %2927 = vmatpush1.msra.mxu0 %v301
    %2928 = vmatprep.subr.mxu0 %v298
    %2929 = vmatpush1.msra.mxu0 %v297
    %2930 = vmatprep.subr.mxu0 0.0
    %2931 = vmatpush2.msra.mxu0 0.0
    %2932 = vmatprep.subr.mxu0 0.0
    %2933 = vmatpush2.msra.mxu0 0.0
    %2934 = vmatprep.subr.mxu0 0.0
    %2935 = vmatpush2.msra.mxu0 0.0
    %2936 = vmatprep.subr.mxu0 0.0
    %2937 = vmatpush2.msra.mxu0 0.0
    %2938 = vmatprep.subr.mxu0 0.0
    %2939 = vmatpush2.msra.mxu0 0.0
    %2940 = vmatprep.subr.mxu0 0.0
    %2941 = vmatpush2.msra.mxu0 0.0
    %2942 = vmatprep.subr.mxu0 0.0
    %2943 = vmatpush2.msra.mxu0 0.0
    %2944 = vmatprep.subr.mxu0 0.0
    %2945 = vmatpush2.msra.mxu0 0.0
    %2946 = vmatprep.subr.mxu0 0.0
    %2947 = vmatpush2.msra.mxu0 0.0
    %2948 = vmatprep.subr.mxu0 0.0
    %2949 = vmatpush2.msra.mxu0 0.0
    %2950 = vmatprep.subr.mxu0 0.0
    %2951 = vmatpush2.msra.mxu0 0.0
    %2952 = vmatprep.subr.mxu0 0.0
    %2953 = vmatpush2.msra.mxu0 0.0
    %2954 = vmatprep.subr.mxu0 0.0
    %2955 = vmatpush2.msra.mxu0 0.0
    %2956 = vmatprep.subr.mxu0 0.0
    %2957 = vmatpush2.msra.mxu0 0.0
    %2958 = vmatprep.subr.mxu0 0.0
    %2959 = vmatpush2.msra.mxu0 0.0
    %2960 = vmatprep.subr.mxu0 0.0
    %2961 = vmatpush2.msra.mxu0 0.0
    %2962 = vmatprep.mubr.f32.mxu0 0.0
    %2963 = vmatmul.mubr.f32.gmra.mxu0 %v2476
    %v2964 = vpop.f32.mrf.mxu0
    %v2965 = vadd.f32 0.0, %v2964
    %v2966 = vpop.f32.mrf.mxu0
    %v2967 = vadd.f32 0.0, %v2966
    %2968 = vdwg.mxu0
    %v2973 = vrot.slane %v2894, 6
    %v2974 = vrot.slane %v2896, 6
    %v2975 = vrot.slane %v2965, 6
    %v2976 = vrot.slane %v2967, 6
    %v2981 = vadd.f32 %v204, %v2973
    %v2982 = vadd.f32 %v206, %v2974
    %v2983 = vadd.f32 %v281, %v2975
    %v2984 = vadd.f32 %v283, %v2976
    %v2985 = vxor.u32 %v2981, 2147483648
    %v2986 = vxor.u32 %v2982, 2147483648
    %v2987 = vxor.u32 %v2983, 2147483648
    %v2988 = vxor.u32 %v2984, 2147483648
    %v2989 = vmul.f32 %v2985, 1.442695
    %v2990 = vpow.pop %v2989
    %v2991 = vmul.f32 %v2986, 1.442695
    %v2992 = vpow.pop %v2991
    %v2993 = vmul.f32 %v2987, 1.442695
    %v2994 = vpow.pop %v2993
    %v2995 = vmul.f32 %v2988, 1.442695
    %v2996 = vpow.pop %v2995
    %v2997 = vadd.f32 %v2990, 1.0
    %v2998 = vadd.f32 %v2992, 1.0
    %v2999 = vadd.f32 %v2994, 1.0
    %v3000 = vadd.f32 %v2996, 1.0
    %v3001 = vrcp.pop %v2997
    %v3002 = vmul.f32 1.0, %v3001
    %v3003 = vrcp.pop %v2998
    %v3004 = vmul.f32 1.0, %v3003
    %v3005 = vrcp.pop %v2999
    %v3006 = vmul.f32 1.0, %v3005
    %v3007 = vrcp.pop %v3000
    %v3008 = vmul.f32 1.0, %v3007
    %v3009 = vmul.f32 %v3006, 2.0
    %v3010 = vsub.f32 %v3009, 1.0
    %v3012 = vrot.slane %v2474, 6
    %v3014 = vmul.f32 %v3004, %v3012
    %v3015 = vmul.f32 %v3002, %v3010
    %v3016 = vadd.f32 %v3014, %v3015
    %v3017 = vtanh.pop %v3016
    %v3018 = vmul.f32 %v3008, %v3017
    %3019 = vmatprep.subr.mxu0 %v789
    %3020 = vmatpush1.msra.mxu0 %v788
    %3021 = vmatprep.subr.mxu0 %v785
    %3022 = vmatpush1.msra.mxu0 %v784
    %3023 = vmatprep.subr.mxu0 %v781
    %3024 = vmatpush1.msra.mxu0 %v780
    %3025 = vmatprep.subr.mxu0 %v777
    %3026 = vmatpush1.msra.mxu0 %v776
    %3027 = vmatprep.subr.mxu0 %v773
    %3028 = vmatpush1.msra.mxu0 %v772
    %3029 = vmatprep.subr.mxu0 %v769
    %3030 = vmatpush1.msra.mxu0 %v768
    %3031 = vmatprep.subr.mxu0 %v765
    %3032 = vmatpush1.msra.mxu0 %v764
    %3033 = vmatprep.subr.mxu0 %v761
    %3034 = vmatpush1.msra.mxu0 %v760
    %3035 = vmatprep.subr.mxu0 %v757
    %3036 = vmatpush1.msra.mxu0 %v756
    %3037 = vmatprep.subr.mxu0 %v753
    %3038 = vmatpush1.msra.mxu0 %v752
    %3039 = vmatprep.subr.mxu0 %v749
    %3040 = vmatpush1.msra.mxu0 %v748
    %3041 = vmatprep.subr.mxu0 %v745
    %3042 = vmatpush1.msra.mxu0 %v744
    %3043 = vmatprep.subr.mxu0 %v741
    %3044 = vmatpush1.msra.mxu0 %v740
    %3045 = vmatprep.subr.mxu0 %v737
    %3046 = vmatpush1.msra.mxu0 %v736
    %3047 = vmatprep.subr.mxu0 %v733
    %3048 = vmatpush1.msra.mxu0 %v732
    %3049 = vmatprep.subr.mxu0 %v729
    %3050 = vmatpush1.msra.mxu0 %v728
    %3051 = vmatprep.subr.mxu0 %v853
    %3052 = vmatpush2.msra.mxu0 %v852
    %3053 = vmatprep.subr.mxu0 %v849
    %3054 = vmatpush2.msra.mxu0 %v848
    %3055 = vmatprep.subr.mxu0 %v845
    %3056 = vmatpush2.msra.mxu0 %v844
    %3057 = vmatprep.subr.mxu0 %v841
    %3058 = vmatpush2.msra.mxu0 %v840
    %3059 = vmatprep.subr.mxu0 %v837
    %3060 = vmatpush2.msra.mxu0 %v836
    %3061 = vmatprep.subr.mxu0 %v833
    %3062 = vmatpush2.msra.mxu0 %v832
    %3063 = vmatprep.subr.mxu0 %v829
    %3064 = vmatpush2.msra.mxu0 %v828
    %3065 = vmatprep.subr.mxu0 %v825
    %3066 = vmatpush2.msra.mxu0 %v824
    %3067 = vmatprep.subr.mxu0 %v821
    %3068 = vmatpush2.msra.mxu0 %v820
    %3069 = vmatprep.subr.mxu0 %v817
    %3070 = vmatpush2.msra.mxu0 %v816
    %3071 = vmatprep.subr.mxu0 %v813
    %3072 = vmatpush2.msra.mxu0 %v812
    %3073 = vmatprep.subr.mxu0 %v809
    %3074 = vmatpush2.msra.mxu0 %v808
    %3075 = vmatprep.subr.mxu0 %v805
    %3076 = vmatpush2.msra.mxu0 %v804
    %3077 = vmatprep.subr.mxu0 %v801
    %3078 = vmatpush2.msra.mxu0 %v800
    %3079 = vmatprep.subr.mxu0 %v797
    %3080 = vmatpush2.msra.mxu0 %v796
    %3081 = vmatprep.subr.mxu0 %v793
    %3082 = vmatpush2.msra.mxu0 %v792
    %3083 = vmatprep.mubr.f32.mxu0 %v2653
    %3084 = vmatmul.mubr.f32.gmra.mxu0 %v2476
    %v3085 = vpop.f32.mrf.mxu0
    %v3086 = vadd.f32 %v862, %v3085
    %v3087 = vpop.f32.mrf.mxu0
    %v3088 = vadd.f32 %v866, %v3087
    %3089 = vdwg.mxu0
    %3090 = vmatprep.subr.mxu0 %v791
    %3091 = vmatpush1.msra.mxu0 %v790
    %3092 = vmatprep.subr.mxu0 %v787
    %3093 = vmatpush1.msra.mxu0 %v786
    %3094 = vmatprep.subr.mxu0 %v783
    %3095 = vmatpush1.msra.mxu0 %v782
    %3096 = vmatprep.subr.mxu0 %v779
    %3097 = vmatpush1.msra.mxu0 %v778
    %3098 = vmatprep.subr.mxu0 %v775
    %3099 = vmatpush1.msra.mxu0 %v774
    %3100 = vmatprep.subr.mxu0 %v771
    %3101 = vmatpush1.msra.mxu0 %v770
    %3102 = vmatprep.subr.mxu0 %v767
    %3103 = vmatpush1.msra.mxu0 %v766
    %3104 = vmatprep.subr.mxu0 %v763
    %3105 = vmatpush1.msra.mxu0 %v762
    %3106 = vmatprep.subr.mxu0 %v759
    %3107 = vmatpush1.msra.mxu0 %v758
    %3108 = vmatprep.subr.mxu0 %v755
    %3109 = vmatpush1.msra.mxu0 %v754
    %3110 = vmatprep.subr.mxu0 %v751
    %3111 = vmatpush1.msra.mxu0 %v750
    %3112 = vmatprep.subr.mxu0 %v747
    %3113 = vmatpush1.msra.mxu0 %v746
    %3114 = vmatprep.subr.mxu0 %v743
    %3115 = vmatpush1.msra.mxu0 %v742
    %3116 = vmatprep.subr.mxu0 %v739
    %3117 = vmatpush1.msra.mxu0 %v738
    %3118 = vmatprep.subr.mxu0 %v735
    %3119 = vmatpush1.msra.mxu0 %v734
    %3120 = vmatprep.subr.mxu0 %v731
    %3121 = vmatpush1.msra.mxu0 %v730
    %3122 = vmatprep.subr.mxu0 %v855
    %3123 = vmatpush2.msra.mxu0 %v854
    %3124 = vmatprep.subr.mxu0 %v851
    %3125 = vmatpush2.msra.mxu0 %v850
    %3126 = vmatprep.subr.mxu0 %v847
    %3127 = vmatpush2.msra.mxu0 %v846
    %3128 = vmatprep.subr.mxu0 %v843
    %3129 = vmatpush2.msra.mxu0 %v842
    %3130 = vmatprep.subr.mxu0 %v839
    %3131 = vmatpush2.msra.mxu0 %v838
    %3132 = vmatprep.subr.mxu0 %v835
    %3133 = vmatpush2.msra.mxu0 %v834
    %3134 = vmatprep.subr.mxu0 %v831
    %3135 = vmatpush2.msra.mxu0 %v830
    %3136 = vmatprep.subr.mxu0 %v827
    %3137 = vmatpush2.msra.mxu0 %v826
    %3138 = vmatprep.subr.mxu0 %v823
    %3139 = vmatpush2.msra.mxu0 %v822
    %3140 = vmatprep.subr.mxu0 %v819
    %3141 = vmatpush2.msra.mxu0 %v818
    %3142 = vmatprep.subr.mxu0 %v815
    %3143 = vmatpush2.msra.mxu0 %v814
    %3144 = vmatprep.subr.mxu0 %v811
    %3145 = vmatpush2.msra.mxu0 %v810
    %3146 = vmatprep.subr.mxu0 %v807
    %3147 = vmatpush2.msra.mxu0 %v806
    %3148 = vmatprep.subr.mxu0 %v803
    %3149 = vmatpush2.msra.mxu0 %v802
    %3150 = vmatprep.subr.mxu0 %v799
    %3151 = vmatpush2.msra.mxu0 %v798
    %3152 = vmatprep.subr.mxu0 %v795
    %3153 = vmatpush2.msra.mxu0 %v794
    %3154 = vmatprep.mubr.f32.mxu0 %v2653
    %3155 = vmatmul.mubr.f32.gmra.mxu0 %v2476
    %v3156 = vpop.f32.mrf.mxu0
    %v3157 = vadd.f32 %v870, %v3156
    %v3158 = vpop.f32.mrf.mxu0
    %v3159 = vadd.f32 %v874, %v3158
    %3160 = vdwg.mxu0
    %v3161 = vxor.u32 %v3086, 2147483648
    %v3162 = vxor.u32 %v3088, 2147483648
    %v3163 = vxor.u32 %v3157, 2147483648
    %v3164 = vxor.u32 %v3159, 2147483648
    %v3165 = vmul.f32 %v3161, 1.442695
    %v3166 = vpow.pop %v3165
    %v3167 = vmul.f32 %v3162, 1.442695
    %v3168 = vpow.pop %v3167
    %v3169 = vmul.f32 %v3163, 1.442695
    %v3170 = vpow.pop %v3169
    %v3171 = vmul.f32 %v3164, 1.442695
    %v3172 = vpow.pop %v3171
    %v3173 = vadd.f32 %v3166, 1.0
    %v3174 = vadd.f32 %v3168, 1.0
    %v3175 = vadd.f32 %v3170, 1.0
    %v3176 = vadd.f32 %v3172, 1.0
    %v3177 = vrcp.pop %v3173
    %v3178 = vmul.f32 1.0, %v3177
    %v3179 = vrcp.pop %v3174
    %v3180 = vmul.f32 1.0, %v3179
    %v3181 = vrcp.pop %v3175
    %v3182 = vmul.f32 1.0, %v3181
    %v3183 = vrcp.pop %v3176
    %v3184 = vmul.f32 1.0, %v3183
    %v3185 = vmul.f32 %v3182, 2.0
    %v3186 = vsub.f32 %v3185, 1.0
    %v3187 = vmul.f32 %v3180, %v2651
    %v3188 = vmul.f32 %v3178, %v3186
    %v3189 = vadd.f32 %v3187, %v3188
    %v3190 = vtanh.pop %v3189
    %v3191 = vmul.f32 %v3184, %v3190
    %3192 = vmatprep.subr.mxu0 %v1486
    %3193 = vmatpush1.msra.mxu0 %v1485
    %3194 = vmatprep.subr.mxu0 %v1482
    %3195 = vmatpush1.msra.mxu0 %v1481
    %3196 = vmatprep.subr.mxu0 %v1478
    %3197 = vmatpush1.msra.mxu0 %v1477
    %3198 = vmatprep.subr.mxu0 %v1474
    %3199 = vmatpush1.msra.mxu0 %v1473
    %3200 = vmatprep.subr.mxu0 %v1470
    %3201 = vmatpush1.msra.mxu0 %v1469
    %3202 = vmatprep.subr.mxu0 %v1466
    %3203 = vmatpush1.msra.mxu0 %v1465
    %3204 = vmatprep.subr.mxu0 %v1462
    %3205 = vmatpush1.msra.mxu0 %v1461
    %3206 = vmatprep.subr.mxu0 %v1458
    %3207 = vmatpush1.msra.mxu0 %v1457
    %3208 = vmatprep.subr.mxu0 %v1454
    %3209 = vmatpush1.msra.mxu0 %v1453
    %3210 = vmatprep.subr.mxu0 %v1450
    %3211 = vmatpush1.msra.mxu0 %v1449
    %3212 = vmatprep.subr.mxu0 %v1446
    %3213 = vmatpush1.msra.mxu0 %v1445
    %3214 = vmatprep.subr.mxu0 %v1442
    %3215 = vmatpush1.msra.mxu0 %v1441
    %3216 = vmatprep.subr.mxu0 %v1438
    %3217 = vmatpush1.msra.mxu0 %v1437
    %3218 = vmatprep.subr.mxu0 %v1434
    %3219 = vmatpush1.msra.mxu0 %v1433
    %3220 = vmatprep.subr.mxu0 %v1430
    %3221 = vmatpush1.msra.mxu0 %v1429
    %3222 = vmatprep.subr.mxu0 %v1426
    %3223 = vmatpush1.msra.mxu0 %v1425
    %3224 = vmatprep.subr.mxu0 %v1550
    %3225 = vmatpush2.msra.mxu0 %v1549
    %3226 = vmatprep.subr.mxu0 %v1546
    %3227 = vmatpush2.msra.mxu0 %v1545
    %3228 = vmatprep.subr.mxu0 %v1542
    %3229 = vmatpush2.msra.mxu0 %v1541
    %3230 = vmatprep.subr.mxu0 %v1538
    %3231 = vmatpush2.msra.mxu0 %v1537
    %3232 = vmatprep.subr.mxu0 %v1534
    %3233 = vmatpush2.msra.mxu0 %v1533
    %3234 = vmatprep.subr.mxu0 %v1530
    %3235 = vmatpush2.msra.mxu0 %v1529
    %3236 = vmatprep.subr.mxu0 %v1526
    %3237 = vmatpush2.msra.mxu0 %v1525
    %3238 = vmatprep.subr.mxu0 %v1522
    %3239 = vmatpush2.msra.mxu0 %v1521
    %3240 = vmatprep.subr.mxu0 %v1518
    %3241 = vmatpush2.msra.mxu0 %v1517
    %3242 = vmatprep.subr.mxu0 %v1514
    %3243 = vmatpush2.msra.mxu0 %v1513
    %3244 = vmatprep.subr.mxu0 %v1510
    %3245 = vmatpush2.msra.mxu0 %v1509
    %3246 = vmatprep.subr.mxu0 %v1506
    %3247 = vmatpush2.msra.mxu0 %v1505
    %3248 = vmatprep.subr.mxu0 %v1502
    %3249 = vmatpush2.msra.mxu0 %v1501
    %3250 = vmatprep.subr.mxu0 %v1498
    %3251 = vmatpush2.msra.mxu0 %v1497
    %3252 = vmatprep.subr.mxu0 %v1494
    %3253 = vmatpush2.msra.mxu0 %v1493
    %3254 = vmatprep.subr.mxu0 %v1490
    %3255 = vmatpush2.msra.mxu0 %v1489
    %3256 = vmatprep.mubr.f32.mxu0 %v2826
    %3257 = vmatmul.mubr.f32.gmra.mxu0 %v2653
    %v3258 = vpop.f32.mrf.mxu0
    %v3259 = vadd.f32 %v1559, %v3258
    %v3260 = vpop.f32.mrf.mxu0
    %v3261 = vadd.f32 %v1563, %v3260
    %3262 = vdwg.mxu0
    %3263 = vmatprep.subr.mxu0 %v1488
    %3264 = vmatpush1.msra.mxu0 %v1487
    %3265 = vmatprep.subr.mxu0 %v1484
    %3266 = vmatpush1.msra.mxu0 %v1483
    %3267 = vmatprep.subr.mxu0 %v1480
    %3268 = vmatpush1.msra.mxu0 %v1479
    %3269 = vmatprep.subr.mxu0 %v1476
    %3270 = vmatpush1.msra.mxu0 %v1475
    %3271 = vmatprep.subr.mxu0 %v1472
    %3272 = vmatpush1.msra.mxu0 %v1471
    %3273 = vmatprep.subr.mxu0 %v1468
    %3274 = vmatpush1.msra.mxu0 %v1467
    %3275 = vmatprep.subr.mxu0 %v1464
    %3276 = vmatpush1.msra.mxu0 %v1463
    %3277 = vmatprep.subr.mxu0 %v1460
    %3278 = vmatpush1.msra.mxu0 %v1459
    %3279 = vmatprep.subr.mxu0 %v1456
    %3280 = vmatpush1.msra.mxu0 %v1455
    %3281 = vmatprep.subr.mxu0 %v1452
    %3282 = vmatpush1.msra.mxu0 %v1451
    %3283 = vmatprep.subr.mxu0 %v1448
    %3284 = vmatpush1.msra.mxu0 %v1447
    %3285 = vmatprep.subr.mxu0 %v1444
    %3286 = vmatpush1.msra.mxu0 %v1443
    %3287 = vmatprep.subr.mxu0 %v1440
    %3288 = vmatpush1.msra.mxu0 %v1439
    %3289 = vmatprep.subr.mxu0 %v1436
    %3290 = vmatpush1.msra.mxu0 %v1435
    %3291 = vmatprep.subr.mxu0 %v1432
    %3292 = vmatpush1.msra.mxu0 %v1431
    %3293 = vmatprep.subr.mxu0 %v1428
    %3294 = vmatpush1.msra.mxu0 %v1427
    %3295 = vmatprep.subr.mxu0 %v1552
    %3296 = vmatpush2.msra.mxu0 %v1551
    %3297 = vmatprep.subr.mxu0 %v1548
    %3298 = vmatpush2.msra.mxu0 %v1547
    %3299 = vmatprep.subr.mxu0 %v1544
    %3300 = vmatpush2.msra.mxu0 %v1543
    %3301 = vmatprep.subr.mxu0 %v1540
    %3302 = vmatpush2.msra.mxu0 %v1539
    %3303 = vmatprep.subr.mxu0 %v1536
    %3304 = vmatpush2.msra.mxu0 %v1535
    %3305 = vmatprep.subr.mxu0 %v1532
    %3306 = vmatpush2.msra.mxu0 %v1531
    %3307 = vmatprep.subr.mxu0 %v1528
    %3308 = vmatpush2.msra.mxu0 %v1527
    %3309 = vmatprep.subr.mxu0 %v1524
    %3310 = vmatpush2.msra.mxu0 %v1523
    %3311 = vmatprep.subr.mxu0 %v1520
    %3312 = vmatpush2.msra.mxu0 %v1519
    %3313 = vmatprep.subr.mxu0 %v1516
    %3314 = vmatpush2.msra.mxu0 %v1515
    %3315 = vmatprep.subr.mxu0 %v1512
    %3316 = vmatpush2.msra.mxu0 %v1511
    %3317 = vmatprep.subr.mxu0 %v1508
    %3318 = vmatpush2.msra.mxu0 %v1507
    %3319 = vmatprep.subr.mxu0 %v1504
    %3320 = vmatpush2.msra.mxu0 %v1503
    %3321 = vmatprep.subr.mxu0 %v1500
    %3322 = vmatpush2.msra.mxu0 %v1499
    %3323 = vmatprep.subr.mxu0 %v1496
    %3324 = vmatpush2.msra.mxu0 %v1495
    %3325 = vmatprep.subr.mxu0 %v1492
    %3326 = vmatpush2.msra.mxu0 %v1491
    %3327 = vmatprep.mubr.f32.mxu0 %v2826
    %3328 = vmatmul.mubr.f32.gmra.mxu0 %v2653
    %v3329 = vpop.f32.mrf.mxu0
    %v3330 = vadd.f32 %v1567, %v3329
    %v3331 = vpop.f32.mrf.mxu0
    %v3332 = vadd.f32 %v1571, %v3331
    %3333 = vdwg.mxu0
    %v3334 = vxor.u32 %v3259, 2147483648
    %v3335 = vxor.u32 %v3261, 2147483648
    %v3336 = vxor.u32 %v3330, 2147483648
    %v3337 = vxor.u32 %v3332, 2147483648
    %v3338 = vmul.f32 %v3334, 1.442695
    %v3339 = vpow.pop %v3338
    %v3340 = vmul.f32 %v3335, 1.442695
    %v3341 = vpow.pop %v3340
    %v3342 = vmul.f32 %v3336, 1.442695
    %v3343 = vpow.pop %v3342
    %v3344 = vmul.f32 %v3337, 1.442695
    %v3345 = vpow.pop %v3344
    %v3346 = vadd.f32 %v3339, 1.0
    %v3347 = vadd.f32 %v3341, 1.0
    %v3348 = vadd.f32 %v3343, 1.0
    %v3349 = vadd.f32 %v3345, 1.0
    %v3350 = vrcp.pop %v3346
    %v3351 = vmul.f32 1.0, %v3350
    %v3352 = vrcp.pop %v3347
    %v3353 = vmul.f32 1.0, %v3352
    %v3354 = vrcp.pop %v3348
    %v3355 = vmul.f32 1.0, %v3354
    %v3356 = vrcp.pop %v3349
    %v3357 = vmul.f32 1.0, %v3356
    %v3358 = vmul.f32 %v3355, 2.0
    %v3359 = vsub.f32 %v3358, 1.0
    %v3360 = vmul.f32 %v3353, %v2824
    %v3361 = vmul.f32 %v3351, %v3359
    %v3362 = vadd.f32 %v3360, %v3361
    %v3363 = vtanh.pop %v3362
    %v3364 = vmul.f32 %v3357, %v3363
    %v3366 = vrot.slane %v3018, 2
    %3368 = vmatprep.subr.mxu0 %v356
    %3369 = vmatpush1.msra.mxu0 %v355
    %3370 = vmatprep.subr.mxu0 %v352
    %3371 = vmatpush1.msra.mxu0 %v351
    %3372 = vmatprep.subr.mxu0 %v348
    %3373 = vmatpush1.msra.mxu0 %v347
    %3374 = vmatprep.subr.mxu0 %v344
    %3375 = vmatpush1.msra.mxu0 %v343
    %3376 = vmatprep.subr.mxu0 %v340
    %3377 = vmatpush1.msra.mxu0 %v339
    %3378 = vmatprep.subr.mxu0 %v336
    %3379 = vmatpush1.msra.mxu0 %v335
    %3380 = vmatprep.subr.mxu0 %v332
    %3381 = vmatpush1.msra.mxu0 %v331
    %3382 = vmatprep.subr.mxu0 %v328
    %3383 = vmatpush1.msra.mxu0 %v327
    %3384 = vmatprep.subr.mxu0 %v324
    %3385 = vmatpush1.msra.mxu0 %v323
    %3386 = vmatprep.subr.mxu0 %v320
    %3387 = vmatpush1.msra.mxu0 %v319
    %3388 = vmatprep.subr.mxu0 %v316
    %3389 = vmatpush1.msra.mxu0 %v315
    %3390 = vmatprep.subr.mxu0 %v312
    %3391 = vmatpush1.msra.mxu0 %v311
    %3392 = vmatprep.subr.mxu0 %v308
    %3393 = vmatpush1.msra.mxu0 %v307
    %3394 = vmatprep.subr.mxu0 %v304
    %3395 = vmatpush1.msra.mxu0 %v303
    %3396 = vmatprep.subr.mxu0 %v300
    %3397 = vmatpush1.msra.mxu0 %v299
    %3398 = vmatprep.subr.mxu0 %v296
    %3399 = vmatpush1.msra.mxu0 %v295
    %3400 = vmatprep.subr.mxu0 0.0
    %3401 = vmatpush2.msra.mxu0 0.0
    %3402 = vmatprep.subr.mxu0 0.0
    %3403 = vmatpush2.msra.mxu0 0.0
    %3404 = vmatprep.subr.mxu0 0.0
    %3405 = vmatpush2.msra.mxu0 0.0
    %3406 = vmatprep.subr.mxu0 0.0
    %3407 = vmatpush2.msra.mxu0 0.0
    %3408 = vmatprep.subr.mxu0 0.0
    %3409 = vmatpush2.msra.mxu0 0.0
    %3410 = vmatprep.subr.mxu0 0.0
    %3411 = vmatpush2.msra.mxu0 0.0
    %3412 = vmatprep.subr.mxu0 0.0
    %3413 = vmatpush2.msra.mxu0 0.0
    %3414 = vmatprep.subr.mxu0 0.0
    %3415 = vmatpush2.msra.mxu0 0.0
    %3416 = vmatprep.subr.mxu0 0.0
    %3417 = vmatpush2.msra.mxu0 0.0
    %3418 = vmatprep.subr.mxu0 0.0
    %3419 = vmatpush2.msra.mxu0 0.0
    %3420 = vmatprep.subr.mxu0 0.0
    %3421 = vmatpush2.msra.mxu0 0.0
    %3422 = vmatprep.subr.mxu0 0.0
    %3423 = vmatpush2.msra.mxu0 0.0
    %3424 = vmatprep.subr.mxu0 0.0
    %3425 = vmatpush2.msra.mxu0 0.0
    %3426 = vmatprep.subr.mxu0 0.0
    %3427 = vmatpush2.msra.mxu0 0.0
    %3428 = vmatprep.subr.mxu0 0.0
    %3429 = vmatpush2.msra.mxu0 0.0
    %3430 = vmatprep.subr.mxu0 0.0
    %3431 = vmatpush2.msra.mxu0 0.0
    %3432 = vmatprep.mubr.f32.mxu0 0.0
    %3433 = vmatmul.mubr.f32.gmra.mxu0 %v3366
    %v3434 = vpop.f32.mrf.mxu0
    %v3435 = vadd.f32 0.0, %v3434
    %v3436 = vpop.f32.mrf.mxu0
    %v3437 = vadd.f32 0.0, %v3436
    %3438 = vdwg.mxu0
    %3439 = vmatprep.subr.mxu0 %v358
    %3440 = vmatpush1.msra.mxu0 %v357
    %3441 = vmatprep.subr.mxu0 %v354
    %3442 = vmatpush1.msra.mxu0 %v353
    %3443 = vmatprep.subr.mxu0 %v350
    %3444 = vmatpush1.msra.mxu0 %v349
    %3445 = vmatprep.subr.mxu0 %v346
    %3446 = vmatpush1.msra.mxu0 %v345
    %3447 = vmatprep.subr.mxu0 %v342
    %3448 = vmatpush1.msra.mxu0 %v341
    %3449 = vmatprep.subr.mxu0 %v338
    %3450 = vmatpush1.msra.mxu0 %v337
    %3451 = vmatprep.subr.mxu0 %v334
    %3452 = vmatpush1.msra.mxu0 %v333
    %3453 = vmatprep.subr.mxu0 %v330
    %3454 = vmatpush1.msra.mxu0 %v329
    %3455 = vmatprep.subr.mxu0 %v326
    %3456 = vmatpush1.msra.mxu0 %v325
    %3457 = vmatprep.subr.mxu0 %v322
    %3458 = vmatpush1.msra.mxu0 %v321
    %3459 = vmatprep.subr.mxu0 %v318
    %3460 = vmatpush1.msra.mxu0 %v317
    %3461 = vmatprep.subr.mxu0 %v314
    %3462 = vmatpush1.msra.mxu0 %v313
    %3463 = vmatprep.subr.mxu0 %v310
    %3464 = vmatpush1.msra.mxu0 %v309
    %3465 = vmatprep.subr.mxu0 %v306
    %3466 = vmatpush1.msra.mxu0 %v305
    %3467 = vmatprep.subr.mxu0 %v302
    %3468 = vmatpush1.msra.mxu0 %v301
    %3469 = vmatprep.subr.mxu0 %v298
    %3470 = vmatpush1.msra.mxu0 %v297
    %3471 = vmatprep.subr.mxu0 0.0
    %3472 = vmatpush2.msra.mxu0 0.0
    %3473 = vmatprep.subr.mxu0 0.0
    %3474 = vmatpush2.msra.mxu0 0.0
    %3475 = vmatprep.subr.mxu0 0.0
    %3476 = vmatpush2.msra.mxu0 0.0
    %3477 = vmatprep.subr.mxu0 0.0
    %3478 = vmatpush2.msra.mxu0 0.0
    %3479 = vmatprep.subr.mxu0 0.0
    %3480 = vmatpush2.msra.mxu0 0.0
    %3481 = vmatprep.subr.mxu0 0.0
    %3482 = vmatpush2.msra.mxu0 0.0
    %3483 = vmatprep.subr.mxu0 0.0
    %3484 = vmatpush2.msra.mxu0 0.0
    %3485 = vmatprep.subr.mxu0 0.0
    %3486 = vmatpush2.msra.mxu0 0.0
    %3487 = vmatprep.subr.mxu0 0.0
    %3488 = vmatpush2.msra.mxu0 0.0
    %3489 = vmatprep.subr.mxu0 0.0
    %3490 = vmatpush2.msra.mxu0 0.0
    %3491 = vmatprep.subr.mxu0 0.0
    %3492 = vmatpush2.msra.mxu0 0.0
    %3493 = vmatprep.subr.mxu0 0.0
    %3494 = vmatpush2.msra.mxu0 0.0
    %3495 = vmatprep.subr.mxu0 0.0
    %3496 = vmatpush2.msra.mxu0 0.0
    %3497 = vmatprep.subr.mxu0 0.0
    %3498 = vmatpush2.msra.mxu0 0.0
    %3499 = vmatprep.subr.mxu0 0.0
    %3500 = vmatpush2.msra.mxu0 0.0
    %3501 = vmatprep.subr.mxu0 0.0
    %3502 = vmatpush2.msra.mxu0 0.0
    %3503 = vmatprep.mubr.f32.mxu0 0.0
    %3504 = vmatmul.mubr.f32.gmra.mxu0 %v3366
    %v3505 = vpop.f32.mrf.mxu0
    %v3506 = vadd.f32 0.0, %v3505
    %v3507 = vpop.f32.mrf.mxu0
    %v3508 = vadd.f32 0.0, %v3507
    %3509 = vdwg.mxu0
    %v3514 = vrot.slane %v3435, 4
    %v3515 = vrot.slane %v3437, 4
    %v3516 = vrot.slane %v3506, 4
    %v3517 = vrot.slane %v3508, 4
    %v3522 = vadd.f32 %v204, %v3514
    %v3523 = vadd.f32 %v206, %v3515
    %v3524 = vadd.f32 %v281, %v3516
    %v3525 = vadd.f32 %v283, %v3517
    %v3526 = vxor.u32 %v3522, 2147483648
    %v3527 = vxor.u32 %v3523, 2147483648
    %v3528 = vxor.u32 %v3524, 2147483648
    %v3529 = vxor.u32 %v3525, 2147483648
    %v3530 = vmul.f32 %v3526, 1.442695
    %v3531 = vpow.pop %v3530
    %v3532 = vmul.f32 %v3527, 1.442695
    %v3533 = vpow.pop %v3532
    %v3534 = vmul.f32 %v3528, 1.442695
    %v3535 = vpow.pop %v3534
    %v3536 = vmul.f32 %v3529, 1.442695
    %v3537 = vpow.pop %v3536
    %v3538 = vadd.f32 %v3531, 1.0
    %v3539 = vadd.f32 %v3533, 1.0
    %v3540 = vadd.f32 %v3535, 1.0
    %v3541 = vadd.f32 %v3537, 1.0
    %v3542 = vrcp.pop %v3538
    %v3543 = vmul.f32 1.0, %v3542
    %v3544 = vrcp.pop %v3539
    %v3545 = vmul.f32 1.0, %v3544
    %v3546 = vrcp.pop %v3540
    %v3547 = vmul.f32 1.0, %v3546
    %v3548 = vrcp.pop %v3541
    %v3549 = vmul.f32 1.0, %v3548
    %v3550 = vmul.f32 %v3547, 2.0
    %v3551 = vsub.f32 %v3550, 1.0
    %v3553 = vrot.slane %v3016, 6
    %v3555 = vmul.f32 %v3545, %v3553
    %v3556 = vmul.f32 %v3543, %v3551
    %v3557 = vadd.f32 %v3555, %v3556
    %v3558 = vtanh.pop %v3557
    %v3559 = vmul.f32 %v3549, %v3558
    %v3561 = vrot.slane %v3191, 6
    %v3562 = vrot.slane %v3561, 2
    %3564 = vmatprep.subr.mxu0 %v789
    %3565 = vmatpush1.msra.mxu0 %v788
    %3566 = vmatprep.subr.mxu0 %v785
    %3567 = vmatpush1.msra.mxu0 %v784
    %3568 = vmatprep.subr.mxu0 %v781
    %3569 = vmatpush1.msra.mxu0 %v780
    %3570 = vmatprep.subr.mxu0 %v777
    %3571 = vmatpush1.msra.mxu0 %v776
    %3572 = vmatprep.subr.mxu0 %v773
    %3573 = vmatpush1.msra.mxu0 %v772
    %3574 = vmatprep.subr.mxu0 %v769
    %3575 = vmatpush1.msra.mxu0 %v768
    %3576 = vmatprep.subr.mxu0 %v765
    %3577 = vmatpush1.msra.mxu0 %v764
    %3578 = vmatprep.subr.mxu0 %v761
    %3579 = vmatpush1.msra.mxu0 %v760
    %3580 = vmatprep.subr.mxu0 %v757
    %3581 = vmatpush1.msra.mxu0 %v756
    %3582 = vmatprep.subr.mxu0 %v753
    %3583 = vmatpush1.msra.mxu0 %v752
    %3584 = vmatprep.subr.mxu0 %v749
    %3585 = vmatpush1.msra.mxu0 %v748
    %3586 = vmatprep.subr.mxu0 %v745
    %3587 = vmatpush1.msra.mxu0 %v744
    %3588 = vmatprep.subr.mxu0 %v741
    %3589 = vmatpush1.msra.mxu0 %v740
    %3590 = vmatprep.subr.mxu0 %v737
    %3591 = vmatpush1.msra.mxu0 %v736
    %3592 = vmatprep.subr.mxu0 %v733
    %3593 = vmatpush1.msra.mxu0 %v732
    %3594 = vmatprep.subr.mxu0 %v729
    %3595 = vmatpush1.msra.mxu0 %v728
    %3596 = vmatprep.subr.mxu0 %v853
    %3597 = vmatpush2.msra.mxu0 %v852
    %3598 = vmatprep.subr.mxu0 %v849
    %3599 = vmatpush2.msra.mxu0 %v848
    %3600 = vmatprep.subr.mxu0 %v845
    %3601 = vmatpush2.msra.mxu0 %v844
    %3602 = vmatprep.subr.mxu0 %v841
    %3603 = vmatpush2.msra.mxu0 %v840
    %3604 = vmatprep.subr.mxu0 %v837
    %3605 = vmatpush2.msra.mxu0 %v836
    %3606 = vmatprep.subr.mxu0 %v833
    %3607 = vmatpush2.msra.mxu0 %v832
    %3608 = vmatprep.subr.mxu0 %v829
    %3609 = vmatpush2.msra.mxu0 %v828
    %3610 = vmatprep.subr.mxu0 %v825
    %3611 = vmatpush2.msra.mxu0 %v824
    %3612 = vmatprep.subr.mxu0 %v821
    %3613 = vmatpush2.msra.mxu0 %v820
    %3614 = vmatprep.subr.mxu0 %v817
    %3615 = vmatpush2.msra.mxu0 %v816
    %3616 = vmatprep.subr.mxu0 %v813
    %3617 = vmatpush2.msra.mxu0 %v812
    %3618 = vmatprep.subr.mxu0 %v809
    %3619 = vmatpush2.msra.mxu0 %v808
    %3620 = vmatprep.subr.mxu0 %v805
    %3621 = vmatpush2.msra.mxu0 %v804
    %3622 = vmatprep.subr.mxu0 %v801
    %3623 = vmatpush2.msra.mxu0 %v800
    %3624 = vmatprep.subr.mxu0 %v797
    %3625 = vmatpush2.msra.mxu0 %v796
    %3626 = vmatprep.subr.mxu0 %v793
    %3627 = vmatpush2.msra.mxu0 %v792
    %3628 = vmatprep.mubr.f32.mxu0 %v3562
    %3629 = vmatmul.mubr.f32.gmra.mxu0 %v3366
    %v3630 = vpop.f32.mrf.mxu0
    %v3631 = vadd.f32 %v862, %v3630
    %v3632 = vpop.f32.mrf.mxu0
    %v3633 = vadd.f32 %v866, %v3632
    %3634 = vdwg.mxu0
    %3635 = vmatprep.subr.mxu0 %v791
    %3636 = vmatpush1.msra.mxu0 %v790
    %3637 = vmatprep.subr.mxu0 %v787
    %3638 = vmatpush1.msra.mxu0 %v786
    %3639 = vmatprep.subr.mxu0 %v783
    %3640 = vmatpush1.msra.mxu0 %v782
    %3641 = vmatprep.subr.mxu0 %v779
    %3642 = vmatpush1.msra.mxu0 %v778
    %3643 = vmatprep.subr.mxu0 %v775
    %3644 = vmatpush1.msra.mxu0 %v774
    %3645 = vmatprep.subr.mxu0 %v771
    %3646 = vmatpush1.msra.mxu0 %v770
    %3647 = vmatprep.subr.mxu0 %v767
    %3648 = vmatpush1.msra.mxu0 %v766
    %3649 = vmatprep.subr.mxu0 %v763
    %3650 = vmatpush1.msra.mxu0 %v762
    %3651 = vmatprep.subr.mxu0 %v759
    %3652 = vmatpush1.msra.mxu0 %v758
    %3653 = vmatprep.subr.mxu0 %v755
    %3654 = vmatpush1.msra.mxu0 %v754
    %3655 = vmatprep.subr.mxu0 %v751
    %3656 = vmatpush1.msra.mxu0 %v750
    %3657 = vmatprep.subr.mxu0 %v747
    %3658 = vmatpush1.msra.mxu0 %v746
    %3659 = vmatprep.subr.mxu0 %v743
    %3660 = vmatpush1.msra.mxu0 %v742
    %3661 = vmatprep.subr.mxu0 %v739
    %3662 = vmatpush1.msra.mxu0 %v738
    %3663 = vmatprep.subr.mxu0 %v735
    %3664 = vmatpush1.msra.mxu0 %v734
    %3665 = vmatprep.subr.mxu0 %v731
    %3666 = vmatpush1.msra.mxu0 %v730
    %3667 = vmatprep.subr.mxu0 %v855
    %3668 = vmatpush2.msra.mxu0 %v854
    %3669 = vmatprep.subr.mxu0 %v851
    %3670 = vmatpush2.msra.mxu0 %v850
    %3671 = vmatprep.subr.mxu0 %v847
    %3672 = vmatpush2.msra.mxu0 %v846
    %3673 = vmatprep.subr.mxu0 %v843
    %3674 = vmatpush2.msra.mxu0 %v842
    %3675 = vmatprep.subr.mxu0 %v839
    %3676 = vmatpush2.msra.mxu0 %v838
    %3677 = vmatprep.subr.mxu0 %v835
    %3678 = vmatpush2.msra.mxu0 %v834
    %3679 = vmatprep.subr.mxu0 %v831
    %3680 = vmatpush2.msra.mxu0 %v830
    %3681 = vmatprep.subr.mxu0 %v827
    %3682 = vmatpush2.msra.mxu0 %v826
    %3683 = vmatprep.subr.mxu0 %v823
    %3684 = vmatpush2.msra.mxu0 %v822
    %3685 = vmatprep.subr.mxu0 %v819
    %3686 = vmatpush2.msra.mxu0 %v818
    %3687 = vmatprep.subr.mxu0 %v815
    %3688 = vmatpush2.msra.mxu0 %v814
    %3689 = vmatprep.subr.mxu0 %v811
    %3690 = vmatpush2.msra.mxu0 %v810
    %3691 = vmatprep.subr.mxu0 %v807
    %3692 = vmatpush2.msra.mxu0 %v806
    %3693 = vmatprep.subr.mxu0 %v803
    %3694 = vmatpush2.msra.mxu0 %v802
    %3695 = vmatprep.subr.mxu0 %v799
    %3696 = vmatpush2.msra.mxu0 %v798
    %3697 = vmatprep.subr.mxu0 %v795
    %3698 = vmatpush2.msra.mxu0 %v794
    %3699 = vmatprep.mubr.f32.mxu0 %v3562
    %3700 = vmatmul.mubr.f32.gmra.mxu0 %v3366
    %v3701 = vpop.f32.mrf.mxu0
    %v3702 = vadd.f32 %v870, %v3701
    %v3703 = vpop.f32.mrf.mxu0
    %v3704 = vadd.f32 %v874, %v3703
    %3705 = vdwg.mxu0
    %v3706 = vxor.u32 %v3631, 2147483648
    %v3707 = vxor.u32 %v3633, 2147483648
    %v3708 = vxor.u32 %v3702, 2147483648
    %v3709 = vxor.u32 %v3704, 2147483648
    %v3710 = vmul.f32 %v3706, 1.442695
    %v3711 = vpow.pop %v3710
    %v3712 = vmul.f32 %v3707, 1.442695
    %v3713 = vpow.pop %v3712
    %v3714 = vmul.f32 %v3708, 1.442695
    %v3715 = vpow.pop %v3714
    %v3716 = vmul.f32 %v3709, 1.442695
    %v3717 = vpow.pop %v3716
    %v3718 = vadd.f32 %v3711, 1.0
    %v3719 = vadd.f32 %v3713, 1.0
    %v3720 = vadd.f32 %v3715, 1.0
    %v3721 = vadd.f32 %v3717, 1.0
    %v3722 = vrcp.pop %v3718
    %v3723 = vmul.f32 1.0, %v3722
    %v3724 = vrcp.pop %v3719
    %v3725 = vmul.f32 1.0, %v3724
    %v3726 = vrcp.pop %v3720
    %v3727 = vmul.f32 1.0, %v3726
    %v3728 = vrcp.pop %v3721
    %v3729 = vmul.f32 1.0, %v3728
    %v3730 = vmul.f32 %v3727, 2.0
    %v3731 = vsub.f32 %v3730, 1.0
    %v3732 = vmul.f32 %v3725, %v3189
    %v3733 = vmul.f32 %v3723, %v3731
    %v3734 = vadd.f32 %v3732, %v3733
    %v3735 = vtanh.pop %v3734
    %v3736 = vmul.f32 %v3729, %v3735
    %3737 = vmatprep.subr.mxu0 %v1486
    %3738 = vmatpush1.msra.mxu0 %v1485
    %3739 = vmatprep.subr.mxu0 %v1482
    %3740 = vmatpush1.msra.mxu0 %v1481
    %3741 = vmatprep.subr.mxu0 %v1478
    %3742 = vmatpush1.msra.mxu0 %v1477
    %3743 = vmatprep.subr.mxu0 %v1474
    %3744 = vmatpush1.msra.mxu0 %v1473
    %3745 = vmatprep.subr.mxu0 %v1470
    %3746 = vmatpush1.msra.mxu0 %v1469
    %3747 = vmatprep.subr.mxu0 %v1466
    %3748 = vmatpush1.msra.mxu0 %v1465
    %3749 = vmatprep.subr.mxu0 %v1462
    %3750 = vmatpush1.msra.mxu0 %v1461
    %3751 = vmatprep.subr.mxu0 %v1458
    %3752 = vmatpush1.msra.mxu0 %v1457
    %3753 = vmatprep.subr.mxu0 %v1454
    %3754 = vmatpush1.msra.mxu0 %v1453
    %3755 = vmatprep.subr.mxu0 %v1450
    %3756 = vmatpush1.msra.mxu0 %v1449
    %3757 = vmatprep.subr.mxu0 %v1446
    %3758 = vmatpush1.msra.mxu0 %v1445
    %3759 = vmatprep.subr.mxu0 %v1442
    %3760 = vmatpush1.msra.mxu0 %v1441
    %3761 = vmatprep.subr.mxu0 %v1438
    %3762 = vmatpush1.msra.mxu0 %v1437
    %3763 = vmatprep.subr.mxu0 %v1434
    %3764 = vmatpush1.msra.mxu0 %v1433
    %3765 = vmatprep.subr.mxu0 %v1430
    %3766 = vmatpush1.msra.mxu0 %v1429
    %3767 = vmatprep.subr.mxu0 %v1426
    %3768 = vmatpush1.msra.mxu0 %v1425
    %3769 = vmatprep.subr.mxu0 %v1550
    %3770 = vmatpush2.msra.mxu0 %v1549
    %3771 = vmatprep.subr.mxu0 %v1546
    %3772 = vmatpush2.msra.mxu0 %v1545
    %3773 = vmatprep.subr.mxu0 %v1542
    %3774 = vmatpush2.msra.mxu0 %v1541
    %3775 = vmatprep.subr.mxu0 %v1538
    %3776 = vmatpush2.msra.mxu0 %v1537
    %3777 = vmatprep.subr.mxu0 %v1534
    %3778 = vmatpush2.msra.mxu0 %v1533
    %3779 = vmatprep.subr.mxu0 %v1530
    %3780 = vmatpush2.msra.mxu0 %v1529
    %3781 = vmatprep.subr.mxu0 %v1526
    %3782 = vmatpush2.msra.mxu0 %v1525
    %3783 = vmatprep.subr.mxu0 %v1522
    %3784 = vmatpush2.msra.mxu0 %v1521
    %3785 = vmatprep.subr.mxu0 %v1518
    %3786 = vmatpush2.msra.mxu0 %v1517
    %3787 = vmatprep.subr.mxu0 %v1514
    %3788 = vmatpush2.msra.mxu0 %v1513
    %3789 = vmatprep.subr.mxu0 %v1510
    %3790 = vmatpush2.msra.mxu0 %v1509
    %3791 = vmatprep.subr.mxu0 %v1506
    %3792 = vmatpush2.msra.mxu0 %v1505
    %3793 = vmatprep.subr.mxu0 %v1502
    %3794 = vmatpush2.msra.mxu0 %v1501
    %3795 = vmatprep.subr.mxu0 %v1498
    %3796 = vmatpush2.msra.mxu0 %v1497
    %3797 = vmatprep.subr.mxu0 %v1494
    %3798 = vmatpush2.msra.mxu0 %v1493
    %3799 = vmatprep.subr.mxu0 %v1490
    %3800 = vmatpush2.msra.mxu0 %v1489
    %3801 = vmatprep.mubr.f32.mxu0 %v3364
    %3802 = vmatmul.mubr.f32.gmra.mxu0 %v3191
    %v3803 = vpop.f32.mrf.mxu0
    %v3804 = vadd.f32 %v1559, %v3803
    %v3805 = vpop.f32.mrf.mxu0
    %v3806 = vadd.f32 %v1563, %v3805
    %3807 = vdwg.mxu0
    %3808 = vmatprep.subr.mxu0 %v1488
    %3809 = vmatpush1.msra.mxu0 %v1487
    %3810 = vmatprep.subr.mxu0 %v1484
    %3811 = vmatpush1.msra.mxu0 %v1483
    %3812 = vmatprep.subr.mxu0 %v1480
    %3813 = vmatpush1.msra.mxu0 %v1479
    %3814 = vmatprep.subr.mxu0 %v1476
    %3815 = vmatpush1.msra.mxu0 %v1475
    %3816 = vmatprep.subr.mxu0 %v1472
    %3817 = vmatpush1.msra.mxu0 %v1471
    %3818 = vmatprep.subr.mxu0 %v1468
    %3819 = vmatpush1.msra.mxu0 %v1467
    %3820 = vmatprep.subr.mxu0 %v1464
    %3821 = vmatpush1.msra.mxu0 %v1463
    %3822 = vmatprep.subr.mxu0 %v1460
    %3823 = vmatpush1.msra.mxu0 %v1459
    %3824 = vmatprep.subr.mxu0 %v1456
    %3825 = vmatpush1.msra.mxu0 %v1455
    %3826 = vmatprep.subr.mxu0 %v1452
    %3827 = vmatpush1.msra.mxu0 %v1451
    %3828 = vmatprep.subr.mxu0 %v1448
    %3829 = vmatpush1.msra.mxu0 %v1447
    %3830 = vmatprep.subr.mxu0 %v1444
    %3831 = vmatpush1.msra.mxu0 %v1443
    %3832 = vmatprep.subr.mxu0 %v1440
    %3833 = vmatpush1.msra.mxu0 %v1439
    %3834 = vmatprep.subr.mxu0 %v1436
    %3835 = vmatpush1.msra.mxu0 %v1435
    %3836 = vmatprep.subr.mxu0 %v1432
    %3837 = vmatpush1.msra.mxu0 %v1431
    %3838 = vmatprep.subr.mxu0 %v1428
    %3839 = vmatpush1.msra.mxu0 %v1427
    %3840 = vmatprep.subr.mxu0 %v1552
    %3841 = vmatpush2.msra.mxu0 %v1551
    %3842 = vmatprep.subr.mxu0 %v1548
    %3843 = vmatpush2.msra.mxu0 %v1547
    %3844 = vmatprep.subr.mxu0 %v1544
    %3845 = vmatpush2.msra.mxu0 %v1543
    %3846 = vmatprep.subr.mxu0 %v1540
    %3847 = vmatpush2.msra.mxu0 %v1539
    %3848 = vmatprep.subr.mxu0 %v1536
    %3849 = vmatpush2.msra.mxu0 %v1535
    %3850 = vmatprep.subr.mxu0 %v1532
    %3851 = vmatpush2.msra.mxu0 %v1531
    %3852 = vmatprep.subr.mxu0 %v1528
    %3853 = vmatpush2.msra.mxu0 %v1527
    %3854 = vmatprep.subr.mxu0 %v1524
    %3855 = vmatpush2.msra.mxu0 %v1523
    %3856 = vmatprep.subr.mxu0 %v1520
    %3857 = vmatpush2.msra.mxu0 %v1519
    %3858 = vmatprep.subr.mxu0 %v1516
    %3859 = vmatpush2.msra.mxu0 %v1515
    %3860 = vmatprep.subr.mxu0 %v1512
    %3861 = vmatpush2.msra.mxu0 %v1511
    %3862 = vmatprep.subr.mxu0 %v1508
    %3863 = vmatpush2.msra.mxu0 %v1507
    %3864 = vmatprep.subr.mxu0 %v1504
    %3865 = vmatpush2.msra.mxu0 %v1503
    %3866 = vmatprep.subr.mxu0 %v1500
    %3867 = vmatpush2.msra.mxu0 %v1499
    %3868 = vmatprep.subr.mxu0 %v1496
    %3869 = vmatpush2.msra.mxu0 %v1495
    %3870 = vmatprep.subr.mxu0 %v1492
    %3871 = vmatpush2.msra.mxu0 %v1491
    %3872 = vmatprep.mubr.f32.mxu0 %v3364
    %3873 = vmatmul.mubr.f32.gmra.mxu0 %v3191
    %v3874 = vpop.f32.mrf.mxu0
    %v3875 = vadd.f32 %v1567, %v3874
    %v3876 = vpop.f32.mrf.mxu0
    %v3877 = vadd.f32 %v1571, %v3876
    %3878 = vdwg.mxu0
    %v3879 = vxor.u32 %v3804, 2147483648
    %v3880 = vxor.u32 %v3806, 2147483648
    %v3881 = vxor.u32 %v3875, 2147483648
    %v3882 = vxor.u32 %v3877, 2147483648
    %v3883 = vmul.f32 %v3879, 1.442695
    %v3884 = vpow.pop %v3883
    %v3885 = vmul.f32 %v3880, 1.442695
    %v3886 = vpow.pop %v3885
    %v3887 = vmul.f32 %v3881, 1.442695
    %v3888 = vpow.pop %v3887
    %v3889 = vmul.f32 %v3882, 1.442695
    %v3890 = vpow.pop %v3889
    %v3891 = vadd.f32 %v3884, 1.0
    %v3892 = vadd.f32 %v3886, 1.0
    %v3893 = vadd.f32 %v3888, 1.0
    %v3894 = vadd.f32 %v3890, 1.0
    %v3895 = vrcp.pop %v3891
    %v3896 = vmul.f32 1.0, %v3895
    %v3897 = vrcp.pop %v3892
    %v3898 = vmul.f32 1.0, %v3897
    %v3899 = vrcp.pop %v3893
    %v3900 = vmul.f32 1.0, %v3899
    %v3901 = vrcp.pop %v3894
    %v3902 = vmul.f32 1.0, %v3901
    %v3903 = vmul.f32 %v3900, 2.0
    %v3904 = vsub.f32 %v3903, 1.0
    %v3905 = vmul.f32 %v3898, %v3362
    %v3906 = vmul.f32 %v3896, %v3904
    %v3907 = vadd.f32 %v3905, %v3906
    %v3908 = vtanh.pop %v3907
    %v3909 = vmul.f32 %v3902, %v3908
    %v3911 = vrot.slane %v3559, 4
    %3913 = vmatprep.subr.mxu0 %v356
    %3914 = vmatpush1.msra.mxu0 %v355
    %3915 = vmatprep.subr.mxu0 %v352
    %3916 = vmatpush1.msra.mxu0 %v351
    %3917 = vmatprep.subr.mxu0 %v348
    %3918 = vmatpush1.msra.mxu0 %v347
    %3919 = vmatprep.subr.mxu0 %v344
    %3920 = vmatpush1.msra.mxu0 %v343
    %3921 = vmatprep.subr.mxu0 %v340
    %3922 = vmatpush1.msra.mxu0 %v339
    %3923 = vmatprep.subr.mxu0 %v336
    %3924 = vmatpush1.msra.mxu0 %v335
    %3925 = vmatprep.subr.mxu0 %v332
    %3926 = vmatpush1.msra.mxu0 %v331
    %3927 = vmatprep.subr.mxu0 %v328
    %3928 = vmatpush1.msra.mxu0 %v327
    %3929 = vmatprep.subr.mxu0 %v324
    %3930 = vmatpush1.msra.mxu0 %v323
    %3931 = vmatprep.subr.mxu0 %v320
    %3932 = vmatpush1.msra.mxu0 %v319
    %3933 = vmatprep.subr.mxu0 %v316
    %3934 = vmatpush1.msra.mxu0 %v315
    %3935 = vmatprep.subr.mxu0 %v312
    %3936 = vmatpush1.msra.mxu0 %v311
    %3937 = vmatprep.subr.mxu0 %v308
    %3938 = vmatpush1.msra.mxu0 %v307
    %3939 = vmatprep.subr.mxu0 %v304
    %3940 = vmatpush1.msra.mxu0 %v303
    %3941 = vmatprep.subr.mxu0 %v300
    %3942 = vmatpush1.msra.mxu0 %v299
    %3943 = vmatprep.subr.mxu0 %v296
    %3944 = vmatpush1.msra.mxu0 %v295
    %3945 = vmatprep.subr.mxu0 0.0
    %3946 = vmatpush2.msra.mxu0 0.0
    %3947 = vmatprep.subr.mxu0 0.0
    %3948 = vmatpush2.msra.mxu0 0.0
    %3949 = vmatprep.subr.mxu0 0.0
    %3950 = vmatpush2.msra.mxu0 0.0
    %3951 = vmatprep.subr.mxu0 0.0
    %3952 = vmatpush2.msra.mxu0 0.0
    %3953 = vmatprep.subr.mxu0 0.0
    %3954 = vmatpush2.msra.mxu0 0.0
    %3955 = vmatprep.subr.mxu0 0.0
    %3956 = vmatpush2.msra.mxu0 0.0
    %3957 = vmatprep.subr.mxu0 0.0
    %3958 = vmatpush2.msra.mxu0 0.0
    %3959 = vmatprep.subr.mxu0 0.0
    %3960 = vmatpush2.msra.mxu0 0.0
    %3961 = vmatprep.subr.mxu0 0.0
    %3962 = vmatpush2.msra.mxu0 0.0
    %3963 = vmatprep.subr.mxu0 0.0
    %3964 = vmatpush2.msra.mxu0 0.0
    %3965 = vmatprep.subr.mxu0 0.0
    %3966 = vmatpush2.msra.mxu0 0.0
    %3967 = vmatprep.subr.mxu0 0.0
    %3968 = vmatpush2.msra.mxu0 0.0
    %3969 = vmatprep.subr.mxu0 0.0
    %3970 = vmatpush2.msra.mxu0 0.0
    %3971 = vmatprep.subr.mxu0 0.0
    %3972 = vmatpush2.msra.mxu0 0.0
    %3973 = vmatprep.subr.mxu0 0.0
    %3974 = vmatpush2.msra.mxu0 0.0
    %3975 = vmatprep.subr.mxu0 0.0
    %3976 = vmatpush2.msra.mxu0 0.0
    %3977 = vmatprep.mubr.f32.mxu0 0.0
    %3978 = vmatmul.mubr.f32.gmra.mxu0 %v3911
    %v3979 = vpop.f32.mrf.mxu0
    %v3980 = vadd.f32 0.0, %v3979
    %v3981 = vpop.f32.mrf.mxu0
    %v3982 = vadd.f32 0.0, %v3981
    %3983 = vdwg.mxu0
    %3984 = vmatprep.subr.mxu0 %v358
    %3985 = vmatpush1.msra.mxu0 %v357
    %3986 = vmatprep.subr.mxu0 %v354
    %3987 = vmatpush1.msra.mxu0 %v353
    %3988 = vmatprep.subr.mxu0 %v350
    %3989 = vmatpush1.msra.mxu0 %v349
    %3990 = vmatprep.subr.mxu0 %v346
    %3991 = vmatpush1.msra.mxu0 %v345
    %3992 = vmatprep.subr.mxu0 %v342
    %3993 = vmatpush1.msra.mxu0 %v341
    %3994 = vmatprep.subr.mxu0 %v338
    %3995 = vmatpush1.msra.mxu0 %v337
    %3996 = vmatprep.subr.mxu0 %v334
    %3997 = vmatpush1.msra.mxu0 %v333
    %3998 = vmatprep.subr.mxu0 %v330
    %3999 = vmatpush1.msra.mxu0 %v329
    %4000 = vmatprep.subr.mxu0 %v326
    %4001 = vmatpush1.msra.mxu0 %v325
    %4002 = vmatprep.subr.mxu0 %v322
    %4003 = vmatpush1.msra.mxu0 %v321
    %4004 = vmatprep.subr.mxu0 %v318
    %4005 = vmatpush1.msra.mxu0 %v317
    %4006 = vmatprep.subr.mxu0 %v314
    %4007 = vmatpush1.msra.mxu0 %v313
    %4008 = vmatprep.subr.mxu0 %v310
    %4009 = vmatpush1.msra.mxu0 %v309
    %4010 = vmatprep.subr.mxu0 %v306
    %4011 = vmatpush1.msra.mxu0 %v305
    %4012 = vmatprep.subr.mxu0 %v302
    %4013 = vmatpush1.msra.mxu0 %v301
    %4014 = vmatprep.subr.mxu0 %v298
    %4015 = vmatpush1.msra.mxu0 %v297
    %4016 = vmatprep.subr.mxu0 0.0
    %4017 = vmatpush2.msra.mxu0 0.0
    %4018 = vmatprep.subr.mxu0 0.0
    %4019 = vmatpush2.msra.mxu0 0.0
    %4020 = vmatprep.subr.mxu0 0.0
    %4021 = vmatpush2.msra.mxu0 0.0
    %4022 = vmatprep.subr.mxu0 0.0
    %4023 = vmatpush2.msra.mxu0 0.0
    %4024 = vmatprep.subr.mxu0 0.0
    %4025 = vmatpush2.msra.mxu0 0.0
    %4026 = vmatprep.subr.mxu0 0.0
    %4027 = vmatpush2.msra.mxu0 0.0
    %4028 = vmatprep.subr.mxu0 0.0
    %4029 = vmatpush2.msra.mxu0 0.0
    %4030 = vmatprep.subr.mxu0 0.0
    %4031 = vmatpush2.msra.mxu0 0.0
    %4032 = vmatprep.subr.mxu0 0.0
    %4033 = vmatpush2.msra.mxu0 0.0
    %4034 = vmatprep.subr.mxu0 0.0
    %4035 = vmatpush2.msra.mxu0 0.0
    %4036 = vmatprep.subr.mxu0 0.0
    %4037 = vmatpush2.msra.mxu0 0.0
    %4038 = vmatprep.subr.mxu0 0.0
    %4039 = vmatpush2.msra.mxu0 0.0
    %4040 = vmatprep.subr.mxu0 0.0
    %4041 = vmatpush2.msra.mxu0 0.0
    %4042 = vmatprep.subr.mxu0 0.0
    %4043 = vmatpush2.msra.mxu0 0.0
    %4044 = vmatprep.subr.mxu0 0.0
    %4045 = vmatpush2.msra.mxu0 0.0
    %4046 = vmatprep.subr.mxu0 0.0
    %4047 = vmatpush2.msra.mxu0 0.0
    %4048 = vmatprep.mubr.f32.mxu0 0.0
    %4049 = vmatmul.mubr.f32.gmra.mxu0 %v3911
    %v4050 = vpop.f32.mrf.mxu0
    %v4051 = vadd.f32 0.0, %v4050
    %v4052 = vpop.f32.mrf.mxu0
    %v4053 = vadd.f32 0.0, %v4052
    %4054 = vdwg.mxu0
    %v4059 = vrot.slane %v3980, 2
    %v4060 = vrot.slane %v3982, 2
    %v4061 = vrot.slane %v4051, 2
    %v4062 = vrot.slane %v4053, 2
    %v4067 = vadd.f32 %v204, %v4059
    %v4068 = vadd.f32 %v206, %v4060
    %v4069 = vadd.f32 %v281, %v4061
    %v4070 = vadd.f32 %v283, %v4062
    %v4071 = vxor.u32 %v4067, 2147483648
    %v4072 = vxor.u32 %v4068, 2147483648
    %v4073 = vxor.u32 %v4069, 2147483648
    %v4074 = vxor.u32 %v4070, 2147483648
    %v4075 = vmul.f32 %v4071, 1.442695
    %v4076 = vpow.pop %v4075
    %v4077 = vmul.f32 %v4072, 1.442695
    %v4078 = vpow.pop %v4077
    %v4079 = vmul.f32 %v4073, 1.442695
    %v4080 = vpow.pop %v4079
    %v4081 = vmul.f32 %v4074, 1.442695
    %v4082 = vpow.pop %v4081
    %v4083 = vadd.f32 %v4076, 1.0
    %v4084 = vadd.f32 %v4078, 1.0
    %v4085 = vadd.f32 %v4080, 1.0
    %v4086 = vadd.f32 %v4082, 1.0
    %v4087 = vrcp.pop %v4083
    %v4088 = vmul.f32 1.0, %v4087
    %v4089 = vrcp.pop %v4084
    %v4090 = vmul.f32 1.0, %v4089
    %v4091 = vrcp.pop %v4085
    %v4092 = vmul.f32 1.0, %v4091
    %v4093 = vrcp.pop %v4086
    %v4094 = vmul.f32 1.0, %v4093
    %v4095 = vmul.f32 %v4092, 2.0
    %v4096 = vsub.f32 %v4095, 1.0
    %v4098 = vrot.slane %v3557, 6
    %v4100 = vmul.f32 %v4090, %v4098
    %v4101 = vmul.f32 %v4088, %v4096
    %v4102 = vadd.f32 %v4100, %v4101
    %v4103 = vtanh.pop %v4102
    %v4104 = vmul.f32 %v4094, %v4103
    %v4106 = vrot.slane %v3736, 4
    %v4107 = vrot.slane %v4106, 4
    %4109 = vmatprep.subr.mxu0 %v789
    %4110 = vmatpush1.msra.mxu0 %v788
    %4111 = vmatprep.subr.mxu0 %v785
    %4112 = vmatpush1.msra.mxu0 %v784
    %4113 = vmatprep.subr.mxu0 %v781
    %4114 = vmatpush1.msra.mxu0 %v780
    %4115 = vmatprep.subr.mxu0 %v777
    %4116 = vmatpush1.msra.mxu0 %v776
    %4117 = vmatprep.subr.mxu0 %v773
    %4118 = vmatpush1.msra.mxu0 %v772
    %4119 = vmatprep.subr.mxu0 %v769
    %4120 = vmatpush1.msra.mxu0 %v768
    %4121 = vmatprep.subr.mxu0 %v765
    %4122 = vmatpush1.msra.mxu0 %v764
    %4123 = vmatprep.subr.mxu0 %v761
    %4124 = vmatpush1.msra.mxu0 %v760
    %4125 = vmatprep.subr.mxu0 %v757
    %4126 = vmatpush1.msra.mxu0 %v756
    %4127 = vmatprep.subr.mxu0 %v753
    %4128 = vmatpush1.msra.mxu0 %v752
    %4129 = vmatprep.subr.mxu0 %v749
    %4130 = vmatpush1.msra.mxu0 %v748
    %4131 = vmatprep.subr.mxu0 %v745
    %4132 = vmatpush1.msra.mxu0 %v744
    %4133 = vmatprep.subr.mxu0 %v741
    %4134 = vmatpush1.msra.mxu0 %v740
    %4135 = vmatprep.subr.mxu0 %v737
    %4136 = vmatpush1.msra.mxu0 %v736
    %4137 = vmatprep.subr.mxu0 %v733
    %4138 = vmatpush1.msra.mxu0 %v732
    %4139 = vmatprep.subr.mxu0 %v729
    %4140 = vmatpush1.msra.mxu0 %v728
    %4141 = vmatprep.subr.mxu0 %v853
    %4142 = vmatpush2.msra.mxu0 %v852
    %4143 = vmatprep.subr.mxu0 %v849
    %4144 = vmatpush2.msra.mxu0 %v848
    %4145 = vmatprep.subr.mxu0 %v845
    %4146 = vmatpush2.msra.mxu0 %v844
    %4147 = vmatprep.subr.mxu0 %v841
    %4148 = vmatpush2.msra.mxu0 %v840
    %4149 = vmatprep.subr.mxu0 %v837
    %4150 = vmatpush2.msra.mxu0 %v836
    %4151 = vmatprep.subr.mxu0 %v833
    %4152 = vmatpush2.msra.mxu0 %v832
    %4153 = vmatprep.subr.mxu0 %v829
    %4154 = vmatpush2.msra.mxu0 %v828
    %4155 = vmatprep.subr.mxu0 %v825
    %4156 = vmatpush2.msra.mxu0 %v824
    %4157 = vmatprep.subr.mxu0 %v821
    %4158 = vmatpush2.msra.mxu0 %v820
    %4159 = vmatprep.subr.mxu0 %v817
    %4160 = vmatpush2.msra.mxu0 %v816
    %4161 = vmatprep.subr.mxu0 %v813
    %4162 = vmatpush2.msra.mxu0 %v812
    %4163 = vmatprep.subr.mxu0 %v809
    %4164 = vmatpush2.msra.mxu0 %v808
    %4165 = vmatprep.subr.mxu0 %v805
    %4166 = vmatpush2.msra.mxu0 %v804
    %4167 = vmatprep.subr.mxu0 %v801
    %4168 = vmatpush2.msra.mxu0 %v800
    %4169 = vmatprep.subr.mxu0 %v797
    %4170 = vmatpush2.msra.mxu0 %v796
    %4171 = vmatprep.subr.mxu0 %v793
    %4172 = vmatpush2.msra.mxu0 %v792
    %4173 = vmatprep.mubr.f32.mxu0 %v4107
    %4174 = vmatmul.mubr.f32.gmra.mxu0 %v3911
    %v4175 = vpop.f32.mrf.mxu0
    %v4176 = vadd.f32 %v862, %v4175
    %v4177 = vpop.f32.mrf.mxu0
    %v4178 = vadd.f32 %v866, %v4177
    %4179 = vdwg.mxu0
    %4180 = vmatprep.subr.mxu0 %v791
    %4181 = vmatpush1.msra.mxu0 %v790
    %4182 = vmatprep.subr.mxu0 %v787
    %4183 = vmatpush1.msra.mxu0 %v786
    %4184 = vmatprep.subr.mxu0 %v783
    %4185 = vmatpush1.msra.mxu0 %v782
    %4186 = vmatprep.subr.mxu0 %v779
    %4187 = vmatpush1.msra.mxu0 %v778
    %4188 = vmatprep.subr.mxu0 %v775
    %4189 = vmatpush1.msra.mxu0 %v774
    %4190 = vmatprep.subr.mxu0 %v771
    %4191 = vmatpush1.msra.mxu0 %v770
    %4192 = vmatprep.subr.mxu0 %v767
    %4193 = vmatpush1.msra.mxu0 %v766
    %4194 = vmatprep.subr.mxu0 %v763
    %4195 = vmatpush1.msra.mxu0 %v762
    %4196 = vmatprep.subr.mxu0 %v759
    %4197 = vmatpush1.msra.mxu0 %v758
    %4198 = vmatprep.subr.mxu0 %v755
    %4199 = vmatpush1.msra.mxu0 %v754
    %4200 = vmatprep.subr.mxu0 %v751
    %4201 = vmatpush1.msra.mxu0 %v750
    %4202 = vmatprep.subr.mxu0 %v747
    %4203 = vmatpush1.msra.mxu0 %v746
    %4204 = vmatprep.subr.mxu0 %v743
    %4205 = vmatpush1.msra.mxu0 %v742
    %4206 = vmatprep.subr.mxu0 %v739
    %4207 = vmatpush1.msra.mxu0 %v738
    %4208 = vmatprep.subr.mxu0 %v735
    %4209 = vmatpush1.msra.mxu0 %v734
    %4210 = vmatprep.subr.mxu0 %v731
    %4211 = vmatpush1.msra.mxu0 %v730
    %4212 = vmatprep.subr.mxu0 %v855
    %4213 = vmatpush2.msra.mxu0 %v854
    %4214 = vmatprep.subr.mxu0 %v851
    %4215 = vmatpush2.msra.mxu0 %v850
    %4216 = vmatprep.subr.mxu0 %v847
    %4217 = vmatpush2.msra.mxu0 %v846
    %4218 = vmatprep.subr.mxu0 %v843
    %4219 = vmatpush2.msra.mxu0 %v842
    %4220 = vmatprep.subr.mxu0 %v839
    %4221 = vmatpush2.msra.mxu0 %v838
    %4222 = vmatprep.subr.mxu0 %v835
    %4223 = vmatpush2.msra.mxu0 %v834
    %4224 = vmatprep.subr.mxu0 %v831
    %4225 = vmatpush2.msra.mxu0 %v830
    %4226 = vmatprep.subr.mxu0 %v827
    %4227 = vmatpush2.msra.mxu0 %v826
    %4228 = vmatprep.subr.mxu0 %v823
    %4229 = vmatpush2.msra.mxu0 %v822
    %4230 = vmatprep.subr.mxu0 %v819
    %4231 = vmatpush2.msra.mxu0 %v818
    %4232 = vmatprep.subr.mxu0 %v815
    %4233 = vmatpush2.msra.mxu0 %v814
    %4234 = vmatprep.subr.mxu0 %v811
    %4235 = vmatpush2.msra.mxu0 %v810
    %4236 = vmatprep.subr.mxu0 %v807
    %4237 = vmatpush2.msra.mxu0 %v806
    %4238 = vmatprep.subr.mxu0 %v803
    %4239 = vmatpush2.msra.mxu0 %v802
    %4240 = vmatprep.subr.mxu0 %v799
    %4241 = vmatpush2.msra.mxu0 %v798
    %4242 = vmatprep.subr.mxu0 %v795
    %4243 = vmatpush2.msra.mxu0 %v794
    %4244 = vmatprep.mubr.f32.mxu0 %v4107
    %4245 = vmatmul.mubr.f32.gmra.mxu0 %v3911
    %v4246 = vpop.f32.mrf.mxu0
    %v4247 = vadd.f32 %v870, %v4246
    %v4248 = vpop.f32.mrf.mxu0
    %v4249 = vadd.f32 %v874, %v4248
    %4250 = vdwg.mxu0
    %v4251 = vxor.u32 %v4176, 2147483648
    %v4252 = vxor.u32 %v4178, 2147483648
    %v4253 = vxor.u32 %v4247, 2147483648
    %v4254 = vxor.u32 %v4249, 2147483648
    %v4255 = vmul.f32 %v4251, 1.442695
    %v4256 = vpow.pop %v4255
    %v4257 = vmul.f32 %v4252, 1.442695
    %v4258 = vpow.pop %v4257
    %v4259 = vmul.f32 %v4253, 1.442695
    %v4260 = vpow.pop %v4259
    %v4261 = vmul.f32 %v4254, 1.442695
    %v4262 = vpow.pop %v4261
    %v4263 = vadd.f32 %v4256, 1.0
    %v4264 = vadd.f32 %v4258, 1.0
    %v4265 = vadd.f32 %v4260, 1.0
    %v4266 = vadd.f32 %v4262, 1.0
    %v4267 = vrcp.pop %v4263
    %v4268 = vmul.f32 1.0, %v4267
    %v4269 = vrcp.pop %v4264
    %v4270 = vmul.f32 1.0, %v4269
    %v4271 = vrcp.pop %v4265
    %v4272 = vmul.f32 1.0, %v4271
    %v4273 = vrcp.pop %v4266
    %v4274 = vmul.f32 1.0, %v4273
    %v4275 = vmul.f32 %v4272, 2.0
    %v4276 = vsub.f32 %v4275, 1.0
    %v4277 = vmul.f32 %v4270, %v3734
    %v4278 = vmul.f32 %v4268, %v4276
    %v4279 = vadd.f32 %v4277, %v4278
    %v4280 = vtanh.pop %v4279
    %v4281 = vmul.f32 %v4274, %v4280
    %4282 = vmatprep.subr.mxu0 %v1486
    %4283 = vmatpush1.msra.mxu0 %v1485
    %4284 = vmatprep.subr.mxu0 %v1482
    %4285 = vmatpush1.msra.mxu0 %v1481
    %4286 = vmatprep.subr.mxu0 %v1478
    %4287 = vmatpush1.msra.mxu0 %v1477
    %4288 = vmatprep.subr.mxu0 %v1474
    %4289 = vmatpush1.msra.mxu0 %v1473
    %4290 = vmatprep.subr.mxu0 %v1470
    %4291 = vmatpush1.msra.mxu0 %v1469
    %4292 = vmatprep.subr.mxu0 %v1466
    %4293 = vmatpush1.msra.mxu0 %v1465
    %4294 = vmatprep.subr.mxu0 %v1462
    %4295 = vmatpush1.msra.mxu0 %v1461
    %4296 = vmatprep.subr.mxu0 %v1458
    %4297 = vmatpush1.msra.mxu0 %v1457
    %4298 = vmatprep.subr.mxu0 %v1454
    %4299 = vmatpush1.msra.mxu0 %v1453
    %4300 = vmatprep.subr.mxu0 %v1450
    %4301 = vmatpush1.msra.mxu0 %v1449
    %4302 = vmatprep.subr.mxu0 %v1446
    %4303 = vmatpush1.msra.mxu0 %v1445
    %4304 = vmatprep.subr.mxu0 %v1442
    %4305 = vmatpush1.msra.mxu0 %v1441
    %4306 = vmatprep.subr.mxu0 %v1438
    %4307 = vmatpush1.msra.mxu0 %v1437
    %4308 = vmatprep.subr.mxu0 %v1434
    %4309 = vmatpush1.msra.mxu0 %v1433
    %4310 = vmatprep.subr.mxu0 %v1430
    %4311 = vmatpush1.msra.mxu0 %v1429
    %4312 = vmatprep.subr.mxu0 %v1426
    %4313 = vmatpush1.msra.mxu0 %v1425
    %4314 = vmatprep.subr.mxu0 %v1550
    %4315 = vmatpush2.msra.mxu0 %v1549
    %4316 = vmatprep.subr.mxu0 %v1546
    %4317 = vmatpush2.msra.mxu0 %v1545
    %4318 = vmatprep.subr.mxu0 %v1542
    %4319 = vmatpush2.msra.mxu0 %v1541
    %4320 = vmatprep.subr.mxu0 %v1538
    %4321 = vmatpush2.msra.mxu0 %v1537
    %4322 = vmatprep.subr.mxu0 %v1534
    %4323 = vmatpush2.msra.mxu0 %v1533
    %4324 = vmatprep.subr.mxu0 %v1530
    %4325 = vmatpush2.msra.mxu0 %v1529
    %4326 = vmatprep.subr.mxu0 %v1526
    %4327 = vmatpush2.msra.mxu0 %v1525
    %4328 = vmatprep.subr.mxu0 %v1522
    %4329 = vmatpush2.msra.mxu0 %v1521
    %4330 = vmatprep.subr.mxu0 %v1518
    %4331 = vmatpush2.msra.mxu0 %v1517
    %4332 = vmatprep.subr.mxu0 %v1514
    %4333 = vmatpush2.msra.mxu0 %v1513
    %4334 = vmatprep.subr.mxu0 %v1510
    %4335 = vmatpush2.msra.mxu0 %v1509
    %4336 = vmatprep.subr.mxu0 %v1506
    %4337 = vmatpush2.msra.mxu0 %v1505
    %4338 = vmatprep.subr.mxu0 %v1502
    %4339 = vmatpush2.msra.mxu0 %v1501
    %4340 = vmatprep.subr.mxu0 %v1498
    %4341 = vmatpush2.msra.mxu0 %v1497
    %4342 = vmatprep.subr.mxu0 %v1494
    %4343 = vmatpush2.msra.mxu0 %v1493
    %4344 = vmatprep.subr.mxu0 %v1490
    %4345 = vmatpush2.msra.mxu0 %v1489
    %4346 = vmatprep.mubr.f32.mxu0 %v3909
    %4347 = vmatmul.mubr.f32.gmra.mxu0 %v3736
    %v4348 = vpop.f32.mrf.mxu0
    %v4349 = vadd.f32 %v1559, %v4348
    %v4350 = vpop.f32.mrf.mxu0
    %v4351 = vadd.f32 %v1563, %v4350
    %4352 = vdwg.mxu0
    %4353 = vmatprep.subr.mxu0 %v1488
    %4354 = vmatpush1.msra.mxu0 %v1487
    %4355 = vmatprep.subr.mxu0 %v1484
    %4356 = vmatpush1.msra.mxu0 %v1483
    %4357 = vmatprep.subr.mxu0 %v1480
    %4358 = vmatpush1.msra.mxu0 %v1479
    %4359 = vmatprep.subr.mxu0 %v1476
    %4360 = vmatpush1.msra.mxu0 %v1475
    %4361 = vmatprep.subr.mxu0 %v1472
    %4362 = vmatpush1.msra.mxu0 %v1471
    %4363 = vmatprep.subr.mxu0 %v1468
    %4364 = vmatpush1.msra.mxu0 %v1467
    %4365 = vmatprep.subr.mxu0 %v1464
    %4366 = vmatpush1.msra.mxu0 %v1463
    %4367 = vmatprep.subr.mxu0 %v1460
    %4368 = vmatpush1.msra.mxu0 %v1459
    %4369 = vmatprep.subr.mxu0 %v1456
    %4370 = vmatpush1.msra.mxu0 %v1455
    %4371 = vmatprep.subr.mxu0 %v1452
    %4372 = vmatpush1.msra.mxu0 %v1451
    %4373 = vmatprep.subr.mxu0 %v1448
    %4374 = vmatpush1.msra.mxu0 %v1447
    %4375 = vmatprep.subr.mxu0 %v1444
    %4376 = vmatpush1.msra.mxu0 %v1443
    %4377 = vmatprep.subr.mxu0 %v1440
    %4378 = vmatpush1.msra.mxu0 %v1439
    %4379 = vmatprep.subr.mxu0 %v1436
    %4380 = vmatpush1.msra.mxu0 %v1435
    %4381 = vmatprep.subr.mxu0 %v1432
    %4382 = vmatpush1.msra.mxu0 %v1431
    %4383 = vmatprep.subr.mxu0 %v1428
    %4384 = vmatpush1.msra.mxu0 %v1427
    %4385 = vmatprep.subr.mxu0 %v1552
    %4386 = vmatpush2.msra.mxu0 %v1551
    %4387 = vmatprep.subr.mxu0 %v1548
    %4388 = vmatpush2.msra.mxu0 %v1547
    %4389 = vmatprep.subr.mxu0 %v1544
    %4390 = vmatpush2.msra.mxu0 %v1543
    %4391 = vmatprep.subr.mxu0 %v1540
    %4392 = vmatpush2.msra.mxu0 %v1539
    %4393 = vmatprep.subr.mxu0 %v1536
    %4394 = vmatpush2.msra.mxu0 %v1535
    %4395 = vmatprep.subr.mxu0 %v1532
    %4396 = vmatpush2.msra.mxu0 %v1531
    %4397 = vmatprep.subr.mxu0 %v1528
    %4398 = vmatpush2.msra.mxu0 %v1527
    %4399 = vmatprep.subr.mxu0 %v1524
    %4400 = vmatpush2.msra.mxu0 %v1523
    %4401 = vmatprep.subr.mxu0 %v1520
    %4402 = vmatpush2.msra.mxu0 %v1519
    %4403 = vmatprep.subr.mxu0 %v1516
    %4404 = vmatpush2.msra.mxu0 %v1515
    %4405 = vmatprep.subr.mxu0 %v1512
    %4406 = vmatpush2.msra.mxu0 %v1511
    %4407 = vmatprep.subr.mxu0 %v1508
    %4408 = vmatpush2.msra.mxu0 %v1507
    %4409 = vmatprep.subr.mxu0 %v1504
    %4410 = vmatpush2.msra.mxu0 %v1503
    %4411 = vmatprep.subr.mxu0 %v1500
    %4412 = vmatpush2.msra.mxu0 %v1499
    %4413 = vmatprep.subr.mxu0 %v1496
    %4414 = vmatpush2.msra.mxu0 %v1495
    %4415 = vmatprep.subr.mxu0 %v1492
    %4416 = vmatpush2.msra.mxu0 %v1491
    %4417 = vmatprep.mubr.f32.mxu0 %v3909
    %4418 = vmatmul.mubr.f32.gmra.mxu0 %v3736
    %v4419 = vpop.f32.mrf.mxu0
    %v4420 = vadd.f32 %v1567, %v4419
    %v4421 = vpop.f32.mrf.mxu0
    %v4422 = vadd.f32 %v1571, %v4421
    %4423 = vdwg.mxu0
    %v4424 = vxor.u32 %v4349, 2147483648
    %v4425 = vxor.u32 %v4351, 2147483648
    %v4426 = vxor.u32 %v4420, 2147483648
    %v4427 = vxor.u32 %v4422, 2147483648
    %v4428 = vmul.f32 %v4424, 1.442695
    %v4429 = vpow.pop %v4428
    %v4430 = vmul.f32 %v4425, 1.442695
    %v4431 = vpow.pop %v4430
    %v4432 = vmul.f32 %v4426, 1.442695
    %v4433 = vpow.pop %v4432
    %v4434 = vmul.f32 %v4427, 1.442695
    %v4435 = vpow.pop %v4434
    %v4436 = vadd.f32 %v4429, 1.0
    %v4437 = vadd.f32 %v4431, 1.0
    %v4438 = vadd.f32 %v4433, 1.0
    %v4439 = vadd.f32 %v4435, 1.0
    %v4440 = vrcp.pop %v4436
    %v4441 = vmul.f32 1.0, %v4440
    %v4442 = vrcp.pop %v4437
    %v4443 = vmul.f32 1.0, %v4442
    %v4444 = vrcp.pop %v4438
    %v4445 = vmul.f32 1.0, %v4444
    %v4446 = vrcp.pop %v4439
    %v4447 = vmul.f32 1.0, %v4446
    %v4448 = vmul.f32 %v4445, 2.0
    %v4449 = vsub.f32 %v4448, 1.0
    %v4450 = vmul.f32 %v4443, %v3907
    %v4451 = vmul.f32 %v4441, %v4449
    %v4452 = vadd.f32 %v4450, %v4451
    %v4453 = vtanh.pop %v4452
    %v4454 = vmul.f32 %v4447, %v4453
    %v4456 = vrot.slane %v4281, 2
    %v4458 = vrot.slane %v4104, 6
    %v4459 = vrot.slane %v4456, 6
    %4462 = vmatprep.subr.mxu0 %v789
    %4463 = vmatpush1.msra.mxu0 %v788
    %4464 = vmatprep.subr.mxu0 %v785
    %4465 = vmatpush1.msra.mxu0 %v784
    %4466 = vmatprep.subr.mxu0 %v781
    %4467 = vmatpush1.msra.mxu0 %v780
    %4468 = vmatprep.subr.mxu0 %v777
    %4469 = vmatpush1.msra.mxu0 %v776
    %4470 = vmatprep.subr.mxu0 %v773
    %4471 = vmatpush1.msra.mxu0 %v772
    %4472 = vmatprep.subr.mxu0 %v769
    %4473 = vmatpush1.msra.mxu0 %v768
    %4474 = vmatprep.subr.mxu0 %v765
    %4475 = vmatpush1.msra.mxu0 %v764
    %4476 = vmatprep.subr.mxu0 %v761
    %4477 = vmatpush1.msra.mxu0 %v760
    %4478 = vmatprep.subr.mxu0 %v757
    %4479 = vmatpush1.msra.mxu0 %v756
    %4480 = vmatprep.subr.mxu0 %v753
    %4481 = vmatpush1.msra.mxu0 %v752
    %4482 = vmatprep.subr.mxu0 %v749
    %4483 = vmatpush1.msra.mxu0 %v748
    %4484 = vmatprep.subr.mxu0 %v745
    %4485 = vmatpush1.msra.mxu0 %v744
    %4486 = vmatprep.subr.mxu0 %v741
    %4487 = vmatpush1.msra.mxu0 %v740
    %4488 = vmatprep.subr.mxu0 %v737
    %4489 = vmatpush1.msra.mxu0 %v736
    %4490 = vmatprep.subr.mxu0 %v733
    %4491 = vmatpush1.msra.mxu0 %v732
    %4492 = vmatprep.subr.mxu0 %v729
    %4493 = vmatpush1.msra.mxu0 %v728
    %4494 = vmatprep.subr.mxu0 %v853
    %4495 = vmatpush2.msra.mxu0 %v852
    %4496 = vmatprep.subr.mxu0 %v849
    %4497 = vmatpush2.msra.mxu0 %v848
    %4498 = vmatprep.subr.mxu0 %v845
    %4499 = vmatpush2.msra.mxu0 %v844
    %4500 = vmatprep.subr.mxu0 %v841
    %4501 = vmatpush2.msra.mxu0 %v840
    %4502 = vmatprep.subr.mxu0 %v837
    %4503 = vmatpush2.msra.mxu0 %v836
    %4504 = vmatprep.subr.mxu0 %v833
    %4505 = vmatpush2.msra.mxu0 %v832
    %4506 = vmatprep.subr.mxu0 %v829
    %4507 = vmatpush2.msra.mxu0 %v828
    %4508 = vmatprep.subr.mxu0 %v825
    %4509 = vmatpush2.msra.mxu0 %v824
    %4510 = vmatprep.subr.mxu0 %v821
    %4511 = vmatpush2.msra.mxu0 %v820
    %4512 = vmatprep.subr.mxu0 %v817
    %4513 = vmatpush2.msra.mxu0 %v816
    %4514 = vmatprep.subr.mxu0 %v813
    %4515 = vmatpush2.msra.mxu0 %v812
    %4516 = vmatprep.subr.mxu0 %v809
    %4517 = vmatpush2.msra.mxu0 %v808
    %4518 = vmatprep.subr.mxu0 %v805
    %4519 = vmatpush2.msra.mxu0 %v804
    %4520 = vmatprep.subr.mxu0 %v801
    %4521 = vmatpush2.msra.mxu0 %v800
    %4522 = vmatprep.subr.mxu0 %v797
    %4523 = vmatpush2.msra.mxu0 %v796
    %4524 = vmatprep.subr.mxu0 %v793
    %4525 = vmatpush2.msra.mxu0 %v792
    %4526 = vmatprep.mubr.f32.mxu0 %v4459
    %4527 = vmatmul.mubr.f32.gmra.mxu0 %v4458
    %v4528 = vpop.f32.mrf.mxu0
    %v4529 = vadd.f32 %v862, %v4528
    %v4530 = vpop.f32.mrf.mxu0
    %v4531 = vadd.f32 %v866, %v4530
    %4532 = vdwg.mxu0
    %4533 = vmatprep.subr.mxu0 %v791
    %4534 = vmatpush1.msra.mxu0 %v790
    %4535 = vmatprep.subr.mxu0 %v787
    %4536 = vmatpush1.msra.mxu0 %v786
    %4537 = vmatprep.subr.mxu0 %v783
    %4538 = vmatpush1.msra.mxu0 %v782
    %4539 = vmatprep.subr.mxu0 %v779
    %4540 = vmatpush1.msra.mxu0 %v778
    %4541 = vmatprep.subr.mxu0 %v775
    %4542 = vmatpush1.msra.mxu0 %v774
    %4543 = vmatprep.subr.mxu0 %v771
    %4544 = vmatpush1.msra.mxu0 %v770
    %4545 = vmatprep.subr.mxu0 %v767
    %4546 = vmatpush1.msra.mxu0 %v766
    %4547 = vmatprep.subr.mxu0 %v763
    %4548 = vmatpush1.msra.mxu0 %v762
    %4549 = vmatprep.subr.mxu0 %v759
    %4550 = vmatpush1.msra.mxu0 %v758
    %4551 = vmatprep.subr.mxu0 %v755
    %4552 = vmatpush1.msra.mxu0 %v754
    %4553 = vmatprep.subr.mxu0 %v751
    %4554 = vmatpush1.msra.mxu0 %v750
    %4555 = vmatprep.subr.mxu0 %v747
    %4556 = vmatpush1.msra.mxu0 %v746
    %4557 = vmatprep.subr.mxu0 %v743
    %4558 = vmatpush1.msra.mxu0 %v742
    %4559 = vmatprep.subr.mxu0 %v739
    %4560 = vmatpush1.msra.mxu0 %v738
    %4561 = vmatprep.subr.mxu0 %v735
    %4562 = vmatpush1.msra.mxu0 %v734
    %4563 = vmatprep.subr.mxu0 %v731
    %4564 = vmatpush1.msra.mxu0 %v730
    %4565 = vmatprep.subr.mxu0 %v855
    %4566 = vmatpush2.msra.mxu0 %v854
    %4567 = vmatprep.subr.mxu0 %v851
    %4568 = vmatpush2.msra.mxu0 %v850
    %4569 = vmatprep.subr.mxu0 %v847
    %4570 = vmatpush2.msra.mxu0 %v846
    %4571 = vmatprep.subr.mxu0 %v843
    %4572 = vmatpush2.msra.mxu0 %v842
    %4573 = vmatprep.subr.mxu0 %v839
    %4574 = vmatpush2.msra.mxu0 %v838
    %4575 = vmatprep.subr.mxu0 %v835
    %4576 = vmatpush2.msra.mxu0 %v834
    %4577 = vmatprep.subr.mxu0 %v831
    %4578 = vmatpush2.msra.mxu0 %v830
    %4579 = vmatprep.subr.mxu0 %v827
    %4580 = vmatpush2.msra.mxu0 %v826
    %4581 = vmatprep.subr.mxu0 %v823
    %4582 = vmatpush2.msra.mxu0 %v822
    %4583 = vmatprep.subr.mxu0 %v819
    %4584 = vmatpush2.msra.mxu0 %v818
    %4585 = vmatprep.subr.mxu0 %v815
    %4586 = vmatpush2.msra.mxu0 %v814
    %4587 = vmatprep.subr.mxu0 %v811
    %4588 = vmatpush2.msra.mxu0 %v810
    %4589 = vmatprep.subr.mxu0 %v807
    %4590 = vmatpush2.msra.mxu0 %v806
    %4591 = vmatprep.subr.mxu0 %v803
    %4592 = vmatpush2.msra.mxu0 %v802
    %4593 = vmatprep.subr.mxu0 %v799
    %4594 = vmatpush2.msra.mxu0 %v798
    %4595 = vmatprep.subr.mxu0 %v795
    %4596 = vmatpush2.msra.mxu0 %v794
    %4597 = vmatprep.mubr.f32.mxu0 %v4459
    %4598 = vmatmul.mubr.f32.gmra.mxu0 %v4458
    %v4599 = vpop.f32.mrf.mxu0
    %v4600 = vadd.f32 %v870, %v4599
    %v4601 = vpop.f32.mrf.mxu0
    %v4602 = vadd.f32 %v874, %v4601
    %4603 = vdwg.mxu0
    %v4604 = vxor.u32 %v4529, 2147483648
    %v4605 = vxor.u32 %v4531, 2147483648
    %v4606 = vxor.u32 %v4600, 2147483648
    %v4607 = vxor.u32 %v4602, 2147483648
    %v4608 = vmul.f32 %v4604, 1.442695
    %v4609 = vpow.pop %v4608
    %v4610 = vmul.f32 %v4605, 1.442695
    %v4611 = vpow.pop %v4610
    %v4612 = vmul.f32 %v4606, 1.442695
    %v4613 = vpow.pop %v4612
    %v4614 = vmul.f32 %v4607, 1.442695
    %v4615 = vpow.pop %v4614
    %v4616 = vadd.f32 %v4609, 1.0
    %v4617 = vadd.f32 %v4611, 1.0
    %v4618 = vadd.f32 %v4613, 1.0
    %v4619 = vadd.f32 %v4615, 1.0
    %v4620 = vrcp.pop %v4616
    %v4621 = vmul.f32 1.0, %v4620
    %v4622 = vrcp.pop %v4617
    %v4623 = vmul.f32 1.0, %v4622
    %v4624 = vrcp.pop %v4618
    %v4625 = vmul.f32 1.0, %v4624
    %v4626 = vrcp.pop %v4619
    %v4627 = vmul.f32 1.0, %v4626
    %v4628 = vmul.f32 %v4625, 2.0
    %v4629 = vsub.f32 %v4628, 1.0
    %v4630 = vmul.f32 %v4623, %v4279
    %v4631 = vmul.f32 %v4621, %v4629
    %v4632 = vadd.f32 %v4630, %v4631
    %v4633 = vtanh.pop %v4632
    %v4634 = vmul.f32 %v4627, %v4633
    %4635 = vmatprep.subr.mxu0 %v1486
    %4636 = vmatpush1.msra.mxu0 %v1485
    %4637 = vmatprep.subr.mxu0 %v1482
    %4638 = vmatpush1.msra.mxu0 %v1481
    %4639 = vmatprep.subr.mxu0 %v1478
    %4640 = vmatpush1.msra.mxu0 %v1477
    %4641 = vmatprep.subr.mxu0 %v1474
    %4642 = vmatpush1.msra.mxu0 %v1473
    %4643 = vmatprep.subr.mxu0 %v1470
    %4644 = vmatpush1.msra.mxu0 %v1469
    %4645 = vmatprep.subr.mxu0 %v1466
    %4646 = vmatpush1.msra.mxu0 %v1465
    %4647 = vmatprep.subr.mxu0 %v1462
    %4648 = vmatpush1.msra.mxu0 %v1461
    %4649 = vmatprep.subr.mxu0 %v1458
    %4650 = vmatpush1.msra.mxu0 %v1457
    %4651 = vmatprep.subr.mxu0 %v1454
    %4652 = vmatpush1.msra.mxu0 %v1453
    %4653 = vmatprep.subr.mxu0 %v1450
    %4654 = vmatpush1.msra.mxu0 %v1449
    %4655 = vmatprep.subr.mxu0 %v1446
    %4656 = vmatpush1.msra.mxu0 %v1445
    %4657 = vmatprep.subr.mxu0 %v1442
    %4658 = vmatpush1.msra.mxu0 %v1441
    %4659 = vmatprep.subr.mxu0 %v1438
    %4660 = vmatpush1.msra.mxu0 %v1437
    %4661 = vmatprep.subr.mxu0 %v1434
    %4662 = vmatpush1.msra.mxu0 %v1433
    %4663 = vmatprep.subr.mxu0 %v1430
    %4664 = vmatpush1.msra.mxu0 %v1429
    %4665 = vmatprep.subr.mxu0 %v1426
    %4666 = vmatpush1.msra.mxu0 %v1425
    %4667 = vmatprep.subr.mxu0 %v1550
    %4668 = vmatpush2.msra.mxu0 %v1549
    %4669 = vmatprep.subr.mxu0 %v1546
    %4670 = vmatpush2.msra.mxu0 %v1545
    %4671 = vmatprep.subr.mxu0 %v1542
    %4672 = vmatpush2.msra.mxu0 %v1541
    %4673 = vmatprep.subr.mxu0 %v1538
    %4674 = vmatpush2.msra.mxu0 %v1537
    %4675 = vmatprep.subr.mxu0 %v1534
    %4676 = vmatpush2.msra.mxu0 %v1533
    %4677 = vmatprep.subr.mxu0 %v1530
    %4678 = vmatpush2.msra.mxu0 %v1529
    %4679 = vmatprep.subr.mxu0 %v1526
    %4680 = vmatpush2.msra.mxu0 %v1525
    %4681 = vmatprep.subr.mxu0 %v1522
    %4682 = vmatpush2.msra.mxu0 %v1521
    %4683 = vmatprep.subr.mxu0 %v1518
    %4684 = vmatpush2.msra.mxu0 %v1517
    %4685 = vmatprep.subr.mxu0 %v1514
    %4686 = vmatpush2.msra.mxu0 %v1513
    %4687 = vmatprep.subr.mxu0 %v1510
    %4688 = vmatpush2.msra.mxu0 %v1509
    %4689 = vmatprep.subr.mxu0 %v1506
    %4690 = vmatpush2.msra.mxu0 %v1505
    %4691 = vmatprep.subr.mxu0 %v1502
    %4692 = vmatpush2.msra.mxu0 %v1501
    %4693 = vmatprep.subr.mxu0 %v1498
    %4694 = vmatpush2.msra.mxu0 %v1497
    %4695 = vmatprep.subr.mxu0 %v1494
    %4696 = vmatpush2.msra.mxu0 %v1493
    %4697 = vmatprep.subr.mxu0 %v1490
    %4698 = vmatpush2.msra.mxu0 %v1489
    %4699 = vmatprep.mubr.f32.mxu0 %v4454
    %4700 = vmatmul.mubr.f32.gmra.mxu0 %v4281
    %v4701 = vpop.f32.mrf.mxu0
    %v4702 = vadd.f32 %v1559, %v4701
    %v4703 = vpop.f32.mrf.mxu0
    %v4704 = vadd.f32 %v1563, %v4703
    %4705 = vdwg.mxu0
    %4706 = vmatprep.subr.mxu0 %v1488
    %4707 = vmatpush1.msra.mxu0 %v1487
    %4708 = vmatprep.subr.mxu0 %v1484
    %4709 = vmatpush1.msra.mxu0 %v1483
    %4710 = vmatprep.subr.mxu0 %v1480
    %4711 = vmatpush1.msra.mxu0 %v1479
    %4712 = vmatprep.subr.mxu0 %v1476
    %4713 = vmatpush1.msra.mxu0 %v1475
    %4714 = vmatprep.subr.mxu0 %v1472
    %4715 = vmatpush1.msra.mxu0 %v1471
    %4716 = vmatprep.subr.mxu0 %v1468
    %4717 = vmatpush1.msra.mxu0 %v1467
    %4718 = vmatprep.subr.mxu0 %v1464
    %4719 = vmatpush1.msra.mxu0 %v1463
    %4720 = vmatprep.subr.mxu0 %v1460
    %4721 = vmatpush1.msra.mxu0 %v1459
    %4722 = vmatprep.subr.mxu0 %v1456
    %4723 = vmatpush1.msra.mxu0 %v1455
    %4724 = vmatprep.subr.mxu0 %v1452
    %4725 = vmatpush1.msra.mxu0 %v1451
    %4726 = vmatprep.subr.mxu0 %v1448
    %4727 = vmatpush1.msra.mxu0 %v1447
    %4728 = vmatprep.subr.mxu0 %v1444
    %4729 = vmatpush1.msra.mxu0 %v1443
    %4730 = vmatprep.subr.mxu0 %v1440
    %4731 = vmatpush1.msra.mxu0 %v1439
    %4732 = vmatprep.subr.mxu0 %v1436
    %4733 = vmatpush1.msra.mxu0 %v1435
    %4734 = vmatprep.subr.mxu0 %v1432
    %4735 = vmatpush1.msra.mxu0 %v1431
    %4736 = vmatprep.subr.mxu0 %v1428
    %4737 = vmatpush1.msra.mxu0 %v1427
    %4738 = vmatprep.subr.mxu0 %v1552
    %4739 = vmatpush2.msra.mxu0 %v1551
    %4740 = vmatprep.subr.mxu0 %v1548
    %4741 = vmatpush2.msra.mxu0 %v1547
    %4742 = vmatprep.subr.mxu0 %v1544
    %4743 = vmatpush2.msra.mxu0 %v1543
    %4744 = vmatprep.subr.mxu0 %v1540
    %4745 = vmatpush2.msra.mxu0 %v1539
    %4746 = vmatprep.subr.mxu0 %v1536
    %4747 = vmatpush2.msra.mxu0 %v1535
    %4748 = vmatprep.subr.mxu0 %v1532
    %4749 = vmatpush2.msra.mxu0 %v1531
    %4750 = vmatprep.subr.mxu0 %v1528
    %4751 = vmatpush2.msra.mxu0 %v1527
    %4752 = vmatprep.subr.mxu0 %v1524
    %4753 = vmatpush2.msra.mxu0 %v1523
    %4754 = vmatprep.subr.mxu0 %v1520
    %4755 = vmatpush2.msra.mxu0 %v1519
    %4756 = vmatprep.subr.mxu0 %v1516
    %4757 = vmatpush2.msra.mxu0 %v1515
    %4758 = vmatprep.subr.mxu0 %v1512
    %4759 = vmatpush2.msra.mxu0 %v1511
    %4760 = vmatprep.subr.mxu0 %v1508
    %4761 = vmatpush2.msra.mxu0 %v1507
    %4762 = vmatprep.subr.mxu0 %v1504
    %4763 = vmatpush2.msra.mxu0 %v1503
    %4764 = vmatprep.subr.mxu0 %v1500
    %4765 = vmatpush2.msra.mxu0 %v1499
    %4766 = vmatprep.subr.mxu0 %v1496
    %4767 = vmatpush2.msra.mxu0 %v1495
    %4768 = vmatprep.subr.mxu0 %v1492
    %4769 = vmatpush2.msra.mxu0 %v1491
    %4770 = vmatprep.mubr.f32.mxu0 %v4454
    %4771 = vmatmul.mubr.f32.gmra.mxu0 %v4281
    %v4772 = vpop.f32.mrf.mxu0
    %v4773 = vadd.f32 %v1567, %v4772
    %v4774 = vpop.f32.mrf.mxu0
    %v4775 = vadd.f32 %v1571, %v4774
    %4776 = vdwg.mxu0
    %v4777 = vxor.u32 %v4702, 2147483648
    %v4778 = vxor.u32 %v4704, 2147483648
    %v4779 = vxor.u32 %v4773, 2147483648
    %v4780 = vxor.u32 %v4775, 2147483648
    %v4781 = vmul.f32 %v4777, 1.442695
    %v4782 = vpow.pop %v4781
    %v4783 = vmul.f32 %v4778, 1.442695
    %v4784 = vpow.pop %v4783
    %v4785 = vmul.f32 %v4779, 1.442695
    %v4786 = vpow.pop %v4785
    %v4787 = vmul.f32 %v4780, 1.442695
    %v4788 = vpow.pop %v4787
    %v4789 = vadd.f32 %v4782, 1.0
    %v4790 = vadd.f32 %v4784, 1.0
    %v4791 = vadd.f32 %v4786, 1.0
    %v4792 = vadd.f32 %v4788, 1.0
    %v4793 = vrcp.pop %v4789
    %v4794 = vmul.f32 1.0, %v4793
    %v4795 = vrcp.pop %v4790
    %v4796 = vmul.f32 1.0, %v4795
    %v4797 = vrcp.pop %v4791
    %v4798 = vmul.f32 1.0, %v4797
    %v4799 = vrcp.pop %v4792
    %v4800 = vmul.f32 1.0, %v4799
    %v4801 = vmul.f32 %v4798, 2.0
    %v4802 = vsub.f32 %v4801, 1.0
    %v4803 = vmul.f32 %v4796, %v4452
    %v4804 = vmul.f32 %v4794, %v4802
    %v4805 = vadd.f32 %v4803, %v4804
    %v4806 = vtanh.pop %v4805
    %v4807 = vmul.f32 %v4800, %v4806
    %4808 = vmatprep.subr.mxu0 %v1486
    %4809 = vmatpush1.msra.mxu0 %v1485
    %4810 = vmatprep.subr.mxu0 %v1482
    %4811 = vmatpush1.msra.mxu0 %v1481
    %4812 = vmatprep.subr.mxu0 %v1478
    %4813 = vmatpush1.msra.mxu0 %v1477
    %4814 = vmatprep.subr.mxu0 %v1474
    %4815 = vmatpush1.msra.mxu0 %v1473
    %4816 = vmatprep.subr.mxu0 %v1470
    %4817 = vmatpush1.msra.mxu0 %v1469
    %4818 = vmatprep.subr.mxu0 %v1466
    %4819 = vmatpush1.msra.mxu0 %v1465
    %4820 = vmatprep.subr.mxu0 %v1462
    %4821 = vmatpush1.msra.mxu0 %v1461
    %4822 = vmatprep.subr.mxu0 %v1458
    %4823 = vmatpush1.msra.mxu0 %v1457
    %4824 = vmatprep.subr.mxu0 %v1454
    %4825 = vmatpush1.msra.mxu0 %v1453
    %4826 = vmatprep.subr.mxu0 %v1450
    %4827 = vmatpush1.msra.mxu0 %v1449
    %4828 = vmatprep.subr.mxu0 %v1446
    %4829 = vmatpush1.msra.mxu0 %v1445
    %4830 = vmatprep.subr.mxu0 %v1442
    %4831 = vmatpush1.msra.mxu0 %v1441
    %4832 = vmatprep.subr.mxu0 %v1438
    %4833 = vmatpush1.msra.mxu0 %v1437
    %4834 = vmatprep.subr.mxu0 %v1434
    %4835 = vmatpush1.msra.mxu0 %v1433
    %4836 = vmatprep.subr.mxu0 %v1430
    %4837 = vmatpush1.msra.mxu0 %v1429
    %4838 = vmatprep.subr.mxu0 %v1426
    %4839 = vmatpush1.msra.mxu0 %v1425
    %4840 = vmatprep.subr.mxu0 %v1550
    %4841 = vmatpush2.msra.mxu0 %v1549
    %4842 = vmatprep.subr.mxu0 %v1546
    %4843 = vmatpush2.msra.mxu0 %v1545
    %4844 = vmatprep.subr.mxu0 %v1542
    %4845 = vmatpush2.msra.mxu0 %v1541
    %4846 = vmatprep.subr.mxu0 %v1538
    %4847 = vmatpush2.msra.mxu0 %v1537
    %4848 = vmatprep.subr.mxu0 %v1534
    %4849 = vmatpush2.msra.mxu0 %v1533
    %4850 = vmatprep.subr.mxu0 %v1530
    %4851 = vmatpush2.msra.mxu0 %v1529
    %4852 = vmatprep.subr.mxu0 %v1526
    %4853 = vmatpush2.msra.mxu0 %v1525
    %4854 = vmatprep.subr.mxu0 %v1522
    %4855 = vmatpush2.msra.mxu0 %v1521
    %4856 = vmatprep.subr.mxu0 %v1518
    %4857 = vmatpush2.msra.mxu0 %v1517
    %4858 = vmatprep.subr.mxu0 %v1514
    %4859 = vmatpush2.msra.mxu0 %v1513
    %4860 = vmatprep.subr.mxu0 %v1510
    %4861 = vmatpush2.msra.mxu0 %v1509
    %4862 = vmatprep.subr.mxu0 %v1506
    %4863 = vmatpush2.msra.mxu0 %v1505
    %4864 = vmatprep.subr.mxu0 %v1502
    %4865 = vmatpush2.msra.mxu0 %v1501
    %4866 = vmatprep.subr.mxu0 %v1498
    %4867 = vmatpush2.msra.mxu0 %v1497
    %4868 = vmatprep.subr.mxu0 %v1494
    %4869 = vmatpush2.msra.mxu0 %v1493
    %4870 = vmatprep.subr.mxu0 %v1490
    %4871 = vmatpush2.msra.mxu0 %v1489
    %4872 = vmatprep.mubr.f32.mxu0 %v4807
    %4873 = vmatmul.mubr.f32.gmra.mxu0 %v4634
    %v4874 = vpop.f32.mrf.mxu0
    %v4875 = vadd.f32 %v1559, %v4874
    %v4876 = vpop.f32.mrf.mxu0
    %v4877 = vadd.f32 %v1563, %v4876
    %4878 = vdwg.mxu0
    %4879 = vmatprep.subr.mxu0 %v1488
    %4880 = vmatpush1.msra.mxu0 %v1487
    %4881 = vmatprep.subr.mxu0 %v1484
    %4882 = vmatpush1.msra.mxu0 %v1483
    %4883 = vmatprep.subr.mxu0 %v1480
    %4884 = vmatpush1.msra.mxu0 %v1479
    %4885 = vmatprep.subr.mxu0 %v1476
    %4886 = vmatpush1.msra.mxu0 %v1475
    %4887 = vmatprep.subr.mxu0 %v1472
    %4888 = vmatpush1.msra.mxu0 %v1471
    %4889 = vmatprep.subr.mxu0 %v1468
    %4890 = vmatpush1.msra.mxu0 %v1467
    %4891 = vmatprep.subr.mxu0 %v1464
    %4892 = vmatpush1.msra.mxu0 %v1463
    %4893 = vmatprep.subr.mxu0 %v1460
    %4894 = vmatpush1.msra.mxu0 %v1459
    %4895 = vmatprep.subr.mxu0 %v1456
    %4896 = vmatpush1.msra.mxu0 %v1455
    %4897 = vmatprep.subr.mxu0 %v1452
    %4898 = vmatpush1.msra.mxu0 %v1451
    %4899 = vmatprep.subr.mxu0 %v1448
    %4900 = vmatpush1.msra.mxu0 %v1447
    %4901 = vmatprep.subr.mxu0 %v1444
    %4902 = vmatpush1.msra.mxu0 %v1443
    %4903 = vmatprep.subr.mxu0 %v1440
    %4904 = vmatpush1.msra.mxu0 %v1439
    %4905 = vmatprep.subr.mxu0 %v1436
    %4906 = vmatpush1.msra.mxu0 %v1435
    %4907 = vmatprep.subr.mxu0 %v1432
    %4908 = vmatpush1.msra.mxu0 %v1431
    %4909 = vmatprep.subr.mxu0 %v1428
    %4910 = vmatpush1.msra.mxu0 %v1427
    %4911 = vmatprep.subr.mxu0 %v1552
    %4912 = vmatpush2.msra.mxu0 %v1551
    %4913 = vmatprep.subr.mxu0 %v1548
    %4914 = vmatpush2.msra.mxu0 %v1547
    %4915 = vmatprep.subr.mxu0 %v1544
    %4916 = vmatpush2.msra.mxu0 %v1543
    %4917 = vmatprep.subr.mxu0 %v1540
    %4918 = vmatpush2.msra.mxu0 %v1539
    %4919 = vmatprep.subr.mxu0 %v1536
    %4920 = vmatpush2.msra.mxu0 %v1535
    %4921 = vmatprep.subr.mxu0 %v1532
    %4922 = vmatpush2.msra.mxu0 %v1531
    %4923 = vmatprep.subr.mxu0 %v1528
    %4924 = vmatpush2.msra.mxu0 %v1527
    %4925 = vmatprep.subr.mxu0 %v1524
    %4926 = vmatpush2.msra.mxu0 %v1523
    %4927 = vmatprep.subr.mxu0 %v1520
    %4928 = vmatpush2.msra.mxu0 %v1519
    %4929 = vmatprep.subr.mxu0 %v1516
    %4930 = vmatpush2.msra.mxu0 %v1515
    %4931 = vmatprep.subr.mxu0 %v1512
    %4932 = vmatpush2.msra.mxu0 %v1511
    %4933 = vmatprep.subr.mxu0 %v1508
    %4934 = vmatpush2.msra.mxu0 %v1507
    %4935 = vmatprep.subr.mxu0 %v1504
    %4936 = vmatpush2.msra.mxu0 %v1503
    %4937 = vmatprep.subr.mxu0 %v1500
    %4938 = vmatpush2.msra.mxu0 %v1499
    %4939 = vmatprep.subr.mxu0 %v1496
    %4940 = vmatpush2.msra.mxu0 %v1495
    %4941 = vmatprep.subr.mxu0 %v1492
    %4942 = vmatpush2.msra.mxu0 %v1491
    %4943 = vmatprep.mubr.f32.mxu0 %v4807
    %4944 = vmatmul.mubr.f32.gmra.mxu0 %v4634
    %v4945 = vpop.f32.mrf.mxu0
    %v4946 = vadd.f32 %v1567, %v4945
    %v4947 = vpop.f32.mrf.mxu0
    %v4948 = vadd.f32 %v1571, %v4947
    %4949 = vdwg.mxu0
    %v4950 = vxor.u32 %v4875, 2147483648
    %v4951 = vxor.u32 %v4877, 2147483648
    %v4952 = vxor.u32 %v4946, 2147483648
    %v4953 = vxor.u32 %v4948, 2147483648
    %v4954 = vmul.f32 %v4950, 1.442695
    %v4955 = vpow.pop %v4954
    %v4956 = vmul.f32 %v4951, 1.442695
    %v4957 = vpow.pop %v4956
    %v4958 = vmul.f32 %v4952, 1.442695
    %v4959 = vpow.pop %v4958
    %v4960 = vmul.f32 %v4953, 1.442695
    %v4961 = vpow.pop %v4960
    %v4962 = vadd.f32 %v4955, 1.0
    %v4963 = vadd.f32 %v4957, 1.0
    %v4964 = vadd.f32 %v4959, 1.0
    %v4965 = vadd.f32 %v4961, 1.0
    %v4966 = vrcp.pop %v4962
    %v4967 = vmul.f32 1.0, %v4966
    %v4968 = vrcp.pop %v4963
    %v4969 = vmul.f32 1.0, %v4968
    %v4970 = vrcp.pop %v4964
    %v4971 = vmul.f32 1.0, %v4970
    %v4972 = vrcp.pop %v4965
    %v4973 = vmul.f32 1.0, %v4972
    %v4974 = vmul.f32 %v4971, 2.0
    %v4975 = vsub.f32 %v4974, 1.0
    %v4976 = vmul.f32 %v4969, %v4805
    %v4977 = vmul.f32 %v4967, %v4975
    %v4978 = vadd.f32 %v4976, %v4977
    %v4979 = vtanh.pop %v4978
    %v4980 = vmul.f32 %v4973, %v4979
    %v4982 = vrot.slane %v2293, 6
    %v4985 = vrot.slane %v2826, 4
    %v4988 = vrot.slane %v3364, 2
    %v4991 = vrot.slane %v4454, 6
    %v4994 = vrot.slane %v4807, 4
    %v4997 = vrot.slane %v4980, 2
    %vm4999 = vcmask 1041408
    %v5000 = vsel %vm4999, %v1748, %v4982
    %vm5001 = vcmask 1043456
    %v5002 = vsel %vm5001, %v5000, %v4985
    %vm5003 = vcmask 1045504
    %v5004 = vsel %vm5003, %v5002, %v4988
    %v5005 = vsel %vm4999, %v3909, %v4991
    %v5006 = vsel %vm5001, %v5005, %v4994
    %v5007 = vsel %vm5003, %v5006, %v4997
    %v5008 = vld [vmem:[#allocation8] sm:$0xff]
    %v5009 = vld [vmem:[#allocation8 + $0x8] sm:$0xff]
    %v5010 = vld [vmem:[#allocation8 + $0x10] sm:$0xff]
    %v5011 = vld [vmem:[#allocation8 + $0x18] sm:$0xff]
    %v5012 = vld [vmem:[#allocation8 + $0x20] sm:$0xff]
    %v5013 = vld [vmem:[#allocation8 + $0x28] sm:$0xff]
    %v5014 = vld [vmem:[#allocation8 + $0x30] sm:$0xff]
    %v5015 = vld [vmem:[#allocation8 + $0x38] sm:$0xff]
    %v5016 = vld [vmem:[#allocation8 + $0x40] sm:$0xff]
    %v5017 = vld [vmem:[#allocation8 + $0x48] sm:$0xff]
    %v5018 = vld [vmem:[#allocation8 + $0x50] sm:$0xff]
    %v5019 = vld [vmem:[#allocation8 + $0x58] sm:$0xff]
    %v5020 = vld [vmem:[#allocation8 + $0x60] sm:$0xff]
    %v5021 = vld [vmem:[#allocation8 + $0x68] sm:$0xff]
    %v5022 = vld [vmem:[#allocation8 + $0x70] sm:$0xff]
    %v5023 = vld [vmem:[#allocation8 + $0x78] sm:$0xff]
    %v5024 = vld [vmem:[%s8] sm:$0x1]
    %v5026 = vlaneseq
    %v5027 = vshrl.u32 %v5026, 7
    %v5028 = vsub.s32 0, %v5027
    %v5029 = vrot.slane %v5024, %v5028
    %5031 = vmatprep.subr.mxu0 0.0
    %5032 = vmatpush1.msra.mxu0 %v5023
    %5033 = vmatprep.subr.mxu0 0.0
    %5034 = vmatpush1.msra.mxu0 %v5022
    %5035 = vmatprep.subr.mxu0 0.0
    %5036 = vmatpush1.msra.mxu0 %v5021
    %5037 = vmatprep.subr.mxu0 0.0
    %5038 = vmatpush1.msra.mxu0 %v5020
    %5039 = vmatprep.subr.mxu0 0.0
    %5040 = vmatpush1.msra.mxu0 %v5019
    %5041 = vmatprep.subr.mxu0 0.0
    %5042 = vmatpush1.msra.mxu0 %v5018
    %5043 = vmatprep.subr.mxu0 0.0
    %5044 = vmatpush1.msra.mxu0 %v5017
    %5045 = vmatprep.subr.mxu0 0.0
    %5046 = vmatpush1.msra.mxu0 %v5016
    %5047 = vmatprep.subr.mxu0 0.0
    %5048 = vmatpush1.msra.mxu0 %v5015
    %5049 = vmatprep.subr.mxu0 0.0
    %5050 = vmatpush1.msra.mxu0 %v5014
    %5051 = vmatprep.subr.mxu0 0.0
    %5052 = vmatpush1.msra.mxu0 %v5013
    %5053 = vmatprep.subr.mxu0 0.0
    %5054 = vmatpush1.msra.mxu0 %v5012
    %5055 = vmatprep.subr.mxu0 0.0
    %5056 = vmatpush1.msra.mxu0 %v5011
    %5057 = vmatprep.subr.mxu0 0.0
    %5058 = vmatpush1.msra.mxu0 %v5010
    %5059 = vmatprep.subr.mxu0 0.0
    %5060 = vmatpush1.msra.mxu0 %v5009
    %5061 = vmatprep.subr.mxu0 0.0
    %5062 = vmatpush1.msra.mxu0 %v5008
    %5063 = vmatprep.subr.mxu0 0.0
    %5064 = vmatpush2.msra.mxu0 0.0
    %5065 = vmatprep.subr.mxu0 0.0
    %5066 = vmatpush2.msra.mxu0 0.0
    %5067 = vmatprep.subr.mxu0 0.0
    %5068 = vmatpush2.msra.mxu0 0.0
    %5069 = vmatprep.subr.mxu0 0.0
    %5070 = vmatpush2.msra.mxu0 0.0
    %5071 = vmatprep.subr.mxu0 0.0
    %5072 = vmatpush2.msra.mxu0 0.0
    %5073 = vmatprep.subr.mxu0 0.0
    %5074 = vmatpush2.msra.mxu0 0.0
    %5075 = vmatprep.subr.mxu0 0.0
    %5076 = vmatpush2.msra.mxu0 0.0
    %5077 = vmatprep.subr.mxu0 0.0
    %5078 = vmatpush2.msra.mxu0 0.0
    %5079 = vmatprep.subr.mxu0 0.0
    %5080 = vmatpush2.msra.mxu0 0.0
    %5081 = vmatprep.subr.mxu0 0.0
    %5082 = vmatpush2.msra.mxu0 0.0
    %5083 = vmatprep.subr.mxu0 0.0
    %5084 = vmatpush2.msra.mxu0 0.0
    %5085 = vmatprep.subr.mxu0 0.0
    %5086 = vmatpush2.msra.mxu0 0.0
    %5087 = vmatprep.subr.mxu0 0.0
    %5088 = vmatpush2.msra.mxu0 0.0
    %5089 = vmatprep.subr.mxu0 0.0
    %5090 = vmatpush2.msra.mxu0 0.0
    %5091 = vmatprep.subr.mxu0 0.0
    %5092 = vmatpush2.msra.mxu0 0.0
    %5093 = vmatprep.subr.mxu0 0.0
    %5094 = vmatpush2.msra.mxu0 0.0
    %5095 = vmatprep.mubr.f32.mxu0 0.0
    %5096 = vmatmul.mubr.f32.gmra.mxu0 %v5004
    %v5097 = vpop.f32.mrf.mxu0
    %v5098 = vadd.f32 %v5029, %v5097
    %v5099 = vpop.f32.mrf.mxu0
    %5100 = vmatprep.mubr.f32.mxu0 0.0
    %5101 = vmatmul.mubr.f32.gmra.mxu0 %v5007
    %v5102 = vpop.f32.mrf.mxu0
    %v5103 = vadd.f32 %v5029, %v5102
    %v5104 = vpop.f32.mrf.mxu0
    %5105 = vdwg.mxu0
    %5106 = vst [vmem:[%s9] sm:$0xff] %v5098
    %5107 = vst [vmem:[%s9 + $0x8] sm:$0xff] %v5103
    %5108 = vst [vmem:[#allocation10 - $0x6] sm:$0xc0] %v4104
    %5109 = vst [vmem:[#allocation11 - $0x6] sm:$0xc0] %v4102
    %s5110 = scalar_lea.vmem [#allocation10], 2
    %5111 = vst [vmem:[%s5110] sm:$0x3] %v4634
    %s5112 = scalar_lea.vmem [#allocation11], 2
    %5113 = vst [vmem:[%s5112] sm:$0x3] %v4632
    %s5114 = scalar_lea.vmem [#allocation10], 4
    %5115 = vst [vmem:[%s5114] sm:$0x3] %v4980
    %s5116 = scalar_lea.vmem [#allocation11], 4
    %5117 = vst [vmem:[%s5116] sm:$0x3] %v4978
    // Predicated region
    $region54: #{sentiment_lstm_forward.1} parent=1 // pred_check
      _
    $region55: #{sentiment_lstm_forward.1} parent=1 // pred_check_branch
      %5119 = sbr.rel (0) target = $region57
    $region56: #{sentiment_lstm_forward.1} parent=1 // pred_region
      _
    $region57: #{sentiment_lstm_forward.1} parent=1 // pred_fallthru
      _
    // Predicated region
    $region58: #{sentiment_lstm_forward.1} parent=1 // pred_check
      _
    $region59: #{sentiment_lstm_forward.1} parent=1 // pred_check_branch
      %5121 = sbr.rel (0) target = $region61
    $region60: #{sentiment_lstm_forward.1} parent=1 // pred_region
      %s5123 = ssub.s32 96, 96
      %5124 = vsyncadd [#allocation4], %s5123
      %s5125 = sshll.u32 [#allocation10], 4
      %s5126 = int_to_ptr.vmem [resolvable:$true] %s5125
      %5131 = dma.vmem_to_hbm [thread:$0]  %s5126, 96, %s10, [#allocation4], 32, 32, 2
    $region61: #{sentiment_lstm_forward.1} parent=1 // pred_fallthru
      _
    // Predicated region
    $region62: #{sentiment_lstm_forward.1} parent=1 // pred_check
      _
    $region63: #{sentiment_lstm_forward.1} parent=1 // pred_check_branch
      %5133 = sbr.rel (0) target = $region65
    $region64: #{sentiment_lstm_forward.1} parent=1 // pred_region
      %s5135 = ssub.s32 96, 96
      %5136 = vsyncadd [#allocation12], %s5135
      %s5137 = sshll.u32 [#allocation11], 4
      %s5138 = int_to_ptr.vmem [resolvable:$true] %s5137
      %5143 = dma.vmem_to_hbm [thread:$0]  %s5138, 96, %s11, [#allocation12], 32, 32, 2
    $region65: #{sentiment_lstm_forward.1} parent=1 // pred_fallthru
      _
    // Predicated region
    $region66: #{sentiment_lstm_forward.1} parent=1 // pred_check
      _
    $region67: #{sentiment_lstm_forward.1} parent=1 // pred_check_branch
      %5145 = sbr.rel (0) target = $region69
    $region68: #{sentiment_lstm_forward.1} parent=1 // pred_region
      _
    $region69: #{sentiment_lstm_forward.1} parent=1 // pred_fallthru
      _
    // Predicated region
    $region70: #{sentiment_lstm_forward.1} parent=1 // pred_check
      _
    $region71: #{sentiment_lstm_forward.1} parent=1 // pred_check_branch
      %5147 = sbr.rel (0) target = $region73
    $region72: #{sentiment_lstm_forward.1} parent=1 // pred_region
      %5148 = dma.done [#allocation4], 96
    $region73: #{sentiment_lstm_forward.1} parent=1 // pred_fallthru
      _
    // Predicated region
    $region74: #{sentiment_lstm_forward.1} parent=1 // pred_check
      _
    $region75: #{sentiment_lstm_forward.1} parent=1 // pred_check_branch
      %5150 = sbr.rel (0) target = $region77
    $region76: #{sentiment_lstm_forward.1} parent=1 // pred_region
      %5151 = dma.done [#allocation12], 96
    $region77: #{sentiment_lstm_forward.1} parent=1 // pred_fallthru
      _
    %5152 = vsyncpa [#allocation3], 1
    %5153 = vsyncpa [#allocation6], 1
    %5154 = vsyncpa [#allocation9], 1
    %5155 = vsyncpa [#allocation4], 1
    %5156 = vsyncpa [#allocation12], 1

</llo_original>
